<compile_context>
chip_gen: v7x
topology: tpu7x:2x2x1
jax: 0.10.0
libtpu: 0.0.40
codegen_flags: <defaults>
</compile_context>

<pallas_src>
import functools
import math

import jax
import jax.numpy as jnp
from jax import lax
from jax.experimental import pallas as pl
from jax.experimental.pallas import tpu as pltpu


def round_up(x, m):
    return ((x + m - 1) // m) * m


# ---------------------------------------------------------------------------
# Kernel 1: fused encoder (patchify conv as matmul) + ReLU + encoder_proj
# ---------------------------------------------------------------------------

def _enc_proj_kernel(x_ref, ew_ref, eb_ref, pw_ref, pb_ref, o_ref, acc_ref):
    """enc_out = ReLU(x @ enc_w + eb) @ proj_w + pb, with enc_w/proj_w streamed in tiles.

    The proj contraction decomposes over the encoder's N tiles:
        out = sum_j ReLU(x @ enc_w[:, jblk] + eb[jblk]) @ proj_w[jblk, :]
    so no full (M, 2048) feature buffer is ever materialized.
    """
    j = pl.program_id(0)

    @pl.when(j == 0)
    def _():
        acc_ref[...] = jnp.zeros_like(acc_ref)

    y = jnp.dot(x_ref[...], ew_ref[...], preferred_element_type=jnp.float32) + eb_ref[...]
    y = jnp.maximum(y, 0.0)
    acc_ref[...] += jnp.dot(y.astype(pw_ref.dtype), pw_ref[...],
                            preferred_element_type=jnp.float32)

    @pl.when(j == pl.num_programs(0) - 1)
    def _():
        o_ref[...] = (acc_ref[...] + pb_ref[...]).astype(o_ref.dtype)


def encoder_proj_pallas(patches, enc_w, enc_b, proj_w, proj_b, *, tn=512):
    """patches:(M, K) f32 -> (M, E) f32.  enc_w:(K, N) bf16, proj_w:(N, E) bf16."""
    M, K = patches.shape
    N = enc_w.shape[1]
    E = proj_w.shape[1]
    assert N % tn == 0 and K % 128 == 0 and E % 128 == 0
    Mp = round_up(M, 8)
    x = patches.astype(enc_w.dtype)
    if Mp != M:
        x = jnp.zeros((Mp, K), x.dtype).at[:M].set(x)

    out = pl.pallas_call(
        _enc_proj_kernel,
        out_shape=jax.ShapeDtypeStruct((Mp, E), jnp.float32),
        grid_spec=pltpu.PrefetchScalarGridSpec(
            num_scalar_prefetch=0,
            grid=(N // tn,),
            in_specs=[pl.BlockSpec((Mp, K), lambda j: (0, 0)),   # patches, resident
                      pl.BlockSpec((K, tn), lambda j: (0, j)),   # enc_w tile (streamed)
                      pl.BlockSpec((1, tn), lambda j: (0, j)),   # enc_b tile
                      pl.BlockSpec((tn, E), lambda j: (j, 0)),   # proj_w tile (streamed)
                      pl.BlockSpec((1, E), lambda j: (0, 0))],   # proj_b, resident
            out_specs=pl.BlockSpec((Mp, E), lambda j: (0, 0)),
            scratch_shapes=[pltpu.VMEM((Mp, E), jnp.float32)],
        ),
        compiler_params=pltpu.CompilerParams(
            dimension_semantics=("arbitrary",),
            vmem_limit_bytes=32 * 1024 * 1024),
    )(x, enc_w, enc_b.reshape(1, -1).astype(jnp.float32),
      proj_w, proj_b.reshape(1, -1).astype(jnp.float32))
    return out[:M] if Mp != M else out


# ---------------------------------------------------------------------------
# Kernel 2: fused TransformerDecoder (all layers) + fc_out
# ---------------------------------------------------------------------------

_LAYER_PARAM_NAMES = ("self_in_w", "self_in_b", "self_out_w", "self_out_b",
                      "cross_q_w", "cross_q_b", "cross_kv_w", "cross_kv_b",
                      "cross_out_w", "cross_out_b",
                      "ff1_w", "ff1_b", "ff2_w", "ff2_b",
                      "ln1_g", "ln1_b", "ln2_g", "ln2_b", "ln3_g", "ln3_b")


def _decoder_kernel(x_ref, mem_ref, hm_ref,
                    sin_w, sin_b, sout_w, sout_b,
                    cq_w, cq_b, ckv_w, ckv_b, cout_w, cout_b,
                    ff1_w, ff1_b, ff2_w, ff2_b,
                    ln1_g, ln1_b, ln2_g, ln2_b, ln3_g, ln3_b,
                    ow_ref, ob_ref,
                    o_ref, x_vmem, *, H, eps):
    """One nn.TransformerDecoderLayer per grid step (post-norm, ReLU FFN, eval dropout=id).

    Grid = (batch, layer). x_vmem keeps the activation resident across the layer axis;
    fc_out runs as an epilogue on the last layer. Heads are packed along sublanes so
    every matmul uses the full 128-lane contraction (no dh-wide lane slices).
    """
    T, E = x_vmem.shape
    dh = E // H
    scale = 1.0 / math.sqrt(dh)
    layer = pl.program_id(1)

    @pl.when(layer == 0)
    def _():
        x_vmem[...] = x_ref[...]

    head_mask = hm_ref[...]                       # (H*T, E) {0,1}: row block h keeps head-h lanes

    def layer_norm(y, g_ref, b_ref):
        mu = jnp.mean(y, axis=-1, keepdims=True)
        c = y - mu
        var = jnp.mean(c * c, axis=-1, keepdims=True)
        return c * lax.rsqrt(var + eps) * g_ref[...] + b_ref[...]

    def mha(q, k, v, w_out_ref, b_out_ref):
        # q:(T,E)  k,v:(Lk,E)  -> already-out-projected attention output (T,E)
        qp = jnp.concatenate([q] * H, axis=0) * head_mask                      # (H*T, E)
        s = lax.dot_general(qp, k, (((1,), (1,)), ((), ())),
                            preferred_element_type=jnp.float32) * scale        # (H*T, Lk)
        m = jnp.max(s, axis=-1, keepdims=True)
        p = jnp.exp(s - m)
        p = p * pl.reciprocal(jnp.sum(p, axis=-1, keepdims=True), approx=True)
        o = jnp.dot(p, v, preferred_element_type=jnp.float32)                  # (H*T, E)
        o = jnp.sum((o * head_mask).reshape(H, T, E), axis=0)                  # concat-over-heads
        return jnp.dot(o, w_out_ref[...], preferred_element_type=jnp.float32) + b_out_ref[...]

    x = x_vmem[...]                               # (T, E)
    mem = mem_ref[...]                            # (S, E)

    # --- self attention (reference passes no tgt_mask) ---
    qkv = jnp.dot(x, sin_w[...], preferred_element_type=jnp.float32) + sin_b[...]
    sa = mha(qkv[:, :E], qkv[:, E:2 * E], qkv[:, 2 * E:], sout_w, sout_b)
    x = layer_norm(x + sa, ln1_g, ln1_b)

    # --- cross attention over encoder memory ---
    qc = jnp.dot(x, cq_w[...], preferred_element_type=jnp.float32) + cq_b[...]
    kv = jnp.dot(mem, ckv_w[...], preferred_element_type=jnp.float32) + ckv_b[...]
    ca = mha(qc, kv[:, :E], kv[:, E:], cout_w, cout_b)
    x = layer_norm(x + ca, ln2_g, ln2_b)

    # --- feed-forward (ReLU); dropout is identity in eval mode ---
    hdn = jnp.maximum(
        jnp.dot(x, ff1_w[...], preferred_element_type=jnp.float32) + ff1_b[...], 0.0)
    ff = jnp.dot(hdn, ff2_w[...], preferred_element_type=jnp.float32) + ff2_b[...]
    x = layer_norm(x + ff, ln3_g, ln3_b)

    x_vmem[...] = x

    # fc_out (Dropout(0.5) is identity in eval mode) fused as last-layer epilogue.
    @pl.when(layer == pl.num_programs(1) - 1)
    def _():
        o_ref[...] = (jnp.dot(x, ow_ref[...], preferred_element_type=jnp.float32)
                      + ob_ref[...]).astype(o_ref.dtype)


def decoder_pallas(x, memory, layers, out_w, out_b, *, H):
    """x:(B,T,E), memory:(B,S,E), layers: dict of (L,...)-stacked params -> logits (B,T,V)."""
    B, T, E = x.shape
    S = memory.shape[1]
    L = layers["self_in_w"].shape[0]
    V = out_w.shape[1]
    Vp = round_up(V, 128)
    assert E % H == 0 and E % 128 == 0
    dh = E // H

    ow, ob = out_w, out_b.reshape(1, -1)
    if Vp != V:
        ow = jnp.zeros((E, Vp), out_w.dtype).at[:, :V].set(out_w)
        ob = jnp.zeros((1, Vp), jnp.float32).at[:, :V].set(ob)

    # Head-packing mask: row block h (rows [h*T:(h+1)*T]) keeps only lanes [h*dh:(h+1)*dh].
    head_mask = (jnp.arange(H * T)[:, None] // T ==
                 jnp.arange(E)[None, :] // dh).astype(jnp.float32)

    layer_args = [layers[n] for n in _LAYER_PARAM_NAMES]
    layer_specs = [pl.BlockSpec((None,) + layers[n].shape[1:], lambda b, l: (l, 0, 0))
                   for n in _LAYER_PARAM_NAMES]

    out = pl.pallas_call(
        functools.partial(_decoder_kernel, H=H, eps=1e-5),
        out_shape=jax.ShapeDtypeStruct((B, T, Vp), jnp.float32),
        grid_spec=pltpu.PrefetchScalarGridSpec(
            num_scalar_prefetch=0,
            grid=(B, L),                                   # batch parallel, layers sequential
            in_specs=[pl.BlockSpec((None, T, E), lambda b, l: (b, 0, 0)),    # x (read at l==0)
                      pl.BlockSpec((None, S, E), lambda b, l: (b, 0, 0)),    # memory, resident
                      pl.BlockSpec((H * T, E), lambda b, l: (0, 0))]         # head mask
                     + layer_specs
                     + [pl.BlockSpec((E, Vp), lambda b, l: (0, 0)),          # fc_out w, resident
                        pl.BlockSpec((1, Vp), lambda b, l: (0, 0))],         # fc_out b
            out_specs=pl.BlockSpec((None, T, Vp), lambda b, l: (b, 0, 0)),
            scratch_shapes=[pltpu.VMEM((T, E), jnp.float32)],                # resident activation
        ),
        compiler_params=pltpu.CompilerParams(
            dimension_semantics=("parallel", "arbitrary")),
    )(x, memory, head_mask, *layer_args, ow, ob)
    return out[:, :, :V] if Vp != V else out


# ---------------------------------------------------------------------------
# Parameter initialization (deterministic, synthetic)
# ---------------------------------------------------------------------------

def init_linear(key, fan_in, fan_out):
    kw, kb = jax.random.split(key)
    bound = 1.0 / math.sqrt(fan_in)
    w = jax.random.uniform(kw, (fan_in, fan_out), jnp.float32, -bound, bound)
    b = jax.random.uniform(kb, (fan_out,), jnp.float32, -bound, bound)
    return w, b


def init_params(key, *, vocab_size, embed_dim, num_heads, ff_dim, num_layers,
                encoder_dim, patch, in_chans):
    keys = jax.random.split(key, 4 + num_layers)
    p = {}
    # Encoder stand-in (patchify conv expressed as a matmul over im2col patches).
    p["enc_w"], p["enc_b"] = init_linear(keys[0], in_chans * patch * patch, encoder_dim)
    # encoder_proj: Linear(encoder_dim=2048, embed_dim)
    p["proj_w"], p["proj_b"] = init_linear(keys[1], encoder_dim, embed_dim)
    # Big weight-streaming matmuls are stored in bf16 (f32 accumulation in-kernel).
    p["enc_w"] = p["enc_w"].astype(jnp.bfloat16)
    p["proj_w"] = p["proj_w"].astype(jnp.bfloat16)
    # NOTE: the reference's Attention module params are not created: its outputs never
    # reach the returned logits (see forward).
    p["emb"] = jax.random.normal(keys[2], (vocab_size, embed_dim), jnp.float32)
    p["pos"] = jnp.zeros((1, 1000, embed_dim), jnp.float32)   # nn.Parameter(zeros)

    layer_list = []
    for li in range(num_layers):
        lk = jax.random.split(keys[3 + li], 7)
        lp = {}
        w, b = init_linear(lk[0], embed_dim, 3 * embed_dim)
        lp["self_in_w"], lp["self_in_b"] = w, b.reshape(1, -1)
        w, b = init_linear(lk[1], embed_dim, embed_dim)
        lp["self_out_w"], lp["self_out_b"] = w, b.reshape(1, -1)
        w, b = init_linear(lk[2], embed_dim, embed_dim)
        lp["cross_q_w"], lp["cross_q_b"] = w, b.reshape(1, -1)
        w, b = init_linear(lk[3], embed_dim, 2 * embed_dim)
        lp["cross_kv_w"], lp["cross_kv_b"] = w, b.reshape(1, -1)
        w, b = init_linear(lk[4], embed_dim, embed_dim)
        lp["cross_out_w"], lp["cross_out_b"] = w, b.reshape(1, -1)
        w, b = init_linear(lk[5], embed_dim, ff_dim)
        lp["ff1_w"], lp["ff1_b"] = w, b.reshape(1, -1)
        w, b = init_linear(lk[6], ff_dim, embed_dim)
        lp["ff2_w"], lp["ff2_b"] = w, b.reshape(1, -1)
        for i in (1, 2, 3):
            lp[f"ln{i}_g"] = jnp.ones((1, embed_dim), jnp.float32)
            lp[f"ln{i}_b"] = jnp.zeros((1, embed_dim), jnp.float32)
        layer_list.append(lp)
    # Stack per-layer params along a leading L axis for the fused decoder kernel.
    p["layers"] = {n: jnp.stack([lp[n] for lp in layer_list], axis=0)
                   for n in _LAYER_PARAM_NAMES}
    # fc_out = Dropout(0.5) + Linear(embed_dim, vocab)
    p["out_w"], p["out_b"] = init_linear(keys[3 + num_layers], embed_dim, vocab_size)
    return p


# ---------------------------------------------------------------------------
# Forward pass
# ---------------------------------------------------------------------------

def image_captioning_forward(params, images, captions, *, num_heads, patch):
    B, C, Hi, Wi = images.shape
    Hc, Wc = Hi // patch, Wi // patch
    NF = Hc * Wc

    # --- CNN encoder + encoder_proj (one fused Pallas kernel) ---
    # TODO(synk): the pretrained ResNet50 backbone is not translated; stand-in is a single
    # patch x patch / stride-patch conv (im2col + matmul) producing the same (B, NF, 2048)
    # layout as encoder_out.permute(0,2,3,1).reshape(B, -1, 2048), fused with encoder_proj.
    patches = images.reshape(B, C, Hc, patch, Wc, patch)
    patches = patches.transpose(0, 2, 4, 1, 3, 5).reshape(B * NF, C * patch * patch)
    enc_flat = encoder_proj_pallas(patches, params["enc_w"], params["enc_b"],
                                   params["proj_w"], params["proj_b"])       # (B*NF, E)
    E = enc_flat.shape[1]
    memory = enc_flat.reshape(B, NF, E)

    # NOTE: the reference also computes Attention(encoder_out, zeros), but its
    # (context, alpha) outputs never reach the returned logits, so the branch is
    # omitted from the traced function (previously it was only XLA-DCE'd).

    # --- transformer decoder + fc_out: ONE fused pallas_call over (batch, layers) ---
    tgt = captions[:, :-1]                                    # (B, T)
    T = tgt.shape[1]
    x = params["emb"][tgt] + params["pos"][:, :T, :]          # (B, T, E)
    logits = decoder_pallas(x, memory, params["layers"],
                            params["out_w"], params["out_b"], H=num_heads)
    return logits                                             # (B, T, vocab)


# ---------------------------------------------------------------------------

if __name__ == "__main__":
    key = jax.random.PRNGKey(0)
    vocab_size, embed_dim, attention_dim = 256, 128, 128   # attention_dim unused (dead branch)
    num_heads, ff_dim, num_layers = 4, 256, 2
    encoder_dim, patch, in_chans = 2048, 32, 3

    kp, ki, kc = jax.random.split(key, 3)
    params = init_params(kp, vocab_size=vocab_size, embed_dim=embed_dim,
                         num_heads=num_heads, ff_dim=ff_dim, num_layers=num_layers,
                         encoder_dim=encoder_dim, patch=patch, in_chans=in_chans)

    images = jax.random.normal(ki, (2, 3, 64, 64), jnp.float32)          # NCHW
    captions = jax.random.randint(kc, (2, 9), 0, vocab_size, jnp.int32)  # (B, T+1)

    fwd = jax.jit(functools.partial(image_captioning_forward,
                                    num_heads=num_heads, patch=patch))
    out = fwd(params, images, captions)
    out = jax.block_until_ready(out)
    assert out.shape == (2, 8, vocab_size), out.shape
    assert bool(jnp.all(jnp.isfinite(out)))
    print("KERNEL_OK")
</pallas_src>

<mosaic_0001>
module attributes {stable_mosaic.version = 11 : i64} {
  func.func @_enc_proj_kernel(%arg0: i32, %arg1: memref<8x3072xbf16, #tpu.memory_space<vmem>>, %arg2: memref<3072x512xbf16, #tpu.memory_space<vmem>>, %arg3: memref<1x512xf32, #tpu.memory_space<vmem>>, %arg4: memref<512x128xbf16, #tpu.memory_space<vmem>>, %arg5: memref<1x128xf32, #tpu.memory_space<vmem>>, %arg6: memref<8x128xf32, #tpu.memory_space<vmem>>, %arg7: memref<8x128xf32, #tpu.memory_space<vmem>>) attributes {dimension_semantics = [#tpu.dimension_semantics<arbitrary>], iteration_bounds = array<i64: 4>, scalar_prefetch = 0 : i64, scratch_operands = 1 : i64, tpu.core_type = #tpu.core_type<tc>, window_params = [{pipeline_mode = #tpu.pipeline_mode<synchronous>, transform_indices = @transform_0, window_bounds = array<i64: 8, 3072>}, {transform_indices = @transform_1, window_bounds = array<i64: 3072, 512>}, {transform_indices = @transform_2, window_bounds = array<i64: 1, 512>}, {transform_indices = @transform_3, window_bounds = array<i64: 512, 128>}, {pipeline_mode = #tpu.pipeline_mode<synchronous>, transform_indices = @transform_4, window_bounds = array<i64: 1, 128>}, {pipeline_mode = #tpu.pipeline_mode<synchronous>, transform_indices = @transform_5, window_bounds = array<i64: 8, 128>}]} {
    %c0_i32 = arith.constant 0 : i32
    %0 = arith.cmpi eq, %arg0, %c0_i32 : i32
    %1 = arith.extui %0 : i1 to i32
    %c0_i32_0 = arith.constant 0 : i32
    %2 = arith.cmpi ne, %1, %c0_i32_0 : i32
    scf.if %2 {
      %cst_15 = arith.constant 0.000000e+00 : f32
      %20 = vector.broadcast %cst_15 : f32 to vector<8x128xf32>
      %c0_16 = arith.constant 0 : index
      %c0_17 = arith.constant 0 : index
      %21 = vector.load %arg7[%c0_16, %c0_17] : memref<8x128xf32, #tpu.memory_space<vmem>>, vector<8x128xf32>
      tpu.vector_store %arg7[%c0_16, %c0_17], %20 {strides = array<i32>} : memref<8x128xf32, #tpu.memory_space<vmem>>, vector<8x128xf32>,
    } else {
    }
    %c0 = arith.constant 0 : index
    %c0_1 = arith.constant 0 : index
    %3 = vector.load %arg1[%c0, %c0_1] : memref<8x3072xbf16, #tpu.memory_space<vmem>>, vector<8x3072xbf16>
    %c0_2 = arith.constant 0 : index
    %c0_3 = arith.constant 0 : index
    %4 = vector.load %arg2[%c0_2, %c0_3] : memref<3072x512xbf16, #tpu.memory_space<vmem>>, vector<3072x512xbf16>
    %cst = arith.constant dense<0.000000e+00> : vector<8x512xf32>
    %5 = tpu.matmul %3, %4, %cst {dimension_numbers = #tpu.dot_dimension_numbers<[1], [0], [0], [1], [0, 0, 1, 1], [], []>} : vector<8x3072xbf16>, vector<3072x512xbf16>, vector<8x512xf32> -> vector<8x512xf32>
    %c0_4 = arith.constant 0 : index
    %c0_5 = arith.constant 0 : index
    %6 = vector.load %arg3[%c0_4, %c0_5] : memref<1x512xf32, #tpu.memory_space<vmem>>, vector<1x512xf32>
    %7 = vector.broadcast %6 : vector<1x512xf32> to vector<8x512xf32>
    %8 = arith.addf %5, %7 : vector<8x512xf32>
    %cst_6 = arith.constant 0.000000e+00 : f32
    %9 = vector.broadcast %cst_6 : f32 to vector<8x512xf32>
    %10 = arith.maximumf %8, %9 : vector<8x512xf32>
    %c0_7 = arith.constant 0 : index
    %c0_8 = arith.constant 0 : index
    %11 = vector.load %arg7[%c0_7, %c0_8] : memref<8x128xf32, #tpu.memory_space<vmem>>, vector<8x128xf32>
    %12 = arith.truncf %10 : vector<8x512xf32> to vector<8x512xbf16>
    %c0_9 = arith.constant 0 : index
    %c0_10 = arith.constant 0 : index
    %13 = vector.load %arg4[%c0_9, %c0_10] : memref<512x128xbf16, #tpu.memory_space<vmem>>, vector<512x128xbf16>
    %cst_11 = arith.constant dense<0.000000e+00> : vector<8x128xf32>
    %14 = tpu.matmul %12, %13, %cst_11 {dimension_numbers = #tpu.dot_dimension_numbers<[1], [0], [0], [1], [0, 0, 1, 1], [], []>} : vector<8x512xbf16>, vector<512x128xbf16>, vector<8x128xf32> -> vector<8x128xf32>
    %15 = arith.addf %11, %14 : vector<8x128xf32>
    %c0_12 = arith.constant 0 : index
    %c0_13 = arith.constant 0 : index
    %16 = vector.load %arg7[%c0_12, %c0_13] : memref<8x128xf32, #tpu.memory_space<vmem>>, vector<8x128xf32>
    tpu.vector_store %arg7[%c0_12, %c0_13], %15 {strides = array<i32>} : memref<8x128xf32, #tpu.memory_space<vmem>>, vector<8x128xf32>,
    %c3_i32 = arith.constant 3 : i32
    %17 = arith.cmpi eq, %arg0, %c3_i32 : i32
    %18 = arith.extui %17 : i1 to i32
    %c0_i32_14 = arith.constant 0 : i32
    %19 = arith.cmpi ne, %18, %c0_i32_14 : i32
    scf.if %19 {
      %c0_15 = arith.constant 0 : index
      %c0_16 = arith.constant 0 : index
      %20 = vector.load %arg7[%c0_15, %c0_16] : memref<8x128xf32, #tpu.memory_space<vmem>>, vector<8x128xf32>
      %c0_17 = arith.constant 0 : index
      %c0_18 = arith.constant 0 : index
      %21 = vector.load %arg5[%c0_17, %c0_18] : memref<1x128xf32, #tpu.memory_space<vmem>>, vector<1x128xf32>
      %22 = vector.broadcast %21 : vector<1x128xf32> to vector<8x128xf32>
      %23 = arith.addf %20, %22 : vector<8x128xf32>
      %c0_19 = arith.constant 0 : index
      %c0_20 = arith.constant 0 : index
      %24 = vector.load %arg6[%c0_19, %c0_20] : memref<8x128xf32, #tpu.memory_space<vmem>>, vector<8x128xf32>
      tpu.vector_store %arg6[%c0_19, %c0_20], %23 {strides = array<i32>} : memref<8x128xf32, #tpu.memory_space<vmem>>, vector<8x128xf32>,
    } else {
    }
    return
  }
  func.func @transform_0(%arg0: i32) -> (i32, i32) {
    %c0_i32 = arith.constant 0 : i32
    %c0_i32_0 = arith.constant 0 : i32
    %c0_i32_1 = arith.constant 0 : i32
    return %c0_i32, %c0_i32_0 : i32, i32
  }
  func.func @transform_1(%arg0: i32) -> (i32, i32) {
    %c0_i32 = arith.constant 0 : i32
    %c0_i32_0 = arith.constant 0 : i32
    return %c0_i32, %arg0 : i32, i32
  }
  func.func @transform_2(%arg0: i32) -> (i32, i32) {
    %c0_i32 = arith.constant 0 : i32
    %c0_i32_0 = arith.constant 0 : i32
    return %c0_i32, %arg0 : i32, i32
  }
  func.func @transform_3(%arg0: i32) -> (i32, i32) {
    %c0_i32 = arith.constant 0 : i32
    %c0_i32_0 = arith.constant 0 : i32
    return %arg0, %c0_i32 : i32, i32
  }
  func.func @transform_4(%arg0: i32) -> (i32, i32) {
    %c0_i32 = arith.constant 0 : i32
    %c0_i32_0 = arith.constant 0 : i32
    %c0_i32_1 = arith.constant 0 : i32
    return %c0_i32, %c0_i32_0 : i32, i32
  }
  func.func @transform_5(%arg0: i32) -> (i32, i32) {
    %c0_i32 = arith.constant 0 : i32
    %c0_i32_0 = arith.constant 0 : i32
    %c0_i32_1 = arith.constant 0 : i32
    return %c0_i32, %c0_i32_0 : i32, i32
  }
}

module attributes {stable_mosaic.version = 11 : i64} {
  func.func @_decoder_kernel(%arg0: i32, %arg1: i32, %arg2: memref<1x8x128xf32, #tpu.memory_space<vmem>>, %arg3: memref<1x4x128xf32, #tpu.memory_space<vmem>>, %arg4: memref<32x128xf32, #tpu.memory_space<vmem>>, %arg5: memref<1x128x384xf32, #tpu.memory_space<vmem>>, %arg6: memref<1x1x384xf32, #tpu.memory_space<vmem>>, %arg7: memref<1x128x128xf32, #tpu.memory_space<vmem>>, %arg8: memref<1x1x128xf32, #tpu.memory_space<vmem>>, %arg9: memref<1x128x128xf32, #tpu.memory_space<vmem>>, %arg10: memref<1x1x128xf32, #tpu.memory_space<vmem>>, %arg11: memref<1x128x256xf32, #tpu.memory_space<vmem>>, %arg12: memref<1x1x256xf32, #tpu.memory_space<vmem>>, %arg13: memref<1x128x128xf32, #tpu.memory_space<vmem>>, %arg14: memref<1x1x128xf32, #tpu.memory_space<vmem>>, %arg15: memref<1x128x256xf32, #tpu.memory_space<vmem>>, %arg16: memref<1x1x256xf32, #tpu.memory_space<vmem>>, %arg17: memref<1x256x128xf32, #tpu.memory_space<vmem>>, %arg18: memref<1x1x128xf32, #tpu.memory_space<vmem>>, %arg19: memref<1x1x128xf32, #tpu.memory_space<vmem>>, %arg20: memref<1x1x128xf32, #tpu.memory_space<vmem>>, %arg21: memref<1x1x128xf32, #tpu.memory_space<vmem>>, %arg22: memref<1x1x128xf32, #tpu.memory_space<vmem>>, %arg23: memref<1x1x128xf32, #tpu.memory_space<vmem>>, %arg24: memref<1x1x128xf32, #tpu.memory_space<vmem>>, %arg25: memref<128x256xf32, #tpu.memory_space<vmem>>, %arg26: memref<1x256xf32, #tpu.memory_space<vmem>>, %arg27: memref<1x8x256xf32, #tpu.memory_space<vmem>>, %arg28: memref<8x128xf32, #tpu.memory_space<vmem>>) attributes {dimension_semantics = [#tpu.dimension_semantics<parallel>, #tpu.dimension_semantics<arbitrary>], iteration_bounds = array<i64: 2, 2>, scalar_prefetch = 0 : i64, scratch_operands = 1 : i64, tpu.core_type = #tpu.core_type<tc>, window_params = [{transform_indices = @transform_0, window_bounds = array<i64: 1, 8, 128>}, {transform_indices = @transform_1, window_bounds = array<i64: 1, 4, 128>}, {pipeline_mode = #tpu.pipeline_mode<synchronous>, transform_indices = @transform_2, window_bounds = array<i64: 32, 128>}, {transform_indices = @transform_3, window_bounds = array<i64: 1, 128, 384>}, {transform_indices = @transform_4, window_bounds = array<i64: 1, 1, 384>}, {transform_indices = @transform_5, window_bounds = array<i64: 1, 128, 128>}, {transform_indices = @transform_6, window_bounds = array<i64: 1, 1, 128>}, {transform_indices = @transform_7, window_bounds = array<i64: 1, 128, 128>}, {transform_indices = @transform_8, window_bounds = array<i64: 1, 1, 128>}, {transform_indices = @transform_9, window_bounds = array<i64: 1, 128, 256>}, {transform_indices = @transform_10, window_bounds = array<i64: 1, 1, 256>}, {transform_indices = @transform_11, window_bounds = array<i64: 1, 128, 128>}, {transform_indices = @transform_12, window_bounds = array<i64: 1, 1, 128>}, {transform_indices = @transform_13, window_bounds = array<i64: 1, 128, 256>}, {transform_indices = @transform_14, window_bounds = array<i64: 1, 1, 256>}, {transform_indices = @transform_15, window_bounds = array<i64: 1, 256, 128>}, {transform_indices = @transform_16, window_bounds = array<i64: 1, 1, 128>}, {transform_indices = @transform_17, window_bounds = array<i64: 1, 1, 128>}, {transform_indices = @transform_18, window_bounds = array<i64: 1, 1, 128>}, {transform_indices = @transform_19, window_bounds = array<i64: 1, 1, 128>}, {transform_indices = @transform_20, window_bounds = array<i64: 1, 1, 128>}, {transform_indices = @transform_21, window_bounds = array<i64: 1, 1, 128>}, {transform_indices = @transform_22, window_bounds = array<i64: 1, 1, 128>}, {pipeline_mode = #tpu.pipeline_mode<synchronous>, transform_indices = @transform_23, window_bounds = array<i64: 128, 256>}, {pipeline_mode = #tpu.pipeline_mode<synchronous>, transform_indices = @transform_24, window_bounds = array<i64: 1, 256>}, {transform_indices = @transform_25, window_bounds = array<i64: 1, 8, 256>}]} {
    %c0_i32 = arith.constant 0 : i32
    %0 = arith.cmpi eq, %arg1, %c0_i32 : i32
    %1 = arith.extui %0 : i1 to i32
    %c0_i32_0 = arith.constant 0 : i32
    %2 = arith.cmpi ne, %1, %c0_i32_0 : i32
    scf.if %2 {
      %c0_104 = arith.constant 0 : index
      %c0_105 = arith.constant 0 : index
      %c0_106 = arith.constant 0 : index
      %180 = vector.load %arg2[%c0_104, %c0_105, %c0_106] : memref<1x8x128xf32, #tpu.memory_space<vmem>>, vector<1x8x128xf32>
      %181 = vector.shape_cast %180 : vector<1x8x128xf32> to vector<8x128xf32>
      %c0_107 = arith.constant 0 : index
      %c0_108 = arith.constant 0 : index
      %182 = vector.load %arg28[%c0_107, %c0_108] : memref<8x128xf32, #tpu.memory_space<vmem>>, vector<8x128xf32>
      tpu.vector_store %arg28[%c0_107, %c0_108], %181 {strides = array<i32>} : memref<8x128xf32, #tpu.memory_space<vmem>>, vector<8x128xf32>,
    } else {
    }
    %c0 = arith.constant 0 : index
    %c0_1 = arith.constant 0 : index
    %3 = vector.load %arg4[%c0, %c0_1] : memref<32x128xf32, #tpu.memory_space<vmem>>, vector<32x128xf32>
    %c0_2 = arith.constant 0 : index
    %c0_3 = arith.constant 0 : index
    %4 = vector.load %arg28[%c0_2, %c0_3] : memref<8x128xf32, #tpu.memory_space<vmem>>, vector<8x128xf32>
    %c0_4 = arith.constant 0 : index
    %c0_5 = arith.constant 0 : index
    %c0_6 = arith.constant 0 : index
    %5 = vector.load %arg3[%c0_4, %c0_5, %c0_6] : memref<1x4x128xf32, #tpu.memory_space<vmem>>, vector<1x4x128xf32>
    %6 = vector.shape_cast %5 : vector<1x4x128xf32> to vector<4x128xf32>
    %c0_7 = arith.constant 0 : index
    %c0_8 = arith.constant 0 : index
    %c0_9 = arith.constant 0 : index
    %7 = vector.load %arg5[%c0_7, %c0_8, %c0_9] : memref<1x128x384xf32, #tpu.memory_space<vmem>>, vector<1x128x384xf32>
    %8 = vector.shape_cast %7 : vector<1x128x384xf32> to vector<128x384xf32>
    %cst = arith.constant dense<0.000000e+00> : vector<8x384xf32>
    %9 = tpu.matmul %4, %8, %cst {dimension_numbers = #tpu.dot_dimension_numbers<[1], [0], [0], [1], [0, 0, 1, 1], [], []>} : vector<8x128xf32>, vector<128x384xf32>, vector<8x384xf32> -> vector<8x384xf32>
    %c0_10 = arith.constant 0 : index
    %c0_11 = arith.constant 0 : index
    %c0_12 = arith.constant 0 : index
    %10 = vector.load %arg6[%c0_10, %c0_11, %c0_12] : memref<1x1x384xf32, #tpu.memory_space<vmem>>, vector<1x1x384xf32>
    %11 = vector.shape_cast %10 : vector<1x1x384xf32> to vector<1x384xf32>
    %12 = vector.broadcast %11 : vector<1x384xf32> to vector<8x384xf32>
    %13 = arith.addf %9, %12 : vector<8x384xf32>
    %14 = vector.extract_strided_slice %13 {offsets = [0, 0], sizes = [8, 128], strides = [1, 1]} : vector<8x384xf32> to vector<8x128xf32>
    %15 = vector.extract_strided_slice %13 {offsets = [0, 128], sizes = [8, 128], strides = [1, 1]} : vector<8x384xf32> to vector<8x128xf32>
    %16 = vector.extract_strided_slice %13 {offsets = [0, 256], sizes = [8, 128], strides = [1, 1]} : vector<8x384xf32> to vector<8x128xf32>
    %17 = tpu.concatenate %14, %14, %14, %14 in 0 : vector<8x128xf32>, vector<8x128xf32>, vector<8x128xf32>, vector<8x128xf32> -> vector<32x128xf32>
    %18 = arith.mulf %17, %3 : vector<32x128xf32>
    %cst_13 = arith.constant dense<0.000000e+00> : vector<32x8xf32>
    %19 = tpu.matmul %18, %15, %cst_13 {dimension_numbers = #tpu.dot_dimension_numbers<[1], [1], [0], [0], [0, 0, 1, 0], [], []>} : vector<32x128xf32>, vector<8x128xf32>, vector<32x8xf32> -> vector<32x8xf32>
    %cst_14 = arith.constant 0.176776692 : f32
    %20 = vector.broadcast %cst_14 : f32 to vector<32x8xf32>
    %21 = arith.mulf %19, %20 : vector<32x8xf32>
    %cst_15 = arith.constant dense<0xFF800000> : vector<32xf32>
    %22 = vector.multi_reduction <maximumf>, %21, %cst_15 [1] : vector<32x8xf32> to vector<32xf32>
    %23 = vector.shape_cast %22 : vector<32xf32> to vector<32x1xf32>
    %24 = vector.broadcast %23 : vector<32x1xf32> to vector<32x8xf32>
    %25 = arith.subf %21, %24 : vector<32x8xf32>
    %26 = math.exp %25 : vector<32x8xf32>
    %cst_16 = arith.constant dense<0.000000e+00> : vector<32xf32>
    %27 = vector.multi_reduction <add>, %26, %cst_16 [1] : vector<32x8xf32> to vector<32xf32>
    %28 = vector.shape_cast %27 : vector<32xf32> to vector<32x1xf32>
    %29 = tpu.reciprocal %28 {approx = true} : vector<32x1xf32> -> vector<32x1xf32>
    %30 = vector.broadcast %29 : vector<32x1xf32> to vector<32x8xf32>
    %31 = arith.mulf %26, %30 : vector<32x8xf32>
    %cst_17 = arith.constant dense<0.000000e+00> : vector<32x128xf32>
    %32 = tpu.matmul %31, %16, %cst_17 {dimension_numbers = #tpu.dot_dimension_numbers<[1], [0], [0], [1], [0, 0, 1, 1], [], []>} : vector<32x8xf32>, vector<8x128xf32>, vector<32x128xf32> -> vector<32x128xf32>
    %33 = arith.mulf %32, %3 : vector<32x128xf32>
    %34 = vector.shape_cast %33 : vector<32x128xf32> to vector<4x8x128xf32>
    %cst_18 = arith.constant dense<0.000000e+00> : vector<8x128xf32>
    %35 = vector.multi_reduction <add>, %34, %cst_18 [0] : vector<4x8x128xf32> to vector<8x128xf32>
    %c0_19 = arith.constant 0 : index
    %c0_20 = arith.constant 0 : index
    %c0_21 = arith.constant 0 : index
    %36 = vector.load %arg7[%c0_19, %c0_20, %c0_21] : memref<1x128x128xf32, #tpu.memory_space<vmem>>, vector<1x128x128xf32>
    %37 = vector.shape_cast %36 : vector<1x128x128xf32> to vector<128x128xf32>
    %cst_22 = arith.constant dense<0.000000e+00> : vector<8x128xf32>
    %38 = tpu.matmul %35, %37, %cst_22 {dimension_numbers = #tpu.dot_dimension_numbers<[1], [0], [0], [1], [0, 0, 1, 1], [], []>} : vector<8x128xf32>, vector<128x128xf32>, vector<8x128xf32> -> vector<8x128xf32>
    %c0_23 = arith.constant 0 : index
    %c0_24 = arith.constant 0 : index
    %c0_25 = arith.constant 0 : index
    %39 = vector.load %arg8[%c0_23, %c0_24, %c0_25] : memref<1x1x128xf32, #tpu.memory_space<vmem>>, vector<1x1x128xf32>
    %40 = vector.shape_cast %39 : vector<1x1x128xf32> to vector<1x128xf32>
    %41 = vector.broadcast %40 : vector<1x128xf32> to vector<8x128xf32>
    %42 = arith.addf %38, %41 : vector<8x128xf32>
    %43 = arith.addf %4, %42 : vector<8x128xf32>
    %cst_26 = arith.constant dense<0.000000e+00> : vector<8xf32>
    %44 = vector.multi_reduction <add>, %43, %cst_26 [1] : vector<8x128xf32> to vector<8xf32>
    %45 = vector.shape_cast %44 : vector<8xf32> to vector<8x1xf32>
    %cst_27 = arith.constant 1.280000e+02 : f32
    %46 = vector.broadcast %cst_27 : f32 to vector<8x1xf32>
    %47 = arith.divf %45, %46 : vector<8x1xf32>
    %48 = vector.broadcast %47 : vector<8x1xf32> to vector<8x128xf32>
    %49 = arith.subf %43, %48 : vector<8x128xf32>
    %50 = arith.mulf %49, %49 : vector<8x128xf32>
    %cst_28 = arith.constant dense<0.000000e+00> : vector<8xf32>
    %51 = vector.multi_reduction <add>, %50, %cst_28 [1] : vector<8x128xf32> to vector<8xf32>
    %52 = vector.shape_cast %51 : vector<8xf32> to vector<8x1xf32>
    %cst_29 = arith.constant 1.280000e+02 : f32
    %53 = vector.broadcast %cst_29 : f32 to vector<8x1xf32>
    %54 = arith.divf %52, %53 : vector<8x1xf32>
    %cst_30 = arith.constant 9.99999974E-6 : f32
    %55 = vector.broadcast %cst_30 : f32 to vector<8x1xf32>
    %56 = arith.addf %54, %55 : vector<8x1xf32>
    %57 = math.rsqrt %56 : vector<8x1xf32>
    %58 = vector.broadcast %57 : vector<8x1xf32> to vector<8x128xf32>
    %59 = arith.mulf %49, %58 : vector<8x128xf32>
    %c0_31 = arith.constant 0 : index
    %c0_32 = arith.constant 0 : index
    %c0_33 = arith.constant 0 : index
    %60 = vector.load %arg19[%c0_31, %c0_32, %c0_33] : memref<1x1x128xf32, #tpu.memory_space<vmem>>, vector<1x1x128xf32>
    %61 = vector.shape_cast %60 : vector<1x1x128xf32> to vector<1x128xf32>
    %62 = vector.broadcast %61 : vector<1x128xf32> to vector<8x128xf32>
    %63 = arith.mulf %59, %62 : vector<8x128xf32>
    %c0_34 = arith.constant 0 : index
    %c0_35 = arith.constant 0 : index
    %c0_36 = arith.constant 0 : index
    %64 = vector.load %arg20[%c0_34, %c0_35, %c0_36] : memref<1x1x128xf32, #tpu.memory_space<vmem>>, vector<1x1x128xf32>
    %65 = vector.shape_cast %64 : vector<1x1x128xf32> to vector<1x128xf32>
    %66 = vector.broadcast %65 : vector<1x128xf32> to vector<8x128xf32>
    %67 = arith.addf %63, %66 : vector<8x128xf32>
    %c0_37 = arith.constant 0 : index
    %c0_38 = arith.constant 0 : index
    %c0_39 = arith.constant 0 : index
    %68 = vector.load %arg9[%c0_37, %c0_38, %c0_39] : memref<1x128x128xf32, #tpu.memory_space<vmem>>, vector<1x128x128xf32>
    %69 = vector.shape_cast %68 : vector<1x128x128xf32> to vector<128x128xf32>
    %cst_40 = arith.constant dense<0.000000e+00> : vector<8x128xf32>
    %70 = tpu.matmul %67, %69, %cst_40 {dimension_numbers = #tpu.dot_dimension_numbers<[1], [0], [0], [1], [0, 0, 1, 1], [], []>} : vector<8x128xf32>, vector<128x128xf32>, vector<8x128xf32> -> vector<8x128xf32>
    %c0_41 = arith.constant 0 : index
    %c0_42 = arith.constant 0 : index
    %c0_43 = arith.constant 0 : index
    %71 = vector.load %arg10[%c0_41, %c0_42, %c0_43] : memref<1x1x128xf32, #tpu.memory_space<vmem>>, vector<1x1x128xf32>
    %72 = vector.shape_cast %71 : vector<1x1x128xf32> to vector<1x128xf32>
    %73 = vector.broadcast %72 : vector<1x128xf32> to vector<8x128xf32>
    %74 = arith.addf %70, %73 : vector<8x128xf32>
    %c0_44 = arith.constant 0 : index
    %c0_45 = arith.constant 0 : index
    %c0_46 = arith.constant 0 : index
    %75 = vector.load %arg11[%c0_44, %c0_45, %c0_46] : memref<1x128x256xf32, #tpu.memory_space<vmem>>, vector<1x128x256xf32>
    %76 = vector.shape_cast %75 : vector<1x128x256xf32> to vector<128x256xf32>
    %cst_47 = arith.constant dense<0.000000e+00> : vector<4x256xf32>
    %77 = tpu.matmul %6, %76, %cst_47 {dimension_numbers = #tpu.dot_dimension_numbers<[1], [0], [0], [1], [0, 0, 1, 1], [], []>} : vector<4x128xf32>, vector<128x256xf32>, vector<4x256xf32> -> vector<4x256xf32>
    %c0_48 = arith.constant 0 : index
    %c0_49 = arith.constant 0 : index
    %c0_50 = arith.constant 0 : index
    %78 = vector.load %arg12[%c0_48, %c0_49, %c0_50] : memref<1x1x256xf32, #tpu.memory_space<vmem>>, vector<1x1x256xf32>
    %79 = vector.shape_cast %78 : vector<1x1x256xf32> to vector<1x256xf32>
    %80 = vector.broadcast %79 : vector<1x256xf32> to vector<4x256xf32>
    %81 = arith.addf %77, %80 : vector<4x256xf32>
    %82 = vector.extract_strided_slice %81 {offsets = [0, 0], sizes = [4, 128], strides = [1, 1]} : vector<4x256xf32> to vector<4x128xf32>
    %83 = vector.extract_strided_slice %81 {offsets = [0, 128], sizes = [4, 128], strides = [1, 1]} : vector<4x256xf32> to vector<4x128xf32>
    %84 = tpu.concatenate %74, %74, %74, %74 in 0 : vector<8x128xf32>, vector<8x128xf32>, vector<8x128xf32>, vector<8x128xf32> -> vector<32x128xf32>
    %85 = arith.mulf %84, %3 : vector<32x128xf32>
    %cst_51 = arith.constant dense<0.000000e+00> : vector<32x4xf32>
    %86 = tpu.matmul %85, %82, %cst_51 {dimension_numbers = #tpu.dot_dimension_numbers<[1], [1], [0], [0], [0, 0, 1, 0], [], []>} : vector<32x128xf32>, vector<4x128xf32>, vector<32x4xf32> -> vector<32x4xf32>
    %cst_52 = arith.constant 0.176776692 : f32
    %87 = vector.broadcast %cst_52 : f32 to vector<32x4xf32>
    %88 = arith.mulf %86, %87 : vector<32x4xf32>
    %cst_53 = arith.constant dense<0xFF800000> : vector<32xf32>
    %89 = vector.multi_reduction <maximumf>, %88, %cst_53 [1] : vector<32x4xf32> to vector<32xf32>
    %90 = vector.shape_cast %89 : vector<32xf32> to vector<32x1xf32>
    %91 = vector.broadcast %90 : vector<32x1xf32> to vector<32x4xf32>
    %92 = arith.subf %88, %91 : vector<32x4xf32>
    %93 = math.exp %92 : vector<32x4xf32>
    %cst_54 = arith.constant dense<0.000000e+00> : vector<32xf32>
    %94 = vector.multi_reduction <add>, %93, %cst_54 [1] : vector<32x4xf32> to vector<32xf32>
    %95 = vector.shape_cast %94 : vector<32xf32> to vector<32x1xf32>
    %96 = tpu.reciprocal %95 {approx = true} : vector<32x1xf32> -> vector<32x1xf32>
    %97 = vector.broadcast %96 : vector<32x1xf32> to vector<32x4xf32>
    %98 = arith.mulf %93, %97 : vector<32x4xf32>
    %cst_55 = arith.constant dense<0.000000e+00> : vector<32x128xf32>
    %99 = tpu.matmul %98, %83, %cst_55 {dimension_numbers = #tpu.dot_dimension_numbers<[1], [0], [0], [1], [0, 0, 1, 1], [], []>} : vector<32x4xf32>, vector<4x128xf32>, vector<32x128xf32> -> vector<32x128xf32>
    %100 = arith.mulf %99, %3 : vector<32x128xf32>
    %101 = vector.shape_cast %100 : vector<32x128xf32> to vector<4x8x128xf32>
    %cst_56 = arith.constant dense<0.000000e+00> : vector<8x128xf32>
    %102 = vector.multi_reduction <add>, %101, %cst_56 [0] : vector<4x8x128xf32> to vector<8x128xf32>
    %c0_57 = arith.constant 0 : index
    %c0_58 = arith.constant 0 : index
    %c0_59 = arith.constant 0 : index
    %103 = vector.load %arg13[%c0_57, %c0_58, %c0_59] : memref<1x128x128xf32, #tpu.memory_space<vmem>>, vector<1x128x128xf32>
    %104 = vector.shape_cast %103 : vector<1x128x128xf32> to vector<128x128xf32>
    %cst_60 = arith.constant dense<0.000000e+00> : vector<8x128xf32>
    %105 = tpu.matmul %102, %104, %cst_60 {dimension_numbers = #tpu.dot_dimension_numbers<[1], [0], [0], [1], [0, 0, 1, 1], [], []>} : vector<8x128xf32>, vector<128x128xf32>, vector<8x128xf32> -> vector<8x128xf32>
    %c0_61 = arith.constant 0 : index
    %c0_62 = arith.constant 0 : index
    %c0_63 = arith.constant 0 : index
    %106 = vector.load %arg14[%c0_61, %c0_62, %c0_63] : memref<1x1x128xf32, #tpu.memory_space<vmem>>, vector<1x1x128xf32>
    %107 = vector.shape_cast %106 : vector<1x1x128xf32> to vector<1x128xf32>
    %108 = vector.broadcast %107 : vector<1x128xf32> to vector<8x128xf32>
    %109 = arith.addf %105, %108 : vector<8x128xf32>
    %110 = arith.addf %67, %109 : vector<8x128xf32>
    %cst_64 = arith.constant dense<0.000000e+00> : vector<8xf32>
    %111 = vector.multi_reduction <add>, %110, %cst_64 [1] : vector<8x128xf32> to vector<8xf32>
    %112 = vector.shape_cast %111 : vector<8xf32> to vector<8x1xf32>
    %cst_65 = arith.constant 1.280000e+02 : f32
    %113 = vector.broadcast %cst_65 : f32 to vector<8x1xf32>
    %114 = arith.divf %112, %113 : vector<8x1xf32>
    %115 = vector.broadcast %114 : vector<8x1xf32> to vector<8x128xf32>
    %116 = arith.subf %110, %115 : vector<8x128xf32>
    %117 = arith.mulf %116, %116 : vector<8x128xf32>
    %cst_66 = arith.constant dense<0.000000e+00> : vector<8xf32>
    %118 = vector.multi_reduction <add>, %117, %cst_66 [1] : vector<8x128xf32> to vector<8xf32>
    %119 = vector.shape_cast %118 : vector<8xf32> to vector<8x1xf32>
    %cst_67 = arith.constant 1.280000e+02 : f32
    %120 = vector.broadcast %cst_67 : f32 to vector<8x1xf32>
    %121 = arith.divf %119, %120 : vector<8x1xf32>
    %cst_68 = arith.constant 9.99999974E-6 : f32
    %122 = vector.broadcast %cst_68 : f32 to vector<8x1xf32>
    %123 = arith.addf %121, %122 : vector<8x1xf32>
    %124 = math.rsqrt %123 : vector<8x1xf32>
    %125 = vector.broadcast %124 : vector<8x1xf32> to vector<8x128xf32>
    %126 = arith.mulf %116, %125 : vector<8x128xf32>
    %c0_69 = arith.constant 0 : index
    %c0_70 = arith.constant 0 : index
    %c0_71 = arith.constant 0 : index
    %127 = vector.load %arg21[%c0_69, %c0_70, %c0_71] : memref<1x1x128xf32, #tpu.memory_space<vmem>>, vector<1x1x128xf32>
    %128 = vector.shape_cast %127 : vector<1x1x128xf32> to vector<1x128xf32>
    %129 = vector.broadcast %128 : vector<1x128xf32> to vector<8x128xf32>
    %130 = arith.mulf %126, %129 : vector<8x128xf32>
    %c0_72 = arith.constant 0 : index
    %c0_73 = arith.constant 0 : index
    %c0_74 = arith.constant 0 : index
    %131 = vector.load %arg22[%c0_72, %c0_73, %c0_74] : memref<1x1x128xf32, #tpu.memory_space<vmem>>, vector<1x1x128xf32>
    %132 = vector.shape_cast %131 : vector<1x1x128xf32> to vector<1x128xf32>
    %133 = vector.broadcast %132 : vector<1x128xf32> to vector<8x128xf32>
    %134 = arith.addf %130, %133 : vector<8x128xf32>
    %c0_75 = arith.constant 0 : index
    %c0_76 = arith.constant 0 : index
    %c0_77 = arith.constant 0 : index
    %135 = vector.load %arg15[%c0_75, %c0_76, %c0_77] : memref<1x128x256xf32, #tpu.memory_space<vmem>>, vector<1x128x256xf32>
    %136 = vector.shape_cast %135 : vector<1x128x256xf32> to vector<128x256xf32>
    %cst_78 = arith.constant dense<0.000000e+00> : vector<8x256xf32>
    %137 = tpu.matmul %134, %136, %cst_78 {dimension_numbers = #tpu.dot_dimension_numbers<[1], [0], [0], [1], [0, 0, 1, 1], [], []>} : vector<8x128xf32>, vector<128x256xf32>, vector<8x256xf32> -> vector<8x256xf32>
    %c0_79 = arith.constant 0 : index
    %c0_80 = arith.constant 0 : index
    %c0_81 = arith.constant 0 : index
    %138 = vector.load %arg16[%c0_79, %c0_80, %c0_81] : memref<1x1x256xf32, #tpu.memory_space<vmem>>, vector<1x1x256xf32>
    %139 = vector.shape_cast %138 : vector<1x1x256xf32> to vector<1x256xf32>
    %140 = vector.broadcast %139 : vector<1x256xf32> to vector<8x256xf32>
    %141 = arith.addf %137, %140 : vector<8x256xf32>
    %cst_82 = arith.constant 0.000000e+00 : f32
    %142 = vector.broadcast %cst_82 : f32 to vector<8x256xf32>
    %143 = arith.maximumf %141, %142 : vector<8x256xf32>
    %c0_83 = arith.constant 0 : index
    %c0_84 = arith.constant 0 : index
    %c0_85 = arith.constant 0 : index
    %144 = vector.load %arg17[%c0_83, %c0_84, %c0_85] : memref<1x256x128xf32, #tpu.memory_space<vmem>>, vector<1x256x128xf32>
    %145 = vector.shape_cast %144 : vector<1x256x128xf32> to vector<256x128xf32>
    %cst_86 = arith.constant dense<0.000000e+00> : vector<8x128xf32>
    %146 = tpu.matmul %143, %145, %cst_86 {dimension_numbers = #tpu.dot_dimension_numbers<[1], [0], [0], [1], [0, 0, 1, 1], [], []>} : vector<8x256xf32>, vector<256x128xf32>, vector<8x128xf32> -> vector<8x128xf32>
    %c0_87 = arith.constant 0 : index
    %c0_88 = arith.constant 0 : index
    %c0_89 = arith.constant 0 : index
    %147 = vector.load %arg18[%c0_87, %c0_88, %c0_89] : memref<1x1x128xf32, #tpu.memory_space<vmem>>, vector<1x1x128xf32>
    %148 = vector.shape_cast %147 : vector<1x1x128xf32> to vector<1x128xf32>
    %149 = vector.broadcast %148 : vector<1x128xf32> to vector<8x128xf32>
    %150 = arith.addf %146, %149 : vector<8x128xf32>
    %151 = arith.addf %134, %150 : vector<8x128xf32>
    %cst_90 = arith.constant dense<0.000000e+00> : vector<8xf32>
    %152 = vector.multi_reduction <add>, %151, %cst_90 [1] : vector<8x128xf32> to vector<8xf32>
    %153 = vector.shape_cast %152 : vector<8xf32> to vector<8x1xf32>
    %cst_91 = arith.constant 1.280000e+02 : f32
    %154 = vector.broadcast %cst_91 : f32 to vector<8x1xf32>
    %155 = arith.divf %153, %154 : vector<8x1xf32>
    %156 = vector.broadcast %155 : vector<8x1xf32> to vector<8x128xf32>
    %157 = arith.subf %151, %156 : vector<8x128xf32>
    %158 = arith.mulf %157, %157 : vector<8x128xf32>
    %cst_92 = arith.constant dense<0.000000e+00> : vector<8xf32>
    %159 = vector.multi_reduction <add>, %158, %cst_92 [1] : vector<8x128xf32> to vector<8xf32>
    %160 = vector.shape_cast %159 : vector<8xf32> to vector<8x1xf32>
    %cst_93 = arith.constant 1.280000e+02 : f32
    %161 = vector.broadcast %cst_93 : f32 to vector<8x1xf32>
    %162 = arith.divf %160, %161 : vector<8x1xf32>
    %cst_94 = arith.constant 9.99999974E-6 : f32
    %163 = vector.broadcast %cst_94 : f32 to vector<8x1xf32>
    %164 = arith.addf %162, %163 : vector<8x1xf32>
    %165 = math.rsqrt %164 : vector<8x1xf32>
    %166 = vector.broadcast %165 : vector<8x1xf32> to vector<8x128xf32>
    %167 = arith.mulf %157, %166 : vector<8x128xf32>
    %c0_95 = arith.constant 0 : index
    %c0_96 = arith.constant 0 : index
    %c0_97 = arith.constant 0 : index
    %168 = vector.load %arg23[%c0_95, %c0_96, %c0_97] : memref<1x1x128xf32, #tpu.memory_space<vmem>>, vector<1x1x128xf32>
    %169 = vector.shape_cast %168 : vector<1x1x128xf32> to vector<1x128xf32>
    %170 = vector.broadcast %169 : vector<1x128xf32> to vector<8x128xf32>
    %171 = arith.mulf %167, %170 : vector<8x128xf32>
    %c0_98 = arith.constant 0 : index
    %c0_99 = arith.constant 0 : index
    %c0_100 = arith.constant 0 : index
    %172 = vector.load %arg24[%c0_98, %c0_99, %c0_100] : memref<1x1x128xf32, #tpu.memory_space<vmem>>, vector<1x1x128xf32>
    %173 = vector.shape_cast %172 : vector<1x1x128xf32> to vector<1x128xf32>
    %174 = vector.broadcast %173 : vector<1x128xf32> to vector<8x128xf32>
    %175 = arith.addf %171, %174 : vector<8x128xf32>
    %c0_101 = arith.constant 0 : index
    %c0_102 = arith.constant 0 : index
    %176 = vector.load %arg28[%c0_101, %c0_102] : memref<8x128xf32, #tpu.memory_space<vmem>>, vector<8x128xf32>
    tpu.vector_store %arg28[%c0_101, %c0_102], %175 {strides = array<i32>} : memref<8x128xf32, #tpu.memory_space<vmem>>, vector<8x128xf32>,
    %c1_i32 = arith.constant 1 : i32
    %177 = arith.cmpi eq, %arg1, %c1_i32 : i32
    %178 = arith.extui %177 : i1 to i32
    %c0_i32_103 = arith.constant 0 : i32
    %179 = arith.cmpi ne, %178, %c0_i32_103 : i32
    scf.if %179 {
      %c0_104 = arith.constant 0 : index
      %c0_105 = arith.constant 0 : index
      %180 = vector.load %arg25[%c0_104, %c0_105] : memref<128x256xf32, #tpu.memory_space<vmem>>, vector<128x256xf32>
      %cst_106 = arith.constant dense<0.000000e+00> : vector<8x256xf32>
      %181 = tpu.matmul %175, %180, %cst_106 {dimension_numbers = #tpu.dot_dimension_numbers<[1], [0], [0], [1], [0, 0, 1, 1], [], []>} : vector<8x128xf32>, vector<128x256xf32>, vector<8x256xf32> -> vector<8x256xf32>
      %c0_107 = arith.constant 0 : index
      %c0_108 = arith.constant 0 : index
      %182 = vector.load %arg26[%c0_107, %c0_108] : memref<1x256xf32, #tpu.memory_space<vmem>>, vector<1x256xf32>
      %183 = vector.broadcast %182 : vector<1x256xf32> to vector<8x256xf32>
      %184 = arith.addf %181, %183 : vector<8x256xf32>
      %c0_109 = arith.constant 0 : index
      %c0_110 = arith.constant 0 : index
      %c0_111 = arith.constant 0 : index
      %185 = vector.load %arg27[%c0_109, %c0_110, %c0_111] : memref<1x8x256xf32, #tpu.memory_space<vmem>>, vector<1x8x256xf32>
      %186 = vector.shape_cast %185 : vector<1x8x256xf32> to vector<8x256xf32>
      %187 = vector.shape_cast %184 : vector<8x256xf32> to vector<1x8x256xf32>
      tpu.vector_store %arg27[%c0_109, %c0_110, %c0_111], %187 {strides = array<i32>} : memref<1x8x256xf32, #tpu.memory_space<vmem>>, vector<1x8x256xf32>,
    } else {
    }
    return
  }
  func.func @transform_0(%arg0: i32, %arg1: i32) -> (i32, i32, i32) {
    %c0_i32 = arith.constant 0 : i32
    %c0_i32_0 = arith.constant 0 : i32
    %c0_i32_1 = arith.constant 0 : i32
    return %arg0, %c0_i32, %c0_i32_0 : i32, i32, i32
  }
  func.func @transform_1(%arg0: i32, %arg1: i32) -> (i32, i32, i32) {
    %c0_i32 = arith.constant 0 : i32
    %c0_i32_0 = arith.constant 0 : i32
    %c0_i32_1 = arith.constant 0 : i32
    return %arg0, %c0_i32, %c0_i32_0 : i32, i32, i32
  }
  func.func @transform_2(%arg0: i32, %arg1: i32) -> (i32, i32) {
    %c0_i32 = arith.constant 0 : i32
    %c0_i32_0 = arith.constant 0 : i32
    %c0_i32_1 = arith.constant 0 : i32
    return %c0_i32, %c0_i32_0 : i32, i32
  }
  func.func @transform_3(%arg0: i32, %arg1: i32) -> (i32, i32, i32) {
    %c0_i32 = arith.constant 0 : i32
    %c0_i32_0 = arith.constant 0 : i32
    %c0_i32_1 = arith.constant 0 : i32
    return %arg1, %c0_i32, %c0_i32_0 : i32, i32, i32
  }
  func.func @transform_4(%arg0: i32, %arg1: i32) -> (i32, i32, i32) {
    %c0_i32 = arith.constant 0 : i32
    %c0_i32_0 = arith.constant 0 : i32
    %c0_i32_1 = arith.constant 0 : i32
    return %arg1, %c0_i32, %c0_i32_0 : i32, i32, i32
  }
  func.func @transform_5(%arg0: i32, %arg1: i32) -> (i32, i32, i32) {
    %c0_i32 = arith.constant 0 : i32
    %c0_i32_0 = arith.constant 0 : i32
    %c0_i32_1 = arith.constant 0 : i32
    return %arg1, %c0_i32, %c0_i32_0 : i32, i32, i32
  }
  func.func @transform_6(%arg0: i32, %arg1: i32) -> (i32, i32, i32) {
    %c0_i32 = arith.constant 0 : i32
    %c0_i32_0 = arith.constant 0 : i32
    %c0_i32_1 = arith.constant 0 : i32
    return %arg1, %c0_i32, %c0_i32_0 : i32, i32, i32
  }
  func.func @transform_7(%arg0: i32, %arg1: i32) -> (i32, i32, i32) {
    %c0_i32 = arith.constant 0 : i32
    %c0_i32_0 = arith.constant 0 : i32
    %c0_i32_1 = arith.constant 0 : i32
    return %arg1, %c0_i32, %c0_i32_0 : i32, i32, i32
  }
  func.func @transform_8(%arg0: i32, %arg1: i32) -> (i32, i32, i32) {
    %c0_i32 = arith.constant 0 : i32
    %c0_i32_0 = arith.constant 0 : i32
    %c0_i32_1 = arith.constant 0 : i32
    return %arg1, %c0_i32, %c0_i32_0 : i32, i32, i32
  }
  func.func @transform_9(%arg0: i32, %arg1: i32) -> (i32, i32, i32) {
    %c0_i32 = arith.constant 0 : i32
    %c0_i32_0 = arith.constant 0 : i32
    %c0_i32_1 = arith.constant 0 : i32
    return %arg1, %c0_i32, %c0_i32_0 : i32, i32, i32
  }
  func.func @transform_10(%arg0: i32, %arg1: i32) -> (i32, i32, i32) {
    %c0_i32 = arith.constant 0 : i32
    %c0_i32_0 = arith.constant 0 : i32
    %c0_i32_1 = arith.constant 0 : i32
    return %arg1, %c0_i32, %c0_i32_0 : i32, i32, i32
  }
  func.func @transform_11(%arg0: i32, %arg1: i32) -> (i32, i32, i32) {
    %c0_i32 = arith.constant 0 : i32
    %c0_i32_0 = arith.constant 0 : i32
    %c0_i32_1 = arith.constant 0 : i32
    return %arg1, %c0_i32, %c0_i32_0 : i32, i32, i32
  }
  func.func @transform_12(%arg0: i32, %arg1: i32) -> (i32, i32, i32) {
    %c0_i32 = arith.constant 0 : i32
    %c0_i32_0 = arith.constant 0 : i32
    %c0_i32_1 = arith.constant 0 : i32
    return %arg1, %c0_i32, %c0_i32_0 : i32, i32, i32
  }
  func.func @transform_13(%arg0: i32, %arg1: i32) -> (i32, i32, i32) {
    %c0_i32 = arith.constant 0 : i32
    %c0_i32_0 = arith.constant 0 : i32
    %c0_i32_1 = arith.constant 0 : i32
    return %arg1, %c0_i32, %c0_i32_0 : i32, i32, i32
  }
  func.func @transform_14(%arg0: i32, %arg1: i32) -> (i32, i32, i32) {
    %c0_i32 = arith.constant 0 : i32
    %c0_i32_0 = arith.constant 0 : i32
    %c0_i32_1 = arith.constant 0 : i32
    return %arg1, %c0_i32, %c0_i32_0 : i32, i32, i32
  }
  func.func @transform_15(%arg0: i32, %arg1: i32) -> (i32, i32, i32) {
    %c0_i32 = arith.constant 0 : i32
    %c0_i32_0 = arith.constant 0 : i32
    %c0_i32_1 = arith.constant 0 : i32
    return %arg1, %c0_i32, %c0_i32_0 : i32, i32, i32
  }
  func.func @transform_16(%arg0: i32, %arg1: i32) -> (i32, i32, i32) {
    %c0_i32 = arith.constant 0 : i32
    %c0_i32_0 = arith.constant 0 : i32
    %c0_i32_1 = arith.constant 0 : i32
    return %arg1, %c0_i32, %c0_i32_0 : i32, i32, i32
  }
  func.func @transform_17(%arg0: i32, %arg1: i32) -> (i32, i32, i32) {
    %c0_i32 = arith.constant 0 : i32
    %c0_i32_0 = arith.constant 0 : i32
    %c0_i32_1 = arith.constant 0 : i32
    return %arg1, %c0_i32, %c0_i32_0 : i32, i32, i32
  }
  func.func @transform_18(%arg0: i32, %arg1: i32) -> (i32, i32, i32) {
    %c0_i32 = arith.constant 0 : i32
    %c0_i32_0 = arith.constant 0 : i32
    %c0_i32_1 = arith.constant 0 : i32
    return %arg1, %c0_i32, %c0_i32_0 : i32, i32, i32
  }
  func.func @transform_19(%arg0: i32, %arg1: i32) -> (i32, i32, i32) {
    %c0_i32 = arith.constant 0 : i32
    %c0_i32_0 = arith.constant 0 : i32
    %c0_i32_1 = arith.constant 0 : i32
    return %arg1, %c0_i32, %c0_i32_0 : i32, i32, i32
  }
  func.func @transform_20(%arg0: i32, %arg1: i32) -> (i32, i32, i32) {
    %c0_i32 = arith.constant 0 : i32
    %c0_i32_0 = arith.constant 0 : i32
    %c0_i32_1 = arith.constant 0 : i32
    return %arg1, %c0_i32, %c0_i32_0 : i32, i32, i32
  }
  func.func @transform_21(%arg0: i32, %arg1: i32) -> (i32, i32, i32) {
    %c0_i32 = arith.constant 0 : i32
    %c0_i32_0 = arith.constant 0 : i32
    %c0_i32_1 = arith.constant 0 : i32
    return %arg1, %c0_i32, %c0_i32_0 : i32, i32, i32
  }
  func.func @transform_22(%arg0: i32, %arg1: i32) -> (i32, i32, i32) {
    %c0_i32 = arith.constant 0 : i32
    %c0_i32_0 = arith.constant 0 : i32
    %c0_i32_1 = arith.constant 0 : i32
    return %arg1, %c0_i32, %c0_i32_0 : i32, i32, i32
  }
  func.func @transform_23(%arg0: i32, %arg1: i32) -> (i32, i32) {
    %c0_i32 = arith.constant 0 : i32
    %c0_i32_0 = arith.constant 0 : i32
    %c0_i32_1 = arith.constant 0 : i32
    return %c0_i32, %c0_i32_0 : i32, i32
  }
  func.func @transform_24(%arg0: i32, %arg1: i32) -> (i32, i32) {
    %c0_i32 = arith.constant 0 : i32
    %c0_i32_0 = arith.constant 0 : i32
    %c0_i32_1 = arith.constant 0 : i32
    return %c0_i32, %c0_i32_0 : i32, i32
  }
  func.func @transform_25(%arg0: i32, %arg1: i32) -> (i32, i32, i32) {
    %c0_i32 = arith.constant 0 : i32
    %c0_i32_0 = arith.constant 0 : i32
    %c0_i32_1 = arith.constant 0 : i32
    return %arg0, %c0_i32, %c0_i32_0 : i32, i32, i32
  }
}

</mosaic_0001>

<llo_original>
// kernel: image_captioning_forward.3
$region0: #{image_captioning_forward.3}
  #allocation0 [shape = 'u32[]', space=smem, size = 0x4, offset = 0x4, fixed_abs, tag = 'smem constant byte address 0x4 - core index']
  #allocation1 [shape = 'u32[144,128]{1,0:T(1,128)}', space=vmem, size = 0x12000, scoped, tag = 'internal scratch']
  #allocation2 [shape = 'f32[8,128]{1,0:T(8,128)}', space=vmem, size = 0x1000, scoped, tag = 'scratch operand']
  %s0 = inlined_call_operand.vmem [shape: f32[2,8,128], index: 0, kind: input, shape index: {}]
  %s1 = inlined_call_operand.vmem [shape: f32[2,4,128], index: 1, kind: input, shape index: {}]
  %s2 = inlined_call_operand.vmem [shape: f32[32,128], index: 2, kind: input, shape index: {}]
  %s3 = inlined_call_operand.vmem [shape: f32[2,128,384], index: 3, kind: input, shape index: {}]
  %s4 = inlined_call_operand.vmem [shape: f32[2,1,384], index: 4, kind: input, shape index: {}]
  %s5 = inlined_call_operand.vmem [shape: f32[2,128,128], index: 5, kind: input, shape index: {}]
  %s6 = inlined_call_operand.vmem [shape: f32[2,1,128], index: 6, kind: input, shape index: {}]
  %s7 = inlined_call_operand.vmem [shape: f32[2,128,128], index: 7, kind: input, shape index: {}]
  %s8 = inlined_call_operand.vmem [shape: f32[2,1,128], index: 8, kind: input, shape index: {}]
  %s9 = inlined_call_operand.vmem [shape: f32[2,128,256], index: 9, kind: input, shape index: {}]
  %s10 = inlined_call_operand.vmem [shape: f32[2,1,256], index: 10, kind: input, shape index: {}]
  %s11 = inlined_call_operand.vmem [shape: f32[2,128,128], index: 11, kind: input, shape index: {}]
  %s12 = inlined_call_operand.vmem [shape: f32[2,1,128], index: 12, kind: input, shape index: {}]
  %s13 = inlined_call_operand.vmem [shape: f32[2,128,256], index: 13, kind: input, shape index: {}]
  %s14 = inlined_call_operand.vmem [shape: f32[2,1,256], index: 14, kind: input, shape index: {}]
  %s15 = inlined_call_operand.vmem [shape: f32[2,256,128], index: 15, kind: input, shape index: {}]
  %s16 = inlined_call_operand.vmem [shape: f32[2,1,128], index: 16, kind: input, shape index: {}]
  %s17 = inlined_call_operand.vmem [shape: f32[2,1,128], index: 17, kind: input, shape index: {}]
  %s18 = inlined_call_operand.vmem [shape: f32[2,1,128], index: 18, kind: input, shape index: {}]
  %s19 = inlined_call_operand.vmem [shape: f32[2,1,128], index: 19, kind: input, shape index: {}]
  %s20 = inlined_call_operand.vmem [shape: f32[2,1,128], index: 20, kind: input, shape index: {}]
  %s21 = inlined_call_operand.vmem [shape: f32[2,1,128], index: 21, kind: input, shape index: {}]
  %s22 = inlined_call_operand.vmem [shape: f32[2,1,128], index: 22, kind: input, shape index: {}]
  %s23 = inlined_call_operand.vmem [shape: f32[128,256], index: 23, kind: input, shape index: {}]
  %s24 = inlined_call_operand.vmem [shape: f32[1,256], index: 24, kind: input, shape index: {}]
  %s25 = inlined_call_operand.hbm [shape: f32[2,8,256], index: 25, kind: output, shape index: {}]
  %s26 = sld [smem:[#allocation0]]
  $region141: #{image_captioning_forward.3} parent=0
    _
  %s28 = ssub.s32 1, %s26
  %s29 = scalar_select 0, %s28, %s26
  $region1: #{image_captioning_forward.3} parent=0
    #allocation3 [shape = 'u8[16384]{0}', space=vmem, size = 0x4000, scoped, tag = 'output window, operand 0']
    #allocation4 [shape = 's32[2]{0}', space=sflag, size = 0x8, scoped, tag = 'scoped memory for image_captioning_forward.3']
    %30 = vsyncpa [#allocation4], 0
    %s31 = scalar_lea.sflag [#allocation4], 1
    %32 = vsyncpa %s31, 0
    loop: start=0, step=1, limit=6
    $region2: #{image_captioning_forward.3} parent=1 // loop_pre_header
      _
    $region3: #{image_captioning_forward.3} parent=1 // loop_header
      %s34 = sphi 0, %s38
      %p35 = scmp.ge.s32.totalorder %s34, 6
      %s41 = sphi 0, %s53
      %s42 = sphi 0, %s49
      %s43 = sphi 0, %s41
      %s44 = sphi 0, %s42
      %s45 = sphi 0, %s43
      %s46 = sphi 0, %s44
      %s56 = sphi 0, %s58
      %s59 = sphi 0, %s56
      %s60 = sphi 0, %s59
      %s76 = sphi 0, %s60
      %s82 = sphi 0, %s84
      %s85 = sphi 0, %s82
      %s86 = sphi 0, %s85
      %s102 = sphi 0, %s86
      %s106 = sphi 0, %s106
      %s108 = sphi 0, %s106
      %s109 = sphi 0, %s108
      %s123 = sphi 0, %s109
      %s129 = sphi 0, %s131
      %s132 = sphi 0, %s129
      %s133 = sphi 0, %s132
      %s149 = sphi 0, %s133
      %s155 = sphi 0, %s157
      %s158 = sphi 0, %s155
      %s159 = sphi 0, %s158
      %s175 = sphi 0, %s159
      %s181 = sphi 0, %s183
      %s184 = sphi 0, %s181
      %s185 = sphi 0, %s184
      %s201 = sphi 0, %s185
      %s207 = sphi 0, %s209
      %s210 = sphi 0, %s207
      %s211 = sphi 0, %s210
      %s227 = sphi 0, %s211
      %s233 = sphi 0, %s235
      %s236 = sphi 0, %s233
      %s237 = sphi 0, %s236
      %s253 = sphi 0, %s237
      %s259 = sphi 0, %s261
      %s262 = sphi 0, %s259
      %s263 = sphi 0, %s262
      %s279 = sphi 0, %s263
      %s285 = sphi 0, %s287
      %s288 = sphi 0, %s285
      %s289 = sphi 0, %s288
      %s305 = sphi 0, %s289
      %s311 = sphi 0, %s313
      %s314 = sphi 0, %s311
      %s315 = sphi 0, %s314
      %s331 = sphi 0, %s315
      %s337 = sphi 0, %s339
      %s340 = sphi 0, %s337
      %s341 = sphi 0, %s340
      %s357 = sphi 0, %s341
      %s363 = sphi 0, %s365
      %s366 = sphi 0, %s363
      %s367 = sphi 0, %s366
      %s383 = sphi 0, %s367
      %s389 = sphi 0, %s391
      %s392 = sphi 0, %s389
      %s393 = sphi 0, %s392
      %s409 = sphi 0, %s393
      %s415 = sphi 0, %s417
      %s418 = sphi 0, %s415
      %s419 = sphi 0, %s418
      %s435 = sphi 0, %s419
      %s441 = sphi 0, %s443
      %s444 = sphi 0, %s441
      %s445 = sphi 0, %s444
      %s461 = sphi 0, %s445
      %s467 = sphi 0, %s469
      %s470 = sphi 0, %s467
      %s471 = sphi 0, %s470
      %s487 = sphi 0, %s471
      %s493 = sphi 0, %s495
      %s496 = sphi 0, %s493
      %s497 = sphi 0, %s496
      %s513 = sphi 0, %s497
      %s519 = sphi 0, %s521
      %s522 = sphi 0, %s519
      %s523 = sphi 0, %s522
      %s539 = sphi 0, %s523
      %s545 = sphi 0, %s547
      %s548 = sphi 0, %s545
      %s549 = sphi 0, %s548
      %s565 = sphi 0, %s549
      %s571 = sphi 0, %s573
      %s574 = sphi 0, %s571
      %s575 = sphi 0, %s574
      %s591 = sphi 0, %s575
      %s597 = sphi 0, %s599
      %s600 = sphi 0, %s597
      %s601 = sphi 0, %s600
      %s617 = sphi 0, %s601
      %s623 = sphi 0, %s625
      %s626 = sphi 0, %s623
      %s627 = sphi 0, %s626
      %s643 = sphi 0, %s627
      %s647 = sphi 0, %s647
      %s649 = sphi 0, %s647
      %s650 = sphi 0, %s649
      %s664 = sphi 0, %s650
      %s668 = sphi 0, %s668
      %s670 = sphi 0, %s668
      %s671 = sphi 0, %s670
      %s685 = sphi 0, %s671
      %s691 = sphi 0, %s693
      %s694 = sphi 0, %s691
      %s695 = sphi 0, %s694
      %s711 = sphi 0, %s695
    $region4: #{image_captioning_forward.3} parent=1 // loop_header_branch
      %37 = sbr.rel (%p35) target = $region8
    $region5: #{image_captioning_forward.3} parent=1 // loop_body
      %s39 = ssub.s32 %s34, 1
      %s40 = ssub.s32 %s34, 2
      %s47 = sadd.s32 1, %s42
      %p48 = scmp.ge.s32.totalorder %s47, 2
      %s49 = scalar_select %p48, 0, %s47
      %s50 = sadd.s32 1, %s41
      %s51 = scalar_select %p48, %s50, %s41
      %p52 = scmp.ge.s32.totalorder %s51, 2
      %s53 = scalar_select %p52, 0, %s51
      %s54 = ssub.s32 %s41, %s53
      %p55 = scmp.eq.s32.totalorder %s54, 0
      %s57 = sadd.s32 %s56, 1
      %s58 = scalar_select %p55, %s56, %s57
      %p61 = pneg %p55
      %p62 = scmp.eq.s32.totalorder %s34, 3
      %p63 = por %p61, %p62
      %p64 = scmp.ne.s32.totalorder %s56, %s59
      %p65 = scmp.eq.s32.totalorder %s34, 0
      %p66 = por %p64, %p65
      %p67 = scmp.ne.s32.totalorder %s56, %s59
      %p68 = scmp.eq.s32.totalorder %s39, 3
      %p69 = por %p67, %p68
      %p70 = scmp.ne.s32.totalorder %s59, %s60
      %p71 = scmp.eq.s32.totalorder %s39, 0
      %p72 = por %p70, %p71
      %p73 = scmp.ne.s32.totalorder %s59, %s60
      %p74 = scmp.eq.s32.totalorder %s40, 3
      %p75 = por %p73, %p74
      %p77 = scmp.ne.s32.totalorder %s60, %s76
      %p78 = scmp.eq.s32.totalorder %s40, 0
      %p79 = por %p77, %p78
      %s80 = ssub.s32 %s41, %s53
      %p81 = scmp.eq.s32.totalorder %s80, 0
      %s83 = sadd.s32 %s82, 1
      %s84 = scalar_select %p81, %s82, %s83
      %p87 = pneg %p81
      %p88 = scmp.eq.s32.totalorder %s34, 3
      %p89 = por %p87, %p88
      %p90 = scmp.ne.s32.totalorder %s82, %s85
      %p91 = scmp.eq.s32.totalorder %s34, 0
      %p92 = por %p90, %p91
      %p93 = scmp.ne.s32.totalorder %s82, %s85
      %p94 = scmp.eq.s32.totalorder %s39, 3
      %p95 = por %p93, %p94
      %p96 = scmp.ne.s32.totalorder %s85, %s86
      %p97 = scmp.eq.s32.totalorder %s39, 0
      %p98 = por %p96, %p97
      %p99 = scmp.ne.s32.totalorder %s85, %s86
      %p100 = scmp.eq.s32.totalorder %s40, 3
      %p101 = por %p99, %p100
      %p103 = scmp.ne.s32.totalorder %s86, %s102
      %p104 = scmp.eq.s32.totalorder %s40, 0
      %p105 = por %p103, %p104
      %s107 = sadd.s32 %s106, 1
      %p110 = scmp.eq.s32.totalorder %s34, 3
      %p111 = scmp.ne.s32.totalorder %s106, %s108
      %p112 = scmp.eq.s32.totalorder %s34, 0
      %p113 = por %p111, %p112
      %p114 = scmp.ne.s32.totalorder %s106, %s108
      %p115 = scmp.eq.s32.totalorder %s39, 3
      %p116 = por %p114, %p115
      %p117 = scmp.ne.s32.totalorder %s108, %s109
      %p118 = scmp.eq.s32.totalorder %s39, 0
      %p119 = por %p117, %p118
      %p120 = scmp.ne.s32.totalorder %s108, %s109
      %p121 = scmp.eq.s32.totalorder %s40, 3
      %p122 = por %p120, %p121
      %p124 = scmp.ne.s32.totalorder %s109, %s123
      %p125 = scmp.eq.s32.totalorder %s40, 0
      %p126 = por %p124, %p125
      %s127 = ssub.s32 %s42, %s49
      %p128 = scmp.eq.s32.totalorder %s127, 0
      %s130 = sadd.s32 %s129, 1
      %s131 = scalar_select %p128, %s129, %s130
      %p134 = pneg %p128
      %p135 = scmp.eq.s32.totalorder %s34, 3
      %p136 = por %p134, %p135
      %p137 = scmp.ne.s32.totalorder %s129, %s132
      %p138 = scmp.eq.s32.totalorder %s34, 0
      %p139 = por %p137, %p138
      %p140 = scmp.ne.s32.totalorder %s129, %s132
      %p141 = scmp.eq.s32.totalorder %s39, 3
      %p142 = por %p140, %p141
      %p143 = scmp.ne.s32.totalorder %s132, %s133
      %p144 = scmp.eq.s32.totalorder %s39, 0
      %p145 = por %p143, %p144
      %p146 = scmp.ne.s32.totalorder %s132, %s133
      %p147 = scmp.eq.s32.totalorder %s40, 3
      %p148 = por %p146, %p147
      %p150 = scmp.ne.s32.totalorder %s133, %s149
      %p151 = scmp.eq.s32.totalorder %s40, 0
      %p152 = por %p150, %p151
      %s153 = ssub.s32 %s42, %s49
      %p154 = scmp.eq.s32.totalorder %s153, 0
      %s156 = sadd.s32 %s155, 1
      %s157 = scalar_select %p154, %s155, %s156
      %p160 = pneg %p154
      %p161 = scmp.eq.s32.totalorder %s34, 3
      %p162 = por %p160, %p161
      %p163 = scmp.ne.s32.totalorder %s155, %s158
      %p164 = scmp.eq.s32.totalorder %s34, 0
      %p165 = por %p163, %p164
      %p166 = scmp.ne.s32.totalorder %s155, %s158
      %p167 = scmp.eq.s32.totalorder %s39, 3
      %p168 = por %p166, %p167
      %p169 = scmp.ne.s32.totalorder %s158, %s159
      %p170 = scmp.eq.s32.totalorder %s39, 0
      %p171 = por %p169, %p170
      %p172 = scmp.ne.s32.totalorder %s158, %s159
      %p173 = scmp.eq.s32.totalorder %s40, 3
      %p174 = por %p172, %p173
      %p176 = scmp.ne.s32.totalorder %s159, %s175
      %p177 = scmp.eq.s32.totalorder %s40, 0
      %p178 = por %p176, %p177
      %s179 = ssub.s32 %s42, %s49
      %p180 = scmp.eq.s32.totalorder %s179, 0
      %s182 = sadd.s32 %s181, 1
      %s183 = scalar_select %p180, %s181, %s182
      %p186 = pneg %p180
      %p187 = scmp.eq.s32.totalorder %s34, 3
      %p188 = por %p186, %p187
      %p189 = scmp.ne.s32.totalorder %s181, %s184
      %p190 = scmp.eq.s32.totalorder %s34, 0
      %p191 = por %p189, %p190
      %p192 = scmp.ne.s32.totalorder %s181, %s184
      %p193 = scmp.eq.s32.totalorder %s39, 3
      %p194 = por %p192, %p193
      %p195 = scmp.ne.s32.totalorder %s184, %s185
      %p196 = scmp.eq.s32.totalorder %s39, 0
      %p197 = por %p195, %p196
      %p198 = scmp.ne.s32.totalorder %s184, %s185
      %p199 = scmp.eq.s32.totalorder %s40, 3
      %p200 = por %p198, %p199
      %p202 = scmp.ne.s32.totalorder %s185, %s201
      %p203 = scmp.eq.s32.totalorder %s40, 0
      %p204 = por %p202, %p203
      %s205 = ssub.s32 %s42, %s49
      %p206 = scmp.eq.s32.totalorder %s205, 0
      %s208 = sadd.s32 %s207, 1
      %s209 = scalar_select %p206, %s207, %s208
      %p212 = pneg %p206
      %p213 = scmp.eq.s32.totalorder %s34, 3
      %p214 = por %p212, %p213
      %p215 = scmp.ne.s32.totalorder %s207, %s210
      %p216 = scmp.eq.s32.totalorder %s34, 0
      %p217 = por %p215, %p216
      %p218 = scmp.ne.s32.totalorder %s207, %s210
      %p219 = scmp.eq.s32.totalorder %s39, 3
      %p220 = por %p218, %p219
      %p221 = scmp.ne.s32.totalorder %s210, %s211
      %p222 = scmp.eq.s32.totalorder %s39, 0
      %p223 = por %p221, %p222
      %p224 = scmp.ne.s32.totalorder %s210, %s211
      %p225 = scmp.eq.s32.totalorder %s40, 3
      %p226 = por %p224, %p225
      %p228 = scmp.ne.s32.totalorder %s211, %s227
      %p229 = scmp.eq.s32.totalorder %s40, 0
      %p230 = por %p228, %p229
      %s231 = ssub.s32 %s42, %s49
      %p232 = scmp.eq.s32.totalorder %s231, 0
      %s234 = sadd.s32 %s233, 1
      %s235 = scalar_select %p232, %s233, %s234
      %p238 = pneg %p232
      %p239 = scmp.eq.s32.totalorder %s34, 3
      %p240 = por %p238, %p239
      %p241 = scmp.ne.s32.totalorder %s233, %s236
      %p242 = scmp.eq.s32.totalorder %s34, 0
      %p243 = por %p241, %p242
      %p244 = scmp.ne.s32.totalorder %s233, %s236
      %p245 = scmp.eq.s32.totalorder %s39, 3
      %p246 = por %p244, %p245
      %p247 = scmp.ne.s32.totalorder %s236, %s237
      %p248 = scmp.eq.s32.totalorder %s39, 0
      %p249 = por %p247, %p248
      %p250 = scmp.ne.s32.totalorder %s236, %s237
      %p251 = scmp.eq.s32.totalorder %s40, 3
      %p252 = por %p250, %p251
      %p254 = scmp.ne.s32.totalorder %s237, %s253
      %p255 = scmp.eq.s32.totalorder %s40, 0
      %p256 = por %p254, %p255
      %s257 = ssub.s32 %s42, %s49
      %p258 = scmp.eq.s32.totalorder %s257, 0
      %s260 = sadd.s32 %s259, 1
      %s261 = scalar_select %p258, %s259, %s260
      %p264 = pneg %p258
      %p265 = scmp.eq.s32.totalorder %s34, 3
      %p266 = por %p264, %p265
      %p267 = scmp.ne.s32.totalorder %s259, %s262
      %p268 = scmp.eq.s32.totalorder %s34, 0
      %p269 = por %p267, %p268
      %p270 = scmp.ne.s32.totalorder %s259, %s262
      %p271 = scmp.eq.s32.totalorder %s39, 3
      %p272 = por %p270, %p271
      %p273 = scmp.ne.s32.totalorder %s262, %s263
      %p274 = scmp.eq.s32.totalorder %s39, 0
      %p275 = por %p273, %p274
      %p276 = scmp.ne.s32.totalorder %s262, %s263
      %p277 = scmp.eq.s32.totalorder %s40, 3
      %p278 = por %p276, %p277
      %p280 = scmp.ne.s32.totalorder %s263, %s279
      %p281 = scmp.eq.s32.totalorder %s40, 0
      %p282 = por %p280, %p281
      %s283 = ssub.s32 %s42, %s49
      %p284 = scmp.eq.s32.totalorder %s283, 0
      %s286 = sadd.s32 %s285, 1
      %s287 = scalar_select %p284, %s285, %s286
      %p290 = pneg %p284
      %p291 = scmp.eq.s32.totalorder %s34, 3
      %p292 = por %p290, %p291
      %p293 = scmp.ne.s32.totalorder %s285, %s288
      %p294 = scmp.eq.s32.totalorder %s34, 0
      %p295 = por %p293, %p294
      %p296 = scmp.ne.s32.totalorder %s285, %s288
      %p297 = scmp.eq.s32.totalorder %s39, 3
      %p298 = por %p296, %p297
      %p299 = scmp.ne.s32.totalorder %s288, %s289
      %p300 = scmp.eq.s32.totalorder %s39, 0
      %p301 = por %p299, %p300
      %p302 = scmp.ne.s32.totalorder %s288, %s289
      %p303 = scmp.eq.s32.totalorder %s40, 3
      %p304 = por %p302, %p303
      %p306 = scmp.ne.s32.totalorder %s289, %s305
      %p307 = scmp.eq.s32.totalorder %s40, 0
      %p308 = por %p306, %p307
      %s309 = ssub.s32 %s42, %s49
      %p310 = scmp.eq.s32.totalorder %s309, 0
      %s312 = sadd.s32 %s311, 1
      %s313 = scalar_select %p310, %s311, %s312
      %p316 = pneg %p310
      %p317 = scmp.eq.s32.totalorder %s34, 3
      %p318 = por %p316, %p317
      %p319 = scmp.ne.s32.totalorder %s311, %s314
      %p320 = scmp.eq.s32.totalorder %s34, 0
      %p321 = por %p319, %p320
      %p322 = scmp.ne.s32.totalorder %s311, %s314
      %p323 = scmp.eq.s32.totalorder %s39, 3
      %p324 = por %p322, %p323
      %p325 = scmp.ne.s32.totalorder %s314, %s315
      %p326 = scmp.eq.s32.totalorder %s39, 0
      %p327 = por %p325, %p326
      %p328 = scmp.ne.s32.totalorder %s314, %s315
      %p329 = scmp.eq.s32.totalorder %s40, 3
      %p330 = por %p328, %p329
      %p332 = scmp.ne.s32.totalorder %s315, %s331
      %p333 = scmp.eq.s32.totalorder %s40, 0
      %p334 = por %p332, %p333
      %s335 = ssub.s32 %s42, %s49
      %p336 = scmp.eq.s32.totalorder %s335, 0
      %s338 = sadd.s32 %s337, 1
      %s339 = scalar_select %p336, %s337, %s338
      %p342 = pneg %p336
      %p343 = scmp.eq.s32.totalorder %s34, 3
      %p344 = por %p342, %p343
      %p345 = scmp.ne.s32.totalorder %s337, %s340
      %p346 = scmp.eq.s32.totalorder %s34, 0
      %p347 = por %p345, %p346
      %p348 = scmp.ne.s32.totalorder %s337, %s340
      %p349 = scmp.eq.s32.totalorder %s39, 3
      %p350 = por %p348, %p349
      %p351 = scmp.ne.s32.totalorder %s340, %s341
      %p352 = scmp.eq.s32.totalorder %s39, 0
      %p353 = por %p351, %p352
      %p354 = scmp.ne.s32.totalorder %s340, %s341
      %p355 = scmp.eq.s32.totalorder %s40, 3
      %p356 = por %p354, %p355
      %p358 = scmp.ne.s32.totalorder %s341, %s357
      %p359 = scmp.eq.s32.totalorder %s40, 0
      %p360 = por %p358, %p359
      %s361 = ssub.s32 %s42, %s49
      %p362 = scmp.eq.s32.totalorder %s361, 0
      %s364 = sadd.s32 %s363, 1
      %s365 = scalar_select %p362, %s363, %s364
      %p368 = pneg %p362
      %p369 = scmp.eq.s32.totalorder %s34, 3
      %p370 = por %p368, %p369
      %p371 = scmp.ne.s32.totalorder %s363, %s366
      %p372 = scmp.eq.s32.totalorder %s34, 0
      %p373 = por %p371, %p372
      %p374 = scmp.ne.s32.totalorder %s363, %s366
      %p375 = scmp.eq.s32.totalorder %s39, 3
      %p376 = por %p374, %p375
      %p377 = scmp.ne.s32.totalorder %s366, %s367
      %p378 = scmp.eq.s32.totalorder %s39, 0
      %p379 = por %p377, %p378
      %p380 = scmp.ne.s32.totalorder %s366, %s367
      %p381 = scmp.eq.s32.totalorder %s40, 3
      %p382 = por %p380, %p381
      %p384 = scmp.ne.s32.totalorder %s367, %s383
      %p385 = scmp.eq.s32.totalorder %s40, 0
      %p386 = por %p384, %p385
      %s387 = ssub.s32 %s42, %s49
      %p388 = scmp.eq.s32.totalorder %s387, 0
      %s390 = sadd.s32 %s389, 1
      %s391 = scalar_select %p388, %s389, %s390
      %p394 = pneg %p388
      %p395 = scmp.eq.s32.totalorder %s34, 3
      %p396 = por %p394, %p395
      %p397 = scmp.ne.s32.totalorder %s389, %s392
      %p398 = scmp.eq.s32.totalorder %s34, 0
      %p399 = por %p397, %p398
      %p400 = scmp.ne.s32.totalorder %s389, %s392
      %p401 = scmp.eq.s32.totalorder %s39, 3
      %p402 = por %p400, %p401
      %p403 = scmp.ne.s32.totalorder %s392, %s393
      %p404 = scmp.eq.s32.totalorder %s39, 0
      %p405 = por %p403, %p404
      %p406 = scmp.ne.s32.totalorder %s392, %s393
      %p407 = scmp.eq.s32.totalorder %s40, 3
      %p408 = por %p406, %p407
      %p410 = scmp.ne.s32.totalorder %s393, %s409
      %p411 = scmp.eq.s32.totalorder %s40, 0
      %p412 = por %p410, %p411
      %s413 = ssub.s32 %s42, %s49
      %p414 = scmp.eq.s32.totalorder %s413, 0
      %s416 = sadd.s32 %s415, 1
      %s417 = scalar_select %p414, %s415, %s416
      %p420 = pneg %p414
      %p421 = scmp.eq.s32.totalorder %s34, 3
      %p422 = por %p420, %p421
      %p423 = scmp.ne.s32.totalorder %s415, %s418
      %p424 = scmp.eq.s32.totalorder %s34, 0
      %p425 = por %p423, %p424
      %p426 = scmp.ne.s32.totalorder %s415, %s418
      %p427 = scmp.eq.s32.totalorder %s39, 3
      %p428 = por %p426, %p427
      %p429 = scmp.ne.s32.totalorder %s418, %s419
      %p430 = scmp.eq.s32.totalorder %s39, 0
      %p431 = por %p429, %p430
      %p432 = scmp.ne.s32.totalorder %s418, %s419
      %p433 = scmp.eq.s32.totalorder %s40, 3
      %p434 = por %p432, %p433
      %p436 = scmp.ne.s32.totalorder %s419, %s435
      %p437 = scmp.eq.s32.totalorder %s40, 0
      %p438 = por %p436, %p437
      %s439 = ssub.s32 %s42, %s49
      %p440 = scmp.eq.s32.totalorder %s439, 0
      %s442 = sadd.s32 %s441, 1
      %s443 = scalar_select %p440, %s441, %s442
      %p446 = pneg %p440
      %p447 = scmp.eq.s32.totalorder %s34, 3
      %p448 = por %p446, %p447
      %p449 = scmp.ne.s32.totalorder %s441, %s444
      %p450 = scmp.eq.s32.totalorder %s34, 0
      %p451 = por %p449, %p450
      %p452 = scmp.ne.s32.totalorder %s441, %s444
      %p453 = scmp.eq.s32.totalorder %s39, 3
      %p454 = por %p452, %p453
      %p455 = scmp.ne.s32.totalorder %s444, %s445
      %p456 = scmp.eq.s32.totalorder %s39, 0
      %p457 = por %p455, %p456
      %p458 = scmp.ne.s32.totalorder %s444, %s445
      %p459 = scmp.eq.s32.totalorder %s40, 3
      %p460 = por %p458, %p459
      %p462 = scmp.ne.s32.totalorder %s445, %s461
      %p463 = scmp.eq.s32.totalorder %s40, 0
      %p464 = por %p462, %p463
      %s465 = ssub.s32 %s42, %s49
      %p466 = scmp.eq.s32.totalorder %s465, 0
      %s468 = sadd.s32 %s467, 1
      %s469 = scalar_select %p466, %s467, %s468
      %p472 = pneg %p466
      %p473 = scmp.eq.s32.totalorder %s34, 3
      %p474 = por %p472, %p473
      %p475 = scmp.ne.s32.totalorder %s467, %s470
      %p476 = scmp.eq.s32.totalorder %s34, 0
      %p477 = por %p475, %p476
      %p478 = scmp.ne.s32.totalorder %s467, %s470
      %p479 = scmp.eq.s32.totalorder %s39, 3
      %p480 = por %p478, %p479
      %p481 = scmp.ne.s32.totalorder %s470, %s471
      %p482 = scmp.eq.s32.totalorder %s39, 0
      %p483 = por %p481, %p482
      %p484 = scmp.ne.s32.totalorder %s470, %s471
      %p485 = scmp.eq.s32.totalorder %s40, 3
      %p486 = por %p484, %p485
      %p488 = scmp.ne.s32.totalorder %s471, %s487
      %p489 = scmp.eq.s32.totalorder %s40, 0
      %p490 = por %p488, %p489
      %s491 = ssub.s32 %s42, %s49
      %p492 = scmp.eq.s32.totalorder %s491, 0
      %s494 = sadd.s32 %s493, 1
      %s495 = scalar_select %p492, %s493, %s494
      %p498 = pneg %p492
      %p499 = scmp.eq.s32.totalorder %s34, 3
      %p500 = por %p498, %p499
      %p501 = scmp.ne.s32.totalorder %s493, %s496
      %p502 = scmp.eq.s32.totalorder %s34, 0
      %p503 = por %p501, %p502
      %p504 = scmp.ne.s32.totalorder %s493, %s496
      %p505 = scmp.eq.s32.totalorder %s39, 3
      %p506 = por %p504, %p505
      %p507 = scmp.ne.s32.totalorder %s496, %s497
      %p508 = scmp.eq.s32.totalorder %s39, 0
      %p509 = por %p507, %p508
      %p510 = scmp.ne.s32.totalorder %s496, %s497
      %p511 = scmp.eq.s32.totalorder %s40, 3
      %p512 = por %p510, %p511
      %p514 = scmp.ne.s32.totalorder %s497, %s513
      %p515 = scmp.eq.s32.totalorder %s40, 0
      %p516 = por %p514, %p515
      %s517 = ssub.s32 %s42, %s49
      %p518 = scmp.eq.s32.totalorder %s517, 0
      %s520 = sadd.s32 %s519, 1
      %s521 = scalar_select %p518, %s519, %s520
      %p524 = pneg %p518
      %p525 = scmp.eq.s32.totalorder %s34, 3
      %p526 = por %p524, %p525
      %p527 = scmp.ne.s32.totalorder %s519, %s522
      %p528 = scmp.eq.s32.totalorder %s34, 0
      %p529 = por %p527, %p528
      %p530 = scmp.ne.s32.totalorder %s519, %s522
      %p531 = scmp.eq.s32.totalorder %s39, 3
      %p532 = por %p530, %p531
      %p533 = scmp.ne.s32.totalorder %s522, %s523
      %p534 = scmp.eq.s32.totalorder %s39, 0
      %p535 = por %p533, %p534
      %p536 = scmp.ne.s32.totalorder %s522, %s523
      %p537 = scmp.eq.s32.totalorder %s40, 3
      %p538 = por %p536, %p537
      %p540 = scmp.ne.s32.totalorder %s523, %s539
      %p541 = scmp.eq.s32.totalorder %s40, 0
      %p542 = por %p540, %p541
      %s543 = ssub.s32 %s42, %s49
      %p544 = scmp.eq.s32.totalorder %s543, 0
      %s546 = sadd.s32 %s545, 1
      %s547 = scalar_select %p544, %s545, %s546
      %p550 = pneg %p544
      %p551 = scmp.eq.s32.totalorder %s34, 3
      %p552 = por %p550, %p551
      %p553 = scmp.ne.s32.totalorder %s545, %s548
      %p554 = scmp.eq.s32.totalorder %s34, 0
      %p555 = por %p553, %p554
      %p556 = scmp.ne.s32.totalorder %s545, %s548
      %p557 = scmp.eq.s32.totalorder %s39, 3
      %p558 = por %p556, %p557
      %p559 = scmp.ne.s32.totalorder %s548, %s549
      %p560 = scmp.eq.s32.totalorder %s39, 0
      %p561 = por %p559, %p560
      %p562 = scmp.ne.s32.totalorder %s548, %s549
      %p563 = scmp.eq.s32.totalorder %s40, 3
      %p564 = por %p562, %p563
      %p566 = scmp.ne.s32.totalorder %s549, %s565
      %p567 = scmp.eq.s32.totalorder %s40, 0
      %p568 = por %p566, %p567
      %s569 = ssub.s32 %s42, %s49
      %p570 = scmp.eq.s32.totalorder %s569, 0
      %s572 = sadd.s32 %s571, 1
      %s573 = scalar_select %p570, %s571, %s572
      %p576 = pneg %p570
      %p577 = scmp.eq.s32.totalorder %s34, 3
      %p578 = por %p576, %p577
      %p579 = scmp.ne.s32.totalorder %s571, %s574
      %p580 = scmp.eq.s32.totalorder %s34, 0
      %p581 = por %p579, %p580
      %p582 = scmp.ne.s32.totalorder %s571, %s574
      %p583 = scmp.eq.s32.totalorder %s39, 3
      %p584 = por %p582, %p583
      %p585 = scmp.ne.s32.totalorder %s574, %s575
      %p586 = scmp.eq.s32.totalorder %s39, 0
      %p587 = por %p585, %p586
      %p588 = scmp.ne.s32.totalorder %s574, %s575
      %p589 = scmp.eq.s32.totalorder %s40, 3
      %p590 = por %p588, %p589
      %p592 = scmp.ne.s32.totalorder %s575, %s591
      %p593 = scmp.eq.s32.totalorder %s40, 0
      %p594 = por %p592, %p593
      %s595 = ssub.s32 %s42, %s49
      %p596 = scmp.eq.s32.totalorder %s595, 0
      %s598 = sadd.s32 %s597, 1
      %s599 = scalar_select %p596, %s597, %s598
      %p602 = pneg %p596
      %p603 = scmp.eq.s32.totalorder %s34, 3
      %p604 = por %p602, %p603
      %p605 = scmp.ne.s32.totalorder %s597, %s600
      %p606 = scmp.eq.s32.totalorder %s34, 0
      %p607 = por %p605, %p606
      %p608 = scmp.ne.s32.totalorder %s597, %s600
      %p609 = scmp.eq.s32.totalorder %s39, 3
      %p610 = por %p608, %p609
      %p611 = scmp.ne.s32.totalorder %s600, %s601
      %p612 = scmp.eq.s32.totalorder %s39, 0
      %p613 = por %p611, %p612
      %p614 = scmp.ne.s32.totalorder %s600, %s601
      %p615 = scmp.eq.s32.totalorder %s40, 3
      %p616 = por %p614, %p615
      %p618 = scmp.ne.s32.totalorder %s601, %s617
      %p619 = scmp.eq.s32.totalorder %s40, 0
      %p620 = por %p618, %p619
      %s621 = ssub.s32 %s42, %s49
      %p622 = scmp.eq.s32.totalorder %s621, 0
      %s624 = sadd.s32 %s623, 1
      %s625 = scalar_select %p622, %s623, %s624
      %p628 = pneg %p622
      %p629 = scmp.eq.s32.totalorder %s34, 3
      %p630 = por %p628, %p629
      %p631 = scmp.ne.s32.totalorder %s623, %s626
      %p632 = scmp.eq.s32.totalorder %s34, 0
      %p633 = por %p631, %p632
      %p634 = scmp.ne.s32.totalorder %s623, %s626
      %p635 = scmp.eq.s32.totalorder %s39, 3
      %p636 = por %p634, %p635
      %p637 = scmp.ne.s32.totalorder %s626, %s627
      %p638 = scmp.eq.s32.totalorder %s39, 0
      %p639 = por %p637, %p638
      %p640 = scmp.ne.s32.totalorder %s626, %s627
      %p641 = scmp.eq.s32.totalorder %s40, 3
      %p642 = por %p640, %p641
      %p644 = scmp.ne.s32.totalorder %s627, %s643
      %p645 = scmp.eq.s32.totalorder %s40, 0
      %p646 = por %p644, %p645
      %s648 = sadd.s32 %s647, 1
      %p651 = scmp.eq.s32.totalorder %s34, 3
      %p652 = scmp.ne.s32.totalorder %s647, %s649
      %p653 = scmp.eq.s32.totalorder %s34, 0
      %p654 = por %p652, %p653
      %p655 = scmp.ne.s32.totalorder %s647, %s649
      %p656 = scmp.eq.s32.totalorder %s39, 3
      %p657 = por %p655, %p656
      %p658 = scmp.ne.s32.totalorder %s649, %s650
      %p659 = scmp.eq.s32.totalorder %s39, 0
      %p660 = por %p658, %p659
      %p661 = scmp.ne.s32.totalorder %s649, %s650
      %p662 = scmp.eq.s32.totalorder %s40, 3
      %p663 = por %p661, %p662
      %p665 = scmp.ne.s32.totalorder %s650, %s664
      %p666 = scmp.eq.s32.totalorder %s40, 0
      %p667 = por %p665, %p666
      %s669 = sadd.s32 %s668, 1
      %p672 = scmp.eq.s32.totalorder %s34, 3
      %p673 = scmp.ne.s32.totalorder %s668, %s670
      %p674 = scmp.eq.s32.totalorder %s34, 0
      %p675 = por %p673, %p674
      %p676 = scmp.ne.s32.totalorder %s668, %s670
      %p677 = scmp.eq.s32.totalorder %s39, 3
      %p678 = por %p676, %p677
      %p679 = scmp.ne.s32.totalorder %s670, %s671
      %p680 = scmp.eq.s32.totalorder %s39, 0
      %p681 = por %p679, %p680
      %p682 = scmp.ne.s32.totalorder %s670, %s671
      %p683 = scmp.eq.s32.totalorder %s40, 3
      %p684 = por %p682, %p683
      %p686 = scmp.ne.s32.totalorder %s671, %s685
      %p687 = scmp.eq.s32.totalorder %s40, 0
      %p688 = por %p686, %p687
      %s689 = ssub.s32 %s41, %s53
      %p690 = scmp.eq.s32.totalorder %s689, 0
      %s692 = sadd.s32 %s691, 1
      %s693 = scalar_select %p690, %s691, %s692
      %p696 = pneg %p690
      %p697 = scmp.eq.s32.totalorder %s34, 3
      %p698 = por %p696, %p697
      %p699 = scmp.ne.s32.totalorder %s691, %s694
      %p700 = scmp.eq.s32.totalorder %s34, 0
      %p701 = por %p699, %p700
      %p702 = scmp.ne.s32.totalorder %s691, %s694
      %p703 = scmp.eq.s32.totalorder %s39, 3
      %p704 = por %p702, %p703
      %p705 = scmp.ne.s32.totalorder %s694, %s695
      %p706 = scmp.eq.s32.totalorder %s39, 0
      %p707 = por %p705, %p706
      %p708 = scmp.ne.s32.totalorder %s694, %s695
      %p709 = scmp.eq.s32.totalorder %s40, 3
      %p710 = por %p708, %p709
      %p712 = scmp.ne.s32.totalorder %s695, %s711
      %p713 = scmp.eq.s32.totalorder %s40, 0
      %p714 = por %p712, %p713
      %p715 = scmp.le.s32.totalorder 1, %s34
      %p716 = scmp.lt.s32.totalorder %s34, 5
      %p717 = pnand %p715, %p716
      %p718 = pneg %p717
      // Predicated region
      $region9: #{image_captioning_forward.3} parent=5 // pred_check
        _
      $region10: #{image_captioning_forward.3} parent=5 // pred_check_branch
        %720 = sbr.rel (%p717) target = $region12
      $region11: #{image_captioning_forward.3} parent=5 // pred_region
        %s721 = ssub.s32 %s34, 1
        // Predicated region
        $region13: #{image_captioning_forward.3} parent=11 // pred_check
          %p722 = pneg %p119
        $region14: #{image_captioning_forward.3} parent=11 // pred_check_branch
          %724 = sbr.rel (%p722) target = $region16
        $region15: #{image_captioning_forward.3} parent=11 // pred_region
          _
        $region16: #{image_captioning_forward.3} parent=11 // pred_fallthru
          _
        // Predicated region
        $region17: #{image_captioning_forward.3} parent=11 // pred_check
          %p725 = pneg %p660
        $region18: #{image_captioning_forward.3} parent=11 // pred_check_branch
          %727 = sbr.rel (%p725) target = $region20
        $region19: #{image_captioning_forward.3} parent=11 // pred_region
          _
        $region20: #{image_captioning_forward.3} parent=11 // pred_fallthru
          _
        // Predicated region
        $region21: #{image_captioning_forward.3} parent=11 // pred_check
          %p728 = pneg %p681
        $region22: #{image_captioning_forward.3} parent=11 // pred_check_branch
          %730 = sbr.rel (%p728) target = $region24
        $region23: #{image_captioning_forward.3} parent=11 // pred_region
          _
        $region24: #{image_captioning_forward.3} parent=11 // pred_fallthru
          _
      $region12: #{image_captioning_forward.3} parent=5 // pred_fallthru
        _
      %p731 = scmp.lt.s32.totalorder %s34, 4
      // Predicated region
      $region25: #{image_captioning_forward.3} parent=5 // pred_check
        %p732 = pneg %p731
      $region26: #{image_captioning_forward.3} parent=5 // pred_check_branch
        %734 = sbr.rel (%p732) target = $region28
      $region27: #{image_captioning_forward.3} parent=5 // pred_region
        // Predicated region
        $region29: #{image_captioning_forward.3} parent=27 // pred_check
          %p735 = pneg %p66
        $region30: #{image_captioning_forward.3} parent=27 // pred_check_branch
          %737 = sbr.rel (%p735) target = $region32
        $region31: #{image_captioning_forward.3} parent=27 // pred_region
          %p738 = scmp.lt.s32.totalorder %s41, 1
          %s739 = scalar_select %p738, %s41, 1
          %s740 = smul.addr %s739, 8
          %s741 = scalar_lea.vmem %s0, %s740
        $region32: #{image_captioning_forward.3} parent=27 // pred_fallthru
          _
        // Predicated region
        $region33: #{image_captioning_forward.3} parent=27 // pred_check
          %p742 = pneg %p92
        $region34: #{image_captioning_forward.3} parent=27 // pred_check_branch
          %744 = sbr.rel (%p742) target = $region36
        $region35: #{image_captioning_forward.3} parent=27 // pred_region
          %p745 = scmp.lt.s32.totalorder %s41, 1
          %s746 = scalar_select %p745, %s41, 1
          %s747 = smul.addr %s746, 4
          %s748 = scalar_lea.vmem %s1, %s747
        $region36: #{image_captioning_forward.3} parent=27 // pred_fallthru
          _
        // Predicated region
        $region37: #{image_captioning_forward.3} parent=27 // pred_check
          %p749 = pneg %p139
        $region38: #{image_captioning_forward.3} parent=27 // pred_check_branch
          %751 = sbr.rel (%p749) target = $region40
        $region39: #{image_captioning_forward.3} parent=27 // pred_region
          %p752 = scmp.lt.s32.totalorder %s42, 1
          %s753 = scalar_select %p752, %s42, 1
          %s754 = smul.addr %s753, 48
          %s755 = smul.addr %s754, 8
          %s756 = scalar_lea.vmem %s3, %s755
        $region40: #{image_captioning_forward.3} parent=27 // pred_fallthru
          _
        // Predicated region
        $region41: #{image_captioning_forward.3} parent=27 // pred_check
          %p757 = pneg %p165
        $region42: #{image_captioning_forward.3} parent=27 // pred_check_branch
          %759 = sbr.rel (%p757) target = $region44
        $region43: #{image_captioning_forward.3} parent=27 // pred_region
          %p760 = scmp.lt.s32.totalorder %s42, 1
          %s761 = scalar_select %p760, %s42, 1
          %s762 = smul.addr %s761, 3
          %s763 = scalar_lea.vmem %s4, %s762
        $region44: #{image_captioning_forward.3} parent=27 // pred_fallthru
          _
        // Predicated region
        $region45: #{image_captioning_forward.3} parent=27 // pred_check
          %p764 = pneg %p191
        $region46: #{image_captioning_forward.3} parent=27 // pred_check_branch
          %766 = sbr.rel (%p764) target = $region48
        $region47: #{image_captioning_forward.3} parent=27 // pred_region
          %p767 = scmp.lt.s32.totalorder %s42, 1
          %s768 = scalar_select %p767, %s42, 1
          %s769 = smul.addr %s768, 16
          %s770 = smul.addr %s769, 8
          %s771 = scalar_lea.vmem %s5, %s770
        $region48: #{image_captioning_forward.3} parent=27 // pred_fallthru
          _
        // Predicated region
        $region49: #{image_captioning_forward.3} parent=27 // pred_check
          %p772 = pneg %p217
        $region50: #{image_captioning_forward.3} parent=27 // pred_check_branch
          %774 = sbr.rel (%p772) target = $region52
        $region51: #{image_captioning_forward.3} parent=27 // pred_region
          %p775 = scmp.lt.s32.totalorder %s42, 1
          %s776 = scalar_select %p775, %s42, 1
          %s777 = scalar_lea.vmem %s6, %s776
        $region52: #{image_captioning_forward.3} parent=27 // pred_fallthru
          _
        // Predicated region
        $region53: #{image_captioning_forward.3} parent=27 // pred_check
          %p778 = pneg %p243
        $region54: #{image_captioning_forward.3} parent=27 // pred_check_branch
          %780 = sbr.rel (%p778) target = $region56
        $region55: #{image_captioning_forward.3} parent=27 // pred_region
          %p781 = scmp.lt.s32.totalorder %s42, 1
          %s782 = scalar_select %p781, %s42, 1
          %s783 = smul.addr %s782, 16
          %s784 = smul.addr %s783, 8
          %s785 = scalar_lea.vmem %s7, %s784
        $region56: #{image_captioning_forward.3} parent=27 // pred_fallthru
          _
        // Predicated region
        $region57: #{image_captioning_forward.3} parent=27 // pred_check
          %p786 = pneg %p269
        $region58: #{image_captioning_forward.3} parent=27 // pred_check_branch
          %788 = sbr.rel (%p786) target = $region60
        $region59: #{image_captioning_forward.3} parent=27 // pred_region
          %p789 = scmp.lt.s32.totalorder %s42, 1
          %s790 = scalar_select %p789, %s42, 1
          %s791 = scalar_lea.vmem %s8, %s790
        $region60: #{image_captioning_forward.3} parent=27 // pred_fallthru
          _
        // Predicated region
        $region61: #{image_captioning_forward.3} parent=27 // pred_check
          %p792 = pneg %p295
        $region62: #{image_captioning_forward.3} parent=27 // pred_check_branch
          %794 = sbr.rel (%p792) target = $region64
        $region63: #{image_captioning_forward.3} parent=27 // pred_region
          %p795 = scmp.lt.s32.totalorder %s42, 1
          %s796 = scalar_select %p795, %s42, 1
          %s797 = smul.addr %s796, 32
          %s798 = smul.addr %s797, 8
          %s799 = scalar_lea.vmem %s9, %s798
        $region64: #{image_captioning_forward.3} parent=27 // pred_fallthru
          _
        // Predicated region
        $region65: #{image_captioning_forward.3} parent=27 // pred_check
          %p800 = pneg %p321
        $region66: #{image_captioning_forward.3} parent=27 // pred_check_branch
          %802 = sbr.rel (%p800) target = $region68
        $region67: #{image_captioning_forward.3} parent=27 // pred_region
          %p803 = scmp.lt.s32.totalorder %s42, 1
          %s804 = scalar_select %p803, %s42, 1
          %s805 = smul.addr %s804, 2
          %s806 = scalar_lea.vmem %s10, %s805
        $region68: #{image_captioning_forward.3} parent=27 // pred_fallthru
          _
        // Predicated region
        $region69: #{image_captioning_forward.3} parent=27 // pred_check
          %p807 = pneg %p347
        $region70: #{image_captioning_forward.3} parent=27 // pred_check_branch
          %809 = sbr.rel (%p807) target = $region72
        $region71: #{image_captioning_forward.3} parent=27 // pred_region
          %p810 = scmp.lt.s32.totalorder %s42, 1
          %s811 = scalar_select %p810, %s42, 1
          %s812 = smul.addr %s811, 16
          %s813 = smul.addr %s812, 8
          %s814 = scalar_lea.vmem %s11, %s813
        $region72: #{image_captioning_forward.3} parent=27 // pred_fallthru
          _
        // Predicated region
        $region73: #{image_captioning_forward.3} parent=27 // pred_check
          %p815 = pneg %p373
        $region74: #{image_captioning_forward.3} parent=27 // pred_check_branch
          %817 = sbr.rel (%p815) target = $region76
        $region75: #{image_captioning_forward.3} parent=27 // pred_region
          %p818 = scmp.lt.s32.totalorder %s42, 1
          %s819 = scalar_select %p818, %s42, 1
          %s820 = scalar_lea.vmem %s12, %s819
        $region76: #{image_captioning_forward.3} parent=27 // pred_fallthru
          _
        // Predicated region
        $region77: #{image_captioning_forward.3} parent=27 // pred_check
          %p821 = pneg %p399
        $region78: #{image_captioning_forward.3} parent=27 // pred_check_branch
          %823 = sbr.rel (%p821) target = $region80
        $region79: #{image_captioning_forward.3} parent=27 // pred_region
          %p824 = scmp.lt.s32.totalorder %s42, 1
          %s825 = scalar_select %p824, %s42, 1
          %s826 = smul.addr %s825, 32
          %s827 = smul.addr %s826, 8
          %s828 = scalar_lea.vmem %s13, %s827
        $region80: #{image_captioning_forward.3} parent=27 // pred_fallthru
          _
        // Predicated region
        $region81: #{image_captioning_forward.3} parent=27 // pred_check
          %p829 = pneg %p425
        $region82: #{image_captioning_forward.3} parent=27 // pred_check_branch
          %831 = sbr.rel (%p829) target = $region84
        $region83: #{image_captioning_forward.3} parent=27 // pred_region
          %p832 = scmp.lt.s32.totalorder %s42, 1
          %s833 = scalar_select %p832, %s42, 1
          %s834 = smul.addr %s833, 2
          %s835 = scalar_lea.vmem %s14, %s834
        $region84: #{image_captioning_forward.3} parent=27 // pred_fallthru
          _
        // Predicated region
        $region85: #{image_captioning_forward.3} parent=27 // pred_check
          %p836 = pneg %p451
        $region86: #{image_captioning_forward.3} parent=27 // pred_check_branch
          %838 = sbr.rel (%p836) target = $region88
        $region87: #{image_captioning_forward.3} parent=27 // pred_region
          %p839 = scmp.lt.s32.totalorder %s42, 1
          %s840 = scalar_select %p839, %s42, 1
          %s841 = smul.addr %s840, 32
          %s842 = smul.addr %s841, 8
          %s843 = scalar_lea.vmem %s15, %s842
        $region88: #{image_captioning_forward.3} parent=27 // pred_fallthru
          _
        // Predicated region
        $region89: #{image_captioning_forward.3} parent=27 // pred_check
          %p844 = pneg %p477
        $region90: #{image_captioning_forward.3} parent=27 // pred_check_branch
          %846 = sbr.rel (%p844) target = $region92
        $region91: #{image_captioning_forward.3} parent=27 // pred_region
          %p847 = scmp.lt.s32.totalorder %s42, 1
          %s848 = scalar_select %p847, %s42, 1
          %s849 = scalar_lea.vmem %s16, %s848
        $region92: #{image_captioning_forward.3} parent=27 // pred_fallthru
          _
        // Predicated region
        $region93: #{image_captioning_forward.3} parent=27 // pred_check
          %p850 = pneg %p503
        $region94: #{image_captioning_forward.3} parent=27 // pred_check_branch
          %852 = sbr.rel (%p850) target = $region96
        $region95: #{image_captioning_forward.3} parent=27 // pred_region
          %p853 = scmp.lt.s32.totalorder %s42, 1
          %s854 = scalar_select %p853, %s42, 1
          %s855 = scalar_lea.vmem %s17, %s854
        $region96: #{image_captioning_forward.3} parent=27 // pred_fallthru
          _
        // Predicated region
        $region97: #{image_captioning_forward.3} parent=27 // pred_check
          %p856 = pneg %p529
        $region98: #{image_captioning_forward.3} parent=27 // pred_check_branch
          %858 = sbr.rel (%p856) target = $region100
        $region99: #{image_captioning_forward.3} parent=27 // pred_region
          %p859 = scmp.lt.s32.totalorder %s42, 1
          %s860 = scalar_select %p859, %s42, 1
          %s861 = scalar_lea.vmem %s18, %s860
        $region100: #{image_captioning_forward.3} parent=27 // pred_fallthru
          _
        // Predicated region
        $region101: #{image_captioning_forward.3} parent=27 // pred_check
          %p862 = pneg %p555
        $region102: #{image_captioning_forward.3} parent=27 // pred_check_branch
          %864 = sbr.rel (%p862) target = $region104
        $region103: #{image_captioning_forward.3} parent=27 // pred_region
          %p865 = scmp.lt.s32.totalorder %s42, 1
          %s866 = scalar_select %p865, %s42, 1
          %s867 = scalar_lea.vmem %s19, %s866
        $region104: #{image_captioning_forward.3} parent=27 // pred_fallthru
          _
        // Predicated region
        $region105: #{image_captioning_forward.3} parent=27 // pred_check
          %p868 = pneg %p581
        $region106: #{image_captioning_forward.3} parent=27 // pred_check_branch
          %870 = sbr.rel (%p868) target = $region108
        $region107: #{image_captioning_forward.3} parent=27 // pred_region
          %p871 = scmp.lt.s32.totalorder %s42, 1
          %s872 = scalar_select %p871, %s42, 1
          %s873 = scalar_lea.vmem %s20, %s872
        $region108: #{image_captioning_forward.3} parent=27 // pred_fallthru
          _
        // Predicated region
        $region109: #{image_captioning_forward.3} parent=27 // pred_check
          %p874 = pneg %p607
        $region110: #{image_captioning_forward.3} parent=27 // pred_check_branch
          %876 = sbr.rel (%p874) target = $region112
        $region111: #{image_captioning_forward.3} parent=27 // pred_region
          %p877 = scmp.lt.s32.totalorder %s42, 1
          %s878 = scalar_select %p877, %s42, 1
          %s879 = scalar_lea.vmem %s21, %s878
        $region112: #{image_captioning_forward.3} parent=27 // pred_fallthru
          _
        // Predicated region
        $region113: #{image_captioning_forward.3} parent=27 // pred_check
          %p880 = pneg %p633
        $region114: #{image_captioning_forward.3} parent=27 // pred_check_branch
          %882 = sbr.rel (%p880) target = $region116
        $region115: #{image_captioning_forward.3} parent=27 // pred_region
          %p883 = scmp.lt.s32.totalorder %s42, 1
          %s884 = scalar_select %p883, %s42, 1
          %s885 = scalar_lea.vmem %s22, %s884
        $region116: #{image_captioning_forward.3} parent=27 // pred_fallthru
          _
      $region28: #{image_captioning_forward.3} parent=5 // pred_fallthru
        _
      %p886 = scmp.le.s32.totalorder 1, %s34
      %p887 = scmp.lt.s32.totalorder %s34, 5
      %p888 = pnand %p886, %p887
      %p889 = pneg %p888
      // Predicated region
      $region117: #{image_captioning_forward.3} parent=5 // pred_check
        _
      $region118: #{image_captioning_forward.3} parent=5 // pred_check_branch
        %891 = sbr.rel (%p888) target = $region120
      $region119: #{image_captioning_forward.3} parent=5 // pred_region
        %s892 = ssub.s32 %s34, 1
        %p893 = scmp.lt.s32.totalorder %s43, 1
        %s894 = scalar_select %p893, %s43, 1
        %s895 = smul.addr %s894, 8
        %s896 = scalar_lea.vmem %s0, %s895
        %p897 = pneg %p72
        %p898 = pneg %p69
        %p899 = scmp.lt.s32.totalorder %s43, 1
        %s900 = scalar_select %p899, %s43, 1
        %s901 = smul.addr %s900, 4
        %s902 = scalar_lea.vmem %s1, %s901
        %p903 = pneg %p98
        %p904 = pneg %p95
        %p905 = pneg %p119
        %p906 = pneg %p116
        %p907 = scmp.lt.s32.totalorder %s44, 1
        %s908 = scalar_select %p907, %s44, 1
        %s909 = smul.addr %s908, 48
        %s910 = smul.addr %s909, 8
        %s911 = scalar_lea.vmem %s3, %s910
        %p912 = pneg %p145
        %p913 = pneg %p142
        %p914 = scmp.lt.s32.totalorder %s44, 1
        %s915 = scalar_select %p914, %s44, 1
        %s916 = smul.addr %s915, 3
        %s917 = scalar_lea.vmem %s4, %s916
        %p918 = pneg %p171
        %p919 = pneg %p168
        %p920 = scmp.lt.s32.totalorder %s44, 1
        %s921 = scalar_select %p920, %s44, 1
        %s922 = smul.addr %s921, 16
        %s923 = smul.addr %s922, 8
        %s924 = scalar_lea.vmem %s5, %s923
        %p925 = pneg %p197
        %p926 = pneg %p194
        %p927 = scmp.lt.s32.totalorder %s44, 1
        %s928 = scalar_select %p927, %s44, 1
        %s929 = scalar_lea.vmem %s6, %s928
        %p930 = pneg %p223
        %p931 = pneg %p220
        %p932 = scmp.lt.s32.totalorder %s44, 1
        %s933 = scalar_select %p932, %s44, 1
        %s934 = smul.addr %s933, 16
        %s935 = smul.addr %s934, 8
        %s936 = scalar_lea.vmem %s7, %s935
        %p937 = pneg %p249
        %p938 = pneg %p246
        %p939 = scmp.lt.s32.totalorder %s44, 1
        %s940 = scalar_select %p939, %s44, 1
        %s941 = scalar_lea.vmem %s8, %s940
        %p942 = pneg %p275
        %p943 = pneg %p272
        %p944 = scmp.lt.s32.totalorder %s44, 1
        %s945 = scalar_select %p944, %s44, 1
        %s946 = smul.addr %s945, 32
        %s947 = smul.addr %s946, 8
        %s948 = scalar_lea.vmem %s9, %s947
        %p949 = pneg %p301
        %p950 = pneg %p298
        %p951 = scmp.lt.s32.totalorder %s44, 1
        %s952 = scalar_select %p951, %s44, 1
        %s953 = smul.addr %s952, 2
        %s954 = scalar_lea.vmem %s10, %s953
        %p955 = pneg %p327
        %p956 = pneg %p324
        %p957 = scmp.lt.s32.totalorder %s44, 1
        %s958 = scalar_select %p957, %s44, 1
        %s959 = smul.addr %s958, 16
        %s960 = smul.addr %s959, 8
        %s961 = scalar_lea.vmem %s11, %s960
        %p962 = pneg %p353
        %p963 = pneg %p350
        %p964 = scmp.lt.s32.totalorder %s44, 1
        %s965 = scalar_select %p964, %s44, 1
        %s966 = scalar_lea.vmem %s12, %s965
        %p967 = pneg %p379
        %p968 = pneg %p376
        %p969 = scmp.lt.s32.totalorder %s44, 1
        %s970 = scalar_select %p969, %s44, 1
        %s971 = smul.addr %s970, 32
        %s972 = smul.addr %s971, 8
        %s973 = scalar_lea.vmem %s13, %s972
        %p974 = pneg %p405
        %p975 = pneg %p402
        %p976 = scmp.lt.s32.totalorder %s44, 1
        %s977 = scalar_select %p976, %s44, 1
        %s978 = smul.addr %s977, 2
        %s979 = scalar_lea.vmem %s14, %s978
        %p980 = pneg %p431
        %p981 = pneg %p428
        %p982 = scmp.lt.s32.totalorder %s44, 1
        %s983 = scalar_select %p982, %s44, 1
        %s984 = smul.addr %s983, 32
        %s985 = smul.addr %s984, 8
        %s986 = scalar_lea.vmem %s15, %s985
        %p987 = pneg %p457
        %p988 = pneg %p454
        %p989 = scmp.lt.s32.totalorder %s44, 1
        %s990 = scalar_select %p989, %s44, 1
        %s991 = scalar_lea.vmem %s16, %s990
        %p992 = pneg %p483
        %p993 = pneg %p480
        %p994 = scmp.lt.s32.totalorder %s44, 1
        %s995 = scalar_select %p994, %s44, 1
        %s996 = scalar_lea.vmem %s17, %s995
        %p997 = pneg %p509
        %p998 = pneg %p506
        %p999 = scmp.lt.s32.totalorder %s44, 1
        %s1000 = scalar_select %p999, %s44, 1
        %s1001 = scalar_lea.vmem %s18, %s1000
        %p1002 = pneg %p535
        %p1003 = pneg %p532
        %p1004 = scmp.lt.s32.totalorder %s44, 1
        %s1005 = scalar_select %p1004, %s44, 1
        %s1006 = scalar_lea.vmem %s19, %s1005
        %p1007 = pneg %p561
        %p1008 = pneg %p558
        %p1009 = scmp.lt.s32.totalorder %s44, 1
        %s1010 = scalar_select %p1009, %s44, 1
        %s1011 = scalar_lea.vmem %s20, %s1010
        %p1012 = pneg %p587
        %p1013 = pneg %p584
        %p1014 = scmp.lt.s32.totalorder %s44, 1
        %s1015 = scalar_select %p1014, %s44, 1
        %s1016 = scalar_lea.vmem %s21, %s1015
        %p1017 = pneg %p613
        %p1018 = pneg %p610
        %p1019 = scmp.lt.s32.totalorder %s44, 1
        %s1020 = scalar_select %p1019, %s44, 1
        %s1021 = scalar_lea.vmem %s22, %s1020
        %p1022 = pneg %p639
        %p1023 = pneg %p636
        %p1024 = pneg %p660
        %p1025 = pneg %p657
        %p1026 = pneg %p681
        %p1027 = pneg %p678
        %p1028 = pneg %p707
        %p1029 = pneg %p704
        %s1030 = sand.u32 %s694, 1
        %s1031 = scalar_lea.sflag [#allocation4], %s1030
        %s1032 = sand.u32 %s694, 1
        %s1033 = smul.addr %s1032, 16
        %s1034 = scalar_lea.vmem [#allocation3], %s1033
        %p1035 = scmp.lt.s32.totalorder %s43, 1
        %s1036 = scalar_select %p1035, %s43, 1
        %s1037 = smul.addr %s1036, 8
        %s1038 = scalar_lea.vmem %s0, %s1037
        %p1039 = scmp.lt.s32.totalorder %s43, 1
        %s1040 = scalar_select %p1039, %s43, 1
        %s1041 = smul.addr %s1040, 4
        %s1042 = scalar_lea.vmem %s1, %s1041
        %p1043 = scmp.lt.s32.totalorder %s44, 1
        %s1044 = scalar_select %p1043, %s44, 1
        %s1045 = smul.addr %s1044, 48
        %s1046 = smul.addr %s1045, 8
        %s1047 = scalar_lea.vmem %s3, %s1046
        %p1048 = scmp.lt.s32.totalorder %s44, 1
        %s1049 = scalar_select %p1048, %s44, 1
        %s1050 = smul.addr %s1049, 3
        %s1051 = scalar_lea.vmem %s4, %s1050
        %p1052 = scmp.lt.s32.totalorder %s44, 1
        %s1053 = scalar_select %p1052, %s44, 1
        %s1054 = smul.addr %s1053, 16
        %s1055 = smul.addr %s1054, 8
        %s1056 = scalar_lea.vmem %s5, %s1055
        %p1057 = scmp.lt.s32.totalorder %s44, 1
        %s1058 = scalar_select %p1057, %s44, 1
        %s1059 = scalar_lea.vmem %s6, %s1058
        %p1060 = scmp.lt.s32.totalorder %s44, 1
        %s1061 = scalar_select %p1060, %s44, 1
        %s1062 = smul.addr %s1061, 16
        %s1063 = smul.addr %s1062, 8
        %s1064 = scalar_lea.vmem %s7, %s1063
        %p1065 = scmp.lt.s32.totalorder %s44, 1
        %s1066 = scalar_select %p1065, %s44, 1
        %s1067 = scalar_lea.vmem %s8, %s1066
        %p1068 = scmp.lt.s32.totalorder %s44, 1
        %s1069 = scalar_select %p1068, %s44, 1
        %s1070 = smul.addr %s1069, 32
        %s1071 = smul.addr %s1070, 8
        %s1072 = scalar_lea.vmem %s9, %s1071
        %p1073 = scmp.lt.s32.totalorder %s44, 1
        %s1074 = scalar_select %p1073, %s44, 1
        %s1075 = smul.addr %s1074, 2
        %s1076 = scalar_lea.vmem %s10, %s1075
        %p1077 = scmp.lt.s32.totalorder %s44, 1
        %s1078 = scalar_select %p1077, %s44, 1
        %s1079 = smul.addr %s1078, 16
        %s1080 = smul.addr %s1079, 8
        %s1081 = scalar_lea.vmem %s11, %s1080
        %p1082 = scmp.lt.s32.totalorder %s44, 1
        %s1083 = scalar_select %p1082, %s44, 1
        %s1084 = scalar_lea.vmem %s12, %s1083
        %p1085 = scmp.lt.s32.totalorder %s44, 1
        %s1086 = scalar_select %p1085, %s44, 1
        %s1087 = smul.addr %s1086, 32
        %s1088 = smul.addr %s1087, 8
        %s1089 = scalar_lea.vmem %s13, %s1088
        %p1090 = scmp.lt.s32.totalorder %s44, 1
        %s1091 = scalar_select %p1090, %s44, 1
        %s1092 = smul.addr %s1091, 2
        %s1093 = scalar_lea.vmem %s14, %s1092
        %p1094 = scmp.lt.s32.totalorder %s44, 1
        %s1095 = scalar_select %p1094, %s44, 1
        %s1096 = smul.addr %s1095, 32
        %s1097 = smul.addr %s1096, 8
        %s1098 = scalar_lea.vmem %s15, %s1097
        %p1099 = scmp.lt.s32.totalorder %s44, 1
        %s1100 = scalar_select %p1099, %s44, 1
        %s1101 = scalar_lea.vmem %s16, %s1100
        %p1102 = scmp.lt.s32.totalorder %s44, 1
        %s1103 = scalar_select %p1102, %s44, 1
        %s1104 = scalar_lea.vmem %s17, %s1103
        %p1105 = scmp.lt.s32.totalorder %s44, 1
        %s1106 = scalar_select %p1105, %s44, 1
        %s1107 = scalar_lea.vmem %s18, %s1106
        %p1108 = scmp.lt.s32.totalorder %s44, 1
        %s1109 = scalar_select %p1108, %s44, 1
        %s1110 = scalar_lea.vmem %s19, %s1109
        %p1111 = scmp.lt.s32.totalorder %s44, 1
        %s1112 = scalar_select %p1111, %s44, 1
        %s1113 = scalar_lea.vmem %s20, %s1112
        %p1114 = scmp.lt.s32.totalorder %s44, 1
        %s1115 = scalar_select %p1114, %s44, 1
        %s1116 = scalar_lea.vmem %s21, %s1115
        %p1117 = scmp.lt.s32.totalorder %s44, 1
        %s1118 = scalar_select %p1117, %s44, 1
        %s1119 = scalar_lea.vmem %s22, %s1118
        %p1120 = scmp.eq.s32.totalorder %s44, 0
        // Predicated region
        $region121: #{image_captioning_forward.3} parent=119 // pred_check
          %p1121 = pneg %p1120
        $region122: #{image_captioning_forward.3} parent=119 // pred_check_branch
          %1123 = sbr.rel (%p1121) target = $region124
        $region123: #{image_captioning_forward.3} parent=119 // pred_region
          %v1124 = vld [vmem:[%s1038] sm:$0xff]
          %1125 = vst [vmem:[#allocation2] sm:$0xff] %v1124
        $region124: #{image_captioning_forward.3} parent=119 // pred_fallthru
          _
        %v1126 = vld [vmem:[%s2] sm:$0xff]
        %v1127 = vld [vmem:[%s2 + $0x8] sm:$0xff]
        %v1128 = vld [vmem:[%s2 + $0x10] sm:$0xff]
        %v1129 = vld [vmem:[%s2 + $0x18] sm:$0xff]
        %v1130 = vld [vmem:[#allocation2] sm:$0xff]
        %v1131 = vld [vmem:[%s1042] sm:$0xf]
        %v1132 = vld [vmem:[%s1047] sm:$0xff]
        %v1133 = vld [vmem:[%s1047 + $0x8] sm:$0xff]
        %v1134 = vld [vmem:[%s1047 + $0x10] sm:$0xff]
        %v1135 = vld [vmem:[%s1047 + $0x18] sm:$0xff]
        %v1136 = vld [vmem:[%s1047 + $0x20] sm:$0xff]
        %v1137 = vld [vmem:[%s1047 + $0x28] sm:$0xff]
        %v1138 = vld [vmem:[%s1047 + $0x30] sm:$0xff]
        %v1139 = vld [vmem:[%s1047 + $0x38] sm:$0xff]
        %v1140 = vld [vmem:[%s1047 + $0x40] sm:$0xff]
        %v1141 = vld [vmem:[%s1047 + $0x48] sm:$0xff]
        %v1142 = vld [vmem:[%s1047 + $0x50] sm:$0xff]
        %v1143 = vld [vmem:[%s1047 + $0x58] sm:$0xff]
        %v1144 = vld [vmem:[%s1047 + $0x60] sm:$0xff]
        %v1145 = vld [vmem:[%s1047 + $0x68] sm:$0xff]
        %v1146 = vld [vmem:[%s1047 + $0x70] sm:$0xff]
        %v1147 = vld [vmem:[%s1047 + $0x78] sm:$0xff]
        %v1148 = vld [vmem:[%s1047 + $0x80] sm:$0xff]
        %v1149 = vld [vmem:[%s1047 + $0x88] sm:$0xff]
        %v1150 = vld [vmem:[%s1047 + $0x90] sm:$0xff]
        %v1151 = vld [vmem:[%s1047 + $0x98] sm:$0xff]
        %v1152 = vld [vmem:[%s1047 + $0xa0] sm:$0xff]
        %v1153 = vld [vmem:[%s1047 + $0xa8] sm:$0xff]
        %v1154 = vld [vmem:[%s1047 + $0xb0] sm:$0xff]
        %v1155 = vld [vmem:[%s1047 + $0xb8] sm:$0xff]
        %v1156 = vld [vmem:[%s1047 + $0xc0] sm:$0xff]
        %v1157 = vld [vmem:[%s1047 + $0xc8] sm:$0xff]
        %v1158 = vld [vmem:[%s1047 + $0xd0] sm:$0xff]
        %v1159 = vld [vmem:[%s1047 + $0xd8] sm:$0xff]
        %v1160 = vld [vmem:[%s1047 + $0xe0] sm:$0xff]
        %v1161 = vld [vmem:[%s1047 + $0xe8] sm:$0xff]
        %v1162 = vld [vmem:[%s1047 + $0xf0] sm:$0xff]
        %v1163 = vld [vmem:[%s1047 + $0xf8] sm:$0xff]
        %v1164 = vld [vmem:[%s1047 + $0x100] sm:$0xff]
        %v1165 = vld [vmem:[%s1047 + $0x108] sm:$0xff]
        %v1166 = vld [vmem:[%s1047 + $0x110] sm:$0xff]
        %v1167 = vld [vmem:[%s1047 + $0x118] sm:$0xff]
        %v1168 = vld [vmem:[%s1047 + $0x120] sm:$0xff]
        %v1169 = vld [vmem:[%s1047 + $0x128] sm:$0xff]
        %v1170 = vld [vmem:[%s1047 + $0x130] sm:$0xff]
        %v1171 = vld [vmem:[%s1047 + $0x138] sm:$0xff]
        %v1172 = vld [vmem:[%s1047 + $0x140] sm:$0xff]
        %v1173 = vld [vmem:[%s1047 + $0x148] sm:$0xff]
        %v1174 = vld [vmem:[%s1047 + $0x150] sm:$0xff]
        %v1175 = vld [vmem:[%s1047 + $0x158] sm:$0xff]
        %v1176 = vld [vmem:[%s1047 + $0x160] sm:$0xff]
        %v1177 = vld [vmem:[%s1047 + $0x168] sm:$0xff]
        %v1178 = vld [vmem:[%s1047 + $0x170] sm:$0xff]
        %v1179 = vld [vmem:[%s1047 + $0x178] sm:$0xff]
        %v1180 = vld [vmem:[%s1051] sm:$0x7]
        %v1182 = vlaneseq
        %v1183 = vshrl.u32 %v1182, 7
        %v1184 = vsub.s32 0, %v1183
        %v1185 = vrot.slane %v1180, %v1184
        %v1186 = vlaneseq
        %v1187 = vshrl.u32 %v1186, 7
        %v1188 = vsub.s32 1, %v1187
        %v1189 = vrot.slane %v1180, %v1188
        %v1190 = vlaneseq
        %v1191 = vshrl.u32 %v1190, 7
        %v1192 = vsub.s32 2, %v1191
        %v1193 = vrot.slane %v1180, %v1192
        %1197 = vmatprep.subr.mxu0 %v1133
        %1198 = vmatpush1.msra.mxu0 %v1132
        %1199 = vmatprep.subr.mxu0 %v1136
        %1200 = vmatpush1.msra.mxu0 %v1135
        %1201 = vmatprep.subr.mxu0 %v1139
        %1202 = vmatpush1.msra.mxu0 %v1138
        %1203 = vmatprep.subr.mxu0 %v1142
        %1204 = vmatpush1.msra.mxu0 %v1141
        %1205 = vmatprep.subr.mxu0 %v1145
        %1206 = vmatpush1.msra.mxu0 %v1144
        %1207 = vmatprep.subr.mxu0 %v1148
        %1208 = vmatpush1.msra.mxu0 %v1147
        %1209 = vmatprep.subr.mxu0 %v1151
        %1210 = vmatpush1.msra.mxu0 %v1150
        %1211 = vmatprep.subr.mxu0 %v1154
        %1212 = vmatpush1.msra.mxu0 %v1153
        %1213 = vmatprep.subr.mxu0 %v1157
        %1214 = vmatpush1.msra.mxu0 %v1156
        %1215 = vmatprep.subr.mxu0 %v1160
        %1216 = vmatpush1.msra.mxu0 %v1159
        %1217 = vmatprep.subr.mxu0 %v1163
        %1218 = vmatpush1.msra.mxu0 %v1162
        %1219 = vmatprep.subr.mxu0 %v1166
        %1220 = vmatpush1.msra.mxu0 %v1165
        %1221 = vmatprep.subr.mxu0 %v1169
        %1222 = vmatpush1.msra.mxu0 %v1168
        %1223 = vmatprep.subr.mxu0 %v1172
        %1224 = vmatpush1.msra.mxu0 %v1171
        %1225 = vmatprep.subr.mxu0 %v1175
        %1226 = vmatpush1.msra.mxu0 %v1174
        %1227 = vmatprep.subr.mxu0 %v1178
        %1228 = vmatpush1.msra.mxu0 %v1177
        %1229 = vmatprep.subr.mxu0 0.0
        %1230 = vmatpush1.msra.mxu0 0.0
        %1231 = vmatprep.subr.mxu0 0.0
        %1232 = vmatpush1.msra.mxu0 0.0
        %1233 = vmatprep.subr.mxu0 0.0
        %1234 = vmatpush1.msra.mxu0 0.0
        %1235 = vmatprep.subr.mxu0 0.0
        %1236 = vmatpush1.msra.mxu0 0.0
        %1237 = vmatprep.subr.mxu0 0.0
        %1238 = vmatpush1.msra.mxu0 0.0
        %1239 = vmatprep.subr.mxu0 0.0
        %1240 = vmatpush1.msra.mxu0 0.0
        %1241 = vmatprep.subr.mxu0 0.0
        %1242 = vmatpush1.msra.mxu0 0.0
        %1243 = vmatprep.subr.mxu0 0.0
        %1244 = vmatpush1.msra.mxu0 0.0
        %1245 = vmatprep.subr.mxu0 0.0
        %1246 = vmatpush1.msra.mxu0 0.0
        %1247 = vmatprep.subr.mxu0 0.0
        %1248 = vmatpush1.msra.mxu0 0.0
        %1249 = vmatprep.subr.mxu0 0.0
        %1250 = vmatpush1.msra.mxu0 0.0
        %1251 = vmatprep.subr.mxu0 0.0
        %1252 = vmatpush1.msra.mxu0 0.0
        %1253 = vmatprep.subr.mxu0 0.0
        %1254 = vmatpush1.msra.mxu0 0.0
        %1255 = vmatprep.subr.mxu0 0.0
        %1256 = vmatpush1.msra.mxu0 0.0
        %1257 = vmatprep.subr.mxu0 0.0
        %1258 = vmatpush1.msra.mxu0 0.0
        %1259 = vmatprep.subr.mxu0 0.0
        %1260 = vmatpush1.msra.mxu0 0.0
        %1261 = vmatprep.mubr.f32.mxu0 0.0
        %1262 = vmatmul.mubr.f32.gmra.mrb[0].mxu0 %v1130
        %v1263 = vpop.f32.mrb[0].mxu0
        %v1264 = vadd.f32 %v1185, %v1263
        %v1265 = vpop.f32.mrb[0].mxu0
        %v1266 = vadd.f32 %v1189, %v1265
        %1267 = vdwg.mxu0
        %1268 = vmatprep.subr.mxu0 0.0
        %1269 = vmatpush1.msra.mxu0 %v1134
        %1270 = vmatprep.subr.mxu0 0.0
        %1271 = vmatpush1.msra.mxu0 %v1137
        %1272 = vmatprep.subr.mxu0 0.0
        %1273 = vmatpush1.msra.mxu0 %v1140
        %1274 = vmatprep.subr.mxu0 0.0
        %1275 = vmatpush1.msra.mxu0 %v1143
        %1276 = vmatprep.subr.mxu0 0.0
        %1277 = vmatpush1.msra.mxu0 %v1146
        %1278 = vmatprep.subr.mxu0 0.0
        %1279 = vmatpush1.msra.mxu0 %v1149
        %1280 = vmatprep.subr.mxu0 0.0
        %1281 = vmatpush1.msra.mxu0 %v1152
        %1282 = vmatprep.subr.mxu0 0.0
        %1283 = vmatpush1.msra.mxu0 %v1155
        %1284 = vmatprep.subr.mxu0 0.0
        %1285 = vmatpush1.msra.mxu0 %v1158
        %1286 = vmatprep.subr.mxu0 0.0
        %1287 = vmatpush1.msra.mxu0 %v1161
        %1288 = vmatprep.subr.mxu0 0.0
        %1289 = vmatpush1.msra.mxu0 %v1164
        %1290 = vmatprep.subr.mxu0 0.0
        %1291 = vmatpush1.msra.mxu0 %v1167
        %1292 = vmatprep.subr.mxu0 0.0
        %1293 = vmatpush1.msra.mxu0 %v1170
        %1294 = vmatprep.subr.mxu0 0.0
        %1295 = vmatpush1.msra.mxu0 %v1173
        %1296 = vmatprep.subr.mxu0 0.0
        %1297 = vmatpush1.msra.mxu0 %v1176
        %1298 = vmatprep.subr.mxu0 0.0
        %1299 = vmatpush1.msra.mxu0 %v1179
        %1300 = vmatprep.subr.mxu0 0.0
        %1301 = vmatpush1.msra.mxu0 0.0
        %1302 = vmatprep.subr.mxu0 0.0
        %1303 = vmatpush1.msra.mxu0 0.0
        %1304 = vmatprep.subr.mxu0 0.0
        %1305 = vmatpush1.msra.mxu0 0.0
        %1306 = vmatprep.subr.mxu0 0.0
        %1307 = vmatpush1.msra.mxu0 0.0
        %1308 = vmatprep.subr.mxu0 0.0
        %1309 = vmatpush1.msra.mxu0 0.0
        %1310 = vmatprep.subr.mxu0 0.0
        %1311 = vmatpush1.msra.mxu0 0.0
        %1312 = vmatprep.subr.mxu0 0.0
        %1313 = vmatpush1.msra.mxu0 0.0
        %1314 = vmatprep.subr.mxu0 0.0
        %1315 = vmatpush1.msra.mxu0 0.0
        %1316 = vmatprep.subr.mxu0 0.0
        %1317 = vmatpush1.msra.mxu0 0.0
        %1318 = vmatprep.subr.mxu0 0.0
        %1319 = vmatpush1.msra.mxu0 0.0
        %1320 = vmatprep.subr.mxu0 0.0
        %1321 = vmatpush1.msra.mxu0 0.0
        %1322 = vmatprep.subr.mxu0 0.0
        %1323 = vmatpush1.msra.mxu0 0.0
        %1324 = vmatprep.subr.mxu0 0.0
        %1325 = vmatpush1.msra.mxu0 0.0
        %1326 = vmatprep.subr.mxu0 0.0
        %1327 = vmatpush1.msra.mxu0 0.0
        %1328 = vmatprep.subr.mxu0 0.0
        %1329 = vmatpush1.msra.mxu0 0.0
        %1330 = vmatprep.subr.mxu0 0.0
        %1331 = vmatpush1.msra.mxu0 0.0
        %1332 = vmatprep.mubr.f32.mxu0 0.0
        %1333 = vmatmul.mubr.f32.gmra.mrb[0].mxu0 %v1130
        %v1334 = vpop.f32.mrb[0].mxu0
        %v1335 = vadd.f32 %v1193, %v1334
        %v1336 = vpop.f32.mrb[0].mxu0
        %1337 = vdwg.mxu0
        %v1338 = vmul.f32 %v1264, %v1126
        %v1339 = vmul.f32 %v1264, %v1127
        %v1340 = vmul.f32 %v1264, %v1128
        %v1341 = vmul.f32 %v1264, %v1129
        %1342 = vmatprep.subr.mxu0 0.0
        %1343 = vmatpush1.xpose.msra.mxu0 %v1266
        %1344 = vmatprep.subr.mxu0 0.0
        %1345 = vmatpush1.xpose.msra.mxu0 0.0
        %1346 = vmatprep.subr.mxu0 0.0
        %1347 = vmatpush1.xpose.msra.mxu0 0.0
        %1348 = vmatprep.subr.mxu0 0.0
        %1349 = vmatpush1.xpose.msra.mxu0 0.0
        %1350 = vmatprep.subr.mxu0 0.0
        %1351 = vmatpush1.xpose.msra.mxu0 0.0
        %1352 = vmatprep.subr.mxu0 0.0
        %1353 = vmatpush1.xpose.msra.mxu0 0.0
        %1354 = vmatprep.subr.mxu0 0.0
        %1355 = vmatpush1.xpose.msra.mxu0 0.0
        %1356 = vmatprep.subr.mxu0 0.0
        %1357 = vmatpush1.xpose.msra.mxu0 0.0
        %1358 = vmatprep.subr.mxu0 0.0
        %1359 = vmatpush1.xpose.msra.mxu0 0.0
        %1360 = vmatprep.subr.mxu0 0.0
        %1361 = vmatpush1.xpose.msra.mxu0 0.0
        %1362 = vmatprep.subr.mxu0 0.0
        %1363 = vmatpush1.xpose.msra.mxu0 0.0
        %1364 = vmatprep.subr.mxu0 0.0
        %1365 = vmatpush1.xpose.msra.mxu0 0.0
        %1366 = vmatprep.subr.mxu0 0.0
        %1367 = vmatpush1.xpose.msra.mxu0 0.0
        %1368 = vmatprep.subr.mxu0 0.0
        %1369 = vmatpush1.xpose.msra.mxu0 0.0
        %1370 = vmatprep.subr.mxu0 0.0
        %1371 = vmatpush1.xpose.msra.mxu0 0.0
        %1372 = vmatprep.subr.mxu0 0.0
        %1373 = vmatpush1.xpose.msra.mxu0 0.0
        %1374 = vmatprep.subr.mxu0 0.0
        %1375 = vmatpush1.xpose.msra.mxu0 0.0
        %1376 = vmatprep.subr.mxu0 0.0
        %1377 = vmatpush1.xpose.msra.mxu0 0.0
        %1378 = vmatprep.subr.mxu0 0.0
        %1379 = vmatpush1.xpose.msra.mxu0 0.0
        %1380 = vmatprep.subr.mxu0 0.0
        %1381 = vmatpush1.xpose.msra.mxu0 0.0
        %1382 = vmatprep.subr.mxu0 0.0
        %1383 = vmatpush1.xpose.msra.mxu0 0.0
        %1384 = vmatprep.subr.mxu0 0.0
        %1385 = vmatpush1.xpose.msra.mxu0 0.0
        %1386 = vmatprep.subr.mxu0 0.0
        %1387 = vmatpush1.xpose.msra.mxu0 0.0
        %1388 = vmatprep.subr.mxu0 0.0
        %1389 = vmatpush1.xpose.msra.mxu0 0.0
        %1390 = vmatprep.subr.mxu0 0.0
        %1391 = vmatpush1.xpose.msra.mxu0 0.0
        %1392 = vmatprep.subr.mxu0 0.0
        %1393 = vmatpush1.xpose.msra.mxu0 0.0
        %1394 = vmatprep.subr.mxu0 0.0
        %1395 = vmatpush1.xpose.msra.mxu0 0.0
        %1396 = vmatprep.subr.mxu0 0.0
        %1397 = vmatpush1.xpose.msra.mxu0 0.0
        %1398 = vmatprep.subr.mxu0 0.0
        %1399 = vmatpush1.xpose.msra.mxu0 0.0
        %1400 = vmatprep.subr.mxu0 0.0
        %1401 = vmatpush1.xpose.msra.mxu0 0.0
        %1402 = vmatprep.subr.mxu0 0.0
        %1403 = vmatpush1.xpose.msra.mxu0 0.0
        %1404 = vmatprep.subr.mxu0 0.0
        %1405 = vmatpush1.xpose.msra.mxu0 0.0
        %1406 = vmatprep.mubr.f32.mxu0 0.0
        %1407 = vmatmul.mubr.f32.gmra.mrb[0].mxu0 %v1338
        %v1408 = vpop.f32.mrb[0].mxu0
        %v1409 = vadd.f32 0.0, %v1408
        %v1410 = vpop.f32.mrb[0].mxu0
        %1411 = vmatprep.mubr.f32.mxu0 0.0
        %1412 = vmatmul.mubr.f32.gmra.mrb[0].mxu0 %v1339
        %v1413 = vpop.f32.mrb[0].mxu0
        %v1414 = vadd.f32 0.0, %v1413
        %v1415 = vpop.f32.mrb[0].mxu0
        %1416 = vmatprep.mubr.f32.mxu0 0.0
        %1417 = vmatmul.mubr.f32.gmra.mrb[0].mxu0 %v1340
        %v1418 = vpop.f32.mrb[0].mxu0
        %v1419 = vadd.f32 0.0, %v1418
        %v1420 = vpop.f32.mrb[0].mxu0
        %1421 = vmatprep.mubr.f32.mxu0 0.0
        %1422 = vmatmul.mubr.f32.gmra.mrb[0].mxu0 %v1341
        %v1423 = vpop.f32.mrb[0].mxu0
        %v1424 = vadd.f32 0.0, %v1423
        %v1425 = vpop.f32.mrb[0].mxu0
        %1426 = vdwg.mxu0
        %v1427 = vmul.f32 %v1409, 0.17677669
        %v1428 = vmul.f32 %v1414, 0.17677669
        %v1429 = vmul.f32 %v1419, 0.17677669
        %v1430 = vmul.f32 %v1424, 0.17677669
        %vm1431 = vcmask 64512
        %v1432 = vsel %vm1431, %v1427, -inf
        %1433 = vmax.xlane.f32.xlu0 %v1432
        %v1434 = vpop.xlane.xlu0 %1433
        %v1435 = vsel %vm1431, %v1428, -inf
        %1436 = vmax.xlane.f32.xlu0 %v1435
        %v1437 = vpop.xlane.xlu0 %1436
        %v1438 = vsel %vm1431, %v1429, -inf
        %1439 = vmax.xlane.f32.xlu0 %v1438
        %v1440 = vpop.xlane.xlu0 %1439
        %v1441 = vsel %vm1431, %v1430, -inf
        %1442 = vmax.xlane.f32.xlu0 %v1441
        %v1443 = vpop.xlane.xlu0 %1442
        %v1444 = vsub.f32 %v1427, %v1434
        %v1445 = vsub.f32 %v1428, %v1437
        %v1446 = vsub.f32 %v1429, %v1440
        %v1447 = vsub.f32 %v1430, %v1443
        %v1448 = vmul.f32 %v1444, 1.442695
        %v1449 = vpow.pop %v1448
        %v1450 = vmul.f32 %v1445, 1.442695
        %v1451 = vpow.pop %v1450
        %v1452 = vmul.f32 %v1446, 1.442695
        %v1453 = vpow.pop %v1452
        %v1454 = vmul.f32 %v1447, 1.442695
        %v1455 = vpow.pop %v1454
        %v1456 = vsel %vm1431, %v1449, 0.0
        %1457 = vadd.xlane.f32.xlu0 %v1456
        %v1458 = vpop.xlane.xlu0 %1457
        %v1459 = vsel %vm1431, %v1451, 0.0
        %1460 = vadd.xlane.f32.xlu0 %v1459
        %v1461 = vpop.xlane.xlu0 %1460
        %v1462 = vsel %vm1431, %v1453, 0.0
        %1463 = vadd.xlane.f32.xlu0 %v1462
        %v1464 = vpop.xlane.xlu0 %1463
        %v1465 = vsel %vm1431, %v1455, 0.0
        %1466 = vadd.xlane.f32.xlu0 %v1465
        %v1467 = vpop.xlane.xlu0 %1466
        %v1468 = vrcp.pop %v1458
        %v1469 = vrcp.pop %v1461
        %v1470 = vrcp.pop %v1464
        %v1471 = vrcp.pop %v1467
        %v1472 = vmul.f32 %v1449, %v1468
        %v1473 = vmul.f32 %v1451, %v1469
        %v1474 = vmul.f32 %v1453, %v1470
        %v1475 = vmul.f32 %v1455, %v1471
        %v1477 = vsel %vm1431, %v1472, 0
        %v1480 = vsel %vm1431, %v1473, 0
        %v1483 = vsel %vm1431, %v1474, 0
        %v1486 = vsel %vm1431, %v1475, 0
        %1488 = vmatprep.subr.mxu0 0.0
        %1489 = vmatpush1.msra.mxu0 %v1335
        %1490 = vmatprep.subr.mxu0 0.0
        %1491 = vmatpush1.msra.mxu0 0.0
        %1492 = vmatprep.subr.mxu0 0.0
        %1493 = vmatpush1.msra.mxu0 0.0
        %1494 = vmatprep.subr.mxu0 0.0
        %1495 = vmatpush1.msra.mxu0 0.0
        %1496 = vmatprep.subr.mxu0 0.0
        %1497 = vmatpush1.msra.mxu0 0.0
        %1498 = vmatprep.subr.mxu0 0.0
        %1499 = vmatpush1.msra.mxu0 0.0
        %1500 = vmatprep.subr.mxu0 0.0
        %1501 = vmatpush1.msra.mxu0 0.0
        %1502 = vmatprep.subr.mxu0 0.0
        %1503 = vmatpush1.msra.mxu0 0.0
        %1504 = vmatprep.subr.mxu0 0.0
        %1505 = vmatpush1.msra.mxu0 0.0
        %1506 = vmatprep.subr.mxu0 0.0
        %1507 = vmatpush1.msra.mxu0 0.0
        %1508 = vmatprep.subr.mxu0 0.0
        %1509 = vmatpush1.msra.mxu0 0.0
        %1510 = vmatprep.subr.mxu0 0.0
        %1511 = vmatpush1.msra.mxu0 0.0
        %1512 = vmatprep.subr.mxu0 0.0
        %1513 = vmatpush1.msra.mxu0 0.0
        %1514 = vmatprep.subr.mxu0 0.0
        %1515 = vmatpush1.msra.mxu0 0.0
        %1516 = vmatprep.subr.mxu0 0.0
        %1517 = vmatpush1.msra.mxu0 0.0
        %1518 = vmatprep.subr.mxu0 0.0
        %1519 = vmatpush1.msra.mxu0 0.0
        %1520 = vmatprep.subr.mxu0 0.0
        %1521 = vmatpush1.msra.mxu0 0.0
        %1522 = vmatprep.subr.mxu0 0.0
        %1523 = vmatpush1.msra.mxu0 0.0
        %1524 = vmatprep.subr.mxu0 0.0
        %1525 = vmatpush1.msra.mxu0 0.0
        %1526 = vmatprep.subr.mxu0 0.0
        %1527 = vmatpush1.msra.mxu0 0.0
        %1528 = vmatprep.subr.mxu0 0.0
        %1529 = vmatpush1.msra.mxu0 0.0
        %1530 = vmatprep.subr.mxu0 0.0
        %1531 = vmatpush1.msra.mxu0 0.0
        %1532 = vmatprep.subr.mxu0 0.0
        %1533 = vmatpush1.msra.mxu0 0.0
        %1534 = vmatprep.subr.mxu0 0.0
        %1535 = vmatpush1.msra.mxu0 0.0
        %1536 = vmatprep.subr.mxu0 0.0
        %1537 = vmatpush1.msra.mxu0 0.0
        %1538 = vmatprep.subr.mxu0 0.0
        %1539 = vmatpush1.msra.mxu0 0.0
        %1540 = vmatprep.subr.mxu0 0.0
        %1541 = vmatpush1.msra.mxu0 0.0
        %1542 = vmatprep.subr.mxu0 0.0
        %1543 = vmatpush1.msra.mxu0 0.0
        %1544 = vmatprep.subr.mxu0 0.0
        %1545 = vmatpush1.msra.mxu0 0.0
        %1546 = vmatprep.subr.mxu0 0.0
        %1547 = vmatpush1.msra.mxu0 0.0
        %1548 = vmatprep.subr.mxu0 0.0
        %1549 = vmatpush1.msra.mxu0 0.0
        %1550 = vmatprep.subr.mxu0 0.0
        %1551 = vmatpush1.msra.mxu0 0.0
        %1552 = vmatprep.mubr.f32.mxu0 0.0
        %1553 = vmatmul.mubr.f32.gmra.mrb[0].mxu0 %v1477
        %v1554 = vpop.f32.mrb[0].mxu0
        %v1555 = vadd.f32 0.0, %v1554
        %v1556 = vpop.f32.mrb[0].mxu0
        %1557 = vmatprep.mubr.f32.mxu0 0.0
        %1558 = vmatmul.mubr.f32.gmra.mrb[0].mxu0 %v1480
        %v1559 = vpop.f32.mrb[0].mxu0
        %v1560 = vadd.f32 0.0, %v1559
        %v1561 = vpop.f32.mrb[0].mxu0
        %1562 = vmatprep.mubr.f32.mxu0 0.0
        %1563 = vmatmul.mubr.f32.gmra.mrb[0].mxu0 %v1483
        %v1564 = vpop.f32.mrb[0].mxu0
        %v1565 = vadd.f32 0.0, %v1564
        %v1566 = vpop.f32.mrb[0].mxu0
        %1567 = vmatprep.mubr.f32.mxu0 0.0
        %1568 = vmatmul.mubr.f32.gmra.mrb[0].mxu0 %v1486
        %v1569 = vpop.f32.mrb[0].mxu0
        %v1570 = vadd.f32 0.0, %v1569
        %v1571 = vpop.f32.mrb[0].mxu0
        %1572 = vdwg.mxu0
        %v1573 = vmul.f32 %v1555, %v1126
        %v1574 = vmul.f32 %v1560, %v1127
        %v1575 = vmul.f32 %v1565, %v1128
        %v1576 = vmul.f32 %v1570, %v1129
        %v1577 = vadd.f32 %v1573, %v1574
        %v1578 = vadd.f32 %v1577, %v1575
        %v1579 = vadd.f32 %v1578, %v1576
        %v1580 = vld [vmem:[%s1056] sm:$0xff]
        %v1581 = vld [vmem:[%s1056 + $0x8] sm:$0xff]
        %v1582 = vld [vmem:[%s1056 + $0x10] sm:$0xff]
        %v1583 = vld [vmem:[%s1056 + $0x18] sm:$0xff]
        %v1584 = vld [vmem:[%s1056 + $0x20] sm:$0xff]
        %v1585 = vld [vmem:[%s1056 + $0x28] sm:$0xff]
        %v1586 = vld [vmem:[%s1056 + $0x30] sm:$0xff]
        %v1587 = vld [vmem:[%s1056 + $0x38] sm:$0xff]
        %v1588 = vld [vmem:[%s1056 + $0x40] sm:$0xff]
        %v1589 = vld [vmem:[%s1056 + $0x48] sm:$0xff]
        %v1590 = vld [vmem:[%s1056 + $0x50] sm:$0xff]
        %v1591 = vld [vmem:[%s1056 + $0x58] sm:$0xff]
        %v1592 = vld [vmem:[%s1056 + $0x60] sm:$0xff]
        %v1593 = vld [vmem:[%s1056 + $0x68] sm:$0xff]
        %v1594 = vld [vmem:[%s1056 + $0x70] sm:$0xff]
        %v1595 = vld [vmem:[%s1056 + $0x78] sm:$0xff]
        %v1596 = vld [vmem:[%s1059] sm:$0x1]
        %v1598 = vlaneseq
        %v1599 = vshrl.u32 %v1598, 7
        %v1600 = vsub.s32 0, %v1599
        %v1601 = vrot.slane %v1596, %v1600
        %1603 = vmatprep.subr.mxu0 0.0
        %1604 = vmatpush1.msra.mxu0 %v1580
        %1605 = vmatprep.subr.mxu0 0.0
        %1606 = vmatpush1.msra.mxu0 %v1581
        %1607 = vmatprep.subr.mxu0 0.0
        %1608 = vmatpush1.msra.mxu0 %v1582
        %1609 = vmatprep.subr.mxu0 0.0
        %1610 = vmatpush1.msra.mxu0 %v1583
        %1611 = vmatprep.subr.mxu0 0.0
        %1612 = vmatpush1.msra.mxu0 %v1584
        %1613 = vmatprep.subr.mxu0 0.0
        %1614 = vmatpush1.msra.mxu0 %v1585
        %1615 = vmatprep.subr.mxu0 0.0
        %1616 = vmatpush1.msra.mxu0 %v1586
        %1617 = vmatprep.subr.mxu0 0.0
        %1618 = vmatpush1.msra.mxu0 %v1587
        %1619 = vmatprep.subr.mxu0 0.0
        %1620 = vmatpush1.msra.mxu0 %v1588
        %1621 = vmatprep.subr.mxu0 0.0
        %1622 = vmatpush1.msra.mxu0 %v1589
        %1623 = vmatprep.subr.mxu0 0.0
        %1624 = vmatpush1.msra.mxu0 %v1590
        %1625 = vmatprep.subr.mxu0 0.0
        %1626 = vmatpush1.msra.mxu0 %v1591
        %1627 = vmatprep.subr.mxu0 0.0
        %1628 = vmatpush1.msra.mxu0 %v1592
        %1629 = vmatprep.subr.mxu0 0.0
        %1630 = vmatpush1.msra.mxu0 %v1593
        %1631 = vmatprep.subr.mxu0 0.0
        %1632 = vmatpush1.msra.mxu0 %v1594
        %1633 = vmatprep.subr.mxu0 0.0
        %1634 = vmatpush1.msra.mxu0 %v1595
        %1635 = vmatprep.subr.mxu0 0.0
        %1636 = vmatpush1.msra.mxu0 0.0
        %1637 = vmatprep.subr.mxu0 0.0
        %1638 = vmatpush1.msra.mxu0 0.0
        %1639 = vmatprep.subr.mxu0 0.0
        %1640 = vmatpush1.msra.mxu0 0.0
        %1641 = vmatprep.subr.mxu0 0.0
        %1642 = vmatpush1.msra.mxu0 0.0
        %1643 = vmatprep.subr.mxu0 0.0
        %1644 = vmatpush1.msra.mxu0 0.0
        %1645 = vmatprep.subr.mxu0 0.0
        %1646 = vmatpush1.msra.mxu0 0.0
        %1647 = vmatprep.subr.mxu0 0.0
        %1648 = vmatpush1.msra.mxu0 0.0
        %1649 = vmatprep.subr.mxu0 0.0
        %1650 = vmatpush1.msra.mxu0 0.0
        %1651 = vmatprep.subr.mxu0 0.0
        %1652 = vmatpush1.msra.mxu0 0.0
        %1653 = vmatprep.subr.mxu0 0.0
        %1654 = vmatpush1.msra.mxu0 0.0
        %1655 = vmatprep.subr.mxu0 0.0
        %1656 = vmatpush1.msra.mxu0 0.0
        %1657 = vmatprep.subr.mxu0 0.0
        %1658 = vmatpush1.msra.mxu0 0.0
        %1659 = vmatprep.subr.mxu0 0.0
        %1660 = vmatpush1.msra.mxu0 0.0
        %1661 = vmatprep.subr.mxu0 0.0
        %1662 = vmatpush1.msra.mxu0 0.0
        %1663 = vmatprep.subr.mxu0 0.0
        %1664 = vmatpush1.msra.mxu0 0.0
        %1665 = vmatprep.subr.mxu0 0.0
        %1666 = vmatpush1.msra.mxu0 0.0
        %1667 = vmatprep.mubr.f32.mxu0 0.0
        %1668 = vmatmul.mubr.f32.gmra.mrb[0].mxu0 %v1579
        %v1669 = vpop.f32.mrb[0].mxu0
        %v1670 = vadd.f32 %v1601, %v1669
        %v1671 = vpop.f32.mrb[0].mxu0
        %1672 = vdwg.mxu0
        %v1673 = vadd.f32 %v1130, %v1670
        %1674 = vadd.xlane.f32.xlu0 %v1673
        %v1675 = vpop.xlane.xlu0 %1674
        %v1676 = vrcp.pop 128.0
        %v1677 = vmul.f32 %v1675, %v1676
        %v1678 = vsub.f32 %v1673, %v1677
        %v1679 = vmul.f32 %v1678, %v1678
        %1680 = vadd.xlane.f32.xlu0 %v1679
        %v1681 = vpop.xlane.xlu0 %1680
        %v1682 = vmul.f32 %v1681, %v1676
        %v1683 = vadd.f32 %v1682, 1e-05
        %v1684 = vrsqrt.pop %v1683
        %v1685 = vmul.f32 %v1678, %v1684
        %v1686 = vld [vmem:[%s1104] sm:$0x1]
        %v1688 = vlaneseq
        %v1689 = vshrl.u32 %v1688, 7
        %v1690 = vsub.s32 0, %v1689
        %v1691 = vrot.slane %v1686, %v1690
        %v1693 = vmul.f32 %v1685, %v1691
        %v1694 = vld [vmem:[%s1107] sm:$0x1]
        %v1696 = vlaneseq
        %v1697 = vshrl.u32 %v1696, 7
        %v1698 = vsub.s32 0, %v1697
        %v1699 = vrot.slane %v1694, %v1698
        %v1701 = vadd.f32 %v1693, %v1699
        %v1702 = vld [vmem:[%s1064] sm:$0xff]
        %v1703 = vld [vmem:[%s1064 + $0x8] sm:$0xff]
        %v1704 = vld [vmem:[%s1064 + $0x10] sm:$0xff]
        %v1705 = vld [vmem:[%s1064 + $0x18] sm:$0xff]
        %v1706 = vld [vmem:[%s1064 + $0x20] sm:$0xff]
        %v1707 = vld [vmem:[%s1064 + $0x28] sm:$0xff]
        %v1708 = vld [vmem:[%s1064 + $0x30] sm:$0xff]
        %v1709 = vld [vmem:[%s1064 + $0x38] sm:$0xff]
        %v1710 = vld [vmem:[%s1064 + $0x40] sm:$0xff]
        %v1711 = vld [vmem:[%s1064 + $0x48] sm:$0xff]
        %v1712 = vld [vmem:[%s1064 + $0x50] sm:$0xff]
        %v1713 = vld [vmem:[%s1064 + $0x58] sm:$0xff]
        %v1714 = vld [vmem:[%s1064 + $0x60] sm:$0xff]
        %v1715 = vld [vmem:[%s1064 + $0x68] sm:$0xff]
        %v1716 = vld [vmem:[%s1064 + $0x70] sm:$0xff]
        %v1717 = vld [vmem:[%s1064 + $0x78] sm:$0xff]
        %v1718 = vld [vmem:[%s1067] sm:$0x1]
        %v1720 = vlaneseq
        %v1721 = vshrl.u32 %v1720, 7
        %v1722 = vsub.s32 0, %v1721
        %v1723 = vrot.slane %v1718, %v1722
        %1725 = vmatprep.subr.mxu0 0.0
        %1726 = vmatpush1.msra.mxu0 %v1702
        %1727 = vmatprep.subr.mxu0 0.0
        %1728 = vmatpush1.msra.mxu0 %v1703
        %1729 = vmatprep.subr.mxu0 0.0
        %1730 = vmatpush1.msra.mxu0 %v1704
        %1731 = vmatprep.subr.mxu0 0.0
        %1732 = vmatpush1.msra.mxu0 %v1705
        %1733 = vmatprep.subr.mxu0 0.0
        %1734 = vmatpush1.msra.mxu0 %v1706
        %1735 = vmatprep.subr.mxu0 0.0
        %1736 = vmatpush1.msra.mxu0 %v1707
        %1737 = vmatprep.subr.mxu0 0.0
        %1738 = vmatpush1.msra.mxu0 %v1708
        %1739 = vmatprep.subr.mxu0 0.0
        %1740 = vmatpush1.msra.mxu0 %v1709
        %1741 = vmatprep.subr.mxu0 0.0
        %1742 = vmatpush1.msra.mxu0 %v1710
        %1743 = vmatprep.subr.mxu0 0.0
        %1744 = vmatpush1.msra.mxu0 %v1711
        %1745 = vmatprep.subr.mxu0 0.0
        %1746 = vmatpush1.msra.mxu0 %v1712
        %1747 = vmatprep.subr.mxu0 0.0
        %1748 = vmatpush1.msra.mxu0 %v1713
        %1749 = vmatprep.subr.mxu0 0.0
        %1750 = vmatpush1.msra.mxu0 %v1714
        %1751 = vmatprep.subr.mxu0 0.0
        %1752 = vmatpush1.msra.mxu0 %v1715
        %1753 = vmatprep.subr.mxu0 0.0
        %1754 = vmatpush1.msra.mxu0 %v1716
        %1755 = vmatprep.subr.mxu0 0.0
        %1756 = vmatpush1.msra.mxu0 %v1717
        %1757 = vmatprep.subr.mxu0 0.0
        %1758 = vmatpush1.msra.mxu0 0.0
        %1759 = vmatprep.subr.mxu0 0.0
        %1760 = vmatpush1.msra.mxu0 0.0
        %1761 = vmatprep.subr.mxu0 0.0
        %1762 = vmatpush1.msra.mxu0 0.0
        %1763 = vmatprep.subr.mxu0 0.0
        %1764 = vmatpush1.msra.mxu0 0.0
        %1765 = vmatprep.subr.mxu0 0.0
        %1766 = vmatpush1.msra.mxu0 0.0
        %1767 = vmatprep.subr.mxu0 0.0
        %1768 = vmatpush1.msra.mxu0 0.0
        %1769 = vmatprep.subr.mxu0 0.0
        %1770 = vmatpush1.msra.mxu0 0.0
        %1771 = vmatprep.subr.mxu0 0.0
        %1772 = vmatpush1.msra.mxu0 0.0
        %1773 = vmatprep.subr.mxu0 0.0
        %1774 = vmatpush1.msra.mxu0 0.0
        %1775 = vmatprep.subr.mxu0 0.0
        %1776 = vmatpush1.msra.mxu0 0.0
        %1777 = vmatprep.subr.mxu0 0.0
        %1778 = vmatpush1.msra.mxu0 0.0
        %1779 = vmatprep.subr.mxu0 0.0
        %1780 = vmatpush1.msra.mxu0 0.0
        %1781 = vmatprep.subr.mxu0 0.0
        %1782 = vmatpush1.msra.mxu0 0.0
        %1783 = vmatprep.subr.mxu0 0.0
        %1784 = vmatpush1.msra.mxu0 0.0
        %1785 = vmatprep.subr.mxu0 0.0
        %1786 = vmatpush1.msra.mxu0 0.0
        %1787 = vmatprep.subr.mxu0 0.0
        %1788 = vmatpush1.msra.mxu0 0.0
        %1789 = vmatprep.mubr.f32.mxu0 0.0
        %1790 = vmatmul.mubr.f32.gmra.mrb[0].mxu0 %v1701
        %v1791 = vpop.f32.mrb[0].mxu0
        %v1792 = vadd.f32 %v1723, %v1791
        %v1793 = vpop.f32.mrb[0].mxu0
        %1794 = vdwg.mxu0
        %v1795 = vld [vmem:[%s1072] sm:$0xff]
        %v1796 = vld [vmem:[%s1072 + $0x8] sm:$0xff]
        %v1797 = vld [vmem:[%s1072 + $0x10] sm:$0xff]
        %v1798 = vld [vmem:[%s1072 + $0x18] sm:$0xff]
        %v1799 = vld [vmem:[%s1072 + $0x20] sm:$0xff]
        %v1800 = vld [vmem:[%s1072 + $0x28] sm:$0xff]
        %v1801 = vld [vmem:[%s1072 + $0x30] sm:$0xff]
        %v1802 = vld [vmem:[%s1072 + $0x38] sm:$0xff]
        %v1803 = vld [vmem:[%s1072 + $0x40] sm:$0xff]
        %v1804 = vld [vmem:[%s1072 + $0x48] sm:$0xff]
        %v1805 = vld [vmem:[%s1072 + $0x50] sm:$0xff]
        %v1806 = vld [vmem:[%s1072 + $0x58] sm:$0xff]
        %v1807 = vld [vmem:[%s1072 + $0x60] sm:$0xff]
        %v1808 = vld [vmem:[%s1072 + $0x68] sm:$0xff]
        %v1809 = vld [vmem:[%s1072 + $0x70] sm:$0xff]
        %v1810 = vld [vmem:[%s1072 + $0x78] sm:$0xff]
        %v1811 = vld [vmem:[%s1072 + $0x80] sm:$0xff]
        %v1812 = vld [vmem:[%s1072 + $0x88] sm:$0xff]
        %v1813 = vld [vmem:[%s1072 + $0x90] sm:$0xff]
        %v1814 = vld [vmem:[%s1072 + $0x98] sm:$0xff]
        %v1815 = vld [vmem:[%s1072 + $0xa0] sm:$0xff]
        %v1816 = vld [vmem:[%s1072 + $0xa8] sm:$0xff]
        %v1817 = vld [vmem:[%s1072 + $0xb0] sm:$0xff]
        %v1818 = vld [vmem:[%s1072 + $0xb8] sm:$0xff]
        %v1819 = vld [vmem:[%s1072 + $0xc0] sm:$0xff]
        %v1820 = vld [vmem:[%s1072 + $0xc8] sm:$0xff]
        %v1821 = vld [vmem:[%s1072 + $0xd0] sm:$0xff]
        %v1822 = vld [vmem:[%s1072 + $0xd8] sm:$0xff]
        %v1823 = vld [vmem:[%s1072 + $0xe0] sm:$0xff]
        %v1824 = vld [vmem:[%s1072 + $0xe8] sm:$0xff]
        %v1825 = vld [vmem:[%s1072 + $0xf0] sm:$0xff]
        %v1826 = vld [vmem:[%s1072 + $0xf8] sm:$0xff]
        %v1827 = vld [vmem:[%s1076] sm:$0x3]
        %v1829 = vlaneseq
        %v1830 = vshrl.u32 %v1829, 7
        %v1831 = vsub.s32 0, %v1830
        %v1832 = vrot.slane %v1827, %v1831
        %v1833 = vlaneseq
        %v1834 = vshrl.u32 %v1833, 7
        %v1835 = vsub.s32 1, %v1834
        %v1836 = vrot.slane %v1827, %v1835
        %1839 = vmatprep.subr.mxu0 %v1796
        %1840 = vmatpush1.msra.mxu0 %v1795
        %1841 = vmatprep.subr.mxu0 %v1798
        %1842 = vmatpush1.msra.mxu0 %v1797
        %1843 = vmatprep.subr.mxu0 %v1800
        %1844 = vmatpush1.msra.mxu0 %v1799
        %1845 = vmatprep.subr.mxu0 %v1802
        %1846 = vmatpush1.msra.mxu0 %v1801
        %1847 = vmatprep.subr.mxu0 %v1804
        %1848 = vmatpush1.msra.mxu0 %v1803
        %1849 = vmatprep.subr.mxu0 %v1806
        %1850 = vmatpush1.msra.mxu0 %v1805
        %1851 = vmatprep.subr.mxu0 %v1808
        %1852 = vmatpush1.msra.mxu0 %v1807
        %1853 = vmatprep.subr.mxu0 %v1810
        %1854 = vmatpush1.msra.mxu0 %v1809
        %1855 = vmatprep.subr.mxu0 %v1812
        %1856 = vmatpush1.msra.mxu0 %v1811
        %1857 = vmatprep.subr.mxu0 %v1814
        %1858 = vmatpush1.msra.mxu0 %v1813
        %1859 = vmatprep.subr.mxu0 %v1816
        %1860 = vmatpush1.msra.mxu0 %v1815
        %1861 = vmatprep.subr.mxu0 %v1818
        %1862 = vmatpush1.msra.mxu0 %v1817
        %1863 = vmatprep.subr.mxu0 %v1820
        %1864 = vmatpush1.msra.mxu0 %v1819
        %1865 = vmatprep.subr.mxu0 %v1822
        %1866 = vmatpush1.msra.mxu0 %v1821
        %1867 = vmatprep.subr.mxu0 %v1824
        %1868 = vmatpush1.msra.mxu0 %v1823
        %1869 = vmatprep.subr.mxu0 %v1826
        %1870 = vmatpush1.msra.mxu0 %v1825
        %1871 = vmatprep.subr.mxu0 0.0
        %1872 = vmatpush1.msra.mxu0 0.0
        %1873 = vmatprep.subr.mxu0 0.0
        %1874 = vmatpush1.msra.mxu0 0.0
        %1875 = vmatprep.subr.mxu0 0.0
        %1876 = vmatpush1.msra.mxu0 0.0
        %1877 = vmatprep.subr.mxu0 0.0
        %1878 = vmatpush1.msra.mxu0 0.0
        %1879 = vmatprep.subr.mxu0 0.0
        %1880 = vmatpush1.msra.mxu0 0.0
        %1881 = vmatprep.subr.mxu0 0.0
        %1882 = vmatpush1.msra.mxu0 0.0
        %1883 = vmatprep.subr.mxu0 0.0
        %1884 = vmatpush1.msra.mxu0 0.0
        %1885 = vmatprep.subr.mxu0 0.0
        %1886 = vmatpush1.msra.mxu0 0.0
        %1887 = vmatprep.subr.mxu0 0.0
        %1888 = vmatpush1.msra.mxu0 0.0
        %1889 = vmatprep.subr.mxu0 0.0
        %1890 = vmatpush1.msra.mxu0 0.0
        %1891 = vmatprep.subr.mxu0 0.0
        %1892 = vmatpush1.msra.mxu0 0.0
        %1893 = vmatprep.subr.mxu0 0.0
        %1894 = vmatpush1.msra.mxu0 0.0
        %1895 = vmatprep.subr.mxu0 0.0
        %1896 = vmatpush1.msra.mxu0 0.0
        %1897 = vmatprep.subr.mxu0 0.0
        %1898 = vmatpush1.msra.mxu0 0.0
        %1899 = vmatprep.subr.mxu0 0.0
        %1900 = vmatpush1.msra.mxu0 0.0
        %1901 = vmatprep.subr.mxu0 0.0
        %1902 = vmatpush1.msra.mxu0 0.0
        %1903 = vmatprep.mubr.f32.mxu0 0.0
        %1904 = vmatmul.mubr.f32.gmra.mrb[0].mxu0 %v1131
        %v1905 = vpop.f32.mrb[0].mxu0
        %v1906 = vadd.f32 %v1832, %v1905
        %v1907 = vpop.f32.mrb[0].mxu0
        %v1908 = vadd.f32 %v1836, %v1907
        %1909 = vdwg.mxu0
        %v1910 = vmul.f32 %v1792, %v1126
        %v1911 = vmul.f32 %v1792, %v1127
        %v1912 = vmul.f32 %v1792, %v1128
        %v1913 = vmul.f32 %v1792, %v1129
        %1914 = vmatprep.subr.mxu0 0.0
        %1915 = vmatpush1.xpose.msra.mxu0 %v1906
        %1916 = vmatprep.subr.mxu0 0.0
        %1917 = vmatpush1.xpose.msra.mxu0 0.0
        %1918 = vmatprep.subr.mxu0 0.0
        %1919 = vmatpush1.xpose.msra.mxu0 0.0
        %1920 = vmatprep.subr.mxu0 0.0
        %1921 = vmatpush1.xpose.msra.mxu0 0.0
        %1922 = vmatprep.subr.mxu0 0.0
        %1923 = vmatpush1.xpose.msra.mxu0 0.0
        %1924 = vmatprep.subr.mxu0 0.0
        %1925 = vmatpush1.xpose.msra.mxu0 0.0
        %1926 = vmatprep.subr.mxu0 0.0
        %1927 = vmatpush1.xpose.msra.mxu0 0.0
        %1928 = vmatprep.subr.mxu0 0.0
        %1929 = vmatpush1.xpose.msra.mxu0 0.0
        %1930 = vmatprep.subr.mxu0 0.0
        %1931 = vmatpush1.xpose.msra.mxu0 0.0
        %1932 = vmatprep.subr.mxu0 0.0
        %1933 = vmatpush1.xpose.msra.mxu0 0.0
        %1934 = vmatprep.subr.mxu0 0.0
        %1935 = vmatpush1.xpose.msra.mxu0 0.0
        %1936 = vmatprep.subr.mxu0 0.0
        %1937 = vmatpush1.xpose.msra.mxu0 0.0
        %1938 = vmatprep.subr.mxu0 0.0
        %1939 = vmatpush1.xpose.msra.mxu0 0.0
        %1940 = vmatprep.subr.mxu0 0.0
        %1941 = vmatpush1.xpose.msra.mxu0 0.0
        %1942 = vmatprep.subr.mxu0 0.0
        %1943 = vmatpush1.xpose.msra.mxu0 0.0
        %1944 = vmatprep.subr.mxu0 0.0
        %1945 = vmatpush1.xpose.msra.mxu0 0.0
        %1946 = vmatprep.subr.mxu0 0.0
        %1947 = vmatpush1.xpose.msra.mxu0 0.0
        %1948 = vmatprep.subr.mxu0 0.0
        %1949 = vmatpush1.xpose.msra.mxu0 0.0
        %1950 = vmatprep.subr.mxu0 0.0
        %1951 = vmatpush1.xpose.msra.mxu0 0.0
        %1952 = vmatprep.subr.mxu0 0.0
        %1953 = vmatpush1.xpose.msra.mxu0 0.0
        %1954 = vmatprep.subr.mxu0 0.0
        %1955 = vmatpush1.xpose.msra.mxu0 0.0
        %1956 = vmatprep.subr.mxu0 0.0
        %1957 = vmatpush1.xpose.msra.mxu0 0.0
        %1958 = vmatprep.subr.mxu0 0.0
        %1959 = vmatpush1.xpose.msra.mxu0 0.0
        %1960 = vmatprep.subr.mxu0 0.0
        %1961 = vmatpush1.xpose.msra.mxu0 0.0
        %1962 = vmatprep.subr.mxu0 0.0
        %1963 = vmatpush1.xpose.msra.mxu0 0.0
        %1964 = vmatprep.subr.mxu0 0.0
        %1965 = vmatpush1.xpose.msra.mxu0 0.0
        %1966 = vmatprep.subr.mxu0 0.0
        %1967 = vmatpush1.xpose.msra.mxu0 0.0
        %1968 = vmatprep.subr.mxu0 0.0
        %1969 = vmatpush1.xpose.msra.mxu0 0.0
        %1970 = vmatprep.subr.mxu0 0.0
        %1971 = vmatpush1.xpose.msra.mxu0 0.0
        %1972 = vmatprep.subr.mxu0 0.0
        %1973 = vmatpush1.xpose.msra.mxu0 0.0
        %1974 = vmatprep.subr.mxu0 0.0
        %1975 = vmatpush1.xpose.msra.mxu0 0.0
        %1976 = vmatprep.subr.mxu0 0.0
        %1977 = vmatpush1.xpose.msra.mxu0 0.0
        %1978 = vmatprep.mubr.f32.mxu0 0.0
        %1979 = vmatmul.mubr.f32.gmra.mrb[0].mxu0 %v1910
        %v1980 = vpop.f32.mrb[0].mxu0
        %v1981 = vadd.f32 0.0, %v1980
        %v1982 = vpop.f32.mrb[0].mxu0
        %1983 = vmatprep.mubr.f32.mxu0 0.0
        %1984 = vmatmul.mubr.f32.gmra.mrb[0].mxu0 %v1911
        %v1985 = vpop.f32.mrb[0].mxu0
        %v1986 = vadd.f32 0.0, %v1985
        %v1987 = vpop.f32.mrb[0].mxu0
        %1988 = vmatprep.mubr.f32.mxu0 0.0
        %1989 = vmatmul.mubr.f32.gmra.mrb[0].mxu0 %v1912
        %v1990 = vpop.f32.mrb[0].mxu0
        %v1991 = vadd.f32 0.0, %v1990
        %v1992 = vpop.f32.mrb[0].mxu0
        %1993 = vmatprep.mubr.f32.mxu0 0.0
        %1994 = vmatmul.mubr.f32.gmra.mrb[0].mxu0 %v1913
        %v1995 = vpop.f32.mrb[0].mxu0
        %v1996 = vadd.f32 0.0, %v1995
        %v1997 = vpop.f32.mrb[0].mxu0
        %1998 = vdwg.mxu0
        %v1999 = vmul.f32 %v1981, 0.17677669
        %v2000 = vmul.f32 %v1986, 0.17677669
        %v2001 = vmul.f32 %v1991, 0.17677669
        %v2002 = vmul.f32 %v1996, 0.17677669
        %vm2003 = vcmask 31744
        %v2004 = vsel %vm2003, %v1999, -inf
        %2005 = vmax.xlane.f32.xlu0 %v2004
        %v2006 = vpop.xlane.xlu0 %2005
        %v2007 = vsel %vm2003, %v2000, -inf
        %2008 = vmax.xlane.f32.xlu0 %v2007
        %v2009 = vpop.xlane.xlu0 %2008
        %v2010 = vsel %vm2003, %v2001, -inf
        %2011 = vmax.xlane.f32.xlu0 %v2010
        %v2012 = vpop.xlane.xlu0 %2011
        %v2013 = vsel %vm2003, %v2002, -inf
        %2014 = vmax.xlane.f32.xlu0 %v2013
        %v2015 = vpop.xlane.xlu0 %2014
        %v2016 = vsub.f32 %v1999, %v2006
        %v2017 = vsub.f32 %v2000, %v2009
        %v2018 = vsub.f32 %v2001, %v2012
        %v2019 = vsub.f32 %v2002, %v2015
        %v2020 = vmul.f32 %v2016, 1.442695
        %v2021 = vpow.pop %v2020
        %v2022 = vmul.f32 %v2017, 1.442695
        %v2023 = vpow.pop %v2022
        %v2024 = vmul.f32 %v2018, 1.442695
        %v2025 = vpow.pop %v2024
        %v2026 = vmul.f32 %v2019, 1.442695
        %v2027 = vpow.pop %v2026
        %v2028 = vsel %vm2003, %v2021, 0.0
        %2029 = vadd.xlane.f32.xlu0 %v2028
        %v2030 = vpop.xlane.xlu0 %2029
        %v2031 = vsel %vm2003, %v2023, 0.0
        %2032 = vadd.xlane.f32.xlu0 %v2031
        %v2033 = vpop.xlane.xlu0 %2032
        %v2034 = vsel %vm2003, %v2025, 0.0
        %2035 = vadd.xlane.f32.xlu0 %v2034
        %v2036 = vpop.xlane.xlu0 %2035
        %v2037 = vsel %vm2003, %v2027, 0.0
        %2038 = vadd.xlane.f32.xlu0 %v2037
        %v2039 = vpop.xlane.xlu0 %2038
        %v2040 = vrcp.pop %v2030
        %v2041 = vrcp.pop %v2033
        %v2042 = vrcp.pop %v2036
        %v2043 = vrcp.pop %v2039
        %v2044 = vmul.f32 %v2021, %v2040
        %v2045 = vmul.f32 %v2023, %v2041
        %v2046 = vmul.f32 %v2025, %v2042
        %v2047 = vmul.f32 %v2027, %v2043
        %v2049 = vsel %vm2003, %v2044, 0
        %v2052 = vsel %vm2003, %v2045, 0
        %v2055 = vsel %vm2003, %v2046, 0
        %v2058 = vsel %vm2003, %v2047, 0
        %vm2060 = vcmask 1043456
        %v2062 = vsel %vm2060, %v1908, 0
        %2064 = vmatprep.subr.mxu0 0.0
        %2065 = vmatpush1.msra.mxu0 %v2062
        %2066 = vmatprep.subr.mxu0 0.0
        %2067 = vmatpush1.msra.mxu0 0.0
        %2068 = vmatprep.subr.mxu0 0.0
        %2069 = vmatpush1.msra.mxu0 0.0
        %2070 = vmatprep.subr.mxu0 0.0
        %2071 = vmatpush1.msra.mxu0 0.0
        %2072 = vmatprep.subr.mxu0 0.0
        %2073 = vmatpush1.msra.mxu0 0.0
        %2074 = vmatprep.subr.mxu0 0.0
        %2075 = vmatpush1.msra.mxu0 0.0
        %2076 = vmatprep.subr.mxu0 0.0
        %2077 = vmatpush1.msra.mxu0 0.0
        %2078 = vmatprep.subr.mxu0 0.0
        %2079 = vmatpush1.msra.mxu0 0.0
        %2080 = vmatprep.subr.mxu0 0.0
        %2081 = vmatpush1.msra.mxu0 0.0
        %2082 = vmatprep.subr.mxu0 0.0
        %2083 = vmatpush1.msra.mxu0 0.0
        %2084 = vmatprep.subr.mxu0 0.0
        %2085 = vmatpush1.msra.mxu0 0.0
        %2086 = vmatprep.subr.mxu0 0.0
        %2087 = vmatpush1.msra.mxu0 0.0
        %2088 = vmatprep.subr.mxu0 0.0
        %2089 = vmatpush1.msra.mxu0 0.0
        %2090 = vmatprep.subr.mxu0 0.0
        %2091 = vmatpush1.msra.mxu0 0.0
        %2092 = vmatprep.subr.mxu0 0.0
        %2093 = vmatpush1.msra.mxu0 0.0
        %2094 = vmatprep.subr.mxu0 0.0
        %2095 = vmatpush1.msra.mxu0 0.0
        %2096 = vmatprep.subr.mxu0 0.0
        %2097 = vmatpush1.msra.mxu0 0.0
        %2098 = vmatprep.subr.mxu0 0.0
        %2099 = vmatpush1.msra.mxu0 0.0
        %2100 = vmatprep.subr.mxu0 0.0
        %2101 = vmatpush1.msra.mxu0 0.0
        %2102 = vmatprep.subr.mxu0 0.0
        %2103 = vmatpush1.msra.mxu0 0.0
        %2104 = vmatprep.subr.mxu0 0.0
        %2105 = vmatpush1.msra.mxu0 0.0
        %2106 = vmatprep.subr.mxu0 0.0
        %2107 = vmatpush1.msra.mxu0 0.0
        %2108 = vmatprep.subr.mxu0 0.0
        %2109 = vmatpush1.msra.mxu0 0.0
        %2110 = vmatprep.subr.mxu0 0.0
        %2111 = vmatpush1.msra.mxu0 0.0
        %2112 = vmatprep.subr.mxu0 0.0
        %2113 = vmatpush1.msra.mxu0 0.0
        %2114 = vmatprep.subr.mxu0 0.0
        %2115 = vmatpush1.msra.mxu0 0.0
        %2116 = vmatprep.subr.mxu0 0.0
        %2117 = vmatpush1.msra.mxu0 0.0
        %2118 = vmatprep.subr.mxu0 0.0
        %2119 = vmatpush1.msra.mxu0 0.0
        %2120 = vmatprep.subr.mxu0 0.0
        %2121 = vmatpush1.msra.mxu0 0.0
        %2122 = vmatprep.subr.mxu0 0.0
        %2123 = vmatpush1.msra.mxu0 0.0
        %2124 = vmatprep.subr.mxu0 0.0
        %2125 = vmatpush1.msra.mxu0 0.0
        %2126 = vmatprep.subr.mxu0 0.0
        %2127 = vmatpush1.msra.mxu0 0.0
        %2128 = vmatprep.mubr.f32.mxu0 0.0
        %2129 = vmatmul.mubr.f32.gmra.mrb[0].mxu0 %v2049
        %v2130 = vpop.f32.mrb[0].mxu0
        %v2131 = vadd.f32 0.0, %v2130
        %v2132 = vpop.f32.mrb[0].mxu0
        %2133 = vmatprep.mubr.f32.mxu0 0.0
        %2134 = vmatmul.mubr.f32.gmra.mrb[0].mxu0 %v2052
        %v2135 = vpop.f32.mrb[0].mxu0
        %v2136 = vadd.f32 0.0, %v2135
        %v2137 = vpop.f32.mrb[0].mxu0
        %2138 = vmatprep.mubr.f32.mxu0 0.0
        %2139 = vmatmul.mubr.f32.gmra.mrb[0].mxu0 %v2055
        %v2140 = vpop.f32.mrb[0].mxu0
        %v2141 = vadd.f32 0.0, %v2140
        %v2142 = vpop.f32.mrb[0].mxu0
        %2143 = vmatprep.mubr.f32.mxu0 0.0
        %2144 = vmatmul.mubr.f32.gmra.mrb[0].mxu0 %v2058
        %v2145 = vpop.f32.mrb[0].mxu0
        %v2146 = vadd.f32 0.0, %v2145
        %v2147 = vpop.f32.mrb[0].mxu0
        %2148 = vdwg.mxu0
        %v2149 = vmul.f32 %v2131, %v1126
        %v2150 = vmul.f32 %v2136, %v1127
        %v2151 = vmul.f32 %v2141, %v1128
        %v2152 = vmul.f32 %v2146, %v1129
        %v2153 = vadd.f32 %v2149, %v2150
        %v2154 = vadd.f32 %v2153, %v2151
        %v2155 = vadd.f32 %v2154, %v2152
        %v2156 = vld [vmem:[%s1081] sm:$0xff]
        %v2157 = vld [vmem:[%s1081 + $0x8] sm:$0xff]
        %v2158 = vld [vmem:[%s1081 + $0x10] sm:$0xff]
        %v2159 = vld [vmem:[%s1081 + $0x18] sm:$0xff]
        %v2160 = vld [vmem:[%s1081 + $0x20] sm:$0xff]
        %v2161 = vld [vmem:[%s1081 + $0x28] sm:$0xff]
        %v2162 = vld [vmem:[%s1081 + $0x30] sm:$0xff]
        %v2163 = vld [vmem:[%s1081 + $0x38] sm:$0xff]
        %v2164 = vld [vmem:[%s1081 + $0x40] sm:$0xff]
        %v2165 = vld [vmem:[%s1081 + $0x48] sm:$0xff]
        %v2166 = vld [vmem:[%s1081 + $0x50] sm:$0xff]
        %v2167 = vld [vmem:[%s1081 + $0x58] sm:$0xff]
        %v2168 = vld [vmem:[%s1081 + $0x60] sm:$0xff]
        %v2169 = vld [vmem:[%s1081 + $0x68] sm:$0xff]
        %v2170 = vld [vmem:[%s1081 + $0x70] sm:$0xff]
        %v2171 = vld [vmem:[%s1081 + $0x78] sm:$0xff]
        %v2172 = vld [vmem:[%s1084] sm:$0x1]
        %v2174 = vlaneseq
        %v2175 = vshrl.u32 %v2174, 7
        %v2176 = vsub.s32 0, %v2175
        %v2177 = vrot.slane %v2172, %v2176
        %2179 = vmatprep.subr.mxu0 0.0
        %2180 = vmatpush1.msra.mxu0 %v2156
        %2181 = vmatprep.subr.mxu0 0.0
        %2182 = vmatpush1.msra.mxu0 %v2157
        %2183 = vmatprep.subr.mxu0 0.0
        %2184 = vmatpush1.msra.mxu0 %v2158
        %2185 = vmatprep.subr.mxu0 0.0
        %2186 = vmatpush1.msra.mxu0 %v2159
        %2187 = vmatprep.subr.mxu0 0.0
        %2188 = vmatpush1.msra.mxu0 %v2160
        %2189 = vmatprep.subr.mxu0 0.0
        %2190 = vmatpush1.msra.mxu0 %v2161
        %2191 = vmatprep.subr.mxu0 0.0
        %2192 = vmatpush1.msra.mxu0 %v2162
        %2193 = vmatprep.subr.mxu0 0.0
        %2194 = vmatpush1.msra.mxu0 %v2163
        %2195 = vmatprep.subr.mxu0 0.0
        %2196 = vmatpush1.msra.mxu0 %v2164
        %2197 = vmatprep.subr.mxu0 0.0
        %2198 = vmatpush1.msra.mxu0 %v2165
        %2199 = vmatprep.subr.mxu0 0.0
        %2200 = vmatpush1.msra.mxu0 %v2166
        %2201 = vmatprep.subr.mxu0 0.0
        %2202 = vmatpush1.msra.mxu0 %v2167
        %2203 = vmatprep.subr.mxu0 0.0
        %2204 = vmatpush1.msra.mxu0 %v2168
        %2205 = vmatprep.subr.mxu0 0.0
        %2206 = vmatpush1.msra.mxu0 %v2169
        %2207 = vmatprep.subr.mxu0 0.0
        %2208 = vmatpush1.msra.mxu0 %v2170
        %2209 = vmatprep.subr.mxu0 0.0
        %2210 = vmatpush1.msra.mxu0 %v2171
        %2211 = vmatprep.subr.mxu0 0.0
        %2212 = vmatpush1.msra.mxu0 0.0
        %2213 = vmatprep.subr.mxu0 0.0
        %2214 = vmatpush1.msra.mxu0 0.0
        %2215 = vmatprep.subr.mxu0 0.0
        %2216 = vmatpush1.msra.mxu0 0.0
        %2217 = vmatprep.subr.mxu0 0.0
        %2218 = vmatpush1.msra.mxu0 0.0
        %2219 = vmatprep.subr.mxu0 0.0
        %2220 = vmatpush1.msra.mxu0 0.0
        %2221 = vmatprep.subr.mxu0 0.0
        %2222 = vmatpush1.msra.mxu0 0.0
        %2223 = vmatprep.subr.mxu0 0.0
        %2224 = vmatpush1.msra.mxu0 0.0
        %2225 = vmatprep.subr.mxu0 0.0
        %2226 = vmatpush1.msra.mxu0 0.0
        %2227 = vmatprep.subr.mxu0 0.0
        %2228 = vmatpush1.msra.mxu0 0.0
        %2229 = vmatprep.subr.mxu0 0.0
        %2230 = vmatpush1.msra.mxu0 0.0
        %2231 = vmatprep.subr.mxu0 0.0
        %2232 = vmatpush1.msra.mxu0 0.0
        %2233 = vmatprep.subr.mxu0 0.0
        %2234 = vmatpush1.msra.mxu0 0.0
        %2235 = vmatprep.subr.mxu0 0.0
        %2236 = vmatpush1.msra.mxu0 0.0
        %2237 = vmatprep.subr.mxu0 0.0
        %2238 = vmatpush1.msra.mxu0 0.0
        %2239 = vmatprep.subr.mxu0 0.0
        %2240 = vmatpush1.msra.mxu0 0.0
        %2241 = vmatprep.subr.mxu0 0.0
        %2242 = vmatpush1.msra.mxu0 0.0
        %2243 = vmatprep.mubr.f32.mxu0 0.0
        %2244 = vmatmul.mubr.f32.gmra.mrb[0].mxu0 %v2155
        %v2245 = vpop.f32.mrb[0].mxu0
        %v2246 = vadd.f32 %v2177, %v2245
        %v2247 = vpop.f32.mrb[0].mxu0
        %2248 = vdwg.mxu0
        %v2249 = vadd.f32 %v1701, %v2246
        %2250 = vadd.xlane.f32.xlu0 %v2249
        %v2251 = vpop.xlane.xlu0 %2250
        %v2252 = vmul.f32 %v2251, %v1676
        %v2253 = vsub.f32 %v2249, %v2252
        %v2254 = vmul.f32 %v2253, %v2253
        %2255 = vadd.xlane.f32.xlu0 %v2254
        %v2256 = vpop.xlane.xlu0 %2255
        %v2257 = vmul.f32 %v2256, %v1676
        %v2258 = vadd.f32 %v2257, 1e-05
        %v2259 = vrsqrt.pop %v2258
        %v2260 = vmul.f32 %v2253, %v2259
        %v2261 = vld [vmem:[%s1110] sm:$0x1]
        %v2263 = vlaneseq
        %v2264 = vshrl.u32 %v2263, 7
        %v2265 = vsub.s32 0, %v2264
        %v2266 = vrot.slane %v2261, %v2265
        %v2268 = vmul.f32 %v2260, %v2266
        %v2269 = vld [vmem:[%s1113] sm:$0x1]
        %v2271 = vlaneseq
        %v2272 = vshrl.u32 %v2271, 7
        %v2273 = vsub.s32 0, %v2272
        %v2274 = vrot.slane %v2269, %v2273
        %v2276 = vadd.f32 %v2268, %v2274
        %v2277 = vld [vmem:[%s1089] sm:$0xff]
        %v2278 = vld [vmem:[%s1089 + $0x8] sm:$0xff]
        %v2279 = vld [vmem:[%s1089 + $0x10] sm:$0xff]
        %v2280 = vld [vmem:[%s1089 + $0x18] sm:$0xff]
        %v2281 = vld [vmem:[%s1089 + $0x20] sm:$0xff]
        %v2282 = vld [vmem:[%s1089 + $0x28] sm:$0xff]
        %v2283 = vld [vmem:[%s1089 + $0x30] sm:$0xff]
        %v2284 = vld [vmem:[%s1089 + $0x38] sm:$0xff]
        %v2285 = vld [vmem:[%s1089 + $0x40] sm:$0xff]
        %v2286 = vld [vmem:[%s1089 + $0x48] sm:$0xff]
        %v2287 = vld [vmem:[%s1089 + $0x50] sm:$0xff]
        %v2288 = vld [vmem:[%s1089 + $0x58] sm:$0xff]
        %v2289 = vld [vmem:[%s1089 + $0x60] sm:$0xff]
        %v2290 = vld [vmem:[%s1089 + $0x68] sm:$0xff]
        %v2291 = vld [vmem:[%s1089 + $0x70] sm:$0xff]
        %v2292 = vld [vmem:[%s1089 + $0x78] sm:$0xff]
        %v2293 = vld [vmem:[%s1089 + $0x80] sm:$0xff]
        %v2294 = vld [vmem:[%s1089 + $0x88] sm:$0xff]
        %v2295 = vld [vmem:[%s1089 + $0x90] sm:$0xff]
        %v2296 = vld [vmem:[%s1089 + $0x98] sm:$0xff]
        %v2297 = vld [vmem:[%s1089 + $0xa0] sm:$0xff]
        %v2298 = vld [vmem:[%s1089 + $0xa8] sm:$0xff]
        %v2299 = vld [vmem:[%s1089 + $0xb0] sm:$0xff]
        %v2300 = vld [vmem:[%s1089 + $0xb8] sm:$0xff]
        %v2301 = vld [vmem:[%s1089 + $0xc0] sm:$0xff]
        %v2302 = vld [vmem:[%s1089 + $0xc8] sm:$0xff]
        %v2303 = vld [vmem:[%s1089 + $0xd0] sm:$0xff]
        %v2304 = vld [vmem:[%s1089 + $0xd8] sm:$0xff]
        %v2305 = vld [vmem:[%s1089 + $0xe0] sm:$0xff]
        %v2306 = vld [vmem:[%s1089 + $0xe8] sm:$0xff]
        %v2307 = vld [vmem:[%s1089 + $0xf0] sm:$0xff]
        %v2308 = vld [vmem:[%s1089 + $0xf8] sm:$0xff]
        %v2309 = vld [vmem:[%s1093] sm:$0x3]
        %v2311 = vlaneseq
        %v2312 = vshrl.u32 %v2311, 7
        %v2313 = vsub.s32 0, %v2312
        %v2314 = vrot.slane %v2309, %v2313
        %v2315 = vlaneseq
        %v2316 = vshrl.u32 %v2315, 7
        %v2317 = vsub.s32 1, %v2316
        %v2318 = vrot.slane %v2309, %v2317
        %2321 = vmatprep.subr.mxu0 %v2278
        %2322 = vmatpush1.msra.mxu0 %v2277
        %2323 = vmatprep.subr.mxu0 %v2280
        %2324 = vmatpush1.msra.mxu0 %v2279
        %2325 = vmatprep.subr.mxu0 %v2282
        %2326 = vmatpush1.msra.mxu0 %v2281
        %2327 = vmatprep.subr.mxu0 %v2284
        %2328 = vmatpush1.msra.mxu0 %v2283
        %2329 = vmatprep.subr.mxu0 %v2286
        %2330 = vmatpush1.msra.mxu0 %v2285
        %2331 = vmatprep.subr.mxu0 %v2288
        %2332 = vmatpush1.msra.mxu0 %v2287
        %2333 = vmatprep.subr.mxu0 %v2290
        %2334 = vmatpush1.msra.mxu0 %v2289
        %2335 = vmatprep.subr.mxu0 %v2292
        %2336 = vmatpush1.msra.mxu0 %v2291
        %2337 = vmatprep.subr.mxu0 %v2294
        %2338 = vmatpush1.msra.mxu0 %v2293
        %2339 = vmatprep.subr.mxu0 %v2296
        %2340 = vmatpush1.msra.mxu0 %v2295
        %2341 = vmatprep.subr.mxu0 %v2298
        %2342 = vmatpush1.msra.mxu0 %v2297
        %2343 = vmatprep.subr.mxu0 %v2300
        %2344 = vmatpush1.msra.mxu0 %v2299
        %2345 = vmatprep.subr.mxu0 %v2302
        %2346 = vmatpush1.msra.mxu0 %v2301
        %2347 = vmatprep.subr.mxu0 %v2304
        %2348 = vmatpush1.msra.mxu0 %v2303
        %2349 = vmatprep.subr.mxu0 %v2306
        %2350 = vmatpush1.msra.mxu0 %v2305
        %2351 = vmatprep.subr.mxu0 %v2308
        %2352 = vmatpush1.msra.mxu0 %v2307
        %2353 = vmatprep.subr.mxu0 0.0
        %2354 = vmatpush1.msra.mxu0 0.0
        %2355 = vmatprep.subr.mxu0 0.0
        %2356 = vmatpush1.msra.mxu0 0.0
        %2357 = vmatprep.subr.mxu0 0.0
        %2358 = vmatpush1.msra.mxu0 0.0
        %2359 = vmatprep.subr.mxu0 0.0
        %2360 = vmatpush1.msra.mxu0 0.0
        %2361 = vmatprep.subr.mxu0 0.0
        %2362 = vmatpush1.msra.mxu0 0.0
        %2363 = vmatprep.subr.mxu0 0.0
        %2364 = vmatpush1.msra.mxu0 0.0
        %2365 = vmatprep.subr.mxu0 0.0
        %2366 = vmatpush1.msra.mxu0 0.0
        %2367 = vmatprep.subr.mxu0 0.0
        %2368 = vmatpush1.msra.mxu0 0.0
        %2369 = vmatprep.subr.mxu0 0.0
        %2370 = vmatpush1.msra.mxu0 0.0
        %2371 = vmatprep.subr.mxu0 0.0
        %2372 = vmatpush1.msra.mxu0 0.0
        %2373 = vmatprep.subr.mxu0 0.0
        %2374 = vmatpush1.msra.mxu0 0.0
        %2375 = vmatprep.subr.mxu0 0.0
        %2376 = vmatpush1.msra.mxu0 0.0
        %2377 = vmatprep.subr.mxu0 0.0
        %2378 = vmatpush1.msra.mxu0 0.0
        %2379 = vmatprep.subr.mxu0 0.0
        %2380 = vmatpush1.msra.mxu0 0.0
        %2381 = vmatprep.subr.mxu0 0.0
        %2382 = vmatpush1.msra.mxu0 0.0
        %2383 = vmatprep.subr.mxu0 0.0
        %2384 = vmatpush1.msra.mxu0 0.0
        %2385 = vmatprep.mubr.f32.mxu0 0.0
        %2386 = vmatmul.mubr.f32.gmra.mrb[0].mxu0 %v2276
        %v2387 = vpop.f32.mrb[0].mxu0
        %v2388 = vadd.f32 %v2314, %v2387
        %v2389 = vpop.f32.mrb[0].mxu0
        %v2390 = vadd.f32 %v2318, %v2389
        %2391 = vdwg.mxu0
        %v2392 = vmax.f32 %v2388, 0.0
        %v2393 = vmax.f32 %v2390, 0.0
        %v2394 = vld [vmem:[%s1098] sm:$0xff]
        %v2395 = vld [vmem:[%s1098 + $0x8] sm:$0xff]
        %v2396 = vld [vmem:[%s1098 + $0x10] sm:$0xff]
        %v2397 = vld [vmem:[%s1098 + $0x18] sm:$0xff]
        %v2398 = vld [vmem:[%s1098 + $0x20] sm:$0xff]
        %v2399 = vld [vmem:[%s1098 + $0x28] sm:$0xff]
        %v2400 = vld [vmem:[%s1098 + $0x30] sm:$0xff]
        %v2401 = vld [vmem:[%s1098 + $0x38] sm:$0xff]
        %v2402 = vld [vmem:[%s1098 + $0x40] sm:$0xff]
        %v2403 = vld [vmem:[%s1098 + $0x48] sm:$0xff]
        %v2404 = vld [vmem:[%s1098 + $0x50] sm:$0xff]
        %v2405 = vld [vmem:[%s1098 + $0x58] sm:$0xff]
        %v2406 = vld [vmem:[%s1098 + $0x60] sm:$0xff]
        %v2407 = vld [vmem:[%s1098 + $0x68] sm:$0xff]
        %v2408 = vld [vmem:[%s1098 + $0x70] sm:$0xff]
        %v2409 = vld [vmem:[%s1098 + $0x78] sm:$0xff]
        %v2410 = vld [vmem:[%s1098 + $0x80] sm:$0xff]
        %v2411 = vld [vmem:[%s1098 + $0x88] sm:$0xff]
        %v2412 = vld [vmem:[%s1098 + $0x90] sm:$0xff]
        %v2413 = vld [vmem:[%s1098 + $0x98] sm:$0xff]
        %v2414 = vld [vmem:[%s1098 + $0xa0] sm:$0xff]
        %v2415 = vld [vmem:[%s1098 + $0xa8] sm:$0xff]
        %v2416 = vld [vmem:[%s1098 + $0xb0] sm:$0xff]
        %v2417 = vld [vmem:[%s1098 + $0xb8] sm:$0xff]
        %v2418 = vld [vmem:[%s1098 + $0xc0] sm:$0xff]
        %v2419 = vld [vmem:[%s1098 + $0xc8] sm:$0xff]
        %v2420 = vld [vmem:[%s1098 + $0xd0] sm:$0xff]
        %v2421 = vld [vmem:[%s1098 + $0xd8] sm:$0xff]
        %v2422 = vld [vmem:[%s1098 + $0xe0] sm:$0xff]
        %v2423 = vld [vmem:[%s1098 + $0xe8] sm:$0xff]
        %v2424 = vld [vmem:[%s1098 + $0xf0] sm:$0xff]
        %v2425 = vld [vmem:[%s1098 + $0xf8] sm:$0xff]
        %v2426 = vld [vmem:[%s1101] sm:$0x1]
        %v2428 = vlaneseq
        %v2429 = vshrl.u32 %v2428, 7
        %v2430 = vsub.s32 0, %v2429
        %v2431 = vrot.slane %v2426, %v2430
        %2433 = vmatprep.subr.mxu0 0.0
        %2434 = vmatpush1.msra.mxu0 %v2394
        %2435 = vmatprep.subr.mxu0 0.0
        %2436 = vmatpush1.msra.mxu0 %v2395
        %2437 = vmatprep.subr.mxu0 0.0
        %2438 = vmatpush1.msra.mxu0 %v2396
        %2439 = vmatprep.subr.mxu0 0.0
        %2440 = vmatpush1.msra.mxu0 %v2397
        %2441 = vmatprep.subr.mxu0 0.0
        %2442 = vmatpush1.msra.mxu0 %v2398
        %2443 = vmatprep.subr.mxu0 0.0
        %2444 = vmatpush1.msra.mxu0 %v2399
        %2445 = vmatprep.subr.mxu0 0.0
        %2446 = vmatpush1.msra.mxu0 %v2400
        %2447 = vmatprep.subr.mxu0 0.0
        %2448 = vmatpush1.msra.mxu0 %v2401
        %2449 = vmatprep.subr.mxu0 0.0
        %2450 = vmatpush1.msra.mxu0 %v2402
        %2451 = vmatprep.subr.mxu0 0.0
        %2452 = vmatpush1.msra.mxu0 %v2403
        %2453 = vmatprep.subr.mxu0 0.0
        %2454 = vmatpush1.msra.mxu0 %v2404
        %2455 = vmatprep.subr.mxu0 0.0
        %2456 = vmatpush1.msra.mxu0 %v2405
        %2457 = vmatprep.subr.mxu0 0.0
        %2458 = vmatpush1.msra.mxu0 %v2406
        %2459 = vmatprep.subr.mxu0 0.0
        %2460 = vmatpush1.msra.mxu0 %v2407
        %2461 = vmatprep.subr.mxu0 0.0
        %2462 = vmatpush1.msra.mxu0 %v2408
        %2463 = vmatprep.subr.mxu0 0.0
        %2464 = vmatpush1.msra.mxu0 %v2409
        %2465 = vmatprep.subr.mxu0 0.0
        %2466 = vmatpush1.msra.mxu0 %v2410
        %2467 = vmatprep.subr.mxu0 0.0
        %2468 = vmatpush1.msra.mxu0 %v2411
        %2469 = vmatprep.subr.mxu0 0.0
        %2470 = vmatpush1.msra.mxu0 %v2412
        %2471 = vmatprep.subr.mxu0 0.0
        %2472 = vmatpush1.msra.mxu0 %v2413
        %2473 = vmatprep.subr.mxu0 0.0
        %2474 = vmatpush1.msra.mxu0 %v2414
        %2475 = vmatprep.subr.mxu0 0.0
        %2476 = vmatpush1.msra.mxu0 %v2415
        %2477 = vmatprep.subr.mxu0 0.0
        %2478 = vmatpush1.msra.mxu0 %v2416
        %2479 = vmatprep.subr.mxu0 0.0
        %2480 = vmatpush1.msra.mxu0 %v2417
        %2481 = vmatprep.subr.mxu0 0.0
        %2482 = vmatpush1.msra.mxu0 %v2418
        %2483 = vmatprep.subr.mxu0 0.0
        %2484 = vmatpush1.msra.mxu0 %v2419
        %2485 = vmatprep.subr.mxu0 0.0
        %2486 = vmatpush1.msra.mxu0 %v2420
        %2487 = vmatprep.subr.mxu0 0.0
        %2488 = vmatpush1.msra.mxu0 %v2421
        %2489 = vmatprep.subr.mxu0 0.0
        %2490 = vmatpush1.msra.mxu0 %v2422
        %2491 = vmatprep.subr.mxu0 0.0
        %2492 = vmatpush1.msra.mxu0 %v2423
        %2493 = vmatprep.subr.mxu0 0.0
        %2494 = vmatpush1.msra.mxu0 %v2424
        %2495 = vmatprep.subr.mxu0 0.0
        %2496 = vmatpush1.msra.mxu0 %v2425
        %2497 = vmatprep.mubr.f32.mxu0 %v2393
        %2498 = vmatmul.mubr.f32.gmra.mrb[0].mxu0 %v2392
        %v2499 = vpop.f32.mrb[0].mxu0
        %v2500 = vadd.f32 %v2431, %v2499
        %v2501 = vpop.f32.mrb[0].mxu0
        %2502 = vdwg.mxu0
        %v2503 = vadd.f32 %v2276, %v2500
        %2504 = vadd.xlane.f32.xlu0 %v2503
        %v2505 = vpop.xlane.xlu0 %2504
        %v2506 = vmul.f32 %v2505, %v1676
        %v2507 = vsub.f32 %v2503, %v2506
        %v2508 = vmul.f32 %v2507, %v2507
        %2509 = vadd.xlane.f32.xlu0 %v2508
        %v2510 = vpop.xlane.xlu0 %2509
        %v2511 = vmul.f32 %v2510, %v1676
        %v2512 = vadd.f32 %v2511, 1e-05
        %v2513 = vrsqrt.pop %v2512
        %v2514 = vmul.f32 %v2507, %v2513
        %v2515 = vld [vmem:[%s1116] sm:$0x1]
        %v2517 = vlaneseq
        %v2518 = vshrl.u32 %v2517, 7
        %v2519 = vsub.s32 0, %v2518
        %v2520 = vrot.slane %v2515, %v2519
        %v2522 = vmul.f32 %v2514, %v2520
        %v2523 = vld [vmem:[%s1119] sm:$0x1]
        %v2525 = vlaneseq
        %v2526 = vshrl.u32 %v2525, 7
        %v2527 = vsub.s32 0, %v2526
        %v2528 = vrot.slane %v2523, %v2527
        %v2530 = vadd.f32 %v2522, %v2528
        %2531 = vst [vmem:[#allocation2] sm:$0xff] %v2530
        %p2532 = scmp.eq.s32.totalorder %s44, 1
        // Predicated region
        $region125: #{image_captioning_forward.3} parent=119 // pred_check
          %p2533 = pneg %p2532
        $region126: #{image_captioning_forward.3} parent=119 // pred_check_branch
          %2535 = sbr.rel (%p2533) target = $region128
        $region127: #{image_captioning_forward.3} parent=119 // pred_region
          %v2536 = vld [vmem:[%s23] sm:$0xff]
          %v2537 = vld [vmem:[%s23 + $0x8] sm:$0xff]
          %v2538 = vld [vmem:[%s23 + $0x10] sm:$0xff]
          %v2539 = vld [vmem:[%s23 + $0x18] sm:$0xff]
          %v2540 = vld [vmem:[%s23 + $0x20] sm:$0xff]
          %v2541 = vld [vmem:[%s23 + $0x28] sm:$0xff]
          %v2542 = vld [vmem:[%s23 + $0x30] sm:$0xff]
          %v2543 = vld [vmem:[%s23 + $0x38] sm:$0xff]
          %v2544 = vld [vmem:[%s23 + $0x40] sm:$0xff]
          %v2545 = vld [vmem:[%s23 + $0x48] sm:$0xff]
          %v2546 = vld [vmem:[%s23 + $0x50] sm:$0xff]
          %v2547 = vld [vmem:[%s23 + $0x58] sm:$0xff]
          %v2548 = vld [vmem:[%s23 + $0x60] sm:$0xff]
          %v2549 = vld [vmem:[%s23 + $0x68] sm:$0xff]
          %v2550 = vld [vmem:[%s23 + $0x70] sm:$0xff]
          %v2551 = vld [vmem:[%s23 + $0x78] sm:$0xff]
          %v2552 = vld [vmem:[%s23 + $0x80] sm:$0xff]
          %v2553 = vld [vmem:[%s23 + $0x88] sm:$0xff]
          %v2554 = vld [vmem:[%s23 + $0x90] sm:$0xff]
          %v2555 = vld [vmem:[%s23 + $0x98] sm:$0xff]
          %v2556 = vld [vmem:[%s23 + $0xa0] sm:$0xff]
          %v2557 = vld [vmem:[%s23 + $0xa8] sm:$0xff]
          %v2558 = vld [vmem:[%s23 + $0xb0] sm:$0xff]
          %v2559 = vld [vmem:[%s23 + $0xb8] sm:$0xff]
          %v2560 = vld [vmem:[%s23 + $0xc0] sm:$0xff]
          %v2561 = vld [vmem:[%s23 + $0xc8] sm:$0xff]
          %v2562 = vld [vmem:[%s23 + $0xd0] sm:$0xff]
          %v2563 = vld [vmem:[%s23 + $0xd8] sm:$0xff]
          %v2564 = vld [vmem:[%s23 + $0xe0] sm:$0xff]
          %v2565 = vld [vmem:[%s23 + $0xe8] sm:$0xff]
          %v2566 = vld [vmem:[%s23 + $0xf0] sm:$0xff]
          %v2567 = vld [vmem:[%s23 + $0xf8] sm:$0xff]
          %v2568 = vld [vmem:[%s24] sm:$0x3]
          %v2570 = vlaneseq
          %v2571 = vshrl.u32 %v2570, 7
          %v2572 = vsub.s32 0, %v2571
          %v2573 = vrot.slane %v2568, %v2572
          %v2574 = vlaneseq
          %v2575 = vshrl.u32 %v2574, 7
          %v2576 = vsub.s32 1, %v2575
          %v2577 = vrot.slane %v2568, %v2576
          %2580 = vmatprep.subr.mxu0 %v2537
          %2581 = vmatpush1.msra.mxu0 %v2536
          %2582 = vmatprep.subr.mxu0 %v2539
          %2583 = vmatpush1.msra.mxu0 %v2538
          %2584 = vmatprep.subr.mxu0 %v2541
          %2585 = vmatpush1.msra.mxu0 %v2540
          %2586 = vmatprep.subr.mxu0 %v2543
          %2587 = vmatpush1.msra.mxu0 %v2542
          %2588 = vmatprep.subr.mxu0 %v2545
          %2589 = vmatpush1.msra.mxu0 %v2544
          %2590 = vmatprep.subr.mxu0 %v2547
          %2591 = vmatpush1.msra.mxu0 %v2546
          %2592 = vmatprep.subr.mxu0 %v2549
          %2593 = vmatpush1.msra.mxu0 %v2548
          %2594 = vmatprep.subr.mxu0 %v2551
          %2595 = vmatpush1.msra.mxu0 %v2550
          %2596 = vmatprep.subr.mxu0 %v2553
          %2597 = vmatpush1.msra.mxu0 %v2552
          %2598 = vmatprep.subr.mxu0 %v2555
          %2599 = vmatpush1.msra.mxu0 %v2554
          %2600 = vmatprep.subr.mxu0 %v2557
          %2601 = vmatpush1.msra.mxu0 %v2556
          %2602 = vmatprep.subr.mxu0 %v2559
          %2603 = vmatpush1.msra.mxu0 %v2558
          %2604 = vmatprep.subr.mxu0 %v2561
          %2605 = vmatpush1.msra.mxu0 %v2560
          %2606 = vmatprep.subr.mxu0 %v2563
          %2607 = vmatpush1.msra.mxu0 %v2562
          %2608 = vmatprep.subr.mxu0 %v2565
          %2609 = vmatpush1.msra.mxu0 %v2564
          %2610 = vmatprep.subr.mxu0 %v2567
          %2611 = vmatpush1.msra.mxu0 %v2566
          %2612 = vmatprep.subr.mxu0 0.0
          %2613 = vmatpush1.msra.mxu0 0.0
          %2614 = vmatprep.subr.mxu0 0.0
          %2615 = vmatpush1.msra.mxu0 0.0
          %2616 = vmatprep.subr.mxu0 0.0
          %2617 = vmatpush1.msra.mxu0 0.0
          %2618 = vmatprep.subr.mxu0 0.0
          %2619 = vmatpush1.msra.mxu0 0.0
          %2620 = vmatprep.subr.mxu0 0.0
          %2621 = vmatpush1.msra.mxu0 0.0
          %2622 = vmatprep.subr.mxu0 0.0
          %2623 = vmatpush1.msra.mxu0 0.0
          %2624 = vmatprep.subr.mxu0 0.0
          %2625 = vmatpush1.msra.mxu0 0.0
          %2626 = vmatprep.subr.mxu0 0.0
          %2627 = vmatpush1.msra.mxu0 0.0
          %2628 = vmatprep.subr.mxu0 0.0
          %2629 = vmatpush1.msra.mxu0 0.0
          %2630 = vmatprep.subr.mxu0 0.0
          %2631 = vmatpush1.msra.mxu0 0.0
          %2632 = vmatprep.subr.mxu0 0.0
          %2633 = vmatpush1.msra.mxu0 0.0
          %2634 = vmatprep.subr.mxu0 0.0
          %2635 = vmatpush1.msra.mxu0 0.0
          %2636 = vmatprep.subr.mxu0 0.0
          %2637 = vmatpush1.msra.mxu0 0.0
          %2638 = vmatprep.subr.mxu0 0.0
          %2639 = vmatpush1.msra.mxu0 0.0
          %2640 = vmatprep.subr.mxu0 0.0
          %2641 = vmatpush1.msra.mxu0 0.0
          %2642 = vmatprep.subr.mxu0 0.0
          %2643 = vmatpush1.msra.mxu0 0.0
          %2644 = vmatprep.mubr.f32.mxu0 0.0
          %2645 = vmatmul.mubr.f32.gmra.mrb[0].mxu0 %v2530
          %v2646 = vpop.f32.mrb[0].mxu0
          %v2647 = vadd.f32 %v2573, %v2646
          %v2648 = vpop.f32.mrb[0].mxu0
          %v2649 = vadd.f32 %v2577, %v2648
          %2650 = vdwg.mxu0
          %2651 = vst [vmem:[%s1034] sm:$0xff] %v2647
          %2652 = vst [vmem:[%s1034 + $0x8] sm:$0xff] %v2649
        $region128: #{image_captioning_forward.3} parent=119 // pred_fallthru
          _
        %s2653 = sand.u32 %s694, 1
        %s2654 = scalar_lea.sflag [#allocation4], %s2653
        %s2655 = sand.u32 %s694, 1
        %s2656 = smul.addr %s2655, 16
        %s2657 = scalar_lea.vmem [#allocation3], %s2656
        // Predicated region
        $region129: #{image_captioning_forward.3} parent=119 // pred_check
          %p2658 = pneg %p704
        $region130: #{image_captioning_forward.3} parent=119 // pred_check_branch
          %2660 = sbr.rel (%p2658) target = $region132
        $region131: #{image_captioning_forward.3} parent=119 // pred_region
          %s2662 = ssub.s32 256, 256
          %2663 = vsyncadd %s2654, %s2662
          %s2664 = smul.addr %s43, 2
          %s2665 = smul.addr %s2664, 128
          %s2666 = scalar_lea.hbm %s25, %s2665
          %s2668 = sshll.u32 %s2657, 4
          %s2669 = int_to_ptr.vmem [resolvable:$true] %s2668
          %2671 = dma.vmem_to_hbm [thread:$0]  %s2669, 256, %s2666, %s2654
        $region132: #{image_captioning_forward.3} parent=119 // pred_fallthru
          _
      $region120: #{image_captioning_forward.3} parent=5 // pred_fallthru
        _
      %p2672 = scmp.le.s32.totalorder 2, %s34
      // Predicated region
      $region133: #{image_captioning_forward.3} parent=5 // pred_check
        %p2673 = pneg %p2672
      $region134: #{image_captioning_forward.3} parent=5 // pred_check_branch
        %2675 = sbr.rel (%p2673) target = $region136
      $region135: #{image_captioning_forward.3} parent=5 // pred_region
        %s2676 = ssub.s32 %s34, 2
        // Predicated region
        $region137: #{image_captioning_forward.3} parent=135 // pred_check
          %p2677 = pneg %p710
        $region138: #{image_captioning_forward.3} parent=135 // pred_check_branch
          %2679 = sbr.rel (%p2677) target = $region140
        $region139: #{image_captioning_forward.3} parent=135 // pred_region
          %s2680 = sand.u32 %s695, 1
          %s2681 = scalar_lea.sflag [#allocation4], %s2680
          %s2682 = sand.u32 %s695, 1
          %s2683 = smul.addr %s2682, 16
          %s2684 = scalar_lea.vmem [#allocation3], %s2683
          %2685 = dma.done %s2681, 256
        $region140: #{image_captioning_forward.3} parent=135 // pred_fallthru
          _
      $region136: #{image_captioning_forward.3} parent=5 // pred_fallthru
        _
    $region6: #{image_captioning_forward.3} parent=1 // loop_footer
      %s38 = sadd.s32 1, %s34
    $region7: #{image_captioning_forward.3} parent=1 // loop_footer_branch
      %33 = sbr.rel target = $region3
    $region8: #{image_captioning_forward.3} parent=1 // loop_exit
      _
    %2686 = vsyncpa [#allocation4], 1
    %s2687 = scalar_lea.sflag [#allocation4], 1
    %2688 = vsyncpa %s2687, 1

// kernel: image_captioning_forward.2
$region0: #{image_captioning_forward.2}
  #allocation0 [shape = 'u32[]', space=smem, size = 0x4, offset = 0x4, fixed_abs, tag = 'smem constant byte address 0x4 - core index']
  #allocation1 [shape = 'u32[144,128]{1,0:T(1,128)}', space=vmem, size = 0x12000, scoped, tag = 'internal scratch']
  #allocation2 [shape = 'f32[8,128]{1,0:T(8,128)}', space=vmem, size = 0x1000, scoped, tag = 'scratch operand']
  %s0 = inlined_call_operand.vmem [shape: bf16[8,3072], index: 0, kind: input, shape index: {}]
  %s1 = inlined_call_operand.hbm [shape: bf16[3072,2048], index: 1, kind: input, shape index: {}]
  %s2 = inlined_call_operand.hbm [shape: f32[1,2048], index: 2, kind: input, shape index: {}]
  %s3 = inlined_call_operand.hbm [shape: bf16[2048,128], index: 3, kind: input, shape index: {}]
  %s4 = inlined_call_operand.hbm [shape: f32[1,128], index: 4, kind: input, shape index: {}]
  %s5 = inlined_call_operand.vmem [shape: f32[8,128], index: 5, kind: output, shape index: {}]
  %s6 = sld [smem:[#allocation0]]
  $region77: #{image_captioning_forward.2} parent=0
    _
  %s8 = ssub.s32 1, %s6
  %s9 = scalar_select 0, %s8, %s6
  $region1: #{image_captioning_forward.2} parent=0
    #allocation3 [shape = 'u8[6291456]{0}', space=vmem, size = 0x600000, scoped, tag = 'input window, operand 1']
    #allocation4 [shape = 's32[2]{0}', space=sflag, size = 0x8, scoped, tag = 'scoped memory for image_captioning_forward.2']
    #allocation5 [shape = 'u8[4096]{0}', space=vmem, size = 0x1000, scoped, tag = 'input window, operand 2']
    #allocation6 [shape = 's32[2]{0}', space=sflag, size = 0x8, scoped, tag = 'scoped memory for image_captioning_forward.2']
    #allocation7 [shape = 'u8[262144]{0}', space=vmem, size = 0x40000, scoped, tag = 'input window, operand 3']
    #allocation8 [shape = 'u8[512]{0}', space=vmem, size = 0x400, scoped, tag = 'input window, operand 4, single buffered']
    #allocation9 [shape = 's32[1]{0}', space=sflag, size = 0x4, scoped, tag = 'scoped memory for image_captioning_forward.2']
    %10 = vsyncpa [#allocation4], 0
    %s11 = scalar_lea.sflag [#allocation4], 1
    %12 = vsyncpa %s11, 0
    %13 = vsyncpa [#allocation6], 0
    %s14 = scalar_lea.sflag [#allocation6], 1
    %15 = vsyncpa %s14, 0
    %16 = vsyncpa [#allocation9], 0
    loop: start=0, step=1, limit=6
    $region2: #{image_captioning_forward.2} parent=1 // loop_pre_header
      _
    $region3: #{image_captioning_forward.2} parent=1 // loop_header
      %s18 = sphi 0, %s22
      %p19 = scmp.ge.s32.totalorder %s18, 6
      %s26 = sphi 0, %s26
      %s28 = sphi 0, %s26
      %s29 = sphi 0, %s28
      %s43 = sphi 0, %s29
      %s49 = sphi 0, %s51
      %s52 = sphi 0, %s49
      %s53 = sphi 0, %s52
      %s69 = sphi 0, %s53
      %s75 = sphi 0, %s77
      %s78 = sphi 0, %s75
      %s79 = sphi 0, %s78
      %s95 = sphi 0, %s79
      %s101 = sphi 0, %s103
      %s104 = sphi 0, %s101
      %s105 = sphi 0, %s104
      %s121 = sphi 0, %s105
      %s125 = sphi 0, %s125
      %s127 = sphi 0, %s125
      %s128 = sphi 0, %s127
      %s142 = sphi 0, %s128
      %s146 = sphi 0, %s146
      %s148 = sphi 0, %s146
      %s149 = sphi 0, %s148
      %s163 = sphi 0, %s149
    $region4: #{image_captioning_forward.2} parent=1 // loop_header_branch
      %21 = sbr.rel (%p19) target = $region8
    $region5: #{image_captioning_forward.2} parent=1 // loop_body
      %s23 = ssub.s32 %s18, 1
      %s24 = ssub.s32 %s18, 2
      %s25 = sadd.s32 %s18, 1
      %s27 = sadd.s32 %s26, 1
      %p30 = scmp.eq.s32.totalorder %s18, 3
      %p31 = scmp.ne.s32.totalorder %s26, %s28
      %p32 = scmp.eq.s32.totalorder %s18, 0
      %p33 = por %p31, %p32
      %p34 = scmp.ne.s32.totalorder %s26, %s28
      %p35 = scmp.eq.s32.totalorder %s23, 3
      %p36 = por %p34, %p35
      %p37 = scmp.ne.s32.totalorder %s28, %s29
      %p38 = scmp.eq.s32.totalorder %s23, 0
      %p39 = por %p37, %p38
      %p40 = scmp.ne.s32.totalorder %s28, %s29
      %p41 = scmp.eq.s32.totalorder %s24, 3
      %p42 = por %p40, %p41
      %p44 = scmp.ne.s32.totalorder %s29, %s43
      %p45 = scmp.eq.s32.totalorder %s24, 0
      %p46 = por %p44, %p45
      %s47 = ssub.s32 %s18, %s25
      %p48 = scmp.eq.s32.totalorder %s47, 0
      %s50 = sadd.s32 %s49, 1
      %s51 = scalar_select %p48, %s49, %s50
      %p54 = pneg %p48
      %p55 = scmp.eq.s32.totalorder %s18, 3
      %p56 = por %p54, %p55
      %p57 = scmp.ne.s32.totalorder %s49, %s52
      %p58 = scmp.eq.s32.totalorder %s18, 0
      %p59 = por %p57, %p58
      %p60 = scmp.ne.s32.totalorder %s49, %s52
      %p61 = scmp.eq.s32.totalorder %s23, 3
      %p62 = por %p60, %p61
      %p63 = scmp.ne.s32.totalorder %s52, %s53
      %p64 = scmp.eq.s32.totalorder %s23, 0
      %p65 = por %p63, %p64
      %p66 = scmp.ne.s32.totalorder %s52, %s53
      %p67 = scmp.eq.s32.totalorder %s24, 3
      %p68 = por %p66, %p67
      %p70 = scmp.ne.s32.totalorder %s53, %s69
      %p71 = scmp.eq.s32.totalorder %s24, 0
      %p72 = por %p70, %p71
      %s73 = ssub.s32 %s18, %s25
      %p74 = scmp.eq.s32.totalorder %s73, 0
      %s76 = sadd.s32 %s75, 1
      %s77 = scalar_select %p74, %s75, %s76
      %p80 = pneg %p74
      %p81 = scmp.eq.s32.totalorder %s18, 3
      %p82 = por %p80, %p81
      %p83 = scmp.ne.s32.totalorder %s75, %s78
      %p84 = scmp.eq.s32.totalorder %s18, 0
      %p85 = por %p83, %p84
      %p86 = scmp.ne.s32.totalorder %s75, %s78
      %p87 = scmp.eq.s32.totalorder %s23, 3
      %p88 = por %p86, %p87
      %p89 = scmp.ne.s32.totalorder %s78, %s79
      %p90 = scmp.eq.s32.totalorder %s23, 0
      %p91 = por %p89, %p90
      %p92 = scmp.ne.s32.totalorder %s78, %s79
      %p93 = scmp.eq.s32.totalorder %s24, 3
      %p94 = por %p92, %p93
      %p96 = scmp.ne.s32.totalorder %s79, %s95
      %p97 = scmp.eq.s32.totalorder %s24, 0
      %p98 = por %p96, %p97
      %s99 = ssub.s32 %s18, %s25
      %p100 = scmp.eq.s32.totalorder %s99, 0
      %s102 = sadd.s32 %s101, 1
      %s103 = scalar_select %p100, %s101, %s102
      %p106 = pneg %p100
      %p107 = scmp.eq.s32.totalorder %s18, 3
      %p108 = por %p106, %p107
      %p109 = scmp.ne.s32.totalorder %s101, %s104
      %p110 = scmp.eq.s32.totalorder %s18, 0
      %p111 = por %p109, %p110
      %p112 = scmp.ne.s32.totalorder %s101, %s104
      %p113 = scmp.eq.s32.totalorder %s23, 3
      %p114 = por %p112, %p113
      %p115 = scmp.ne.s32.totalorder %s104, %s105
      %p116 = scmp.eq.s32.totalorder %s23, 0
      %p117 = por %p115, %p116
      %p118 = scmp.ne.s32.totalorder %s104, %s105
      %p119 = scmp.eq.s32.totalorder %s24, 3
      %p120 = por %p118, %p119
      %p122 = scmp.ne.s32.totalorder %s105, %s121
      %p123 = scmp.eq.s32.totalorder %s24, 0
      %p124 = por %p122, %p123
      %s126 = sadd.s32 %s125, 1
      %p129 = scmp.eq.s32.totalorder %s18, 3
      %p130 = scmp.ne.s32.totalorder %s125, %s127
      %p131 = scmp.eq.s32.totalorder %s18, 0
      %p132 = por %p130, %p131
      %p133 = scmp.ne.s32.totalorder %s125, %s127
      %p134 = scmp.eq.s32.totalorder %s23, 3
      %p135 = por %p133, %p134
      %p136 = scmp.ne.s32.totalorder %s127, %s128
      %p137 = scmp.eq.s32.totalorder %s23, 0
      %p138 = por %p136, %p137
      %p139 = scmp.ne.s32.totalorder %s127, %s128
      %p140 = scmp.eq.s32.totalorder %s24, 3
      %p141 = por %p139, %p140
      %p143 = scmp.ne.s32.totalorder %s128, %s142
      %p144 = scmp.eq.s32.totalorder %s24, 0
      %p145 = por %p143, %p144
      %s147 = sadd.s32 %s146, 1
      %p150 = scmp.eq.s32.totalorder %s18, 3
      %p151 = scmp.ne.s32.totalorder %s146, %s148
      %p152 = scmp.eq.s32.totalorder %s18, 0
      %p153 = por %p151, %p152
      %p154 = scmp.ne.s32.totalorder %s146, %s148
      %p155 = scmp.eq.s32.totalorder %s23, 3
      %p156 = por %p154, %p155
      %p157 = scmp.ne.s32.totalorder %s148, %s149
      %p158 = scmp.eq.s32.totalorder %s23, 0
      %p159 = por %p157, %p158
      %p160 = scmp.ne.s32.totalorder %s148, %s149
      %p161 = scmp.eq.s32.totalorder %s24, 3
      %p162 = por %p160, %p161
      %p164 = scmp.ne.s32.totalorder %s149, %s163
      %p165 = scmp.eq.s32.totalorder %s24, 0
      %p166 = por %p164, %p165
      %p167 = scmp.le.s32.totalorder 1, %s18
      %p168 = scmp.lt.s32.totalorder %s18, 5
      %p169 = pnand %p167, %p168
      %p170 = pneg %p169
      // Predicated region
      $region9: #{image_captioning_forward.2} parent=5 // pred_check
        _
      $region10: #{image_captioning_forward.2} parent=5 // pred_check_branch
        %172 = sbr.rel (%p169) target = $region12
      $region11: #{image_captioning_forward.2} parent=5 // pred_region
        %s173 = ssub.s32 %s18, 1
        // Predicated region
        $region13: #{image_captioning_forward.2} parent=11 // pred_check
          %p174 = pneg %p39
        $region14: #{image_captioning_forward.2} parent=11 // pred_check_branch
          %176 = sbr.rel (%p174) target = $region16
        $region15: #{image_captioning_forward.2} parent=11 // pred_region
          _
        $region16: #{image_captioning_forward.2} parent=11 // pred_fallthru
          _
        // Predicated region
        $region17: #{image_captioning_forward.2} parent=11 // pred_check
          %p177 = pneg %p138
        $region18: #{image_captioning_forward.2} parent=11 // pred_check_branch
          %179 = sbr.rel (%p177) target = $region20
        $region19: #{image_captioning_forward.2} parent=11 // pred_region
          %s181 = ssub.s32 16, 16
          %182 = vsyncadd [#allocation9], %s181
          %s184 = sshll.u32 [#allocation8], 4
          %s185 = int_to_ptr.vmem [resolvable:$true] %s184
          %187 = dma.hbm_to_vmem [thread:$0]  %s4, 16, %s185, [#allocation9]
        $region20: #{image_captioning_forward.2} parent=11 // pred_fallthru
          _
      $region12: #{image_captioning_forward.2} parent=5 // pred_fallthru
        _
      %p188 = scmp.lt.s32.totalorder %s18, 4
      // Predicated region
      $region21: #{image_captioning_forward.2} parent=5 // pred_check
        %p189 = pneg %p188
      $region22: #{image_captioning_forward.2} parent=5 // pred_check_branch
        %191 = sbr.rel (%p189) target = $region24
      $region23: #{image_captioning_forward.2} parent=5 // pred_region
        // Predicated region
        $region25: #{image_captioning_forward.2} parent=23 // pred_check
          %p192 = pneg %p59
        $region26: #{image_captioning_forward.2} parent=23 // pred_check_branch
          %194 = sbr.rel (%p192) target = $region28
        $region27: #{image_captioning_forward.2} parent=23 // pred_region
          %s195 = sand.u32 %s49, 1
          %s196 = scalar_lea.sflag [#allocation4], %s195
          %s197 = sand.u32 %s49, 1
          %s198 = smul.addr %s197, 6144
          %s199 = scalar_lea.vmem [#allocation3], %s198
          %s200 = smul.u32 4, %s18
          %s202 = ssub.s32 98304, 98304
          %203 = vsyncadd %s196, %s202
          %s204 = smul.addr %s200, 64
          %s205 = scalar_lea.hbm %s1, %s204
          %s206 = sshll.u32 %s199, 4
          %s207 = int_to_ptr.vmem [resolvable:$true] %s206
          %212 = dma.hbm_to_vmem [thread:$0]  %s205, 98304, %s207, %s196, 1024, 256, 16
        $region28: #{image_captioning_forward.2} parent=23 // pred_fallthru
          _
        // Predicated region
        $region29: #{image_captioning_forward.2} parent=23 // pred_check
          %p213 = pneg %p85
        $region30: #{image_captioning_forward.2} parent=23 // pred_check_branch
          %215 = sbr.rel (%p213) target = $region32
        $region31: #{image_captioning_forward.2} parent=23 // pred_region
          %s216 = sand.u32 %s18, 1
          %s217 = scalar_lea.sflag [#allocation6], %s216
          %s218 = sand.u32 %s75, 1
          %s219 = smul.addr %s218, 4
          %s220 = scalar_lea.vmem [#allocation5], %s219
          %s221 = smul.u32 4, %s18
          %s223 = ssub.s32 64, 64
          %224 = vsyncadd %s217, %s223
          %s225 = smul.addr %s221, 16
          %s226 = scalar_lea.hbm %s2, %s225
          %s228 = sshll.u32 %s220, 4
          %s229 = int_to_ptr.vmem [resolvable:$true] %s228
          %231 = dma.hbm_to_vmem [thread:$0]  %s226, 64, %s229, %s217
        $region32: #{image_captioning_forward.2} parent=23 // pred_fallthru
          _
        // Predicated region
        $region33: #{image_captioning_forward.2} parent=23 // pred_check
          %p232 = pneg %p111
        $region34: #{image_captioning_forward.2} parent=23 // pred_check_branch
          %234 = sbr.rel (%p232) target = $region36
        $region35: #{image_captioning_forward.2} parent=23 // pred_region
          %s235 = sand.u32 %s18, 1
          %s236 = scalar_lea.sflag [#allocation6], %s235
          %s237 = sand.u32 %s101, 1
          %s238 = smul.addr %s237, 256
          %s239 = scalar_lea.vmem [#allocation7], %s238
          %s240 = smul.u32 64, %s18
          %s242 = ssub.s32 4096, 4096
          %243 = vsyncadd %s236, %s242
          %s244 = smul.addr %s240, 64
          %s245 = scalar_lea.hbm %s3, %s244
          %s246 = sshll.u32 %s239, 4
          %s247 = int_to_ptr.vmem [resolvable:$true] %s246
          %252 = dma.hbm_to_vmem [thread:$0]  %s245, 4096, %s247, %s236, 64, 64, 4
        $region36: #{image_captioning_forward.2} parent=23 // pred_fallthru
          _
      $region24: #{image_captioning_forward.2} parent=5 // pred_fallthru
        _
      %p253 = scmp.le.s32.totalorder 1, %s18
      %p254 = scmp.lt.s32.totalorder %s18, 5
      %p255 = pnand %p253, %p254
      %p256 = pneg %p255
      // Predicated region
      $region37: #{image_captioning_forward.2} parent=5 // pred_check
        _
      $region38: #{image_captioning_forward.2} parent=5 // pred_check_branch
        %258 = sbr.rel (%p255) target = $region40
      $region39: #{image_captioning_forward.2} parent=5 // pred_region
        %s259 = ssub.s32 %s18, 1
        %s260 = sand.u32 %s52, 1
        %s261 = scalar_lea.sflag [#allocation4], %s260
        %s262 = sand.u32 %s52, 1
        %s263 = smul.addr %s262, 6144
        %s264 = scalar_lea.vmem [#allocation3], %s263
        // Predicated region
        $region41: #{image_captioning_forward.2} parent=39 // pred_check
          %p265 = pneg %p65
        $region42: #{image_captioning_forward.2} parent=39 // pred_check_branch
          %267 = sbr.rel (%p265) target = $region44
        $region43: #{image_captioning_forward.2} parent=39 // pred_region
          %268 = dma.done %s261, 98304
        $region44: #{image_captioning_forward.2} parent=39 // pred_fallthru
          _
        %s269 = sand.u32 %s23, 1
        %s270 = scalar_lea.sflag [#allocation6], %s269
        %s271 = sand.u32 %s78, 1
        %s272 = smul.addr %s271, 4
        %s273 = scalar_lea.vmem [#allocation5], %s272
        // Predicated region
        $region45: #{image_captioning_forward.2} parent=39 // pred_check
          %p274 = pneg %p91
        $region46: #{image_captioning_forward.2} parent=39 // pred_check_branch
          %276 = sbr.rel (%p274) target = $region48
        $region47: #{image_captioning_forward.2} parent=39 // pred_region
          %277 = dma.done %s270, 64
        $region48: #{image_captioning_forward.2} parent=39 // pred_fallthru
          _
        %s278 = sand.u32 %s23, 1
        %s279 = scalar_lea.sflag [#allocation6], %s278
        %s280 = sand.u32 %s104, 1
        %s281 = smul.addr %s280, 256
        %s282 = scalar_lea.vmem [#allocation7], %s281
        // Predicated region
        $region49: #{image_captioning_forward.2} parent=39 // pred_check
          %p283 = pneg %p117
        $region50: #{image_captioning_forward.2} parent=39 // pred_check_branch
          %285 = sbr.rel (%p283) target = $region52
        $region51: #{image_captioning_forward.2} parent=39 // pred_region
          %286 = dma.done %s279, 4096
        $region52: #{image_captioning_forward.2} parent=39 // pred_fallthru
          _
        // Predicated region
        $region53: #{image_captioning_forward.2} parent=39 // pred_check
          %p287 = pneg %p138
        $region54: #{image_captioning_forward.2} parent=39 // pred_check_branch
          %289 = sbr.rel (%p287) target = $region56
        $region55: #{image_captioning_forward.2} parent=39 // pred_region
          %290 = dma.done [#allocation9], 16
        $region56: #{image_captioning_forward.2} parent=39 // pred_fallthru
          _
        %p291 = pneg %p39
        %p292 = pneg %p36
        %s293 = sand.u32 %s52, 1
        %s294 = scalar_lea.sflag [#allocation4], %s293
        %s295 = sand.u32 %s52, 1
        %s296 = smul.addr %s295, 6144
        %s297 = scalar_lea.vmem [#allocation3], %s296
        %p298 = pneg %p65
        %p299 = pneg %p62
        %s300 = sand.u32 %s23, 1
        %s301 = scalar_lea.sflag [#allocation6], %s300
        %s302 = sand.u32 %s78, 1
        %s303 = smul.addr %s302, 4
        %s304 = scalar_lea.vmem [#allocation5], %s303
        %p305 = pneg %p91
        %p306 = pneg %p88
        %s307 = sand.u32 %s23, 1
        %s308 = scalar_lea.sflag [#allocation6], %s307
        %s309 = sand.u32 %s104, 1
        %s310 = smul.addr %s309, 256
        %s311 = scalar_lea.vmem [#allocation7], %s310
        %p312 = pneg %p117
        %p313 = pneg %p114
        %p314 = pneg %p138
        %p315 = pneg %p135
        %p316 = pneg %p159
        %p317 = pneg %p156
        %s318 = smul.u32 4, %s23
        %s319 = smul.u32 4, %s23
        %s320 = smul.u32 64, %s23
        %p322 = scmp.eq.s32.totalorder %s23, 0
        // Predicated region
        $region57: #{image_captioning_forward.2} parent=39 // pred_check
          %p323 = pneg %p322
        $region58: #{image_captioning_forward.2} parent=39 // pred_check_branch
          %325 = sbr.rel (%p323) target = $region60
        $region59: #{image_captioning_forward.2} parent=39 // pred_region
          %326 = vst [vmem:[#allocation2] sm:$0xff] 0.0
        $region60: #{image_captioning_forward.2} parent=39 // pred_fallthru
          _
        %v327 = vld [vmem:[%s0] sm:$0xff]
        %v328 = vld [vmem:[%s0 + $0x8] sm:$0xff]
        %v329 = vld [vmem:[%s0 + $0x10] sm:$0xff]
        %v330 = vld [vmem:[%s0 + $0x18] sm:$0xff]
        %v331 = vld [vmem:[%s0 + $0x20] sm:$0xff]
        %v332 = vld [vmem:[%s0 + $0x28] sm:$0xff]
        %v333 = vld [vmem:[%s0 + $0x30] sm:$0xff]
        %v334 = vld [vmem:[%s0 + $0x38] sm:$0xff]
        %v335 = vld [vmem:[%s0 + $0x40] sm:$0xff]
        %v336 = vld [vmem:[%s0 + $0x48] sm:$0xff]
        %v337 = vld [vmem:[%s0 + $0x50] sm:$0xff]
        %v338 = vld [vmem:[%s0 + $0x58] sm:$0xff]
        %v339 = vld [vmem:[%s264] sm:$0xff]
        %v340 = vld [vmem:[%s264 + $0x8] sm:$0xff]
        %v341 = vld [vmem:[%s264 + $0x10] sm:$0xff]
        %v342 = vld [vmem:[%s264 + $0x18] sm:$0xff]
        %v343 = vld [vmem:[%s264 + $0x20] sm:$0xff]
        %v344 = vld [vmem:[%s264 + $0x28] sm:$0xff]
        %v345 = vld [vmem:[%s264 + $0x30] sm:$0xff]
        %v346 = vld [vmem:[%s264 + $0x38] sm:$0xff]
        %v347 = vld [vmem:[%s264 + $0x40] sm:$0xff]
        %v348 = vld [vmem:[%s264 + $0x48] sm:$0xff]
        %v349 = vld [vmem:[%s264 + $0x50] sm:$0xff]
        %v350 = vld [vmem:[%s264 + $0x58] sm:$0xff]
        %v351 = vld [vmem:[%s264 + $0x60] sm:$0xff]
        %v352 = vld [vmem:[%s264 + $0x68] sm:$0xff]
        %v353 = vld [vmem:[%s264 + $0x70] sm:$0xff]
        %v354 = vld [vmem:[%s264 + $0x78] sm:$0xff]
        %v355 = vld [vmem:[%s264 + $0x80] sm:$0xff]
        %v356 = vld [vmem:[%s264 + $0x88] sm:$0xff]
        %v357 = vld [vmem:[%s264 + $0x90] sm:$0xff]
        %v358 = vld [vmem:[%s264 + $0x98] sm:$0xff]
        %v359 = vld [vmem:[%s264 + $0xa0] sm:$0xff]
        %v360 = vld [vmem:[%s264 + $0xa8] sm:$0xff]
        %v361 = vld [vmem:[%s264 + $0xb0] sm:$0xff]
        %v362 = vld [vmem:[%s264 + $0xb8] sm:$0xff]
        %v363 = vld [vmem:[%s264 + $0xc0] sm:$0xff]
        %v364 = vld [vmem:[%s264 + $0xc8] sm:$0xff]
        %v365 = vld [vmem:[%s264 + $0xd0] sm:$0xff]
        %v366 = vld [vmem:[%s264 + $0xd8] sm:$0xff]
        %v367 = vld [vmem:[%s264 + $0xe0] sm:$0xff]
        %v368 = vld [vmem:[%s264 + $0xe8] sm:$0xff]
        %v369 = vld [vmem:[%s264 + $0xf0] sm:$0xff]
        %v370 = vld [vmem:[%s264 + $0xf8] sm:$0xff]
        %v371 = vld [vmem:[%s264 + $0x100] sm:$0xff]
        %v372 = vld [vmem:[%s264 + $0x108] sm:$0xff]
        %v373 = vld [vmem:[%s264 + $0x110] sm:$0xff]
        %v374 = vld [vmem:[%s264 + $0x118] sm:$0xff]
        %v375 = vld [vmem:[%s264 + $0x120] sm:$0xff]
        %v376 = vld [vmem:[%s264 + $0x128] sm:$0xff]
        %v377 = vld [vmem:[%s264 + $0x130] sm:$0xff]
        %v378 = vld [vmem:[%s264 + $0x138] sm:$0xff]
        %v379 = vld [vmem:[%s264 + $0x140] sm:$0xff]
        %v380 = vld [vmem:[%s264 + $0x148] sm:$0xff]
        %v381 = vld [vmem:[%s264 + $0x150] sm:$0xff]
        %v382 = vld [vmem:[%s264 + $0x158] sm:$0xff]
        %v383 = vld [vmem:[%s264 + $0x160] sm:$0xff]
        %v384 = vld [vmem:[%s264 + $0x168] sm:$0xff]
        %v385 = vld [vmem:[%s264 + $0x170] sm:$0xff]
        %v386 = vld [vmem:[%s264 + $0x178] sm:$0xff]
        %v387 = vld [vmem:[%s264 + $0x180] sm:$0xff]
        %v388 = vld [vmem:[%s264 + $0x188] sm:$0xff]
        %v389 = vld [vmem:[%s264 + $0x190] sm:$0xff]
        %v390 = vld [vmem:[%s264 + $0x198] sm:$0xff]
        %v391 = vld [vmem:[%s264 + $0x1a0] sm:$0xff]
        %v392 = vld [vmem:[%s264 + $0x1a8] sm:$0xff]
        %v393 = vld [vmem:[%s264 + $0x1b0] sm:$0xff]
        %v394 = vld [vmem:[%s264 + $0x1b8] sm:$0xff]
        %v395 = vld [vmem:[%s264 + $0x1c0] sm:$0xff]
        %v396 = vld [vmem:[%s264 + $0x1c8] sm:$0xff]
        %v397 = vld [vmem:[%s264 + $0x1d0] sm:$0xff]
        %v398 = vld [vmem:[%s264 + $0x1d8] sm:$0xff]
        %v399 = vld [vmem:[%s264 + $0x1e0] sm:$0xff]
        %v400 = vld [vmem:[%s264 + $0x1e8] sm:$0xff]
        %v401 = vld [vmem:[%s264 + $0x1f0] sm:$0xff]
        %v402 = vld [vmem:[%s264 + $0x1f8] sm:$0xff]
        %v403 = vld [vmem:[%s264 + $0x200] sm:$0xff]
        %v404 = vld [vmem:[%s264 + $0x208] sm:$0xff]
        %v405 = vld [vmem:[%s264 + $0x210] sm:$0xff]
        %v406 = vld [vmem:[%s264 + $0x218] sm:$0xff]
        %v407 = vld [vmem:[%s264 + $0x220] sm:$0xff]
        %v408 = vld [vmem:[%s264 + $0x228] sm:$0xff]
        %v409 = vld [vmem:[%s264 + $0x230] sm:$0xff]
        %v410 = vld [vmem:[%s264 + $0x238] sm:$0xff]
        %v411 = vld [vmem:[%s264 + $0x240] sm:$0xff]
        %v412 = vld [vmem:[%s264 + $0x248] sm:$0xff]
        %v413 = vld [vmem:[%s264 + $0x250] sm:$0xff]
        %v414 = vld [vmem:[%s264 + $0x258] sm:$0xff]
        %v415 = vld [vmem:[%s264 + $0x260] sm:$0xff]
        %v416 = vld [vmem:[%s264 + $0x268] sm:$0xff]
        %v417 = vld [vmem:[%s264 + $0x270] sm:$0xff]
        %v418 = vld [vmem:[%s264 + $0x278] sm:$0xff]
        %v419 = vld [vmem:[%s264 + $0x280] sm:$0xff]
        %v420 = vld [vmem:[%s264 + $0x288] sm:$0xff]
        %v421 = vld [vmem:[%s264 + $0x290] sm:$0xff]
        %v422 = vld [vmem:[%s264 + $0x298] sm:$0xff]
        %v423 = vld [vmem:[%s264 + $0x2a0] sm:$0xff]
        %v424 = vld [vmem:[%s264 + $0x2a8] sm:$0xff]
        %v425 = vld [vmem:[%s264 + $0x2b0] sm:$0xff]
        %v426 = vld [vmem:[%s264 + $0x2b8] sm:$0xff]
        %v427 = vld [vmem:[%s264 + $0x2c0] sm:$0xff]
        %v428 = vld [vmem:[%s264 + $0x2c8] sm:$0xff]
        %v429 = vld [vmem:[%s264 + $0x2d0] sm:$0xff]
        %v430 = vld [vmem:[%s264 + $0x2d8] sm:$0xff]
        %v431 = vld [vmem:[%s264 + $0x2e0] sm:$0xff]
        %v432 = vld [vmem:[%s264 + $0x2e8] sm:$0xff]
        %v433 = vld [vmem:[%s264 + $0x2f0] sm:$0xff]
        %v434 = vld [vmem:[%s264 + $0x2f8] sm:$0xff]
        %v435 = vld [vmem:[%s264 + $0x300] sm:$0xff]
        %v436 = vld [vmem:[%s264 + $0x308] sm:$0xff]
        %v437 = vld [vmem:[%s264 + $0x310] sm:$0xff]
        %v438 = vld [vmem:[%s264 + $0x318] sm:$0xff]
        %v439 = vld [vmem:[%s264 + $0x320] sm:$0xff]
        %v440 = vld [vmem:[%s264 + $0x328] sm:$0xff]
        %v441 = vld [vmem:[%s264 + $0x330] sm:$0xff]
        %v442 = vld [vmem:[%s264 + $0x338] sm:$0xff]
        %v443 = vld [vmem:[%s264 + $0x340] sm:$0xff]
        %v444 = vld [vmem:[%s264 + $0x348] sm:$0xff]
        %v445 = vld [vmem:[%s264 + $0x350] sm:$0xff]
        %v446 = vld [vmem:[%s264 + $0x358] sm:$0xff]
        %v447 = vld [vmem:[%s264 + $0x360] sm:$0xff]
        %v448 = vld [vmem:[%s264 + $0x368] sm:$0xff]
        %v449 = vld [vmem:[%s264 + $0x370] sm:$0xff]
        %v450 = vld [vmem:[%s264 + $0x378] sm:$0xff]
        %v451 = vld [vmem:[%s264 + $0x380] sm:$0xff]
        %v452 = vld [vmem:[%s264 + $0x388] sm:$0xff]
        %v453 = vld [vmem:[%s264 + $0x390] sm:$0xff]
        %v454 = vld [vmem:[%s264 + $0x398] sm:$0xff]
        %v455 = vld [vmem:[%s264 + $0x3a0] sm:$0xff]
        %v456 = vld [vmem:[%s264 + $0x3a8] sm:$0xff]
        %v457 = vld [vmem:[%s264 + $0x3b0] sm:$0xff]
        %v458 = vld [vmem:[%s264 + $0x3b8] sm:$0xff]
        %v459 = vld [vmem:[%s264 + $0x3c0] sm:$0xff]
        %v460 = vld [vmem:[%s264 + $0x3c8] sm:$0xff]
        %v461 = vld [vmem:[%s264 + $0x3d0] sm:$0xff]
        %v462 = vld [vmem:[%s264 + $0x3d8] sm:$0xff]
        %v463 = vld [vmem:[%s264 + $0x3e0] sm:$0xff]
        %v464 = vld [vmem:[%s264 + $0x3e8] sm:$0xff]
        %v465 = vld [vmem:[%s264 + $0x3f0] sm:$0xff]
        %v466 = vld [vmem:[%s264 + $0x3f8] sm:$0xff]
        %v467 = vld [vmem:[%s264 + $0x400] sm:$0xff]
        %v468 = vld [vmem:[%s264 + $0x408] sm:$0xff]
        %v469 = vld [vmem:[%s264 + $0x410] sm:$0xff]
        %v470 = vld [vmem:[%s264 + $0x418] sm:$0xff]
        %v471 = vld [vmem:[%s264 + $0x420] sm:$0xff]
        %v472 = vld [vmem:[%s264 + $0x428] sm:$0xff]
        %v473 = vld [vmem:[%s264 + $0x430] sm:$0xff]
        %v474 = vld [vmem:[%s264 + $0x438] sm:$0xff]
        %v475 = vld [vmem:[%s264 + $0x440] sm:$0xff]
        %v476 = vld [vmem:[%s264 + $0x448] sm:$0xff]
        %v477 = vld [vmem:[%s264 + $0x450] sm:$0xff]
        %v478 = vld [vmem:[%s264 + $0x458] sm:$0xff]
        %v479 = vld [vmem:[%s264 + $0x460] sm:$0xff]
        %v480 = vld [vmem:[%s264 + $0x468] sm:$0xff]
        %v481 = vld [vmem:[%s264 + $0x470] sm:$0xff]
        %v482 = vld [vmem:[%s264 + $0x478] sm:$0xff]
        %v483 = vld [vmem:[%s264 + $0x480] sm:$0xff]
        %v484 = vld [vmem:[%s264 + $0x488] sm:$0xff]
        %v485 = vld [vmem:[%s264 + $0x490] sm:$0xff]
        %v486 = vld [vmem:[%s264 + $0x498] sm:$0xff]
        %v487 = vld [vmem:[%s264 + $0x4a0] sm:$0xff]
        %v488 = vld [vmem:[%s264 + $0x4a8] sm:$0xff]
        %v489 = vld [vmem:[%s264 + $0x4b0] sm:$0xff]
        %v490 = vld [vmem:[%s264 + $0x4b8] sm:$0xff]
        %v491 = vld [vmem:[%s264 + $0x4c0] sm:$0xff]
        %v492 = vld [vmem:[%s264 + $0x4c8] sm:$0xff]
        %v493 = vld [vmem:[%s264 + $0x4d0] sm:$0xff]
        %v494 = vld [vmem:[%s264 + $0x4d8] sm:$0xff]
        %v495 = vld [vmem:[%s264 + $0x4e0] sm:$0xff]
        %v496 = vld [vmem:[%s264 + $0x4e8] sm:$0xff]
        %v497 = vld [vmem:[%s264 + $0x4f0] sm:$0xff]
        %v498 = vld [vmem:[%s264 + $0x4f8] sm:$0xff]
        %v499 = vld [vmem:[%s264 + $0x500] sm:$0xff]
        %v500 = vld [vmem:[%s264 + $0x508] sm:$0xff]
        %v501 = vld [vmem:[%s264 + $0x510] sm:$0xff]
        %v502 = vld [vmem:[%s264 + $0x518] sm:$0xff]
        %v503 = vld [vmem:[%s264 + $0x520] sm:$0xff]
        %v504 = vld [vmem:[%s264 + $0x528] sm:$0xff]
        %v505 = vld [vmem:[%s264 + $0x530] sm:$0xff]
        %v506 = vld [vmem:[%s264 + $0x538] sm:$0xff]
        %v507 = vld [vmem:[%s264 + $0x540] sm:$0xff]
        %v508 = vld [vmem:[%s264 + $0x548] sm:$0xff]
        %v509 = vld [vmem:[%s264 + $0x550] sm:$0xff]
        %v510 = vld [vmem:[%s264 + $0x558] sm:$0xff]
        %v511 = vld [vmem:[%s264 + $0x560] sm:$0xff]
        %v512 = vld [vmem:[%s264 + $0x568] sm:$0xff]
        %v513 = vld [vmem:[%s264 + $0x570] sm:$0xff]
        %v514 = vld [vmem:[%s264 + $0x578] sm:$0xff]
        %v515 = vld [vmem:[%s264 + $0x580] sm:$0xff]
        %v516 = vld [vmem:[%s264 + $0x588] sm:$0xff]
        %v517 = vld [vmem:[%s264 + $0x590] sm:$0xff]
        %v518 = vld [vmem:[%s264 + $0x598] sm:$0xff]
        %v519 = vld [vmem:[%s264 + $0x5a0] sm:$0xff]
        %v520 = vld [vmem:[%s264 + $0x5a8] sm:$0xff]
        %v521 = vld [vmem:[%s264 + $0x5b0] sm:$0xff]
        %v522 = vld [vmem:[%s264 + $0x5b8] sm:$0xff]
        %v523 = vld [vmem:[%s264 + $0x5c0] sm:$0xff]
        %v524 = vld [vmem:[%s264 + $0x5c8] sm:$0xff]
        %v525 = vld [vmem:[%s264 + $0x5d0] sm:$0xff]
        %v526 = vld [vmem:[%s264 + $0x5d8] sm:$0xff]
        %v527 = vld [vmem:[%s264 + $0x5e0] sm:$0xff]
        %v528 = vld [vmem:[%s264 + $0x5e8] sm:$0xff]
        %v529 = vld [vmem:[%s264 + $0x5f0] sm:$0xff]
        %v530 = vld [vmem:[%s264 + $0x5f8] sm:$0xff]
        %v531 = vld [vmem:[%s264 + $0x600] sm:$0xff]
        %v532 = vld [vmem:[%s264 + $0x608] sm:$0xff]
        %v533 = vld [vmem:[%s264 + $0x610] sm:$0xff]
        %v534 = vld [vmem:[%s264 + $0x618] sm:$0xff]
        %v535 = vld [vmem:[%s264 + $0x620] sm:$0xff]
        %v536 = vld [vmem:[%s264 + $0x628] sm:$0xff]
        %v537 = vld [vmem:[%s264 + $0x630] sm:$0xff]
        %v538 = vld [vmem:[%s264 + $0x638] sm:$0xff]
        %v539 = vld [vmem:[%s264 + $0x640] sm:$0xff]
        %v540 = vld [vmem:[%s264 + $0x648] sm:$0xff]
        %v541 = vld [vmem:[%s264 + $0x650] sm:$0xff]
        %v542 = vld [vmem:[%s264 + $0x658] sm:$0xff]
        %v543 = vld [vmem:[%s264 + $0x660] sm:$0xff]
        %v544 = vld [vmem:[%s264 + $0x668] sm:$0xff]
        %v545 = vld [vmem:[%s264 + $0x670] sm:$0xff]
        %v546 = vld [vmem:[%s264 + $0x678] sm:$0xff]
        %v547 = vld [vmem:[%s264 + $0x680] sm:$0xff]
        %v548 = vld [vmem:[%s264 + $0x688] sm:$0xff]
        %v549 = vld [vmem:[%s264 + $0x690] sm:$0xff]
        %v550 = vld [vmem:[%s264 + $0x698] sm:$0xff]
        %v551 = vld [vmem:[%s264 + $0x6a0] sm:$0xff]
        %v552 = vld [vmem:[%s264 + $0x6a8] sm:$0xff]
        %v553 = vld [vmem:[%s264 + $0x6b0] sm:$0xff]
        %v554 = vld [vmem:[%s264 + $0x6b8] sm:$0xff]
        %v555 = vld [vmem:[%s264 + $0x6c0] sm:$0xff]
        %v556 = vld [vmem:[%s264 + $0x6c8] sm:$0xff]
        %v557 = vld [vmem:[%s264 + $0x6d0] sm:$0xff]
        %v558 = vld [vmem:[%s264 + $0x6d8] sm:$0xff]
        %v559 = vld [vmem:[%s264 + $0x6e0] sm:$0xff]
        %v560 = vld [vmem:[%s264 + $0x6e8] sm:$0xff]
        %v561 = vld [vmem:[%s264 + $0x6f0] sm:$0xff]
        %v562 = vld [vmem:[%s264 + $0x6f8] sm:$0xff]
        %v563 = vld [vmem:[%s264 + $0x700] sm:$0xff]
        %v564 = vld [vmem:[%s264 + $0x708] sm:$0xff]
        %v565 = vld [vmem:[%s264 + $0x710] sm:$0xff]
        %v566 = vld [vmem:[%s264 + $0x718] sm:$0xff]
        %v567 = vld [vmem:[%s264 + $0x720] sm:$0xff]
        %v568 = vld [vmem:[%s264 + $0x728] sm:$0xff]
        %v569 = vld [vmem:[%s264 + $0x730] sm:$0xff]
        %v570 = vld [vmem:[%s264 + $0x738] sm:$0xff]
        %v571 = vld [vmem:[%s264 + $0x740] sm:$0xff]
        %v572 = vld [vmem:[%s264 + $0x748] sm:$0xff]
        %v573 = vld [vmem:[%s264 + $0x750] sm:$0xff]
        %v574 = vld [vmem:[%s264 + $0x758] sm:$0xff]
        %v575 = vld [vmem:[%s264 + $0x760] sm:$0xff]
        %v576 = vld [vmem:[%s264 + $0x768] sm:$0xff]
        %v577 = vld [vmem:[%s264 + $0x770] sm:$0xff]
        %v578 = vld [vmem:[%s264 + $0x778] sm:$0xff]
        %v579 = vld [vmem:[%s264 + $0x780] sm:$0xff]
        %v580 = vld [vmem:[%s264 + $0x788] sm:$0xff]
        %v581 = vld [vmem:[%s264 + $0x790] sm:$0xff]
        %v582 = vld [vmem:[%s264 + $0x798] sm:$0xff]
        %v583 = vld [vmem:[%s264 + $0x7a0] sm:$0xff]
        %v584 = vld [vmem:[%s264 + $0x7a8] sm:$0xff]
        %v585 = vld [vmem:[%s264 + $0x7b0] sm:$0xff]
        %v586 = vld [vmem:[%s264 + $0x7b8] sm:$0xff]
        %v587 = vld [vmem:[%s264 + $0x7c0] sm:$0xff]
        %v588 = vld [vmem:[%s264 + $0x7c8] sm:$0xff]
        %v589 = vld [vmem:[%s264 + $0x7d0] sm:$0xff]
        %v590 = vld [vmem:[%s264 + $0x7d8] sm:$0xff]
        %v591 = vld [vmem:[%s264 + $0x7e0] sm:$0xff]
        %v592 = vld [vmem:[%s264 + $0x7e8] sm:$0xff]
        %v593 = vld [vmem:[%s264 + $0x7f0] sm:$0xff]
        %v594 = vld [vmem:[%s264 + $0x7f8] sm:$0xff]
        %v595 = vld [vmem:[%s264 + $0x800] sm:$0xff]
        %v596 = vld [vmem:[%s264 + $0x808] sm:$0xff]
        %v597 = vld [vmem:[%s264 + $0x810] sm:$0xff]
        %v598 = vld [vmem:[%s264 + $0x818] sm:$0xff]
        %v599 = vld [vmem:[%s264 + $0x820] sm:$0xff]
        %v600 = vld [vmem:[%s264 + $0x828] sm:$0xff]
        %v601 = vld [vmem:[%s264 + $0x830] sm:$0xff]
        %v602 = vld [vmem:[%s264 + $0x838] sm:$0xff]
        %v603 = vld [vmem:[%s264 + $0x840] sm:$0xff]
        %v604 = vld [vmem:[%s264 + $0x848] sm:$0xff]
        %v605 = vld [vmem:[%s264 + $0x850] sm:$0xff]
        %v606 = vld [vmem:[%s264 + $0x858] sm:$0xff]
        %v607 = vld [vmem:[%s264 + $0x860] sm:$0xff]
        %v608 = vld [vmem:[%s264 + $0x868] sm:$0xff]
        %v609 = vld [vmem:[%s264 + $0x870] sm:$0xff]
        %v610 = vld [vmem:[%s264 + $0x878] sm:$0xff]
        %v611 = vld [vmem:[%s264 + $0x880] sm:$0xff]
        %v612 = vld [vmem:[%s264 + $0x888] sm:$0xff]
        %v613 = vld [vmem:[%s264 + $0x890] sm:$0xff]
        %v614 = vld [vmem:[%s264 + $0x898] sm:$0xff]
        %v615 = vld [vmem:[%s264 + $0x8a0] sm:$0xff]
        %v616 = vld [vmem:[%s264 + $0x8a8] sm:$0xff]
        %v617 = vld [vmem:[%s264 + $0x8b0] sm:$0xff]
        %v618 = vld [vmem:[%s264 + $0x8b8] sm:$0xff]
        %v619 = vld [vmem:[%s264 + $0x8c0] sm:$0xff]
        %v620 = vld [vmem:[%s264 + $0x8c8] sm:$0xff]
        %v621 = vld [vmem:[%s264 + $0x8d0] sm:$0xff]
        %v622 = vld [vmem:[%s264 + $0x8d8] sm:$0xff]
        %v623 = vld [vmem:[%s264 + $0x8e0] sm:$0xff]
        %v624 = vld [vmem:[%s264 + $0x8e8] sm:$0xff]
        %v625 = vld [vmem:[%s264 + $0x8f0] sm:$0xff]
        %v626 = vld [vmem:[%s264 + $0x8f8] sm:$0xff]
        %v627 = vld [vmem:[%s264 + $0x900] sm:$0xff]
        %v628 = vld [vmem:[%s264 + $0x908] sm:$0xff]
        %v629 = vld [vmem:[%s264 + $0x910] sm:$0xff]
        %v630 = vld [vmem:[%s264 + $0x918] sm:$0xff]
        %v631 = vld [vmem:[%s264 + $0x920] sm:$0xff]
        %v632 = vld [vmem:[%s264 + $0x928] sm:$0xff]
        %v633 = vld [vmem:[%s264 + $0x930] sm:$0xff]
        %v634 = vld [vmem:[%s264 + $0x938] sm:$0xff]
        %v635 = vld [vmem:[%s264 + $0x940] sm:$0xff]
        %v636 = vld [vmem:[%s264 + $0x948] sm:$0xff]
        %v637 = vld [vmem:[%s264 + $0x950] sm:$0xff]
        %v638 = vld [vmem:[%s264 + $0x958] sm:$0xff]
        %v639 = vld [vmem:[%s264 + $0x960] sm:$0xff]
        %v640 = vld [vmem:[%s264 + $0x968] sm:$0xff]
        %v641 = vld [vmem:[%s264 + $0x970] sm:$0xff]
        %v642 = vld [vmem:[%s264 + $0x978] sm:$0xff]
        %v643 = vld [vmem:[%s264 + $0x980] sm:$0xff]
        %v644 = vld [vmem:[%s264 + $0x988] sm:$0xff]
        %v645 = vld [vmem:[%s264 + $0x990] sm:$0xff]
        %v646 = vld [vmem:[%s264 + $0x998] sm:$0xff]
        %v647 = vld [vmem:[%s264 + $0x9a0] sm:$0xff]
        %v648 = vld [vmem:[%s264 + $0x9a8] sm:$0xff]
        %v649 = vld [vmem:[%s264 + $0x9b0] sm:$0xff]
        %v650 = vld [vmem:[%s264 + $0x9b8] sm:$0xff]
        %v651 = vld [vmem:[%s264 + $0x9c0] sm:$0xff]
        %v652 = vld [vmem:[%s264 + $0x9c8] sm:$0xff]
        %v653 = vld [vmem:[%s264 + $0x9d0] sm:$0xff]
        %v654 = vld [vmem:[%s264 + $0x9d8] sm:$0xff]
        %v655 = vld [vmem:[%s264 + $0x9e0] sm:$0xff]
        %v656 = vld [vmem:[%s264 + $0x9e8] sm:$0xff]
        %v657 = vld [vmem:[%s264 + $0x9f0] sm:$0xff]
        %v658 = vld [vmem:[%s264 + $0x9f8] sm:$0xff]
        %v659 = vld [vmem:[%s264 + $0xa00] sm:$0xff]
        %v660 = vld [vmem:[%s264 + $0xa08] sm:$0xff]
        %v661 = vld [vmem:[%s264 + $0xa10] sm:$0xff]
        %v662 = vld [vmem:[%s264 + $0xa18] sm:$0xff]
        %v663 = vld [vmem:[%s264 + $0xa20] sm:$0xff]
        %v664 = vld [vmem:[%s264 + $0xa28] sm:$0xff]
        %v665 = vld [vmem:[%s264 + $0xa30] sm:$0xff]
        %v666 = vld [vmem:[%s264 + $0xa38] sm:$0xff]
        %v667 = vld [vmem:[%s264 + $0xa40] sm:$0xff]
        %v668 = vld [vmem:[%s264 + $0xa48] sm:$0xff]
        %v669 = vld [vmem:[%s264 + $0xa50] sm:$0xff]
        %v670 = vld [vmem:[%s264 + $0xa58] sm:$0xff]
        %v671 = vld [vmem:[%s264 + $0xa60] sm:$0xff]
        %v672 = vld [vmem:[%s264 + $0xa68] sm:$0xff]
        %v673 = vld [vmem:[%s264 + $0xa70] sm:$0xff]
        %v674 = vld [vmem:[%s264 + $0xa78] sm:$0xff]
        %v675 = vld [vmem:[%s264 + $0xa80] sm:$0xff]
        %v676 = vld [vmem:[%s264 + $0xa88] sm:$0xff]
        %v677 = vld [vmem:[%s264 + $0xa90] sm:$0xff]
        %v678 = vld [vmem:[%s264 + $0xa98] sm:$0xff]
        %v679 = vld [vmem:[%s264 + $0xaa0] sm:$0xff]
        %v680 = vld [vmem:[%s264 + $0xaa8] sm:$0xff]
        %v681 = vld [vmem:[%s264 + $0xab0] sm:$0xff]
        %v682 = vld [vmem:[%s264 + $0xab8] sm:$0xff]
        %v683 = vld [vmem:[%s264 + $0xac0] sm:$0xff]
        %v684 = vld [vmem:[%s264 + $0xac8] sm:$0xff]
        %v685 = vld [vmem:[%s264 + $0xad0] sm:$0xff]
        %v686 = vld [vmem:[%s264 + $0xad8] sm:$0xff]
        %v687 = vld [vmem:[%s264 + $0xae0] sm:$0xff]
        %v688 = vld [vmem:[%s264 + $0xae8] sm:$0xff]
        %v689 = vld [vmem:[%s264 + $0xaf0] sm:$0xff]
        %v690 = vld [vmem:[%s264 + $0xaf8] sm:$0xff]
        %v691 = vld [vmem:[%s264 + $0xb00] sm:$0xff]
        %v692 = vld [vmem:[%s264 + $0xb08] sm:$0xff]
        %v693 = vld [vmem:[%s264 + $0xb10] sm:$0xff]
        %v694 = vld [vmem:[%s264 + $0xb18] sm:$0xff]
        %v695 = vld [vmem:[%s264 + $0xb20] sm:$0xff]
        %v696 = vld [vmem:[%s264 + $0xb28] sm:$0xff]
        %v697 = vld [vmem:[%s264 + $0xb30] sm:$0xff]
        %v698 = vld [vmem:[%s264 + $0xb38] sm:$0xff]
        %v699 = vld [vmem:[%s264 + $0xb40] sm:$0xff]
        %v700 = vld [vmem:[%s264 + $0xb48] sm:$0xff]
        %v701 = vld [vmem:[%s264 + $0xb50] sm:$0xff]
        %v702 = vld [vmem:[%s264 + $0xb58] sm:$0xff]
        %v703 = vld [vmem:[%s264 + $0xb60] sm:$0xff]
        %v704 = vld [vmem:[%s264 + $0xb68] sm:$0xff]
        %v705 = vld [vmem:[%s264 + $0xb70] sm:$0xff]
        %v706 = vld [vmem:[%s264 + $0xb78] sm:$0xff]
        %v707 = vld [vmem:[%s264 + $0xb80] sm:$0xff]
        %v708 = vld [vmem:[%s264 + $0xb88] sm:$0xff]
        %v709 = vld [vmem:[%s264 + $0xb90] sm:$0xff]
        %v710 = vld [vmem:[%s264 + $0xb98] sm:$0xff]
        %v711 = vld [vmem:[%s264 + $0xba0] sm:$0xff]
        %v712 = vld [vmem:[%s264 + $0xba8] sm:$0xff]
        %v713 = vld [vmem:[%s264 + $0xbb0] sm:$0xff]
        %v714 = vld [vmem:[%s264 + $0xbb8] sm:$0xff]
        %v715 = vld [vmem:[%s264 + $0xbc0] sm:$0xff]
        %v716 = vld [vmem:[%s264 + $0xbc8] sm:$0xff]
        %v717 = vld [vmem:[%s264 + $0xbd0] sm:$0xff]
        %v718 = vld [vmem:[%s264 + $0xbd8] sm:$0xff]
        %v719 = vld [vmem:[%s264 + $0xbe0] sm:$0xff]
        %v720 = vld [vmem:[%s264 + $0xbe8] sm:$0xff]
        %v721 = vld [vmem:[%s264 + $0xbf0] sm:$0xff]
        %v722 = vld [vmem:[%s264 + $0xbf8] sm:$0xff]
        %v723 = vld [vmem:[%s264 + $0xc00] sm:$0xff]
        %v724 = vld [vmem:[%s264 + $0xc08] sm:$0xff]
        %v725 = vld [vmem:[%s264 + $0xc10] sm:$0xff]
        %v726 = vld [vmem:[%s264 + $0xc18] sm:$0xff]
        %v727 = vld [vmem:[%s264 + $0xc20] sm:$0xff]
        %v728 = vld [vmem:[%s264 + $0xc28] sm:$0xff]
        %v729 = vld [vmem:[%s264 + $0xc30] sm:$0xff]
        %v730 = vld [vmem:[%s264 + $0xc38] sm:$0xff]
        %v731 = vld [vmem:[%s264 + $0xc40] sm:$0xff]
        %v732 = vld [vmem:[%s264 + $0xc48] sm:$0xff]
        %v733 = vld [vmem:[%s264 + $0xc50] sm:$0xff]
        %v734 = vld [vmem:[%s264 + $0xc58] sm:$0xff]
        %v735 = vld [vmem:[%s264 + $0xc60] sm:$0xff]
        %v736 = vld [vmem:[%s264 + $0xc68] sm:$0xff]
        %v737 = vld [vmem:[%s264 + $0xc70] sm:$0xff]
        %v738 = vld [vmem:[%s264 + $0xc78] sm:$0xff]
        %v739 = vld [vmem:[%s264 + $0xc80] sm:$0xff]
        %v740 = vld [vmem:[%s264 + $0xc88] sm:$0xff]
        %v741 = vld [vmem:[%s264 + $0xc90] sm:$0xff]
        %v742 = vld [vmem:[%s264 + $0xc98] sm:$0xff]
        %v743 = vld [vmem:[%s264 + $0xca0] sm:$0xff]
        %v744 = vld [vmem:[%s264 + $0xca8] sm:$0xff]
        %v745 = vld [vmem:[%s264 + $0xcb0] sm:$0xff]
        %v746 = vld [vmem:[%s264 + $0xcb8] sm:$0xff]
        %v747 = vld [vmem:[%s264 + $0xcc0] sm:$0xff]
        %v748 = vld [vmem:[%s264 + $0xcc8] sm:$0xff]
        %v749 = vld [vmem:[%s264 + $0xcd0] sm:$0xff]
        %v750 = vld [vmem:[%s264 + $0xcd8] sm:$0xff]
        %v751 = vld [vmem:[%s264 + $0xce0] sm:$0xff]
        %v752 = vld [vmem:[%s264 + $0xce8] sm:$0xff]
        %v753 = vld [vmem:[%s264 + $0xcf0] sm:$0xff]
        %v754 = vld [vmem:[%s264 + $0xcf8] sm:$0xff]
        %v755 = vld [vmem:[%s264 + $0xd00] sm:$0xff]
        %v756 = vld [vmem:[%s264 + $0xd08] sm:$0xff]
        %v757 = vld [vmem:[%s264 + $0xd10] sm:$0xff]
        %v758 = vld [vmem:[%s264 + $0xd18] sm:$0xff]
        %v759 = vld [vmem:[%s264 + $0xd20] sm:$0xff]
        %v760 = vld [vmem:[%s264 + $0xd28] sm:$0xff]
        %v761 = vld [vmem:[%s264 + $0xd30] sm:$0xff]
        %v762 = vld [vmem:[%s264 + $0xd38] sm:$0xff]
        %v763 = vld [vmem:[%s264 + $0xd40] sm:$0xff]
        %v764 = vld [vmem:[%s264 + $0xd48] sm:$0xff]
        %v765 = vld [vmem:[%s264 + $0xd50] sm:$0xff]
        %v766 = vld [vmem:[%s264 + $0xd58] sm:$0xff]
        %v767 = vld [vmem:[%s264 + $0xd60] sm:$0xff]
        %v768 = vld [vmem:[%s264 + $0xd68] sm:$0xff]
        %v769 = vld [vmem:[%s264 + $0xd70] sm:$0xff]
        %v770 = vld [vmem:[%s264 + $0xd78] sm:$0xff]
        %v771 = vld [vmem:[%s264 + $0xd80] sm:$0xff]
        %v772 = vld [vmem:[%s264 + $0xd88] sm:$0xff]
        %v773 = vld [vmem:[%s264 + $0xd90] sm:$0xff]
        %v774 = vld [vmem:[%s264 + $0xd98] sm:$0xff]
        %v775 = vld [vmem:[%s264 + $0xda0] sm:$0xff]
        %v776 = vld [vmem:[%s264 + $0xda8] sm:$0xff]
        %v777 = vld [vmem:[%s264 + $0xdb0] sm:$0xff]
        %v778 = vld [vmem:[%s264 + $0xdb8] sm:$0xff]
        %v779 = vld [vmem:[%s264 + $0xdc0] sm:$0xff]
        %v780 = vld [vmem:[%s264 + $0xdc8] sm:$0xff]
        %v781 = vld [vmem:[%s264 + $0xdd0] sm:$0xff]
        %v782 = vld [vmem:[%s264 + $0xdd8] sm:$0xff]
        %v783 = vld [vmem:[%s264 + $0xde0] sm:$0xff]
        %v784 = vld [vmem:[%s264 + $0xde8] sm:$0xff]
        %v785 = vld [vmem:[%s264 + $0xdf0] sm:$0xff]
        %v786 = vld [vmem:[%s264 + $0xdf8] sm:$0xff]
        %v787 = vld [vmem:[%s264 + $0xe00] sm:$0xff]
        %v788 = vld [vmem:[%s264 + $0xe08] sm:$0xff]
        %v789 = vld [vmem:[%s264 + $0xe10] sm:$0xff]
        %v790 = vld [vmem:[%s264 + $0xe18] sm:$0xff]
        %v791 = vld [vmem:[%s264 + $0xe20] sm:$0xff]
        %v792 = vld [vmem:[%s264 + $0xe28] sm:$0xff]
        %v793 = vld [vmem:[%s264 + $0xe30] sm:$0xff]
        %v794 = vld [vmem:[%s264 + $0xe38] sm:$0xff]
        %v795 = vld [vmem:[%s264 + $0xe40] sm:$0xff]
        %v796 = vld [vmem:[%s264 + $0xe48] sm:$0xff]
        %v797 = vld [vmem:[%s264 + $0xe50] sm:$0xff]
        %v798 = vld [vmem:[%s264 + $0xe58] sm:$0xff]
        %v799 = vld [vmem:[%s264 + $0xe60] sm:$0xff]
        %v800 = vld [vmem:[%s264 + $0xe68] sm:$0xff]
        %v801 = vld [vmem:[%s264 + $0xe70] sm:$0xff]
        %v802 = vld [vmem:[%s264 + $0xe78] sm:$0xff]
        %v803 = vld [vmem:[%s264 + $0xe80] sm:$0xff]
        %v804 = vld [vmem:[%s264 + $0xe88] sm:$0xff]
        %v805 = vld [vmem:[%s264 + $0xe90] sm:$0xff]
        %v806 = vld [vmem:[%s264 + $0xe98] sm:$0xff]
        %v807 = vld [vmem:[%s264 + $0xea0] sm:$0xff]
        %v808 = vld [vmem:[%s264 + $0xea8] sm:$0xff]
        %v809 = vld [vmem:[%s264 + $0xeb0] sm:$0xff]
        %v810 = vld [vmem:[%s264 + $0xeb8] sm:$0xff]
        %v811 = vld [vmem:[%s264 + $0xec0] sm:$0xff]
        %v812 = vld [vmem:[%s264 + $0xec8] sm:$0xff]
        %v813 = vld [vmem:[%s264 + $0xed0] sm:$0xff]
        %v814 = vld [vmem:[%s264 + $0xed8] sm:$0xff]
        %v815 = vld [vmem:[%s264 + $0xee0] sm:$0xff]
        %v816 = vld [vmem:[%s264 + $0xee8] sm:$0xff]
        %v817 = vld [vmem:[%s264 + $0xef0] sm:$0xff]
        %v818 = vld [vmem:[%s264 + $0xef8] sm:$0xff]
        %v819 = vld [vmem:[%s264 + $0xf00] sm:$0xff]
        %v820 = vld [vmem:[%s264 + $0xf08] sm:$0xff]
        %v821 = vld [vmem:[%s264 + $0xf10] sm:$0xff]
        %v822 = vld [vmem:[%s264 + $0xf18] sm:$0xff]
        %v823 = vld [vmem:[%s264 + $0xf20] sm:$0xff]
        %v824 = vld [vmem:[%s264 + $0xf28] sm:$0xff]
        %v825 = vld [vmem:[%s264 + $0xf30] sm:$0xff]
        %v826 = vld [vmem:[%s264 + $0xf38] sm:$0xff]
        %v827 = vld [vmem:[%s264 + $0xf40] sm:$0xff]
        %v828 = vld [vmem:[%s264 + $0xf48] sm:$0xff]
        %v829 = vld [vmem:[%s264 + $0xf50] sm:$0xff]
        %v830 = vld [vmem:[%s264 + $0xf58] sm:$0xff]
        %v831 = vld [vmem:[%s264 + $0xf60] sm:$0xff]
        %v832 = vld [vmem:[%s264 + $0xf68] sm:$0xff]
        %v833 = vld [vmem:[%s264 + $0xf70] sm:$0xff]
        %v834 = vld [vmem:[%s264 + $0xf78] sm:$0xff]
        %v835 = vld [vmem:[%s264 + $0xf80] sm:$0xff]
        %v836 = vld [vmem:[%s264 + $0xf88] sm:$0xff]
        %v837 = vld [vmem:[%s264 + $0xf90] sm:$0xff]
        %v838 = vld [vmem:[%s264 + $0xf98] sm:$0xff]
        %v839 = vld [vmem:[%s264 + $0xfa0] sm:$0xff]
        %v840 = vld [vmem:[%s264 + $0xfa8] sm:$0xff]
        %v841 = vld [vmem:[%s264 + $0xfb0] sm:$0xff]
        %v842 = vld [vmem:[%s264 + $0xfb8] sm:$0xff]
        %v843 = vld [vmem:[%s264 + $0xfc0] sm:$0xff]
        %v844 = vld [vmem:[%s264 + $0xfc8] sm:$0xff]
        %v845 = vld [vmem:[%s264 + $0xfd0] sm:$0xff]
        %v846 = vld [vmem:[%s264 + $0xfd8] sm:$0xff]
        %v847 = vld [vmem:[%s264 + $0xfe0] sm:$0xff]
        %v848 = vld [vmem:[%s264 + $0xfe8] sm:$0xff]
        %v849 = vld [vmem:[%s264 + $0xff0] sm:$0xff]
        %v850 = vld [vmem:[%s264 + $0xff8] sm:$0xff]
        %v851 = vld [vmem:[%s264 + $0x1000] sm:$0xff]
        %v852 = vld [vmem:[%s264 + $0x1008] sm:$0xff]
        %v853 = vld [vmem:[%s264 + $0x1010] sm:$0xff]
        %v854 = vld [vmem:[%s264 + $0x1018] sm:$0xff]
        %v855 = vld [vmem:[%s264 + $0x1020] sm:$0xff]
        %v856 = vld [vmem:[%s264 + $0x1028] sm:$0xff]
        %v857 = vld [vmem:[%s264 + $0x1030] sm:$0xff]
        %v858 = vld [vmem:[%s264 + $0x1038] sm:$0xff]
        %v859 = vld [vmem:[%s264 + $0x1040] sm:$0xff]
        %v860 = vld [vmem:[%s264 + $0x1048] sm:$0xff]
        %v861 = vld [vmem:[%s264 + $0x1050] sm:$0xff]
        %v862 = vld [vmem:[%s264 + $0x1058] sm:$0xff]
        %v863 = vld [vmem:[%s264 + $0x1060] sm:$0xff]
        %v864 = vld [vmem:[%s264 + $0x1068] sm:$0xff]
        %v865 = vld [vmem:[%s264 + $0x1070] sm:$0xff]
        %v866 = vld [vmem:[%s264 + $0x1078] sm:$0xff]
        %v867 = vld [vmem:[%s264 + $0x1080] sm:$0xff]
        %v868 = vld [vmem:[%s264 + $0x1088] sm:$0xff]
        %v869 = vld [vmem:[%s264 + $0x1090] sm:$0xff]
        %v870 = vld [vmem:[%s264 + $0x1098] sm:$0xff]
        %v871 = vld [vmem:[%s264 + $0x10a0] sm:$0xff]
        %v872 = vld [vmem:[%s264 + $0x10a8] sm:$0xff]
        %v873 = vld [vmem:[%s264 + $0x10b0] sm:$0xff]
        %v874 = vld [vmem:[%s264 + $0x10b8] sm:$0xff]
        %v875 = vld [vmem:[%s264 + $0x10c0] sm:$0xff]
        %v876 = vld [vmem:[%s264 + $0x10c8] sm:$0xff]
        %v877 = vld [vmem:[%s264 + $0x10d0] sm:$0xff]
        %v878 = vld [vmem:[%s264 + $0x10d8] sm:$0xff]
        %v879 = vld [vmem:[%s264 + $0x10e0] sm:$0xff]
        %v880 = vld [vmem:[%s264 + $0x10e8] sm:$0xff]
        %v881 = vld [vmem:[%s264 + $0x10f0] sm:$0xff]
        %v882 = vld [vmem:[%s264 + $0x10f8] sm:$0xff]
        %v883 = vld [vmem:[%s264 + $0x1100] sm:$0xff]
        %v884 = vld [vmem:[%s264 + $0x1108] sm:$0xff]
        %v885 = vld [vmem:[%s264 + $0x1110] sm:$0xff]
        %v886 = vld [vmem:[%s264 + $0x1118] sm:$0xff]
        %v887 = vld [vmem:[%s264 + $0x1120] sm:$0xff]
        %v888 = vld [vmem:[%s264 + $0x1128] sm:$0xff]
        %v889 = vld [vmem:[%s264 + $0x1130] sm:$0xff]
        %v890 = vld [vmem:[%s264 + $0x1138] sm:$0xff]
        %v891 = vld [vmem:[%s264 + $0x1140] sm:$0xff]
        %v892 = vld [vmem:[%s264 + $0x1148] sm:$0xff]
        %v893 = vld [vmem:[%s264 + $0x1150] sm:$0xff]
        %v894 = vld [vmem:[%s264 + $0x1158] sm:$0xff]
        %v895 = vld [vmem:[%s264 + $0x1160] sm:$0xff]
        %v896 = vld [vmem:[%s264 + $0x1168] sm:$0xff]
        %v897 = vld [vmem:[%s264 + $0x1170] sm:$0xff]
        %v898 = vld [vmem:[%s264 + $0x1178] sm:$0xff]
        %v899 = vld [vmem:[%s264 + $0x1180] sm:$0xff]
        %v900 = vld [vmem:[%s264 + $0x1188] sm:$0xff]
        %v901 = vld [vmem:[%s264 + $0x1190] sm:$0xff]
        %v902 = vld [vmem:[%s264 + $0x1198] sm:$0xff]
        %v903 = vld [vmem:[%s264 + $0x11a0] sm:$0xff]
        %v904 = vld [vmem:[%s264 + $0x11a8] sm:$0xff]
        %v905 = vld [vmem:[%s264 + $0x11b0] sm:$0xff]
        %v906 = vld [vmem:[%s264 + $0x11b8] sm:$0xff]
        %v907 = vld [vmem:[%s264 + $0x11c0] sm:$0xff]
        %v908 = vld [vmem:[%s264 + $0x11c8] sm:$0xff]
        %v909 = vld [vmem:[%s264 + $0x11d0] sm:$0xff]
        %v910 = vld [vmem:[%s264 + $0x11d8] sm:$0xff]
        %v911 = vld [vmem:[%s264 + $0x11e0] sm:$0xff]
        %v912 = vld [vmem:[%s264 + $0x11e8] sm:$0xff]
        %v913 = vld [vmem:[%s264 + $0x11f0] sm:$0xff]
        %v914 = vld [vmem:[%s264 + $0x11f8] sm:$0xff]
        %v915 = vld [vmem:[%s264 + $0x1200] sm:$0xff]
        %v916 = vld [vmem:[%s264 + $0x1208] sm:$0xff]
        %v917 = vld [vmem:[%s264 + $0x1210] sm:$0xff]
        %v918 = vld [vmem:[%s264 + $0x1218] sm:$0xff]
        %v919 = vld [vmem:[%s264 + $0x1220] sm:$0xff]
        %v920 = vld [vmem:[%s264 + $0x1228] sm:$0xff]
        %v921 = vld [vmem:[%s264 + $0x1230] sm:$0xff]
        %v922 = vld [vmem:[%s264 + $0x1238] sm:$0xff]
        %v923 = vld [vmem:[%s264 + $0x1240] sm:$0xff]
        %v924 = vld [vmem:[%s264 + $0x1248] sm:$0xff]
        %v925 = vld [vmem:[%s264 + $0x1250] sm:$0xff]
        %v926 = vld [vmem:[%s264 + $0x1258] sm:$0xff]
        %v927 = vld [vmem:[%s264 + $0x1260] sm:$0xff]
        %v928 = vld [vmem:[%s264 + $0x1268] sm:$0xff]
        %v929 = vld [vmem:[%s264 + $0x1270] sm:$0xff]
        %v930 = vld [vmem:[%s264 + $0x1278] sm:$0xff]
        %v931 = vld [vmem:[%s264 + $0x1280] sm:$0xff]
        %v932 = vld [vmem:[%s264 + $0x1288] sm:$0xff]
        %v933 = vld [vmem:[%s264 + $0x1290] sm:$0xff]
        %v934 = vld [vmem:[%s264 + $0x1298] sm:$0xff]
        %v935 = vld [vmem:[%s264 + $0x12a0] sm:$0xff]
        %v936 = vld [vmem:[%s264 + $0x12a8] sm:$0xff]
        %v937 = vld [vmem:[%s264 + $0x12b0] sm:$0xff]
        %v938 = vld [vmem:[%s264 + $0x12b8] sm:$0xff]
        %v939 = vld [vmem:[%s264 + $0x12c0] sm:$0xff]
        %v940 = vld [vmem:[%s264 + $0x12c8] sm:$0xff]
        %v941 = vld [vmem:[%s264 + $0x12d0] sm:$0xff]
        %v942 = vld [vmem:[%s264 + $0x12d8] sm:$0xff]
        %v943 = vld [vmem:[%s264 + $0x12e0] sm:$0xff]
        %v944 = vld [vmem:[%s264 + $0x12e8] sm:$0xff]
        %v945 = vld [vmem:[%s264 + $0x12f0] sm:$0xff]
        %v946 = vld [vmem:[%s264 + $0x12f8] sm:$0xff]
        %v947 = vld [vmem:[%s264 + $0x1300] sm:$0xff]
        %v948 = vld [vmem:[%s264 + $0x1308] sm:$0xff]
        %v949 = vld [vmem:[%s264 + $0x1310] sm:$0xff]
        %v950 = vld [vmem:[%s264 + $0x1318] sm:$0xff]
        %v951 = vld [vmem:[%s264 + $0x1320] sm:$0xff]
        %v952 = vld [vmem:[%s264 + $0x1328] sm:$0xff]
        %v953 = vld [vmem:[%s264 + $0x1330] sm:$0xff]
        %v954 = vld [vmem:[%s264 + $0x1338] sm:$0xff]
        %v955 = vld [vmem:[%s264 + $0x1340] sm:$0xff]
        %v956 = vld [vmem:[%s264 + $0x1348] sm:$0xff]
        %v957 = vld [vmem:[%s264 + $0x1350] sm:$0xff]
        %v958 = vld [vmem:[%s264 + $0x1358] sm:$0xff]
        %v959 = vld [vmem:[%s264 + $0x1360] sm:$0xff]
        %v960 = vld [vmem:[%s264 + $0x1368] sm:$0xff]
        %v961 = vld [vmem:[%s264 + $0x1370] sm:$0xff]
        %v962 = vld [vmem:[%s264 + $0x1378] sm:$0xff]
        %v963 = vld [vmem:[%s264 + $0x1380] sm:$0xff]
        %v964 = vld [vmem:[%s264 + $0x1388] sm:$0xff]
        %v965 = vld [vmem:[%s264 + $0x1390] sm:$0xff]
        %v966 = vld [vmem:[%s264 + $0x1398] sm:$0xff]
        %v967 = vld [vmem:[%s264 + $0x13a0] sm:$0xff]
        %v968 = vld [vmem:[%s264 + $0x13a8] sm:$0xff]
        %v969 = vld [vmem:[%s264 + $0x13b0] sm:$0xff]
        %v970 = vld [vmem:[%s264 + $0x13b8] sm:$0xff]
        %v971 = vld [vmem:[%s264 + $0x13c0] sm:$0xff]
        %v972 = vld [vmem:[%s264 + $0x13c8] sm:$0xff]
        %v973 = vld [vmem:[%s264 + $0x13d0] sm:$0xff]
        %v974 = vld [vmem:[%s264 + $0x13d8] sm:$0xff]
        %v975 = vld [vmem:[%s264 + $0x13e0] sm:$0xff]
        %v976 = vld [vmem:[%s264 + $0x13e8] sm:$0xff]
        %v977 = vld [vmem:[%s264 + $0x13f0] sm:$0xff]
        %v978 = vld [vmem:[%s264 + $0x13f8] sm:$0xff]
        %v979 = vld [vmem:[%s264 + $0x1400] sm:$0xff]
        %v980 = vld [vmem:[%s264 + $0x1408] sm:$0xff]
        %v981 = vld [vmem:[%s264 + $0x1410] sm:$0xff]
        %v982 = vld [vmem:[%s264 + $0x1418] sm:$0xff]
        %v983 = vld [vmem:[%s264 + $0x1420] sm:$0xff]
        %v984 = vld [vmem:[%s264 + $0x1428] sm:$0xff]
        %v985 = vld [vmem:[%s264 + $0x1430] sm:$0xff]
        %v986 = vld [vmem:[%s264 + $0x1438] sm:$0xff]
        %v987 = vld [vmem:[%s264 + $0x1440] sm:$0xff]
        %v988 = vld [vmem:[%s264 + $0x1448] sm:$0xff]
        %v989 = vld [vmem:[%s264 + $0x1450] sm:$0xff]
        %v990 = vld [vmem:[%s264 + $0x1458] sm:$0xff]
        %v991 = vld [vmem:[%s264 + $0x1460] sm:$0xff]
        %v992 = vld [vmem:[%s264 + $0x1468] sm:$0xff]
        %v993 = vld [vmem:[%s264 + $0x1470] sm:$0xff]
        %v994 = vld [vmem:[%s264 + $0x1478] sm:$0xff]
        %v995 = vld [vmem:[%s264 + $0x1480] sm:$0xff]
        %v996 = vld [vmem:[%s264 + $0x1488] sm:$0xff]
        %v997 = vld [vmem:[%s264 + $0x1490] sm:$0xff]
        %v998 = vld [vmem:[%s264 + $0x1498] sm:$0xff]
        %v999 = vld [vmem:[%s264 + $0x14a0] sm:$0xff]
        %v1000 = vld [vmem:[%s264 + $0x14a8] sm:$0xff]
        %v1001 = vld [vmem:[%s264 + $0x14b0] sm:$0xff]
        %v1002 = vld [vmem:[%s264 + $0x14b8] sm:$0xff]
        %v1003 = vld [vmem:[%s264 + $0x14c0] sm:$0xff]
        %v1004 = vld [vmem:[%s264 + $0x14c8] sm:$0xff]
        %v1005 = vld [vmem:[%s264 + $0x14d0] sm:$0xff]
        %v1006 = vld [vmem:[%s264 + $0x14d8] sm:$0xff]
        %v1007 = vld [vmem:[%s264 + $0x14e0] sm:$0xff]
        %v1008 = vld [vmem:[%s264 + $0x14e8] sm:$0xff]
        %v1009 = vld [vmem:[%s264 + $0x14f0] sm:$0xff]
        %v1010 = vld [vmem:[%s264 + $0x14f8] sm:$0xff]
        %v1011 = vld [vmem:[%s264 + $0x1500] sm:$0xff]
        %v1012 = vld [vmem:[%s264 + $0x1508] sm:$0xff]
        %v1013 = vld [vmem:[%s264 + $0x1510] sm:$0xff]
        %v1014 = vld [vmem:[%s264 + $0x1518] sm:$0xff]
        %v1015 = vld [vmem:[%s264 + $0x1520] sm:$0xff]
        %v1016 = vld [vmem:[%s264 + $0x1528] sm:$0xff]
        %v1017 = vld [vmem:[%s264 + $0x1530] sm:$0xff]
        %v1018 = vld [vmem:[%s264 + $0x1538] sm:$0xff]
        %v1019 = vld [vmem:[%s264 + $0x1540] sm:$0xff]
        %v1020 = vld [vmem:[%s264 + $0x1548] sm:$0xff]
        %v1021 = vld [vmem:[%s264 + $0x1550] sm:$0xff]
        %v1022 = vld [vmem:[%s264 + $0x1558] sm:$0xff]
        %v1023 = vld [vmem:[%s264 + $0x1560] sm:$0xff]
        %v1024 = vld [vmem:[%s264 + $0x1568] sm:$0xff]
        %v1025 = vld [vmem:[%s264 + $0x1570] sm:$0xff]
        %v1026 = vld [vmem:[%s264 + $0x1578] sm:$0xff]
        %v1027 = vld [vmem:[%s264 + $0x1580] sm:$0xff]
        %v1028 = vld [vmem:[%s264 + $0x1588] sm:$0xff]
        %v1029 = vld [vmem:[%s264 + $0x1590] sm:$0xff]
        %v1030 = vld [vmem:[%s264 + $0x1598] sm:$0xff]
        %v1031 = vld [vmem:[%s264 + $0x15a0] sm:$0xff]
        %v1032 = vld [vmem:[%s264 + $0x15a8] sm:$0xff]
        %v1033 = vld [vmem:[%s264 + $0x15b0] sm:$0xff]
        %v1034 = vld [vmem:[%s264 + $0x15b8] sm:$0xff]
        %v1035 = vld [vmem:[%s264 + $0x15c0] sm:$0xff]
        %v1036 = vld [vmem:[%s264 + $0x15c8] sm:$0xff]
        %v1037 = vld [vmem:[%s264 + $0x15d0] sm:$0xff]
        %v1038 = vld [vmem:[%s264 + $0x15d8] sm:$0xff]
        %v1039 = vld [vmem:[%s264 + $0x15e0] sm:$0xff]
        %v1040 = vld [vmem:[%s264 + $0x15e8] sm:$0xff]
        %v1041 = vld [vmem:[%s264 + $0x15f0] sm:$0xff]
        %v1042 = vld [vmem:[%s264 + $0x15f8] sm:$0xff]
        %v1043 = vld [vmem:[%s264 + $0x1600] sm:$0xff]
        %v1044 = vld [vmem:[%s264 + $0x1608] sm:$0xff]
        %v1045 = vld [vmem:[%s264 + $0x1610] sm:$0xff]
        %v1046 = vld [vmem:[%s264 + $0x1618] sm:$0xff]
        %v1047 = vld [vmem:[%s264 + $0x1620] sm:$0xff]
        %v1048 = vld [vmem:[%s264 + $0x1628] sm:$0xff]
        %v1049 = vld [vmem:[%s264 + $0x1630] sm:$0xff]
        %v1050 = vld [vmem:[%s264 + $0x1638] sm:$0xff]
        %v1051 = vld [vmem:[%s264 + $0x1640] sm:$0xff]
        %v1052 = vld [vmem:[%s264 + $0x1648] sm:$0xff]
        %v1053 = vld [vmem:[%s264 + $0x1650] sm:$0xff]
        %v1054 = vld [vmem:[%s264 + $0x1658] sm:$0xff]
        %v1055 = vld [vmem:[%s264 + $0x1660] sm:$0xff]
        %v1056 = vld [vmem:[%s264 + $0x1668] sm:$0xff]
        %v1057 = vld [vmem:[%s264 + $0x1670] sm:$0xff]
        %v1058 = vld [vmem:[%s264 + $0x1678] sm:$0xff]
        %v1059 = vld [vmem:[%s264 + $0x1680] sm:$0xff]
        %v1060 = vld [vmem:[%s264 + $0x1688] sm:$0xff]
        %v1061 = vld [vmem:[%s264 + $0x1690] sm:$0xff]
        %v1062 = vld [vmem:[%s264 + $0x1698] sm:$0xff]
        %v1063 = vld [vmem:[%s264 + $0x16a0] sm:$0xff]
        %v1064 = vld [vmem:[%s264 + $0x16a8] sm:$0xff]
        %v1065 = vld [vmem:[%s264 + $0x16b0] sm:$0xff]
        %v1066 = vld [vmem:[%s264 + $0x16b8] sm:$0xff]
        %v1067 = vld [vmem:[%s264 + $0x16c0] sm:$0xff]
        %v1068 = vld [vmem:[%s264 + $0x16c8] sm:$0xff]
        %v1069 = vld [vmem:[%s264 + $0x16d0] sm:$0xff]
        %v1070 = vld [vmem:[%s264 + $0x16d8] sm:$0xff]
        %v1071 = vld [vmem:[%s264 + $0x16e0] sm:$0xff]
        %v1072 = vld [vmem:[%s264 + $0x16e8] sm:$0xff]
        %v1073 = vld [vmem:[%s264 + $0x16f0] sm:$0xff]
        %v1074 = vld [vmem:[%s264 + $0x16f8] sm:$0xff]
        %v1075 = vld [vmem:[%s264 + $0x1700] sm:$0xff]
        %v1076 = vld [vmem:[%s264 + $0x1708] sm:$0xff]
        %v1077 = vld [vmem:[%s264 + $0x1710] sm:$0xff]
        %v1078 = vld [vmem:[%s264 + $0x1718] sm:$0xff]
        %v1079 = vld [vmem:[%s264 + $0x1720] sm:$0xff]
        %v1080 = vld [vmem:[%s264 + $0x1728] sm:$0xff]
        %v1081 = vld [vmem:[%s264 + $0x1730] sm:$0xff]
        %v1082 = vld [vmem:[%s264 + $0x1738] sm:$0xff]
        %v1083 = vld [vmem:[%s264 + $0x1740] sm:$0xff]
        %v1084 = vld [vmem:[%s264 + $0x1748] sm:$0xff]
        %v1085 = vld [vmem:[%s264 + $0x1750] sm:$0xff]
        %v1086 = vld [vmem:[%s264 + $0x1758] sm:$0xff]
        %v1087 = vld [vmem:[%s264 + $0x1760] sm:$0xff]
        %v1088 = vld [vmem:[%s264 + $0x1768] sm:$0xff]
        %v1089 = vld [vmem:[%s264 + $0x1770] sm:$0xff]
        %v1090 = vld [vmem:[%s264 + $0x1778] sm:$0xff]
        %v1091 = vld [vmem:[%s264 + $0x1780] sm:$0xff]
        %v1092 = vld [vmem:[%s264 + $0x1788] sm:$0xff]
        %v1093 = vld [vmem:[%s264 + $0x1790] sm:$0xff]
        %v1094 = vld [vmem:[%s264 + $0x1798] sm:$0xff]
        %v1095 = vld [vmem:[%s264 + $0x17a0] sm:$0xff]
        %v1096 = vld [vmem:[%s264 + $0x17a8] sm:$0xff]
        %v1097 = vld [vmem:[%s264 + $0x17b0] sm:$0xff]
        %v1098 = vld [vmem:[%s264 + $0x17b8] sm:$0xff]
        %v1099 = vld [vmem:[%s264 + $0x17c0] sm:$0xff]
        %v1100 = vld [vmem:[%s264 + $0x17c8] sm:$0xff]
        %v1101 = vld [vmem:[%s264 + $0x17d0] sm:$0xff]
        %v1102 = vld [vmem:[%s264 + $0x17d8] sm:$0xff]
        %v1103 = vld [vmem:[%s264 + $0x17e0] sm:$0xff]
        %v1104 = vld [vmem:[%s264 + $0x17e8] sm:$0xff]
        %v1105 = vld [vmem:[%s264 + $0x17f0] sm:$0xff]
        %v1106 = vld [vmem:[%s264 + $0x17f8] sm:$0xff]
        %v1107 = vld [vmem:[%s273] sm:$0xf]
        %v1109 = vlaneseq
        %v1110 = vshrl.u32 %v1109, 7
        %v1111 = vsub.s32 0, %v1110
        %v1112 = vrot.slane %v1107, %v1111
        %v1113 = vlaneseq
        %v1114 = vshrl.u32 %v1113, 7
        %v1115 = vsub.s32 1, %v1114
        %v1116 = vrot.slane %v1107, %v1115
        %v1117 = vlaneseq
        %v1118 = vshrl.u32 %v1117, 7
        %v1119 = vsub.s32 2, %v1118
        %v1120 = vrot.slane %v1107, %v1119
        %v1121 = vlaneseq
        %v1122 = vshrl.u32 %v1121, 7
        %v1123 = vsub.s32 3, %v1122
        %v1124 = vrot.slane %v1107, %v1123
        %v1141 = vunpack.c.l.b16 %v327
        %v1142 = vunpack.c.h.b16 %v327
        %v1143 = vunpack.c.l.b16 %v328
        %v1144 = vunpack.c.h.b16 %v328
        %v1145 = vunpack.c.l.b16 %v329
        %v1146 = vunpack.c.h.b16 %v329
        %v1147 = vunpack.c.l.b16 %v330
        %v1148 = vunpack.c.h.b16 %v330
        %v1149 = vunpack.c.l.b16 %v331
        %v1150 = vunpack.c.h.b16 %v331
        %v1151 = vunpack.c.l.b16 %v332
        %v1152 = vunpack.c.h.b16 %v332
        %v1153 = vunpack.c.l.b16 %v333
        %v1154 = vunpack.c.h.b16 %v333
        %v1155 = vunpack.c.l.b16 %v334
        %v1156 = vunpack.c.h.b16 %v334
        %v1157 = vunpack.c.l.b16 %v335
        %v1158 = vunpack.c.h.b16 %v335
        %v1159 = vunpack.c.l.b16 %v336
        %v1160 = vunpack.c.h.b16 %v336
        %v1161 = vunpack.c.l.b16 %v337
        %v1162 = vunpack.c.h.b16 %v337
        %v1163 = vunpack.c.l.b16 %v338
        %v1164 = vunpack.c.h.b16 %v338
        %v1165 = vpack.c.b16 %v1141, %v1141
        %v1166 = vpack.c.b16 %v1142, %v1142
        %v1167 = vpack.c.b16 %v1143, %v1143
        %v1168 = vpack.c.b16 %v1144, %v1144
        %v1169 = vpack.c.b16 %v1145, %v1145
        %v1170 = vpack.c.b16 %v1146, %v1146
        %v1171 = vpack.c.b16 %v1147, %v1147
        %v1172 = vpack.c.b16 %v1148, %v1148
        %v1173 = vpack.c.b16 %v1149, %v1149
        %v1174 = vpack.c.b16 %v1150, %v1150
        %v1175 = vpack.c.b16 %v1151, %v1151
        %v1176 = vpack.c.b16 %v1152, %v1152
        %v1177 = vpack.c.b16 %v1153, %v1153
        %v1178 = vpack.c.b16 %v1154, %v1154
        %v1179 = vpack.c.b16 %v1155, %v1155
        %v1180 = vpack.c.b16 %v1156, %v1156
        %v1181 = vpack.c.b16 %v1157, %v1157
        %v1182 = vpack.c.b16 %v1158, %v1158
        %v1183 = vpack.c.b16 %v1159, %v1159
        %v1184 = vpack.c.b16 %v1160, %v1160
        %v1185 = vpack.c.b16 %v1161, %v1161
        %v1186 = vpack.c.b16 %v1162, %v1162
        %v1187 = vpack.c.b16 %v1163, %v1163
        %v1188 = vpack.c.b16 %v1164, %v1164
        %v1981 = vunpack.c.l.b16 %v339
        %v1982 = vunpack.c.h.b16 %v339
        %v1983 = vunpack.c.l.b16 %v340
        %v1984 = vunpack.c.h.b16 %v340
        %v1985 = vunpack.c.l.b16 %v341
        %v1986 = vunpack.c.h.b16 %v341
        %v1987 = vunpack.c.l.b16 %v342
        %v1988 = vunpack.c.h.b16 %v342
        %v1989 = vunpack.c.l.b16 %v343
        %v1990 = vunpack.c.h.b16 %v343
        %v1991 = vunpack.c.l.b16 %v344
        %v1992 = vunpack.c.h.b16 %v344
        %v1993 = vunpack.c.l.b16 %v345
        %v1994 = vunpack.c.h.b16 %v345
        %v1995 = vunpack.c.l.b16 %v346
        %v1996 = vunpack.c.h.b16 %v346
        %v1997 = vunpack.c.l.b16 %v347
        %v1998 = vunpack.c.h.b16 %v347
        %v1999 = vunpack.c.l.b16 %v348
        %v2000 = vunpack.c.h.b16 %v348
        %v2001 = vunpack.c.l.b16 %v349
        %v2002 = vunpack.c.h.b16 %v349
        %v2003 = vunpack.c.l.b16 %v350
        %v2004 = vunpack.c.h.b16 %v350
        %v2005 = vunpack.c.l.b16 %v351
        %v2006 = vunpack.c.h.b16 %v351
        %v2007 = vunpack.c.l.b16 %v352
        %v2008 = vunpack.c.h.b16 %v352
        %v2009 = vunpack.c.l.b16 %v353
        %v2010 = vunpack.c.h.b16 %v353
        %v2011 = vunpack.c.l.b16 %v354
        %v2012 = vunpack.c.h.b16 %v354
        %v2013 = vunpack.c.l.b16 %v355
        %v2014 = vunpack.c.h.b16 %v355
        %v2015 = vunpack.c.l.b16 %v356
        %v2016 = vunpack.c.h.b16 %v356
        %v2017 = vunpack.c.l.b16 %v357
        %v2018 = vunpack.c.h.b16 %v357
        %v2019 = vunpack.c.l.b16 %v358
        %v2020 = vunpack.c.h.b16 %v358
        %v2021 = vunpack.c.l.b16 %v359
        %v2022 = vunpack.c.h.b16 %v359
        %v2023 = vunpack.c.l.b16 %v360
        %v2024 = vunpack.c.h.b16 %v360
        %v2025 = vunpack.c.l.b16 %v361
        %v2026 = vunpack.c.h.b16 %v361
        %v2027 = vunpack.c.l.b16 %v362
        %v2028 = vunpack.c.h.b16 %v362
        %v2029 = vunpack.c.l.b16 %v363
        %v2030 = vunpack.c.h.b16 %v363
        %v2031 = vunpack.c.l.b16 %v364
        %v2032 = vunpack.c.h.b16 %v364
        %v2033 = vunpack.c.l.b16 %v365
        %v2034 = vunpack.c.h.b16 %v365
        %v2035 = vunpack.c.l.b16 %v366
        %v2036 = vunpack.c.h.b16 %v366
        %v2037 = vunpack.c.l.b16 %v367
        %v2038 = vunpack.c.h.b16 %v367
        %v2039 = vunpack.c.l.b16 %v368
        %v2040 = vunpack.c.h.b16 %v368
        %v2041 = vunpack.c.l.b16 %v369
        %v2042 = vunpack.c.h.b16 %v369
        %v2043 = vunpack.c.l.b16 %v370
        %v2044 = vunpack.c.h.b16 %v370
        %v2045 = vunpack.c.l.b16 %v371
        %v2046 = vunpack.c.h.b16 %v371
        %v2047 = vunpack.c.l.b16 %v372
        %v2048 = vunpack.c.h.b16 %v372
        %v2049 = vunpack.c.l.b16 %v373
        %v2050 = vunpack.c.h.b16 %v373
        %v2051 = vunpack.c.l.b16 %v374
        %v2052 = vunpack.c.h.b16 %v374
        %v2053 = vunpack.c.l.b16 %v375
        %v2054 = vunpack.c.h.b16 %v375
        %v2055 = vunpack.c.l.b16 %v376
        %v2056 = vunpack.c.h.b16 %v376
        %v2057 = vunpack.c.l.b16 %v377
        %v2058 = vunpack.c.h.b16 %v377
        %v2059 = vunpack.c.l.b16 %v378
        %v2060 = vunpack.c.h.b16 %v378
        %v2061 = vunpack.c.l.b16 %v379
        %v2062 = vunpack.c.h.b16 %v379
        %v2063 = vunpack.c.l.b16 %v380
        %v2064 = vunpack.c.h.b16 %v380
        %v2065 = vunpack.c.l.b16 %v381
        %v2066 = vunpack.c.h.b16 %v381
        %v2067 = vunpack.c.l.b16 %v382
        %v2068 = vunpack.c.h.b16 %v382
        %v2069 = vunpack.c.l.b16 %v383
        %v2070 = vunpack.c.h.b16 %v383
        %v2071 = vunpack.c.l.b16 %v384
        %v2072 = vunpack.c.h.b16 %v384
        %v2073 = vunpack.c.l.b16 %v385
        %v2074 = vunpack.c.h.b16 %v385
        %v2075 = vunpack.c.l.b16 %v386
        %v2076 = vunpack.c.h.b16 %v386
        %v2077 = vunpack.c.l.b16 %v387
        %v2078 = vunpack.c.h.b16 %v387
        %v2079 = vunpack.c.l.b16 %v388
        %v2080 = vunpack.c.h.b16 %v388
        %v2081 = vunpack.c.l.b16 %v389
        %v2082 = vunpack.c.h.b16 %v389
        %v2083 = vunpack.c.l.b16 %v390
        %v2084 = vunpack.c.h.b16 %v390
        %v2085 = vunpack.c.l.b16 %v391
        %v2086 = vunpack.c.h.b16 %v391
        %v2087 = vunpack.c.l.b16 %v392
        %v2088 = vunpack.c.h.b16 %v392
        %v2089 = vunpack.c.l.b16 %v393
        %v2090 = vunpack.c.h.b16 %v393
        %v2091 = vunpack.c.l.b16 %v394
        %v2092 = vunpack.c.h.b16 %v394
        %v2093 = vunpack.c.l.b16 %v395
        %v2094 = vunpack.c.h.b16 %v395
        %v2095 = vunpack.c.l.b16 %v396
        %v2096 = vunpack.c.h.b16 %v396
        %v2097 = vunpack.c.l.b16 %v397
        %v2098 = vunpack.c.h.b16 %v397
        %v2099 = vunpack.c.l.b16 %v398
        %v2100 = vunpack.c.h.b16 %v398
        %v2101 = vunpack.c.l.b16 %v399
        %v2102 = vunpack.c.h.b16 %v399
        %v2103 = vunpack.c.l.b16 %v400
        %v2104 = vunpack.c.h.b16 %v400
        %v2105 = vunpack.c.l.b16 %v401
        %v2106 = vunpack.c.h.b16 %v401
        %v2107 = vunpack.c.l.b16 %v402
        %v2108 = vunpack.c.h.b16 %v402
        %v2109 = vunpack.c.l.b16 %v403
        %v2110 = vunpack.c.h.b16 %v403
        %v2111 = vunpack.c.l.b16 %v404
        %v2112 = vunpack.c.h.b16 %v404
        %v2113 = vunpack.c.l.b16 %v405
        %v2114 = vunpack.c.h.b16 %v405
        %v2115 = vunpack.c.l.b16 %v406
        %v2116 = vunpack.c.h.b16 %v406
        %v2117 = vunpack.c.l.b16 %v407
        %v2118 = vunpack.c.h.b16 %v407
        %v2119 = vunpack.c.l.b16 %v408
        %v2120 = vunpack.c.h.b16 %v408
        %v2121 = vunpack.c.l.b16 %v409
        %v2122 = vunpack.c.h.b16 %v409
        %v2123 = vunpack.c.l.b16 %v410
        %v2124 = vunpack.c.h.b16 %v410
        %v2125 = vunpack.c.l.b16 %v411
        %v2126 = vunpack.c.h.b16 %v411
        %v2127 = vunpack.c.l.b16 %v412
        %v2128 = vunpack.c.h.b16 %v412
        %v2129 = vunpack.c.l.b16 %v413
        %v2130 = vunpack.c.h.b16 %v413
        %v2131 = vunpack.c.l.b16 %v414
        %v2132 = vunpack.c.h.b16 %v414
        %v2133 = vunpack.c.l.b16 %v415
        %v2134 = vunpack.c.h.b16 %v415
        %v2135 = vunpack.c.l.b16 %v416
        %v2136 = vunpack.c.h.b16 %v416
        %v2137 = vunpack.c.l.b16 %v417
        %v2138 = vunpack.c.h.b16 %v417
        %v2139 = vunpack.c.l.b16 %v418
        %v2140 = vunpack.c.h.b16 %v418
        %v2141 = vunpack.c.l.b16 %v419
        %v2142 = vunpack.c.h.b16 %v419
        %v2143 = vunpack.c.l.b16 %v420
        %v2144 = vunpack.c.h.b16 %v420
        %v2145 = vunpack.c.l.b16 %v421
        %v2146 = vunpack.c.h.b16 %v421
        %v2147 = vunpack.c.l.b16 %v422
        %v2148 = vunpack.c.h.b16 %v422
        %v2149 = vunpack.c.l.b16 %v423
        %v2150 = vunpack.c.h.b16 %v423
        %v2151 = vunpack.c.l.b16 %v424
        %v2152 = vunpack.c.h.b16 %v424
        %v2153 = vunpack.c.l.b16 %v425
        %v2154 = vunpack.c.h.b16 %v425
        %v2155 = vunpack.c.l.b16 %v426
        %v2156 = vunpack.c.h.b16 %v426
        %v2157 = vunpack.c.l.b16 %v427
        %v2158 = vunpack.c.h.b16 %v427
        %v2159 = vunpack.c.l.b16 %v428
        %v2160 = vunpack.c.h.b16 %v428
        %v2161 = vunpack.c.l.b16 %v429
        %v2162 = vunpack.c.h.b16 %v429
        %v2163 = vunpack.c.l.b16 %v430
        %v2164 = vunpack.c.h.b16 %v430
        %v2165 = vunpack.c.l.b16 %v431
        %v2166 = vunpack.c.h.b16 %v431
        %v2167 = vunpack.c.l.b16 %v432
        %v2168 = vunpack.c.h.b16 %v432
        %v2169 = vunpack.c.l.b16 %v433
        %v2170 = vunpack.c.h.b16 %v433
        %v2171 = vunpack.c.l.b16 %v434
        %v2172 = vunpack.c.h.b16 %v434
        %v2173 = vunpack.c.l.b16 %v435
        %v2174 = vunpack.c.h.b16 %v435
        %v2175 = vunpack.c.l.b16 %v436
        %v2176 = vunpack.c.h.b16 %v436
        %v2177 = vunpack.c.l.b16 %v437
        %v2178 = vunpack.c.h.b16 %v437
        %v2179 = vunpack.c.l.b16 %v438
        %v2180 = vunpack.c.h.b16 %v438
        %v2181 = vunpack.c.l.b16 %v439
        %v2182 = vunpack.c.h.b16 %v439
        %v2183 = vunpack.c.l.b16 %v440
        %v2184 = vunpack.c.h.b16 %v440
        %v2185 = vunpack.c.l.b16 %v441
        %v2186 = vunpack.c.h.b16 %v441
        %v2187 = vunpack.c.l.b16 %v442
        %v2188 = vunpack.c.h.b16 %v442
        %v2189 = vunpack.c.l.b16 %v443
        %v2190 = vunpack.c.h.b16 %v443
        %v2191 = vunpack.c.l.b16 %v444
        %v2192 = vunpack.c.h.b16 %v444
        %v2193 = vunpack.c.l.b16 %v445
        %v2194 = vunpack.c.h.b16 %v445
        %v2195 = vunpack.c.l.b16 %v446
        %v2196 = vunpack.c.h.b16 %v446
        %v2197 = vunpack.c.l.b16 %v447
        %v2198 = vunpack.c.h.b16 %v447
        %v2199 = vunpack.c.l.b16 %v448
        %v2200 = vunpack.c.h.b16 %v448
        %v2201 = vunpack.c.l.b16 %v449
        %v2202 = vunpack.c.h.b16 %v449
        %v2203 = vunpack.c.l.b16 %v450
        %v2204 = vunpack.c.h.b16 %v450
        %v2205 = vunpack.c.l.b16 %v451
        %v2206 = vunpack.c.h.b16 %v451
        %v2207 = vunpack.c.l.b16 %v452
        %v2208 = vunpack.c.h.b16 %v452
        %v2209 = vunpack.c.l.b16 %v453
        %v2210 = vunpack.c.h.b16 %v453
        %v2211 = vunpack.c.l.b16 %v454
        %v2212 = vunpack.c.h.b16 %v454
        %v2213 = vunpack.c.l.b16 %v455
        %v2214 = vunpack.c.h.b16 %v455
        %v2215 = vunpack.c.l.b16 %v456
        %v2216 = vunpack.c.h.b16 %v456
        %v2217 = vunpack.c.l.b16 %v457
        %v2218 = vunpack.c.h.b16 %v457
        %v2219 = vunpack.c.l.b16 %v458
        %v2220 = vunpack.c.h.b16 %v458
        %v2221 = vunpack.c.l.b16 %v459
        %v2222 = vunpack.c.h.b16 %v459
        %v2223 = vunpack.c.l.b16 %v460
        %v2224 = vunpack.c.h.b16 %v460
        %v2225 = vunpack.c.l.b16 %v461
        %v2226 = vunpack.c.h.b16 %v461
        %v2227 = vunpack.c.l.b16 %v462
        %v2228 = vunpack.c.h.b16 %v462
        %v2229 = vunpack.c.l.b16 %v463
        %v2230 = vunpack.c.h.b16 %v463
        %v2231 = vunpack.c.l.b16 %v464
        %v2232 = vunpack.c.h.b16 %v464
        %v2233 = vunpack.c.l.b16 %v465
        %v2234 = vunpack.c.h.b16 %v465
        %v2235 = vunpack.c.l.b16 %v466
        %v2236 = vunpack.c.h.b16 %v466
        %v2237 = vunpack.c.l.b16 %v467
        %v2238 = vunpack.c.h.b16 %v467
        %v2239 = vunpack.c.l.b16 %v468
        %v2240 = vunpack.c.h.b16 %v468
        %v2241 = vunpack.c.l.b16 %v469
        %v2242 = vunpack.c.h.b16 %v469
        %v2243 = vunpack.c.l.b16 %v470
        %v2244 = vunpack.c.h.b16 %v470
        %v2245 = vunpack.c.l.b16 %v471
        %v2246 = vunpack.c.h.b16 %v471
        %v2247 = vunpack.c.l.b16 %v472
        %v2248 = vunpack.c.h.b16 %v472
        %v2249 = vunpack.c.l.b16 %v473
        %v2250 = vunpack.c.h.b16 %v473
        %v2251 = vunpack.c.l.b16 %v474
        %v2252 = vunpack.c.h.b16 %v474
        %v2253 = vunpack.c.l.b16 %v475
        %v2254 = vunpack.c.h.b16 %v475
        %v2255 = vunpack.c.l.b16 %v476
        %v2256 = vunpack.c.h.b16 %v476
        %v2257 = vunpack.c.l.b16 %v477
        %v2258 = vunpack.c.h.b16 %v477
        %v2259 = vunpack.c.l.b16 %v478
        %v2260 = vunpack.c.h.b16 %v478
        %v2261 = vunpack.c.l.b16 %v479
        %v2262 = vunpack.c.h.b16 %v479
        %v2263 = vunpack.c.l.b16 %v480
        %v2264 = vunpack.c.h.b16 %v480
        %v2265 = vunpack.c.l.b16 %v481
        %v2266 = vunpack.c.h.b16 %v481
        %v2267 = vunpack.c.l.b16 %v482
        %v2268 = vunpack.c.h.b16 %v482
        %v2269 = vunpack.c.l.b16 %v483
        %v2270 = vunpack.c.h.b16 %v483
        %v2271 = vunpack.c.l.b16 %v484
        %v2272 = vunpack.c.h.b16 %v484
        %v2273 = vunpack.c.l.b16 %v485
        %v2274 = vunpack.c.h.b16 %v485
        %v2275 = vunpack.c.l.b16 %v486
        %v2276 = vunpack.c.h.b16 %v486
        %v2277 = vunpack.c.l.b16 %v487
        %v2278 = vunpack.c.h.b16 %v487
        %v2279 = vunpack.c.l.b16 %v488
        %v2280 = vunpack.c.h.b16 %v488
        %v2281 = vunpack.c.l.b16 %v489
        %v2282 = vunpack.c.h.b16 %v489
        %v2283 = vunpack.c.l.b16 %v490
        %v2284 = vunpack.c.h.b16 %v490
        %v2285 = vunpack.c.l.b16 %v491
        %v2286 = vunpack.c.h.b16 %v491
        %v2287 = vunpack.c.l.b16 %v492
        %v2288 = vunpack.c.h.b16 %v492
        %v2289 = vunpack.c.l.b16 %v493
        %v2290 = vunpack.c.h.b16 %v493
        %v2291 = vunpack.c.l.b16 %v494
        %v2292 = vunpack.c.h.b16 %v494
        %v2293 = vunpack.c.l.b16 %v495
        %v2294 = vunpack.c.h.b16 %v495
        %v2295 = vunpack.c.l.b16 %v496
        %v2296 = vunpack.c.h.b16 %v496
        %v2297 = vunpack.c.l.b16 %v497
        %v2298 = vunpack.c.h.b16 %v497
        %v2299 = vunpack.c.l.b16 %v498
        %v2300 = vunpack.c.h.b16 %v498
        %v2301 = vunpack.c.l.b16 %v499
        %v2302 = vunpack.c.h.b16 %v499
        %v2303 = vunpack.c.l.b16 %v500
        %v2304 = vunpack.c.h.b16 %v500
        %v2305 = vunpack.c.l.b16 %v501
        %v2306 = vunpack.c.h.b16 %v501
        %v2307 = vunpack.c.l.b16 %v502
        %v2308 = vunpack.c.h.b16 %v502
        %v2309 = vunpack.c.l.b16 %v503
        %v2310 = vunpack.c.h.b16 %v503
        %v2311 = vunpack.c.l.b16 %v504
        %v2312 = vunpack.c.h.b16 %v504
        %v2313 = vunpack.c.l.b16 %v505
        %v2314 = vunpack.c.h.b16 %v505
        %v2315 = vunpack.c.l.b16 %v506
        %v2316 = vunpack.c.h.b16 %v506
        %v2317 = vunpack.c.l.b16 %v507
        %v2318 = vunpack.c.h.b16 %v507
        %v2319 = vunpack.c.l.b16 %v508
        %v2320 = vunpack.c.h.b16 %v508
        %v2321 = vunpack.c.l.b16 %v509
        %v2322 = vunpack.c.h.b16 %v509
        %v2323 = vunpack.c.l.b16 %v510
        %v2324 = vunpack.c.h.b16 %v510
        %v2325 = vunpack.c.l.b16 %v511
        %v2326 = vunpack.c.h.b16 %v511
        %v2327 = vunpack.c.l.b16 %v512
        %v2328 = vunpack.c.h.b16 %v512
        %v2329 = vunpack.c.l.b16 %v513
        %v2330 = vunpack.c.h.b16 %v513
        %v2331 = vunpack.c.l.b16 %v514
        %v2332 = vunpack.c.h.b16 %v514
        %v2333 = vunpack.c.l.b16 %v515
        %v2334 = vunpack.c.h.b16 %v515
        %v2335 = vunpack.c.l.b16 %v516
        %v2336 = vunpack.c.h.b16 %v516
        %v2337 = vunpack.c.l.b16 %v517
        %v2338 = vunpack.c.h.b16 %v517
        %v2339 = vunpack.c.l.b16 %v518
        %v2340 = vunpack.c.h.b16 %v518
        %v2341 = vunpack.c.l.b16 %v519
        %v2342 = vunpack.c.h.b16 %v519
        %v2343 = vunpack.c.l.b16 %v520
        %v2344 = vunpack.c.h.b16 %v520
        %v2345 = vunpack.c.l.b16 %v521
        %v2346 = vunpack.c.h.b16 %v521
        %v2347 = vunpack.c.l.b16 %v522
        %v2348 = vunpack.c.h.b16 %v522
        %v2349 = vunpack.c.l.b16 %v523
        %v2350 = vunpack.c.h.b16 %v523
        %v2351 = vunpack.c.l.b16 %v524
        %v2352 = vunpack.c.h.b16 %v524
        %v2353 = vunpack.c.l.b16 %v525
        %v2354 = vunpack.c.h.b16 %v525
        %v2355 = vunpack.c.l.b16 %v526
        %v2356 = vunpack.c.h.b16 %v526
        %v2357 = vunpack.c.l.b16 %v527
        %v2358 = vunpack.c.h.b16 %v527
        %v2359 = vunpack.c.l.b16 %v528
        %v2360 = vunpack.c.h.b16 %v528
        %v2361 = vunpack.c.l.b16 %v529
        %v2362 = vunpack.c.h.b16 %v529
        %v2363 = vunpack.c.l.b16 %v530
        %v2364 = vunpack.c.h.b16 %v530
        %v2365 = vunpack.c.l.b16 %v531
        %v2366 = vunpack.c.h.b16 %v531
        %v2367 = vunpack.c.l.b16 %v532
        %v2368 = vunpack.c.h.b16 %v532
        %v2369 = vunpack.c.l.b16 %v533
        %v2370 = vunpack.c.h.b16 %v533
        %v2371 = vunpack.c.l.b16 %v534
        %v2372 = vunpack.c.h.b16 %v534
        %v2373 = vunpack.c.l.b16 %v535
        %v2374 = vunpack.c.h.b16 %v535
        %v2375 = vunpack.c.l.b16 %v536
        %v2376 = vunpack.c.h.b16 %v536
        %v2377 = vunpack.c.l.b16 %v537
        %v2378 = vunpack.c.h.b16 %v537
        %v2379 = vunpack.c.l.b16 %v538
        %v2380 = vunpack.c.h.b16 %v538
        %v2381 = vunpack.c.l.b16 %v539
        %v2382 = vunpack.c.h.b16 %v539
        %v2383 = vunpack.c.l.b16 %v540
        %v2384 = vunpack.c.h.b16 %v540
        %v2385 = vunpack.c.l.b16 %v541
        %v2386 = vunpack.c.h.b16 %v541
        %v2387 = vunpack.c.l.b16 %v542
        %v2388 = vunpack.c.h.b16 %v542
        %v2389 = vunpack.c.l.b16 %v543
        %v2390 = vunpack.c.h.b16 %v543
        %v2391 = vunpack.c.l.b16 %v544
        %v2392 = vunpack.c.h.b16 %v544
        %v2393 = vunpack.c.l.b16 %v545
        %v2394 = vunpack.c.h.b16 %v545
        %v2395 = vunpack.c.l.b16 %v546
        %v2396 = vunpack.c.h.b16 %v546
        %v2397 = vunpack.c.l.b16 %v547
        %v2398 = vunpack.c.h.b16 %v547
        %v2399 = vunpack.c.l.b16 %v548
        %v2400 = vunpack.c.h.b16 %v548
        %v2401 = vunpack.c.l.b16 %v549
        %v2402 = vunpack.c.h.b16 %v549
        %v2403 = vunpack.c.l.b16 %v550
        %v2404 = vunpack.c.h.b16 %v550
        %v2405 = vunpack.c.l.b16 %v551
        %v2406 = vunpack.c.h.b16 %v551
        %v2407 = vunpack.c.l.b16 %v552
        %v2408 = vunpack.c.h.b16 %v552
        %v2409 = vunpack.c.l.b16 %v553
        %v2410 = vunpack.c.h.b16 %v553
        %v2411 = vunpack.c.l.b16 %v554
        %v2412 = vunpack.c.h.b16 %v554
        %v2413 = vunpack.c.l.b16 %v555
        %v2414 = vunpack.c.h.b16 %v555
        %v2415 = vunpack.c.l.b16 %v556
        %v2416 = vunpack.c.h.b16 %v556
        %v2417 = vunpack.c.l.b16 %v557
        %v2418 = vunpack.c.h.b16 %v557
        %v2419 = vunpack.c.l.b16 %v558
        %v2420 = vunpack.c.h.b16 %v558
        %v2421 = vunpack.c.l.b16 %v559
        %v2422 = vunpack.c.h.b16 %v559
        %v2423 = vunpack.c.l.b16 %v560
        %v2424 = vunpack.c.h.b16 %v560
        %v2425 = vunpack.c.l.b16 %v561
        %v2426 = vunpack.c.h.b16 %v561
        %v2427 = vunpack.c.l.b16 %v562
        %v2428 = vunpack.c.h.b16 %v562
        %v2429 = vunpack.c.l.b16 %v563
        %v2430 = vunpack.c.h.b16 %v563
        %v2431 = vunpack.c.l.b16 %v564
        %v2432 = vunpack.c.h.b16 %v564
        %v2433 = vunpack.c.l.b16 %v565
        %v2434 = vunpack.c.h.b16 %v565
        %v2435 = vunpack.c.l.b16 %v566
        %v2436 = vunpack.c.h.b16 %v566
        %v2437 = vunpack.c.l.b16 %v567
        %v2438 = vunpack.c.h.b16 %v567
        %v2439 = vunpack.c.l.b16 %v568
        %v2440 = vunpack.c.h.b16 %v568
        %v2441 = vunpack.c.l.b16 %v569
        %v2442 = vunpack.c.h.b16 %v569
        %v2443 = vunpack.c.l.b16 %v570
        %v2444 = vunpack.c.h.b16 %v570
        %v2445 = vunpack.c.l.b16 %v571
        %v2446 = vunpack.c.h.b16 %v571
        %v2447 = vunpack.c.l.b16 %v572
        %v2448 = vunpack.c.h.b16 %v572
        %v2449 = vunpack.c.l.b16 %v573
        %v2450 = vunpack.c.h.b16 %v573
        %v2451 = vunpack.c.l.b16 %v574
        %v2452 = vunpack.c.h.b16 %v574
        %v2453 = vunpack.c.l.b16 %v575
        %v2454 = vunpack.c.h.b16 %v575
        %v2455 = vunpack.c.l.b16 %v576
        %v2456 = vunpack.c.h.b16 %v576
        %v2457 = vunpack.c.l.b16 %v577
        %v2458 = vunpack.c.h.b16 %v577
        %v2459 = vunpack.c.l.b16 %v578
        %v2460 = vunpack.c.h.b16 %v578
        %v2461 = vunpack.c.l.b16 %v579
        %v2462 = vunpack.c.h.b16 %v579
        %v2463 = vunpack.c.l.b16 %v580
        %v2464 = vunpack.c.h.b16 %v580
        %v2465 = vunpack.c.l.b16 %v581
        %v2466 = vunpack.c.h.b16 %v581
        %v2467 = vunpack.c.l.b16 %v582
        %v2468 = vunpack.c.h.b16 %v582
        %v2469 = vunpack.c.l.b16 %v583
        %v2470 = vunpack.c.h.b16 %v583
        %v2471 = vunpack.c.l.b16 %v584
        %v2472 = vunpack.c.h.b16 %v584
        %v2473 = vunpack.c.l.b16 %v585
        %v2474 = vunpack.c.h.b16 %v585
        %v2475 = vunpack.c.l.b16 %v586
        %v2476 = vunpack.c.h.b16 %v586
        %v2477 = vunpack.c.l.b16 %v587
        %v2478 = vunpack.c.h.b16 %v587
        %v2479 = vunpack.c.l.b16 %v588
        %v2480 = vunpack.c.h.b16 %v588
        %v2481 = vunpack.c.l.b16 %v589
        %v2482 = vunpack.c.h.b16 %v589
        %v2483 = vunpack.c.l.b16 %v590
        %v2484 = vunpack.c.h.b16 %v590
        %v2485 = vunpack.c.l.b16 %v591
        %v2486 = vunpack.c.h.b16 %v591
        %v2487 = vunpack.c.l.b16 %v592
        %v2488 = vunpack.c.h.b16 %v592
        %v2489 = vunpack.c.l.b16 %v593
        %v2490 = vunpack.c.h.b16 %v593
        %v2491 = vunpack.c.l.b16 %v594
        %v2492 = vunpack.c.h.b16 %v594
        %v2493 = vunpack.c.l.b16 %v595
        %v2494 = vunpack.c.h.b16 %v595
        %v2495 = vunpack.c.l.b16 %v596
        %v2496 = vunpack.c.h.b16 %v596
        %v2497 = vunpack.c.l.b16 %v597
        %v2498 = vunpack.c.h.b16 %v597
        %v2499 = vunpack.c.l.b16 %v598
        %v2500 = vunpack.c.h.b16 %v598
        %v2501 = vunpack.c.l.b16 %v599
        %v2502 = vunpack.c.h.b16 %v599
        %v2503 = vunpack.c.l.b16 %v600
        %v2504 = vunpack.c.h.b16 %v600
        %v2505 = vunpack.c.l.b16 %v601
        %v2506 = vunpack.c.h.b16 %v601
        %v2507 = vunpack.c.l.b16 %v602
        %v2508 = vunpack.c.h.b16 %v602
        %v2509 = vunpack.c.l.b16 %v603
        %v2510 = vunpack.c.h.b16 %v603
        %v2511 = vunpack.c.l.b16 %v604
        %v2512 = vunpack.c.h.b16 %v604
        %v2513 = vunpack.c.l.b16 %v605
        %v2514 = vunpack.c.h.b16 %v605
        %v2515 = vunpack.c.l.b16 %v606
        %v2516 = vunpack.c.h.b16 %v606
        %v2517 = vunpack.c.l.b16 %v607
        %v2518 = vunpack.c.h.b16 %v607
        %v2519 = vunpack.c.l.b16 %v608
        %v2520 = vunpack.c.h.b16 %v608
        %v2521 = vunpack.c.l.b16 %v609
        %v2522 = vunpack.c.h.b16 %v609
        %v2523 = vunpack.c.l.b16 %v610
        %v2524 = vunpack.c.h.b16 %v610
        %v2525 = vunpack.c.l.b16 %v611
        %v2526 = vunpack.c.h.b16 %v611
        %v2527 = vunpack.c.l.b16 %v612
        %v2528 = vunpack.c.h.b16 %v612
        %v2529 = vunpack.c.l.b16 %v613
        %v2530 = vunpack.c.h.b16 %v613
        %v2531 = vunpack.c.l.b16 %v614
        %v2532 = vunpack.c.h.b16 %v614
        %v2533 = vunpack.c.l.b16 %v615
        %v2534 = vunpack.c.h.b16 %v615
        %v2535 = vunpack.c.l.b16 %v616
        %v2536 = vunpack.c.h.b16 %v616
        %v2537 = vunpack.c.l.b16 %v617
        %v2538 = vunpack.c.h.b16 %v617
        %v2539 = vunpack.c.l.b16 %v618
        %v2540 = vunpack.c.h.b16 %v618
        %v2541 = vunpack.c.l.b16 %v619
        %v2542 = vunpack.c.h.b16 %v619
        %v2543 = vunpack.c.l.b16 %v620
        %v2544 = vunpack.c.h.b16 %v620
        %v2545 = vunpack.c.l.b16 %v621
        %v2546 = vunpack.c.h.b16 %v621
        %v2547 = vunpack.c.l.b16 %v622
        %v2548 = vunpack.c.h.b16 %v622
        %v2549 = vunpack.c.l.b16 %v623
        %v2550 = vunpack.c.h.b16 %v623
        %v2551 = vunpack.c.l.b16 %v624
        %v2552 = vunpack.c.h.b16 %v624
        %v2553 = vunpack.c.l.b16 %v625
        %v2554 = vunpack.c.h.b16 %v625
        %v2555 = vunpack.c.l.b16 %v626
        %v2556 = vunpack.c.h.b16 %v626
        %v2557 = vunpack.c.l.b16 %v627
        %v2558 = vunpack.c.h.b16 %v627
        %v2559 = vunpack.c.l.b16 %v628
        %v2560 = vunpack.c.h.b16 %v628
        %v2561 = vunpack.c.l.b16 %v629
        %v2562 = vunpack.c.h.b16 %v629
        %v2563 = vunpack.c.l.b16 %v630
        %v2564 = vunpack.c.h.b16 %v630
        %v2565 = vunpack.c.l.b16 %v631
        %v2566 = vunpack.c.h.b16 %v631
        %v2567 = vunpack.c.l.b16 %v632
        %v2568 = vunpack.c.h.b16 %v632
        %v2569 = vunpack.c.l.b16 %v633
        %v2570 = vunpack.c.h.b16 %v633
        %v2571 = vunpack.c.l.b16 %v634
        %v2572 = vunpack.c.h.b16 %v634
        %v2573 = vunpack.c.l.b16 %v635
        %v2574 = vunpack.c.h.b16 %v635
        %v2575 = vunpack.c.l.b16 %v636
        %v2576 = vunpack.c.h.b16 %v636
        %v2577 = vunpack.c.l.b16 %v637
        %v2578 = vunpack.c.h.b16 %v637
        %v2579 = vunpack.c.l.b16 %v638
        %v2580 = vunpack.c.h.b16 %v638
        %v2581 = vunpack.c.l.b16 %v639
        %v2582 = vunpack.c.h.b16 %v639
        %v2583 = vunpack.c.l.b16 %v640
        %v2584 = vunpack.c.h.b16 %v640
        %v2585 = vunpack.c.l.b16 %v641
        %v2586 = vunpack.c.h.b16 %v641
        %v2587 = vunpack.c.l.b16 %v642
        %v2588 = vunpack.c.h.b16 %v642
        %v2589 = vunpack.c.l.b16 %v643
        %v2590 = vunpack.c.h.b16 %v643
        %v2591 = vunpack.c.l.b16 %v644
        %v2592 = vunpack.c.h.b16 %v644
        %v2593 = vunpack.c.l.b16 %v645
        %v2594 = vunpack.c.h.b16 %v645
        %v2595 = vunpack.c.l.b16 %v646
        %v2596 = vunpack.c.h.b16 %v646
        %v2597 = vunpack.c.l.b16 %v647
        %v2598 = vunpack.c.h.b16 %v647
        %v2599 = vunpack.c.l.b16 %v648
        %v2600 = vunpack.c.h.b16 %v648
        %v2601 = vunpack.c.l.b16 %v649
        %v2602 = vunpack.c.h.b16 %v649
        %v2603 = vunpack.c.l.b16 %v650
        %v2604 = vunpack.c.h.b16 %v650
        %v2605 = vunpack.c.l.b16 %v651
        %v2606 = vunpack.c.h.b16 %v651
        %v2607 = vunpack.c.l.b16 %v652
        %v2608 = vunpack.c.h.b16 %v652
        %v2609 = vunpack.c.l.b16 %v653
        %v2610 = vunpack.c.h.b16 %v653
        %v2611 = vunpack.c.l.b16 %v654
        %v2612 = vunpack.c.h.b16 %v654
        %v2613 = vunpack.c.l.b16 %v655
        %v2614 = vunpack.c.h.b16 %v655
        %v2615 = vunpack.c.l.b16 %v656
        %v2616 = vunpack.c.h.b16 %v656
        %v2617 = vunpack.c.l.b16 %v657
        %v2618 = vunpack.c.h.b16 %v657
        %v2619 = vunpack.c.l.b16 %v658
        %v2620 = vunpack.c.h.b16 %v658
        %v2621 = vunpack.c.l.b16 %v659
        %v2622 = vunpack.c.h.b16 %v659
        %v2623 = vunpack.c.l.b16 %v660
        %v2624 = vunpack.c.h.b16 %v660
        %v2625 = vunpack.c.l.b16 %v661
        %v2626 = vunpack.c.h.b16 %v661
        %v2627 = vunpack.c.l.b16 %v662
        %v2628 = vunpack.c.h.b16 %v662
        %v2629 = vunpack.c.l.b16 %v663
        %v2630 = vunpack.c.h.b16 %v663
        %v2631 = vunpack.c.l.b16 %v664
        %v2632 = vunpack.c.h.b16 %v664
        %v2633 = vunpack.c.l.b16 %v665
        %v2634 = vunpack.c.h.b16 %v665
        %v2635 = vunpack.c.l.b16 %v666
        %v2636 = vunpack.c.h.b16 %v666
        %v2637 = vunpack.c.l.b16 %v667
        %v2638 = vunpack.c.h.b16 %v667
        %v2639 = vunpack.c.l.b16 %v668
        %v2640 = vunpack.c.h.b16 %v668
        %v2641 = vunpack.c.l.b16 %v669
        %v2642 = vunpack.c.h.b16 %v669
        %v2643 = vunpack.c.l.b16 %v670
        %v2644 = vunpack.c.h.b16 %v670
        %v2645 = vunpack.c.l.b16 %v671
        %v2646 = vunpack.c.h.b16 %v671
        %v2647 = vunpack.c.l.b16 %v672
        %v2648 = vunpack.c.h.b16 %v672
        %v2649 = vunpack.c.l.b16 %v673
        %v2650 = vunpack.c.h.b16 %v673
        %v2651 = vunpack.c.l.b16 %v674
        %v2652 = vunpack.c.h.b16 %v674
        %v2653 = vunpack.c.l.b16 %v675
        %v2654 = vunpack.c.h.b16 %v675
        %v2655 = vunpack.c.l.b16 %v676
        %v2656 = vunpack.c.h.b16 %v676
        %v2657 = vunpack.c.l.b16 %v677
        %v2658 = vunpack.c.h.b16 %v677
        %v2659 = vunpack.c.l.b16 %v678
        %v2660 = vunpack.c.h.b16 %v678
        %v2661 = vunpack.c.l.b16 %v679
        %v2662 = vunpack.c.h.b16 %v679
        %v2663 = vunpack.c.l.b16 %v680
        %v2664 = vunpack.c.h.b16 %v680
        %v2665 = vunpack.c.l.b16 %v681
        %v2666 = vunpack.c.h.b16 %v681
        %v2667 = vunpack.c.l.b16 %v682
        %v2668 = vunpack.c.h.b16 %v682
        %v2669 = vunpack.c.l.b16 %v683
        %v2670 = vunpack.c.h.b16 %v683
        %v2671 = vunpack.c.l.b16 %v684
        %v2672 = vunpack.c.h.b16 %v684
        %v2673 = vunpack.c.l.b16 %v685
        %v2674 = vunpack.c.h.b16 %v685
        %v2675 = vunpack.c.l.b16 %v686
        %v2676 = vunpack.c.h.b16 %v686
        %v2677 = vunpack.c.l.b16 %v687
        %v2678 = vunpack.c.h.b16 %v687
        %v2679 = vunpack.c.l.b16 %v688
        %v2680 = vunpack.c.h.b16 %v688
        %v2681 = vunpack.c.l.b16 %v689
        %v2682 = vunpack.c.h.b16 %v689
        %v2683 = vunpack.c.l.b16 %v690
        %v2684 = vunpack.c.h.b16 %v690
        %v2685 = vunpack.c.l.b16 %v691
        %v2686 = vunpack.c.h.b16 %v691
        %v2687 = vunpack.c.l.b16 %v692
        %v2688 = vunpack.c.h.b16 %v692
        %v2689 = vunpack.c.l.b16 %v693
        %v2690 = vunpack.c.h.b16 %v693
        %v2691 = vunpack.c.l.b16 %v694
        %v2692 = vunpack.c.h.b16 %v694
        %v2693 = vunpack.c.l.b16 %v695
        %v2694 = vunpack.c.h.b16 %v695
        %v2695 = vunpack.c.l.b16 %v696
        %v2696 = vunpack.c.h.b16 %v696
        %v2697 = vunpack.c.l.b16 %v697
        %v2698 = vunpack.c.h.b16 %v697
        %v2699 = vunpack.c.l.b16 %v698
        %v2700 = vunpack.c.h.b16 %v698
        %v2701 = vunpack.c.l.b16 %v699
        %v2702 = vunpack.c.h.b16 %v699
        %v2703 = vunpack.c.l.b16 %v700
        %v2704 = vunpack.c.h.b16 %v700
        %v2705 = vunpack.c.l.b16 %v701
        %v2706 = vunpack.c.h.b16 %v701
        %v2707 = vunpack.c.l.b16 %v702
        %v2708 = vunpack.c.h.b16 %v702
        %v2709 = vunpack.c.l.b16 %v703
        %v2710 = vunpack.c.h.b16 %v703
        %v2711 = vunpack.c.l.b16 %v704
        %v2712 = vunpack.c.h.b16 %v704
        %v2713 = vunpack.c.l.b16 %v705
        %v2714 = vunpack.c.h.b16 %v705
        %v2715 = vunpack.c.l.b16 %v706
        %v2716 = vunpack.c.h.b16 %v706
        %v2717 = vunpack.c.l.b16 %v707
        %v2718 = vunpack.c.h.b16 %v707
        %v2719 = vunpack.c.l.b16 %v708
        %v2720 = vunpack.c.h.b16 %v708
        %v2721 = vunpack.c.l.b16 %v709
        %v2722 = vunpack.c.h.b16 %v709
        %v2723 = vunpack.c.l.b16 %v710
        %v2724 = vunpack.c.h.b16 %v710
        %v2725 = vunpack.c.l.b16 %v711
        %v2726 = vunpack.c.h.b16 %v711
        %v2727 = vunpack.c.l.b16 %v712
        %v2728 = vunpack.c.h.b16 %v712
        %v2729 = vunpack.c.l.b16 %v713
        %v2730 = vunpack.c.h.b16 %v713
        %v2731 = vunpack.c.l.b16 %v714
        %v2732 = vunpack.c.h.b16 %v714
        %v2733 = vunpack.c.l.b16 %v715
        %v2734 = vunpack.c.h.b16 %v715
        %v2735 = vunpack.c.l.b16 %v716
        %v2736 = vunpack.c.h.b16 %v716
        %v2737 = vunpack.c.l.b16 %v717
        %v2738 = vunpack.c.h.b16 %v717
        %v2739 = vunpack.c.l.b16 %v718
        %v2740 = vunpack.c.h.b16 %v718
        %v2741 = vunpack.c.l.b16 %v719
        %v2742 = vunpack.c.h.b16 %v719
        %v2743 = vunpack.c.l.b16 %v720
        %v2744 = vunpack.c.h.b16 %v720
        %v2745 = vunpack.c.l.b16 %v721
        %v2746 = vunpack.c.h.b16 %v721
        %v2747 = vunpack.c.l.b16 %v722
        %v2748 = vunpack.c.h.b16 %v722
        %v2749 = vunpack.c.l.b16 %v723
        %v2750 = vunpack.c.h.b16 %v723
        %v2751 = vunpack.c.l.b16 %v724
        %v2752 = vunpack.c.h.b16 %v724
        %v2753 = vunpack.c.l.b16 %v725
        %v2754 = vunpack.c.h.b16 %v725
        %v2755 = vunpack.c.l.b16 %v726
        %v2756 = vunpack.c.h.b16 %v726
        %v2757 = vunpack.c.l.b16 %v727
        %v2758 = vunpack.c.h.b16 %v727
        %v2759 = vunpack.c.l.b16 %v728
        %v2760 = vunpack.c.h.b16 %v728
        %v2761 = vunpack.c.l.b16 %v729
        %v2762 = vunpack.c.h.b16 %v729
        %v2763 = vunpack.c.l.b16 %v730
        %v2764 = vunpack.c.h.b16 %v730
        %v2765 = vunpack.c.l.b16 %v731
        %v2766 = vunpack.c.h.b16 %v731
        %v2767 = vunpack.c.l.b16 %v732
        %v2768 = vunpack.c.h.b16 %v732
        %v2769 = vunpack.c.l.b16 %v733
        %v2770 = vunpack.c.h.b16 %v733
        %v2771 = vunpack.c.l.b16 %v734
        %v2772 = vunpack.c.h.b16 %v734
        %v2773 = vunpack.c.l.b16 %v735
        %v2774 = vunpack.c.h.b16 %v735
        %v2775 = vunpack.c.l.b16 %v736
        %v2776 = vunpack.c.h.b16 %v736
        %v2777 = vunpack.c.l.b16 %v737
        %v2778 = vunpack.c.h.b16 %v737
        %v2779 = vunpack.c.l.b16 %v738
        %v2780 = vunpack.c.h.b16 %v738
        %v2781 = vunpack.c.l.b16 %v739
        %v2782 = vunpack.c.h.b16 %v739
        %v2783 = vunpack.c.l.b16 %v740
        %v2784 = vunpack.c.h.b16 %v740
        %v2785 = vunpack.c.l.b16 %v741
        %v2786 = vunpack.c.h.b16 %v741
        %v2787 = vunpack.c.l.b16 %v742
        %v2788 = vunpack.c.h.b16 %v742
        %v2789 = vunpack.c.l.b16 %v743
        %v2790 = vunpack.c.h.b16 %v743
        %v2791 = vunpack.c.l.b16 %v744
        %v2792 = vunpack.c.h.b16 %v744
        %v2793 = vunpack.c.l.b16 %v745
        %v2794 = vunpack.c.h.b16 %v745
        %v2795 = vunpack.c.l.b16 %v746
        %v2796 = vunpack.c.h.b16 %v746
        %v2797 = vunpack.c.l.b16 %v747
        %v2798 = vunpack.c.h.b16 %v747
        %v2799 = vunpack.c.l.b16 %v748
        %v2800 = vunpack.c.h.b16 %v748
        %v2801 = vunpack.c.l.b16 %v749
        %v2802 = vunpack.c.h.b16 %v749
        %v2803 = vunpack.c.l.b16 %v750
        %v2804 = vunpack.c.h.b16 %v750
        %v2805 = vunpack.c.l.b16 %v751
        %v2806 = vunpack.c.h.b16 %v751
        %v2807 = vunpack.c.l.b16 %v752
        %v2808 = vunpack.c.h.b16 %v752
        %v2809 = vunpack.c.l.b16 %v753
        %v2810 = vunpack.c.h.b16 %v753
        %v2811 = vunpack.c.l.b16 %v754
        %v2812 = vunpack.c.h.b16 %v754
        %v2813 = vunpack.c.l.b16 %v755
        %v2814 = vunpack.c.h.b16 %v755
        %v2815 = vunpack.c.l.b16 %v756
        %v2816 = vunpack.c.h.b16 %v756
        %v2817 = vunpack.c.l.b16 %v757
        %v2818 = vunpack.c.h.b16 %v757
        %v2819 = vunpack.c.l.b16 %v758
        %v2820 = vunpack.c.h.b16 %v758
        %v2821 = vunpack.c.l.b16 %v759
        %v2822 = vunpack.c.h.b16 %v759
        %v2823 = vunpack.c.l.b16 %v760
        %v2824 = vunpack.c.h.b16 %v760
        %v2825 = vunpack.c.l.b16 %v761
        %v2826 = vunpack.c.h.b16 %v761
        %v2827 = vunpack.c.l.b16 %v762
        %v2828 = vunpack.c.h.b16 %v762
        %v2829 = vunpack.c.l.b16 %v763
        %v2830 = vunpack.c.h.b16 %v763
        %v2831 = vunpack.c.l.b16 %v764
        %v2832 = vunpack.c.h.b16 %v764
        %v2833 = vunpack.c.l.b16 %v765
        %v2834 = vunpack.c.h.b16 %v765
        %v2835 = vunpack.c.l.b16 %v766
        %v2836 = vunpack.c.h.b16 %v766
        %v2837 = vunpack.c.l.b16 %v767
        %v2838 = vunpack.c.h.b16 %v767
        %v2839 = vunpack.c.l.b16 %v768
        %v2840 = vunpack.c.h.b16 %v768
        %v2841 = vunpack.c.l.b16 %v769
        %v2842 = vunpack.c.h.b16 %v769
        %v2843 = vunpack.c.l.b16 %v770
        %v2844 = vunpack.c.h.b16 %v770
        %v2845 = vunpack.c.l.b16 %v771
        %v2846 = vunpack.c.h.b16 %v771
        %v2847 = vunpack.c.l.b16 %v772
        %v2848 = vunpack.c.h.b16 %v772
        %v2849 = vunpack.c.l.b16 %v773
        %v2850 = vunpack.c.h.b16 %v773
        %v2851 = vunpack.c.l.b16 %v774
        %v2852 = vunpack.c.h.b16 %v774
        %v2853 = vunpack.c.l.b16 %v775
        %v2854 = vunpack.c.h.b16 %v775
        %v2855 = vunpack.c.l.b16 %v776
        %v2856 = vunpack.c.h.b16 %v776
        %v2857 = vunpack.c.l.b16 %v777
        %v2858 = vunpack.c.h.b16 %v777
        %v2859 = vunpack.c.l.b16 %v778
        %v2860 = vunpack.c.h.b16 %v778
        %v2861 = vunpack.c.l.b16 %v779
        %v2862 = vunpack.c.h.b16 %v779
        %v2863 = vunpack.c.l.b16 %v780
        %v2864 = vunpack.c.h.b16 %v780
        %v2865 = vunpack.c.l.b16 %v781
        %v2866 = vunpack.c.h.b16 %v781
        %v2867 = vunpack.c.l.b16 %v782
        %v2868 = vunpack.c.h.b16 %v782
        %v2869 = vunpack.c.l.b16 %v783
        %v2870 = vunpack.c.h.b16 %v783
        %v2871 = vunpack.c.l.b16 %v784
        %v2872 = vunpack.c.h.b16 %v784
        %v2873 = vunpack.c.l.b16 %v785
        %v2874 = vunpack.c.h.b16 %v785
        %v2875 = vunpack.c.l.b16 %v786
        %v2876 = vunpack.c.h.b16 %v786
        %v2877 = vunpack.c.l.b16 %v787
        %v2878 = vunpack.c.h.b16 %v787
        %v2879 = vunpack.c.l.b16 %v788
        %v2880 = vunpack.c.h.b16 %v788
        %v2881 = vunpack.c.l.b16 %v789
        %v2882 = vunpack.c.h.b16 %v789
        %v2883 = vunpack.c.l.b16 %v790
        %v2884 = vunpack.c.h.b16 %v790
        %v2885 = vunpack.c.l.b16 %v791
        %v2886 = vunpack.c.h.b16 %v791
        %v2887 = vunpack.c.l.b16 %v792
        %v2888 = vunpack.c.h.b16 %v792
        %v2889 = vunpack.c.l.b16 %v793
        %v2890 = vunpack.c.h.b16 %v793
        %v2891 = vunpack.c.l.b16 %v794
        %v2892 = vunpack.c.h.b16 %v794
        %v2893 = vunpack.c.l.b16 %v795
        %v2894 = vunpack.c.h.b16 %v795
        %v2895 = vunpack.c.l.b16 %v796
        %v2896 = vunpack.c.h.b16 %v796
        %v2897 = vunpack.c.l.b16 %v797
        %v2898 = vunpack.c.h.b16 %v797
        %v2899 = vunpack.c.l.b16 %v798
        %v2900 = vunpack.c.h.b16 %v798
        %v2901 = vunpack.c.l.b16 %v799
        %v2902 = vunpack.c.h.b16 %v799
        %v2903 = vunpack.c.l.b16 %v800
        %v2904 = vunpack.c.h.b16 %v800
        %v2905 = vunpack.c.l.b16 %v801
        %v2906 = vunpack.c.h.b16 %v801
        %v2907 = vunpack.c.l.b16 %v802
        %v2908 = vunpack.c.h.b16 %v802
        %v2909 = vunpack.c.l.b16 %v803
        %v2910 = vunpack.c.h.b16 %v803
        %v2911 = vunpack.c.l.b16 %v804
        %v2912 = vunpack.c.h.b16 %v804
        %v2913 = vunpack.c.l.b16 %v805
        %v2914 = vunpack.c.h.b16 %v805
        %v2915 = vunpack.c.l.b16 %v806
        %v2916 = vunpack.c.h.b16 %v806
        %v2917 = vunpack.c.l.b16 %v807
        %v2918 = vunpack.c.h.b16 %v807
        %v2919 = vunpack.c.l.b16 %v808
        %v2920 = vunpack.c.h.b16 %v808
        %v2921 = vunpack.c.l.b16 %v809
        %v2922 = vunpack.c.h.b16 %v809
        %v2923 = vunpack.c.l.b16 %v810
        %v2924 = vunpack.c.h.b16 %v810
        %v2925 = vunpack.c.l.b16 %v811
        %v2926 = vunpack.c.h.b16 %v811
        %v2927 = vunpack.c.l.b16 %v812
        %v2928 = vunpack.c.h.b16 %v812
        %v2929 = vunpack.c.l.b16 %v813
        %v2930 = vunpack.c.h.b16 %v813
        %v2931 = vunpack.c.l.b16 %v814
        %v2932 = vunpack.c.h.b16 %v814
        %v2933 = vunpack.c.l.b16 %v815
        %v2934 = vunpack.c.h.b16 %v815
        %v2935 = vunpack.c.l.b16 %v816
        %v2936 = vunpack.c.h.b16 %v816
        %v2937 = vunpack.c.l.b16 %v817
        %v2938 = vunpack.c.h.b16 %v817
        %v2939 = vunpack.c.l.b16 %v818
        %v2940 = vunpack.c.h.b16 %v818
        %v2941 = vunpack.c.l.b16 %v819
        %v2942 = vunpack.c.h.b16 %v819
        %v2943 = vunpack.c.l.b16 %v820
        %v2944 = vunpack.c.h.b16 %v820
        %v2945 = vunpack.c.l.b16 %v821
        %v2946 = vunpack.c.h.b16 %v821
        %v2947 = vunpack.c.l.b16 %v822
        %v2948 = vunpack.c.h.b16 %v822
        %v2949 = vunpack.c.l.b16 %v823
        %v2950 = vunpack.c.h.b16 %v823
        %v2951 = vunpack.c.l.b16 %v824
        %v2952 = vunpack.c.h.b16 %v824
        %v2953 = vunpack.c.l.b16 %v825
        %v2954 = vunpack.c.h.b16 %v825
        %v2955 = vunpack.c.l.b16 %v826
        %v2956 = vunpack.c.h.b16 %v826
        %v2957 = vunpack.c.l.b16 %v827
        %v2958 = vunpack.c.h.b16 %v827
        %v2959 = vunpack.c.l.b16 %v828
        %v2960 = vunpack.c.h.b16 %v828
        %v2961 = vunpack.c.l.b16 %v829
        %v2962 = vunpack.c.h.b16 %v829
        %v2963 = vunpack.c.l.b16 %v830
        %v2964 = vunpack.c.h.b16 %v830
        %v2965 = vunpack.c.l.b16 %v831
        %v2966 = vunpack.c.h.b16 %v831
        %v2967 = vunpack.c.l.b16 %v832
        %v2968 = vunpack.c.h.b16 %v832
        %v2969 = vunpack.c.l.b16 %v833
        %v2970 = vunpack.c.h.b16 %v833
        %v2971 = vunpack.c.l.b16 %v834
        %v2972 = vunpack.c.h.b16 %v834
        %v2973 = vunpack.c.l.b16 %v835
        %v2974 = vunpack.c.h.b16 %v835
        %v2975 = vunpack.c.l.b16 %v836
        %v2976 = vunpack.c.h.b16 %v836
        %v2977 = vunpack.c.l.b16 %v837
        %v2978 = vunpack.c.h.b16 %v837
        %v2979 = vunpack.c.l.b16 %v838
        %v2980 = vunpack.c.h.b16 %v838
        %v2981 = vunpack.c.l.b16 %v839
        %v2982 = vunpack.c.h.b16 %v839
        %v2983 = vunpack.c.l.b16 %v840
        %v2984 = vunpack.c.h.b16 %v840
        %v2985 = vunpack.c.l.b16 %v841
        %v2986 = vunpack.c.h.b16 %v841
        %v2987 = vunpack.c.l.b16 %v842
        %v2988 = vunpack.c.h.b16 %v842
        %v2989 = vunpack.c.l.b16 %v843
        %v2990 = vunpack.c.h.b16 %v843
        %v2991 = vunpack.c.l.b16 %v844
        %v2992 = vunpack.c.h.b16 %v844
        %v2993 = vunpack.c.l.b16 %v845
        %v2994 = vunpack.c.h.b16 %v845
        %v2995 = vunpack.c.l.b16 %v846
        %v2996 = vunpack.c.h.b16 %v846
        %v2997 = vunpack.c.l.b16 %v847
        %v2998 = vunpack.c.h.b16 %v847
        %v2999 = vunpack.c.l.b16 %v848
        %v3000 = vunpack.c.h.b16 %v848
        %v3001 = vunpack.c.l.b16 %v849
        %v3002 = vunpack.c.h.b16 %v849
        %v3003 = vunpack.c.l.b16 %v850
        %v3004 = vunpack.c.h.b16 %v850
        %v3005 = vunpack.c.l.b16 %v851
        %v3006 = vunpack.c.h.b16 %v851
        %v3007 = vunpack.c.l.b16 %v852
        %v3008 = vunpack.c.h.b16 %v852
        %v3009 = vunpack.c.l.b16 %v853
        %v3010 = vunpack.c.h.b16 %v853
        %v3011 = vunpack.c.l.b16 %v854
        %v3012 = vunpack.c.h.b16 %v854
        %v3013 = vunpack.c.l.b16 %v855
        %v3014 = vunpack.c.h.b16 %v855
        %v3015 = vunpack.c.l.b16 %v856
        %v3016 = vunpack.c.h.b16 %v856
        %v3017 = vunpack.c.l.b16 %v857
        %v3018 = vunpack.c.h.b16 %v857
        %v3019 = vunpack.c.l.b16 %v858
        %v3020 = vunpack.c.h.b16 %v858
        %v3021 = vunpack.c.l.b16 %v859
        %v3022 = vunpack.c.h.b16 %v859
        %v3023 = vunpack.c.l.b16 %v860
        %v3024 = vunpack.c.h.b16 %v860
        %v3025 = vunpack.c.l.b16 %v861
        %v3026 = vunpack.c.h.b16 %v861
        %v3027 = vunpack.c.l.b16 %v862
        %v3028 = vunpack.c.h.b16 %v862
        %v3029 = vunpack.c.l.b16 %v863
        %v3030 = vunpack.c.h.b16 %v863
        %v3031 = vunpack.c.l.b16 %v864
        %v3032 = vunpack.c.h.b16 %v864
        %v3033 = vunpack.c.l.b16 %v865
        %v3034 = vunpack.c.h.b16 %v865
        %v3035 = vunpack.c.l.b16 %v866
        %v3036 = vunpack.c.h.b16 %v866
        %v3037 = vunpack.c.l.b16 %v867
        %v3038 = vunpack.c.h.b16 %v867
        %v3039 = vunpack.c.l.b16 %v868
        %v3040 = vunpack.c.h.b16 %v868
        %v3041 = vunpack.c.l.b16 %v869
        %v3042 = vunpack.c.h.b16 %v869
        %v3043 = vunpack.c.l.b16 %v870
        %v3044 = vunpack.c.h.b16 %v870
        %v3045 = vunpack.c.l.b16 %v871
        %v3046 = vunpack.c.h.b16 %v871
        %v3047 = vunpack.c.l.b16 %v872
        %v3048 = vunpack.c.h.b16 %v872
        %v3049 = vunpack.c.l.b16 %v873
        %v3050 = vunpack.c.h.b16 %v873
        %v3051 = vunpack.c.l.b16 %v874
        %v3052 = vunpack.c.h.b16 %v874
        %v3053 = vunpack.c.l.b16 %v875
        %v3054 = vunpack.c.h.b16 %v875
        %v3055 = vunpack.c.l.b16 %v876
        %v3056 = vunpack.c.h.b16 %v876
        %v3057 = vunpack.c.l.b16 %v877
        %v3058 = vunpack.c.h.b16 %v877
        %v3059 = vunpack.c.l.b16 %v878
        %v3060 = vunpack.c.h.b16 %v878
        %v3061 = vunpack.c.l.b16 %v879
        %v3062 = vunpack.c.h.b16 %v879
        %v3063 = vunpack.c.l.b16 %v880
        %v3064 = vunpack.c.h.b16 %v880
        %v3065 = vunpack.c.l.b16 %v881
        %v3066 = vunpack.c.h.b16 %v881
        %v3067 = vunpack.c.l.b16 %v882
        %v3068 = vunpack.c.h.b16 %v882
        %v3069 = vunpack.c.l.b16 %v883
        %v3070 = vunpack.c.h.b16 %v883
        %v3071 = vunpack.c.l.b16 %v884
        %v3072 = vunpack.c.h.b16 %v884
        %v3073 = vunpack.c.l.b16 %v885
        %v3074 = vunpack.c.h.b16 %v885
        %v3075 = vunpack.c.l.b16 %v886
        %v3076 = vunpack.c.h.b16 %v886
        %v3077 = vunpack.c.l.b16 %v887
        %v3078 = vunpack.c.h.b16 %v887
        %v3079 = vunpack.c.l.b16 %v888
        %v3080 = vunpack.c.h.b16 %v888
        %v3081 = vunpack.c.l.b16 %v889
        %v3082 = vunpack.c.h.b16 %v889
        %v3083 = vunpack.c.l.b16 %v890
        %v3084 = vunpack.c.h.b16 %v890
        %v3085 = vunpack.c.l.b16 %v891
        %v3086 = vunpack.c.h.b16 %v891
        %v3087 = vunpack.c.l.b16 %v892
        %v3088 = vunpack.c.h.b16 %v892
        %v3089 = vunpack.c.l.b16 %v893
        %v3090 = vunpack.c.h.b16 %v893
        %v3091 = vunpack.c.l.b16 %v894
        %v3092 = vunpack.c.h.b16 %v894
        %v3093 = vunpack.c.l.b16 %v895
        %v3094 = vunpack.c.h.b16 %v895
        %v3095 = vunpack.c.l.b16 %v896
        %v3096 = vunpack.c.h.b16 %v896
        %v3097 = vunpack.c.l.b16 %v897
        %v3098 = vunpack.c.h.b16 %v897
        %v3099 = vunpack.c.l.b16 %v898
        %v3100 = vunpack.c.h.b16 %v898
        %v3101 = vunpack.c.l.b16 %v899
        %v3102 = vunpack.c.h.b16 %v899
        %v3103 = vunpack.c.l.b16 %v900
        %v3104 = vunpack.c.h.b16 %v900
        %v3105 = vunpack.c.l.b16 %v901
        %v3106 = vunpack.c.h.b16 %v901
        %v3107 = vunpack.c.l.b16 %v902
        %v3108 = vunpack.c.h.b16 %v902
        %v3109 = vunpack.c.l.b16 %v903
        %v3110 = vunpack.c.h.b16 %v903
        %v3111 = vunpack.c.l.b16 %v904
        %v3112 = vunpack.c.h.b16 %v904
        %v3113 = vunpack.c.l.b16 %v905
        %v3114 = vunpack.c.h.b16 %v905
        %v3115 = vunpack.c.l.b16 %v906
        %v3116 = vunpack.c.h.b16 %v906
        %v3117 = vunpack.c.l.b16 %v907
        %v3118 = vunpack.c.h.b16 %v907
        %v3119 = vunpack.c.l.b16 %v908
        %v3120 = vunpack.c.h.b16 %v908
        %v3121 = vunpack.c.l.b16 %v909
        %v3122 = vunpack.c.h.b16 %v909
        %v3123 = vunpack.c.l.b16 %v910
        %v3124 = vunpack.c.h.b16 %v910
        %v3125 = vunpack.c.l.b16 %v911
        %v3126 = vunpack.c.h.b16 %v911
        %v3127 = vunpack.c.l.b16 %v912
        %v3128 = vunpack.c.h.b16 %v912
        %v3129 = vunpack.c.l.b16 %v913
        %v3130 = vunpack.c.h.b16 %v913
        %v3131 = vunpack.c.l.b16 %v914
        %v3132 = vunpack.c.h.b16 %v914
        %v3133 = vunpack.c.l.b16 %v915
        %v3134 = vunpack.c.h.b16 %v915
        %v3135 = vunpack.c.l.b16 %v916
        %v3136 = vunpack.c.h.b16 %v916
        %v3137 = vunpack.c.l.b16 %v917
        %v3138 = vunpack.c.h.b16 %v917
        %v3139 = vunpack.c.l.b16 %v918
        %v3140 = vunpack.c.h.b16 %v918
        %v3141 = vunpack.c.l.b16 %v919
        %v3142 = vunpack.c.h.b16 %v919
        %v3143 = vunpack.c.l.b16 %v920
        %v3144 = vunpack.c.h.b16 %v920
        %v3145 = vunpack.c.l.b16 %v921
        %v3146 = vunpack.c.h.b16 %v921
        %v3147 = vunpack.c.l.b16 %v922
        %v3148 = vunpack.c.h.b16 %v922
        %v3149 = vunpack.c.l.b16 %v923
        %v3150 = vunpack.c.h.b16 %v923
        %v3151 = vunpack.c.l.b16 %v924
        %v3152 = vunpack.c.h.b16 %v924
        %v3153 = vunpack.c.l.b16 %v925
        %v3154 = vunpack.c.h.b16 %v925
        %v3155 = vunpack.c.l.b16 %v926
        %v3156 = vunpack.c.h.b16 %v926
        %v3157 = vunpack.c.l.b16 %v927
        %v3158 = vunpack.c.h.b16 %v927
        %v3159 = vunpack.c.l.b16 %v928
        %v3160 = vunpack.c.h.b16 %v928
        %v3161 = vunpack.c.l.b16 %v929
        %v3162 = vunpack.c.h.b16 %v929
        %v3163 = vunpack.c.l.b16 %v930
        %v3164 = vunpack.c.h.b16 %v930
        %v3165 = vunpack.c.l.b16 %v931
        %v3166 = vunpack.c.h.b16 %v931
        %v3167 = vunpack.c.l.b16 %v932
        %v3168 = vunpack.c.h.b16 %v932
        %v3169 = vunpack.c.l.b16 %v933
        %v3170 = vunpack.c.h.b16 %v933
        %v3171 = vunpack.c.l.b16 %v934
        %v3172 = vunpack.c.h.b16 %v934
        %v3173 = vunpack.c.l.b16 %v935
        %v3174 = vunpack.c.h.b16 %v935
        %v3175 = vunpack.c.l.b16 %v936
        %v3176 = vunpack.c.h.b16 %v936
        %v3177 = vunpack.c.l.b16 %v937
        %v3178 = vunpack.c.h.b16 %v937
        %v3179 = vunpack.c.l.b16 %v938
        %v3180 = vunpack.c.h.b16 %v938
        %v3181 = vunpack.c.l.b16 %v939
        %v3182 = vunpack.c.h.b16 %v939
        %v3183 = vunpack.c.l.b16 %v940
        %v3184 = vunpack.c.h.b16 %v940
        %v3185 = vunpack.c.l.b16 %v941
        %v3186 = vunpack.c.h.b16 %v941
        %v3187 = vunpack.c.l.b16 %v942
        %v3188 = vunpack.c.h.b16 %v942
        %v3189 = vunpack.c.l.b16 %v943
        %v3190 = vunpack.c.h.b16 %v943
        %v3191 = vunpack.c.l.b16 %v944
        %v3192 = vunpack.c.h.b16 %v944
        %v3193 = vunpack.c.l.b16 %v945
        %v3194 = vunpack.c.h.b16 %v945
        %v3195 = vunpack.c.l.b16 %v946
        %v3196 = vunpack.c.h.b16 %v946
        %v3197 = vunpack.c.l.b16 %v947
        %v3198 = vunpack.c.h.b16 %v947
        %v3199 = vunpack.c.l.b16 %v948
        %v3200 = vunpack.c.h.b16 %v948
        %v3201 = vunpack.c.l.b16 %v949
        %v3202 = vunpack.c.h.b16 %v949
        %v3203 = vunpack.c.l.b16 %v950
        %v3204 = vunpack.c.h.b16 %v950
        %v3205 = vunpack.c.l.b16 %v951
        %v3206 = vunpack.c.h.b16 %v951
        %v3207 = vunpack.c.l.b16 %v952
        %v3208 = vunpack.c.h.b16 %v952
        %v3209 = vunpack.c.l.b16 %v953
        %v3210 = vunpack.c.h.b16 %v953
        %v3211 = vunpack.c.l.b16 %v954
        %v3212 = vunpack.c.h.b16 %v954
        %v3213 = vunpack.c.l.b16 %v955
        %v3214 = vunpack.c.h.b16 %v955
        %v3215 = vunpack.c.l.b16 %v956
        %v3216 = vunpack.c.h.b16 %v956
        %v3217 = vunpack.c.l.b16 %v957
        %v3218 = vunpack.c.h.b16 %v957
        %v3219 = vunpack.c.l.b16 %v958
        %v3220 = vunpack.c.h.b16 %v958
        %v3221 = vunpack.c.l.b16 %v959
        %v3222 = vunpack.c.h.b16 %v959
        %v3223 = vunpack.c.l.b16 %v960
        %v3224 = vunpack.c.h.b16 %v960
        %v3225 = vunpack.c.l.b16 %v961
        %v3226 = vunpack.c.h.b16 %v961
        %v3227 = vunpack.c.l.b16 %v962
        %v3228 = vunpack.c.h.b16 %v962
        %v3229 = vunpack.c.l.b16 %v963
        %v3230 = vunpack.c.h.b16 %v963
        %v3231 = vunpack.c.l.b16 %v964
        %v3232 = vunpack.c.h.b16 %v964
        %v3233 = vunpack.c.l.b16 %v965
        %v3234 = vunpack.c.h.b16 %v965
        %v3235 = vunpack.c.l.b16 %v966
        %v3236 = vunpack.c.h.b16 %v966
        %v3237 = vunpack.c.l.b16 %v967
        %v3238 = vunpack.c.h.b16 %v967
        %v3239 = vunpack.c.l.b16 %v968
        %v3240 = vunpack.c.h.b16 %v968
        %v3241 = vunpack.c.l.b16 %v969
        %v3242 = vunpack.c.h.b16 %v969
        %v3243 = vunpack.c.l.b16 %v970
        %v3244 = vunpack.c.h.b16 %v970
        %v3245 = vunpack.c.l.b16 %v971
        %v3246 = vunpack.c.h.b16 %v971
        %v3247 = vunpack.c.l.b16 %v972
        %v3248 = vunpack.c.h.b16 %v972
        %v3249 = vunpack.c.l.b16 %v973
        %v3250 = vunpack.c.h.b16 %v973
        %v3251 = vunpack.c.l.b16 %v974
        %v3252 = vunpack.c.h.b16 %v974
        %v3253 = vunpack.c.l.b16 %v975
        %v3254 = vunpack.c.h.b16 %v975
        %v3255 = vunpack.c.l.b16 %v976
        %v3256 = vunpack.c.h.b16 %v976
        %v3257 = vunpack.c.l.b16 %v977
        %v3258 = vunpack.c.h.b16 %v977
        %v3259 = vunpack.c.l.b16 %v978
        %v3260 = vunpack.c.h.b16 %v978
        %v3261 = vunpack.c.l.b16 %v979
        %v3262 = vunpack.c.h.b16 %v979
        %v3263 = vunpack.c.l.b16 %v980
        %v3264 = vunpack.c.h.b16 %v980
        %v3265 = vunpack.c.l.b16 %v981
        %v3266 = vunpack.c.h.b16 %v981
        %v3267 = vunpack.c.l.b16 %v982
        %v3268 = vunpack.c.h.b16 %v982
        %v3269 = vunpack.c.l.b16 %v983
        %v3270 = vunpack.c.h.b16 %v983
        %v3271 = vunpack.c.l.b16 %v984
        %v3272 = vunpack.c.h.b16 %v984
        %v3273 = vunpack.c.l.b16 %v985
        %v3274 = vunpack.c.h.b16 %v985
        %v3275 = vunpack.c.l.b16 %v986
        %v3276 = vunpack.c.h.b16 %v986
        %v3277 = vunpack.c.l.b16 %v987
        %v3278 = vunpack.c.h.b16 %v987
        %v3279 = vunpack.c.l.b16 %v988
        %v3280 = vunpack.c.h.b16 %v988
        %v3281 = vunpack.c.l.b16 %v989
        %v3282 = vunpack.c.h.b16 %v989
        %v3283 = vunpack.c.l.b16 %v990
        %v3284 = vunpack.c.h.b16 %v990
        %v3285 = vunpack.c.l.b16 %v991
        %v3286 = vunpack.c.h.b16 %v991
        %v3287 = vunpack.c.l.b16 %v992
        %v3288 = vunpack.c.h.b16 %v992
        %v3289 = vunpack.c.l.b16 %v993
        %v3290 = vunpack.c.h.b16 %v993
        %v3291 = vunpack.c.l.b16 %v994
        %v3292 = vunpack.c.h.b16 %v994
        %v3293 = vunpack.c.l.b16 %v995
        %v3294 = vunpack.c.h.b16 %v995
        %v3295 = vunpack.c.l.b16 %v996
        %v3296 = vunpack.c.h.b16 %v996
        %v3297 = vunpack.c.l.b16 %v997
        %v3298 = vunpack.c.h.b16 %v997
        %v3299 = vunpack.c.l.b16 %v998
        %v3300 = vunpack.c.h.b16 %v998
        %v3301 = vunpack.c.l.b16 %v999
        %v3302 = vunpack.c.h.b16 %v999
        %v3303 = vunpack.c.l.b16 %v1000
        %v3304 = vunpack.c.h.b16 %v1000
        %v3305 = vunpack.c.l.b16 %v1001
        %v3306 = vunpack.c.h.b16 %v1001
        %v3307 = vunpack.c.l.b16 %v1002
        %v3308 = vunpack.c.h.b16 %v1002
        %v3309 = vunpack.c.l.b16 %v1003
        %v3310 = vunpack.c.h.b16 %v1003
        %v3311 = vunpack.c.l.b16 %v1004
        %v3312 = vunpack.c.h.b16 %v1004
        %v3313 = vunpack.c.l.b16 %v1005
        %v3314 = vunpack.c.h.b16 %v1005
        %v3315 = vunpack.c.l.b16 %v1006
        %v3316 = vunpack.c.h.b16 %v1006
        %v3317 = vunpack.c.l.b16 %v1007
        %v3318 = vunpack.c.h.b16 %v1007
        %v3319 = vunpack.c.l.b16 %v1008
        %v3320 = vunpack.c.h.b16 %v1008
        %v3321 = vunpack.c.l.b16 %v1009
        %v3322 = vunpack.c.h.b16 %v1009
        %v3323 = vunpack.c.l.b16 %v1010
        %v3324 = vunpack.c.h.b16 %v1010
        %v3325 = vunpack.c.l.b16 %v1011
        %v3326 = vunpack.c.h.b16 %v1011
        %v3327 = vunpack.c.l.b16 %v1012
        %v3328 = vunpack.c.h.b16 %v1012
        %v3329 = vunpack.c.l.b16 %v1013
        %v3330 = vunpack.c.h.b16 %v1013
        %v3331 = vunpack.c.l.b16 %v1014
        %v3332 = vunpack.c.h.b16 %v1014
        %v3333 = vunpack.c.l.b16 %v1015
        %v3334 = vunpack.c.h.b16 %v1015
        %v3335 = vunpack.c.l.b16 %v1016
        %v3336 = vunpack.c.h.b16 %v1016
        %v3337 = vunpack.c.l.b16 %v1017
        %v3338 = vunpack.c.h.b16 %v1017
        %v3339 = vunpack.c.l.b16 %v1018
        %v3340 = vunpack.c.h.b16 %v1018
        %v3341 = vunpack.c.l.b16 %v1019
        %v3342 = vunpack.c.h.b16 %v1019
        %v3343 = vunpack.c.l.b16 %v1020
        %v3344 = vunpack.c.h.b16 %v1020
        %v3345 = vunpack.c.l.b16 %v1021
        %v3346 = vunpack.c.h.b16 %v1021
        %v3347 = vunpack.c.l.b16 %v1022
        %v3348 = vunpack.c.h.b16 %v1022
        %v3349 = vunpack.c.l.b16 %v1023
        %v3350 = vunpack.c.h.b16 %v1023
        %v3351 = vunpack.c.l.b16 %v1024
        %v3352 = vunpack.c.h.b16 %v1024
        %v3353 = vunpack.c.l.b16 %v1025
        %v3354 = vunpack.c.h.b16 %v1025
        %v3355 = vunpack.c.l.b16 %v1026
        %v3356 = vunpack.c.h.b16 %v1026
        %v3357 = vunpack.c.l.b16 %v1027
        %v3358 = vunpack.c.h.b16 %v1027
        %v3359 = vunpack.c.l.b16 %v1028
        %v3360 = vunpack.c.h.b16 %v1028
        %v3361 = vunpack.c.l.b16 %v1029
        %v3362 = vunpack.c.h.b16 %v1029
        %v3363 = vunpack.c.l.b16 %v1030
        %v3364 = vunpack.c.h.b16 %v1030
        %v3365 = vunpack.c.l.b16 %v1031
        %v3366 = vunpack.c.h.b16 %v1031
        %v3367 = vunpack.c.l.b16 %v1032
        %v3368 = vunpack.c.h.b16 %v1032
        %v3369 = vunpack.c.l.b16 %v1033
        %v3370 = vunpack.c.h.b16 %v1033
        %v3371 = vunpack.c.l.b16 %v1034
        %v3372 = vunpack.c.h.b16 %v1034
        %v3373 = vunpack.c.l.b16 %v1035
        %v3374 = vunpack.c.h.b16 %v1035
        %v3375 = vunpack.c.l.b16 %v1036
        %v3376 = vunpack.c.h.b16 %v1036
        %v3377 = vunpack.c.l.b16 %v1037
        %v3378 = vunpack.c.h.b16 %v1037
        %v3379 = vunpack.c.l.b16 %v1038
        %v3380 = vunpack.c.h.b16 %v1038
        %v3381 = vunpack.c.l.b16 %v1039
        %v3382 = vunpack.c.h.b16 %v1039
        %v3383 = vunpack.c.l.b16 %v1040
        %v3384 = vunpack.c.h.b16 %v1040
        %v3385 = vunpack.c.l.b16 %v1041
        %v3386 = vunpack.c.h.b16 %v1041
        %v3387 = vunpack.c.l.b16 %v1042
        %v3388 = vunpack.c.h.b16 %v1042
        %v3389 = vunpack.c.l.b16 %v1043
        %v3390 = vunpack.c.h.b16 %v1043
        %v3391 = vunpack.c.l.b16 %v1044
        %v3392 = vunpack.c.h.b16 %v1044
        %v3393 = vunpack.c.l.b16 %v1045
        %v3394 = vunpack.c.h.b16 %v1045
        %v3395 = vunpack.c.l.b16 %v1046
        %v3396 = vunpack.c.h.b16 %v1046
        %v3397 = vunpack.c.l.b16 %v1047
        %v3398 = vunpack.c.h.b16 %v1047
        %v3399 = vunpack.c.l.b16 %v1048
        %v3400 = vunpack.c.h.b16 %v1048
        %v3401 = vunpack.c.l.b16 %v1049
        %v3402 = vunpack.c.h.b16 %v1049
        %v3403 = vunpack.c.l.b16 %v1050
        %v3404 = vunpack.c.h.b16 %v1050
        %v3405 = vunpack.c.l.b16 %v1051
        %v3406 = vunpack.c.h.b16 %v1051
        %v3407 = vunpack.c.l.b16 %v1052
        %v3408 = vunpack.c.h.b16 %v1052
        %v3409 = vunpack.c.l.b16 %v1053
        %v3410 = vunpack.c.h.b16 %v1053
        %v3411 = vunpack.c.l.b16 %v1054
        %v3412 = vunpack.c.h.b16 %v1054
        %v3413 = vunpack.c.l.b16 %v1055
        %v3414 = vunpack.c.h.b16 %v1055
        %v3415 = vunpack.c.l.b16 %v1056
        %v3416 = vunpack.c.h.b16 %v1056
        %v3417 = vunpack.c.l.b16 %v1057
        %v3418 = vunpack.c.h.b16 %v1057
        %v3419 = vunpack.c.l.b16 %v1058
        %v3420 = vunpack.c.h.b16 %v1058
        %v3421 = vunpack.c.l.b16 %v1059
        %v3422 = vunpack.c.h.b16 %v1059
        %v3423 = vunpack.c.l.b16 %v1060
        %v3424 = vunpack.c.h.b16 %v1060
        %v3425 = vunpack.c.l.b16 %v1061
        %v3426 = vunpack.c.h.b16 %v1061
        %v3427 = vunpack.c.l.b16 %v1062
        %v3428 = vunpack.c.h.b16 %v1062
        %v3429 = vunpack.c.l.b16 %v1063
        %v3430 = vunpack.c.h.b16 %v1063
        %v3431 = vunpack.c.l.b16 %v1064
        %v3432 = vunpack.c.h.b16 %v1064
        %v3433 = vunpack.c.l.b16 %v1065
        %v3434 = vunpack.c.h.b16 %v1065
        %v3435 = vunpack.c.l.b16 %v1066
        %v3436 = vunpack.c.h.b16 %v1066
        %v3437 = vunpack.c.l.b16 %v1067
        %v3438 = vunpack.c.h.b16 %v1067
        %v3439 = vunpack.c.l.b16 %v1068
        %v3440 = vunpack.c.h.b16 %v1068
        %v3441 = vunpack.c.l.b16 %v1069
        %v3442 = vunpack.c.h.b16 %v1069
        %v3443 = vunpack.c.l.b16 %v1070
        %v3444 = vunpack.c.h.b16 %v1070
        %v3445 = vunpack.c.l.b16 %v1071
        %v3446 = vunpack.c.h.b16 %v1071
        %v3447 = vunpack.c.l.b16 %v1072
        %v3448 = vunpack.c.h.b16 %v1072
        %v3449 = vunpack.c.l.b16 %v1073
        %v3450 = vunpack.c.h.b16 %v1073
        %v3451 = vunpack.c.l.b16 %v1074
        %v3452 = vunpack.c.h.b16 %v1074
        %v3453 = vunpack.c.l.b16 %v1075
        %v3454 = vunpack.c.h.b16 %v1075
        %v3455 = vunpack.c.l.b16 %v1076
        %v3456 = vunpack.c.h.b16 %v1076
        %v3457 = vunpack.c.l.b16 %v1077
        %v3458 = vunpack.c.h.b16 %v1077
        %v3459 = vunpack.c.l.b16 %v1078
        %v3460 = vunpack.c.h.b16 %v1078
        %v3461 = vunpack.c.l.b16 %v1079
        %v3462 = vunpack.c.h.b16 %v1079
        %v3463 = vunpack.c.l.b16 %v1080
        %v3464 = vunpack.c.h.b16 %v1080
        %v3465 = vunpack.c.l.b16 %v1081
        %v3466 = vunpack.c.h.b16 %v1081
        %v3467 = vunpack.c.l.b16 %v1082
        %v3468 = vunpack.c.h.b16 %v1082
        %v3469 = vunpack.c.l.b16 %v1083
        %v3470 = vunpack.c.h.b16 %v1083
        %v3471 = vunpack.c.l.b16 %v1084
        %v3472 = vunpack.c.h.b16 %v1084
        %v3473 = vunpack.c.l.b16 %v1085
        %v3474 = vunpack.c.h.b16 %v1085
        %v3475 = vunpack.c.l.b16 %v1086
        %v3476 = vunpack.c.h.b16 %v1086
        %v3477 = vunpack.c.l.b16 %v1087
        %v3478 = vunpack.c.h.b16 %v1087
        %v3479 = vunpack.c.l.b16 %v1088
        %v3480 = vunpack.c.h.b16 %v1088
        %v3481 = vunpack.c.l.b16 %v1089
        %v3482 = vunpack.c.h.b16 %v1089
        %v3483 = vunpack.c.l.b16 %v1090
        %v3484 = vunpack.c.h.b16 %v1090
        %v3485 = vunpack.c.l.b16 %v1091
        %v3486 = vunpack.c.h.b16 %v1091
        %v3487 = vunpack.c.l.b16 %v1092
        %v3488 = vunpack.c.h.b16 %v1092
        %v3489 = vunpack.c.l.b16 %v1093
        %v3490 = vunpack.c.h.b16 %v1093
        %v3491 = vunpack.c.l.b16 %v1094
        %v3492 = vunpack.c.h.b16 %v1094
        %v3493 = vunpack.c.l.b16 %v1095
        %v3494 = vunpack.c.h.b16 %v1095
        %v3495 = vunpack.c.l.b16 %v1096
        %v3496 = vunpack.c.h.b16 %v1096
        %v3497 = vunpack.c.l.b16 %v1097
        %v3498 = vunpack.c.h.b16 %v1097
        %v3499 = vunpack.c.l.b16 %v1098
        %v3500 = vunpack.c.h.b16 %v1098
        %v3501 = vunpack.c.l.b16 %v1099
        %v3502 = vunpack.c.h.b16 %v1099
        %v3503 = vunpack.c.l.b16 %v1100
        %v3504 = vunpack.c.h.b16 %v1100
        %v3505 = vunpack.c.l.b16 %v1101
        %v3506 = vunpack.c.h.b16 %v1101
        %v3507 = vunpack.c.l.b16 %v1102
        %v3508 = vunpack.c.h.b16 %v1102
        %v3509 = vunpack.c.l.b16 %v1103
        %v3510 = vunpack.c.h.b16 %v1103
        %v3511 = vunpack.c.l.b16 %v1104
        %v3512 = vunpack.c.h.b16 %v1104
        %v3513 = vunpack.c.l.b16 %v1105
        %v3514 = vunpack.c.h.b16 %v1105
        %v3515 = vunpack.c.l.b16 %v1106
        %v3516 = vunpack.c.h.b16 %v1106
        %v3517 = vpack.c.b16 %v1985, %v1981
        %v3518 = vpack.c.b16 %v1986, %v1982
        %v3519 = vpack.c.b16 %v1987, %v1983
        %v3520 = vpack.c.b16 %v1988, %v1984
        %v3521 = vpack.c.b16 %v1993, %v1989
        %v3522 = vpack.c.b16 %v1994, %v1990
        %v3523 = vpack.c.b16 %v1995, %v1991
        %v3524 = vpack.c.b16 %v1996, %v1992
        %v3525 = vpack.c.b16 %v2001, %v1997
        %v3526 = vpack.c.b16 %v2002, %v1998
        %v3527 = vpack.c.b16 %v2003, %v1999
        %v3528 = vpack.c.b16 %v2004, %v2000
        %v3529 = vpack.c.b16 %v2009, %v2005
        %v3530 = vpack.c.b16 %v2010, %v2006
        %v3531 = vpack.c.b16 %v2011, %v2007
        %v3532 = vpack.c.b16 %v2012, %v2008
        %v3533 = vpack.c.b16 %v2017, %v2013
        %v3534 = vpack.c.b16 %v2018, %v2014
        %v3535 = vpack.c.b16 %v2019, %v2015
        %v3536 = vpack.c.b16 %v2020, %v2016
        %v3537 = vpack.c.b16 %v2025, %v2021
        %v3538 = vpack.c.b16 %v2026, %v2022
        %v3539 = vpack.c.b16 %v2027, %v2023
        %v3540 = vpack.c.b16 %v2028, %v2024
        %v3541 = vpack.c.b16 %v2033, %v2029
        %v3542 = vpack.c.b16 %v2034, %v2030
        %v3543 = vpack.c.b16 %v2035, %v2031
        %v3544 = vpack.c.b16 %v2036, %v2032
        %v3545 = vpack.c.b16 %v2041, %v2037
        %v3546 = vpack.c.b16 %v2042, %v2038
        %v3547 = vpack.c.b16 %v2043, %v2039
        %v3548 = vpack.c.b16 %v2044, %v2040
        %v3549 = vpack.c.b16 %v2049, %v2045
        %v3550 = vpack.c.b16 %v2050, %v2046
        %v3551 = vpack.c.b16 %v2051, %v2047
        %v3552 = vpack.c.b16 %v2052, %v2048
        %v3553 = vpack.c.b16 %v2057, %v2053
        %v3554 = vpack.c.b16 %v2058, %v2054
        %v3555 = vpack.c.b16 %v2059, %v2055
        %v3556 = vpack.c.b16 %v2060, %v2056
        %v3557 = vpack.c.b16 %v2065, %v2061
        %v3558 = vpack.c.b16 %v2066, %v2062
        %v3559 = vpack.c.b16 %v2067, %v2063
        %v3560 = vpack.c.b16 %v2068, %v2064
        %v3561 = vpack.c.b16 %v2073, %v2069
        %v3562 = vpack.c.b16 %v2074, %v2070
        %v3563 = vpack.c.b16 %v2075, %v2071
        %v3564 = vpack.c.b16 %v2076, %v2072
        %v3565 = vpack.c.b16 %v2081, %v2077
        %v3566 = vpack.c.b16 %v2082, %v2078
        %v3567 = vpack.c.b16 %v2083, %v2079
        %v3568 = vpack.c.b16 %v2084, %v2080
        %v3569 = vpack.c.b16 %v2089, %v2085
        %v3570 = vpack.c.b16 %v2090, %v2086
        %v3571 = vpack.c.b16 %v2091, %v2087
        %v3572 = vpack.c.b16 %v2092, %v2088
        %v3573 = vpack.c.b16 %v2097, %v2093
        %v3574 = vpack.c.b16 %v2098, %v2094
        %v3575 = vpack.c.b16 %v2099, %v2095
        %v3576 = vpack.c.b16 %v2100, %v2096
        %v3577 = vpack.c.b16 %v2105, %v2101
        %v3578 = vpack.c.b16 %v2106, %v2102
        %v3579 = vpack.c.b16 %v2107, %v2103
        %v3580 = vpack.c.b16 %v2108, %v2104
        %v3581 = vpack.c.b16 %v2113, %v2109
        %v3582 = vpack.c.b16 %v2114, %v2110
        %v3583 = vpack.c.b16 %v2115, %v2111
        %v3584 = vpack.c.b16 %v2116, %v2112
        %v3585 = vpack.c.b16 %v2121, %v2117
        %v3586 = vpack.c.b16 %v2122, %v2118
        %v3587 = vpack.c.b16 %v2123, %v2119
        %v3588 = vpack.c.b16 %v2124, %v2120
        %v3589 = vpack.c.b16 %v2129, %v2125
        %v3590 = vpack.c.b16 %v2130, %v2126
        %v3591 = vpack.c.b16 %v2131, %v2127
        %v3592 = vpack.c.b16 %v2132, %v2128
        %v3593 = vpack.c.b16 %v2137, %v2133
        %v3594 = vpack.c.b16 %v2138, %v2134
        %v3595 = vpack.c.b16 %v2139, %v2135
        %v3596 = vpack.c.b16 %v2140, %v2136
        %v3597 = vpack.c.b16 %v2145, %v2141
        %v3598 = vpack.c.b16 %v2146, %v2142
        %v3599 = vpack.c.b16 %v2147, %v2143
        %v3600 = vpack.c.b16 %v2148, %v2144
        %v3601 = vpack.c.b16 %v2153, %v2149
        %v3602 = vpack.c.b16 %v2154, %v2150
        %v3603 = vpack.c.b16 %v2155, %v2151
        %v3604 = vpack.c.b16 %v2156, %v2152
        %v3605 = vpack.c.b16 %v2161, %v2157
        %v3606 = vpack.c.b16 %v2162, %v2158
        %v3607 = vpack.c.b16 %v2163, %v2159
        %v3608 = vpack.c.b16 %v2164, %v2160
        %v3609 = vpack.c.b16 %v2169, %v2165
        %v3610 = vpack.c.b16 %v2170, %v2166
        %v3611 = vpack.c.b16 %v2171, %v2167
        %v3612 = vpack.c.b16 %v2172, %v2168
        %v3613 = vpack.c.b16 %v2177, %v2173
        %v3614 = vpack.c.b16 %v2178, %v2174
        %v3615 = vpack.c.b16 %v2179, %v2175
        %v3616 = vpack.c.b16 %v2180, %v2176
        %v3617 = vpack.c.b16 %v2185, %v2181
        %v3618 = vpack.c.b16 %v2186, %v2182
        %v3619 = vpack.c.b16 %v2187, %v2183
        %v3620 = vpack.c.b16 %v2188, %v2184
        %v3621 = vpack.c.b16 %v2193, %v2189
        %v3622 = vpack.c.b16 %v2194, %v2190
        %v3623 = vpack.c.b16 %v2195, %v2191
        %v3624 = vpack.c.b16 %v2196, %v2192
        %v3625 = vpack.c.b16 %v2201, %v2197
        %v3626 = vpack.c.b16 %v2202, %v2198
        %v3627 = vpack.c.b16 %v2203, %v2199
        %v3628 = vpack.c.b16 %v2204, %v2200
        %v3629 = vpack.c.b16 %v2209, %v2205
        %v3630 = vpack.c.b16 %v2210, %v2206
        %v3631 = vpack.c.b16 %v2211, %v2207
        %v3632 = vpack.c.b16 %v2212, %v2208
        %v3633 = vpack.c.b16 %v2217, %v2213
        %v3634 = vpack.c.b16 %v2218, %v2214
        %v3635 = vpack.c.b16 %v2219, %v2215
        %v3636 = vpack.c.b16 %v2220, %v2216
        %v3637 = vpack.c.b16 %v2225, %v2221
        %v3638 = vpack.c.b16 %v2226, %v2222
        %v3639 = vpack.c.b16 %v2227, %v2223
        %v3640 = vpack.c.b16 %v2228, %v2224
        %v3641 = vpack.c.b16 %v2233, %v2229
        %v3642 = vpack.c.b16 %v2234, %v2230
        %v3643 = vpack.c.b16 %v2235, %v2231
        %v3644 = vpack.c.b16 %v2236, %v2232
        %v3645 = vpack.c.b16 %v2241, %v2237
        %v3646 = vpack.c.b16 %v2242, %v2238
        %v3647 = vpack.c.b16 %v2243, %v2239
        %v3648 = vpack.c.b16 %v2244, %v2240
        %v3649 = vpack.c.b16 %v2249, %v2245
        %v3650 = vpack.c.b16 %v2250, %v2246
        %v3651 = vpack.c.b16 %v2251, %v2247
        %v3652 = vpack.c.b16 %v2252, %v2248
        %v3653 = vpack.c.b16 %v2257, %v2253
        %v3654 = vpack.c.b16 %v2258, %v2254
        %v3655 = vpack.c.b16 %v2259, %v2255
        %v3656 = vpack.c.b16 %v2260, %v2256
        %v3657 = vpack.c.b16 %v2265, %v2261
        %v3658 = vpack.c.b16 %v2266, %v2262
        %v3659 = vpack.c.b16 %v2267, %v2263
        %v3660 = vpack.c.b16 %v2268, %v2264
        %v3661 = vpack.c.b16 %v2273, %v2269
        %v3662 = vpack.c.b16 %v2274, %v2270
        %v3663 = vpack.c.b16 %v2275, %v2271
        %v3664 = vpack.c.b16 %v2276, %v2272
        %v3665 = vpack.c.b16 %v2281, %v2277
        %v3666 = vpack.c.b16 %v2282, %v2278
        %v3667 = vpack.c.b16 %v2283, %v2279
        %v3668 = vpack.c.b16 %v2284, %v2280
        %v3669 = vpack.c.b16 %v2289, %v2285
        %v3670 = vpack.c.b16 %v2290, %v2286
        %v3671 = vpack.c.b16 %v2291, %v2287
        %v3672 = vpack.c.b16 %v2292, %v2288
        %v3673 = vpack.c.b16 %v2297, %v2293
        %v3674 = vpack.c.b16 %v2298, %v2294
        %v3675 = vpack.c.b16 %v2299, %v2295
        %v3676 = vpack.c.b16 %v2300, %v2296
        %v3677 = vpack.c.b16 %v2305, %v2301
        %v3678 = vpack.c.b16 %v2306, %v2302
        %v3679 = vpack.c.b16 %v2307, %v2303
        %v3680 = vpack.c.b16 %v2308, %v2304
        %v3681 = vpack.c.b16 %v2313, %v2309
        %v3682 = vpack.c.b16 %v2314, %v2310
        %v3683 = vpack.c.b16 %v2315, %v2311
        %v3684 = vpack.c.b16 %v2316, %v2312
        %v3685 = vpack.c.b16 %v2321, %v2317
        %v3686 = vpack.c.b16 %v2322, %v2318
        %v3687 = vpack.c.b16 %v2323, %v2319
        %v3688 = vpack.c.b16 %v2324, %v2320
        %v3689 = vpack.c.b16 %v2329, %v2325
        %v3690 = vpack.c.b16 %v2330, %v2326
        %v3691 = vpack.c.b16 %v2331, %v2327
        %v3692 = vpack.c.b16 %v2332, %v2328
        %v3693 = vpack.c.b16 %v2337, %v2333
        %v3694 = vpack.c.b16 %v2338, %v2334
        %v3695 = vpack.c.b16 %v2339, %v2335
        %v3696 = vpack.c.b16 %v2340, %v2336
        %v3697 = vpack.c.b16 %v2345, %v2341
        %v3698 = vpack.c.b16 %v2346, %v2342
        %v3699 = vpack.c.b16 %v2347, %v2343
        %v3700 = vpack.c.b16 %v2348, %v2344
        %v3701 = vpack.c.b16 %v2353, %v2349
        %v3702 = vpack.c.b16 %v2354, %v2350
        %v3703 = vpack.c.b16 %v2355, %v2351
        %v3704 = vpack.c.b16 %v2356, %v2352
        %v3705 = vpack.c.b16 %v2361, %v2357
        %v3706 = vpack.c.b16 %v2362, %v2358
        %v3707 = vpack.c.b16 %v2363, %v2359
        %v3708 = vpack.c.b16 %v2364, %v2360
        %v3709 = vpack.c.b16 %v2369, %v2365
        %v3710 = vpack.c.b16 %v2370, %v2366
        %v3711 = vpack.c.b16 %v2371, %v2367
        %v3712 = vpack.c.b16 %v2372, %v2368
        %v3713 = vpack.c.b16 %v2377, %v2373
        %v3714 = vpack.c.b16 %v2378, %v2374
        %v3715 = vpack.c.b16 %v2379, %v2375
        %v3716 = vpack.c.b16 %v2380, %v2376
        %v3717 = vpack.c.b16 %v2385, %v2381
        %v3718 = vpack.c.b16 %v2386, %v2382
        %v3719 = vpack.c.b16 %v2387, %v2383
        %v3720 = vpack.c.b16 %v2388, %v2384
        %v3721 = vpack.c.b16 %v2393, %v2389
        %v3722 = vpack.c.b16 %v2394, %v2390
        %v3723 = vpack.c.b16 %v2395, %v2391
        %v3724 = vpack.c.b16 %v2396, %v2392
        %v3725 = vpack.c.b16 %v2401, %v2397
        %v3726 = vpack.c.b16 %v2402, %v2398
        %v3727 = vpack.c.b16 %v2403, %v2399
        %v3728 = vpack.c.b16 %v2404, %v2400
        %v3729 = vpack.c.b16 %v2409, %v2405
        %v3730 = vpack.c.b16 %v2410, %v2406
        %v3731 = vpack.c.b16 %v2411, %v2407
        %v3732 = vpack.c.b16 %v2412, %v2408
        %v3733 = vpack.c.b16 %v2417, %v2413
        %v3734 = vpack.c.b16 %v2418, %v2414
        %v3735 = vpack.c.b16 %v2419, %v2415
        %v3736 = vpack.c.b16 %v2420, %v2416
        %v3737 = vpack.c.b16 %v2425, %v2421
        %v3738 = vpack.c.b16 %v2426, %v2422
        %v3739 = vpack.c.b16 %v2427, %v2423
        %v3740 = vpack.c.b16 %v2428, %v2424
        %v3741 = vpack.c.b16 %v2433, %v2429
        %v3742 = vpack.c.b16 %v2434, %v2430
        %v3743 = vpack.c.b16 %v2435, %v2431
        %v3744 = vpack.c.b16 %v2436, %v2432
        %v3745 = vpack.c.b16 %v2441, %v2437
        %v3746 = vpack.c.b16 %v2442, %v2438
        %v3747 = vpack.c.b16 %v2443, %v2439
        %v3748 = vpack.c.b16 %v2444, %v2440
        %v3749 = vpack.c.b16 %v2449, %v2445
        %v3750 = vpack.c.b16 %v2450, %v2446
        %v3751 = vpack.c.b16 %v2451, %v2447
        %v3752 = vpack.c.b16 %v2452, %v2448
        %v3753 = vpack.c.b16 %v2457, %v2453
        %v3754 = vpack.c.b16 %v2458, %v2454
        %v3755 = vpack.c.b16 %v2459, %v2455
        %v3756 = vpack.c.b16 %v2460, %v2456
        %v3757 = vpack.c.b16 %v2465, %v2461
        %v3758 = vpack.c.b16 %v2466, %v2462
        %v3759 = vpack.c.b16 %v2467, %v2463
        %v3760 = vpack.c.b16 %v2468, %v2464
        %v3761 = vpack.c.b16 %v2473, %v2469
        %v3762 = vpack.c.b16 %v2474, %v2470
        %v3763 = vpack.c.b16 %v2475, %v2471
        %v3764 = vpack.c.b16 %v2476, %v2472
        %v3765 = vpack.c.b16 %v2481, %v2477
        %v3766 = vpack.c.b16 %v2482, %v2478
        %v3767 = vpack.c.b16 %v2483, %v2479
        %v3768 = vpack.c.b16 %v2484, %v2480
        %v3769 = vpack.c.b16 %v2489, %v2485
        %v3770 = vpack.c.b16 %v2490, %v2486
        %v3771 = vpack.c.b16 %v2491, %v2487
        %v3772 = vpack.c.b16 %v2492, %v2488
        %v3773 = vpack.c.b16 %v2497, %v2493
        %v3774 = vpack.c.b16 %v2498, %v2494
        %v3775 = vpack.c.b16 %v2499, %v2495
        %v3776 = vpack.c.b16 %v2500, %v2496
        %v3777 = vpack.c.b16 %v2505, %v2501
        %v3778 = vpack.c.b16 %v2506, %v2502
        %v3779 = vpack.c.b16 %v2507, %v2503
        %v3780 = vpack.c.b16 %v2508, %v2504
        %v3781 = vpack.c.b16 %v2513, %v2509
        %v3782 = vpack.c.b16 %v2514, %v2510
        %v3783 = vpack.c.b16 %v2515, %v2511
        %v3784 = vpack.c.b16 %v2516, %v2512
        %v3785 = vpack.c.b16 %v2521, %v2517
        %v3786 = vpack.c.b16 %v2522, %v2518
        %v3787 = vpack.c.b16 %v2523, %v2519
        %v3788 = vpack.c.b16 %v2524, %v2520
        %v3789 = vpack.c.b16 %v2529, %v2525
        %v3790 = vpack.c.b16 %v2530, %v2526
        %v3791 = vpack.c.b16 %v2531, %v2527
        %v3792 = vpack.c.b16 %v2532, %v2528
        %v3793 = vpack.c.b16 %v2537, %v2533
        %v3794 = vpack.c.b16 %v2538, %v2534
        %v3795 = vpack.c.b16 %v2539, %v2535
        %v3796 = vpack.c.b16 %v2540, %v2536
        %v3797 = vpack.c.b16 %v2545, %v2541
        %v3798 = vpack.c.b16 %v2546, %v2542
        %v3799 = vpack.c.b16 %v2547, %v2543
        %v3800 = vpack.c.b16 %v2548, %v2544
        %v3801 = vpack.c.b16 %v2553, %v2549
        %v3802 = vpack.c.b16 %v2554, %v2550
        %v3803 = vpack.c.b16 %v2555, %v2551
        %v3804 = vpack.c.b16 %v2556, %v2552
        %v3805 = vpack.c.b16 %v2561, %v2557
        %v3806 = vpack.c.b16 %v2562, %v2558
        %v3807 = vpack.c.b16 %v2563, %v2559
        %v3808 = vpack.c.b16 %v2564, %v2560
        %v3809 = vpack.c.b16 %v2569, %v2565
        %v3810 = vpack.c.b16 %v2570, %v2566
        %v3811 = vpack.c.b16 %v2571, %v2567
        %v3812 = vpack.c.b16 %v2572, %v2568
        %v3813 = vpack.c.b16 %v2577, %v2573
        %v3814 = vpack.c.b16 %v2578, %v2574
        %v3815 = vpack.c.b16 %v2579, %v2575
        %v3816 = vpack.c.b16 %v2580, %v2576
        %v3817 = vpack.c.b16 %v2585, %v2581
        %v3818 = vpack.c.b16 %v2586, %v2582
        %v3819 = vpack.c.b16 %v2587, %v2583
        %v3820 = vpack.c.b16 %v2588, %v2584
        %v3821 = vpack.c.b16 %v2593, %v2589
        %v3822 = vpack.c.b16 %v2594, %v2590
        %v3823 = vpack.c.b16 %v2595, %v2591
        %v3824 = vpack.c.b16 %v2596, %v2592
        %v3825 = vpack.c.b16 %v2601, %v2597
        %v3826 = vpack.c.b16 %v2602, %v2598
        %v3827 = vpack.c.b16 %v2603, %v2599
        %v3828 = vpack.c.b16 %v2604, %v2600
        %v3829 = vpack.c.b16 %v2609, %v2605
        %v3830 = vpack.c.b16 %v2610, %v2606
        %v3831 = vpack.c.b16 %v2611, %v2607
        %v3832 = vpack.c.b16 %v2612, %v2608
        %v3833 = vpack.c.b16 %v2617, %v2613
        %v3834 = vpack.c.b16 %v2618, %v2614
        %v3835 = vpack.c.b16 %v2619, %v2615
        %v3836 = vpack.c.b16 %v2620, %v2616
        %v3837 = vpack.c.b16 %v2625, %v2621
        %v3838 = vpack.c.b16 %v2626, %v2622
        %v3839 = vpack.c.b16 %v2627, %v2623
        %v3840 = vpack.c.b16 %v2628, %v2624
        %v3841 = vpack.c.b16 %v2633, %v2629
        %v3842 = vpack.c.b16 %v2634, %v2630
        %v3843 = vpack.c.b16 %v2635, %v2631
        %v3844 = vpack.c.b16 %v2636, %v2632
        %v3845 = vpack.c.b16 %v2641, %v2637
        %v3846 = vpack.c.b16 %v2642, %v2638
        %v3847 = vpack.c.b16 %v2643, %v2639
        %v3848 = vpack.c.b16 %v2644, %v2640
        %v3849 = vpack.c.b16 %v2649, %v2645
        %v3850 = vpack.c.b16 %v2650, %v2646
        %v3851 = vpack.c.b16 %v2651, %v2647
        %v3852 = vpack.c.b16 %v2652, %v2648
        %v3853 = vpack.c.b16 %v2657, %v2653
        %v3854 = vpack.c.b16 %v2658, %v2654
        %v3855 = vpack.c.b16 %v2659, %v2655
        %v3856 = vpack.c.b16 %v2660, %v2656
        %v3857 = vpack.c.b16 %v2665, %v2661
        %v3858 = vpack.c.b16 %v2666, %v2662
        %v3859 = vpack.c.b16 %v2667, %v2663
        %v3860 = vpack.c.b16 %v2668, %v2664
        %v3861 = vpack.c.b16 %v2673, %v2669
        %v3862 = vpack.c.b16 %v2674, %v2670
        %v3863 = vpack.c.b16 %v2675, %v2671
        %v3864 = vpack.c.b16 %v2676, %v2672
        %v3865 = vpack.c.b16 %v2681, %v2677
        %v3866 = vpack.c.b16 %v2682, %v2678
        %v3867 = vpack.c.b16 %v2683, %v2679
        %v3868 = vpack.c.b16 %v2684, %v2680
        %v3869 = vpack.c.b16 %v2689, %v2685
        %v3870 = vpack.c.b16 %v2690, %v2686
        %v3871 = vpack.c.b16 %v2691, %v2687
        %v3872 = vpack.c.b16 %v2692, %v2688
        %v3873 = vpack.c.b16 %v2697, %v2693
        %v3874 = vpack.c.b16 %v2698, %v2694
        %v3875 = vpack.c.b16 %v2699, %v2695
        %v3876 = vpack.c.b16 %v2700, %v2696
        %v3877 = vpack.c.b16 %v2705, %v2701
        %v3878 = vpack.c.b16 %v2706, %v2702
        %v3879 = vpack.c.b16 %v2707, %v2703
        %v3880 = vpack.c.b16 %v2708, %v2704
        %v3881 = vpack.c.b16 %v2713, %v2709
        %v3882 = vpack.c.b16 %v2714, %v2710
        %v3883 = vpack.c.b16 %v2715, %v2711
        %v3884 = vpack.c.b16 %v2716, %v2712
        %v3885 = vpack.c.b16 %v2721, %v2717
        %v3886 = vpack.c.b16 %v2722, %v2718
        %v3887 = vpack.c.b16 %v2723, %v2719
        %v3888 = vpack.c.b16 %v2724, %v2720
        %v3889 = vpack.c.b16 %v2729, %v2725
        %v3890 = vpack.c.b16 %v2730, %v2726
        %v3891 = vpack.c.b16 %v2731, %v2727
        %v3892 = vpack.c.b16 %v2732, %v2728
        %v3893 = vpack.c.b16 %v2737, %v2733
        %v3894 = vpack.c.b16 %v2738, %v2734
        %v3895 = vpack.c.b16 %v2739, %v2735
        %v3896 = vpack.c.b16 %v2740, %v2736
        %v3897 = vpack.c.b16 %v2745, %v2741
        %v3898 = vpack.c.b16 %v2746, %v2742
        %v3899 = vpack.c.b16 %v2747, %v2743
        %v3900 = vpack.c.b16 %v2748, %v2744
        %v3901 = vpack.c.b16 %v2753, %v2749
        %v3902 = vpack.c.b16 %v2754, %v2750
        %v3903 = vpack.c.b16 %v2755, %v2751
        %v3904 = vpack.c.b16 %v2756, %v2752
        %v3905 = vpack.c.b16 %v2761, %v2757
        %v3906 = vpack.c.b16 %v2762, %v2758
        %v3907 = vpack.c.b16 %v2763, %v2759
        %v3908 = vpack.c.b16 %v2764, %v2760
        %v3909 = vpack.c.b16 %v2769, %v2765
        %v3910 = vpack.c.b16 %v2770, %v2766
        %v3911 = vpack.c.b16 %v2771, %v2767
        %v3912 = vpack.c.b16 %v2772, %v2768
        %v3913 = vpack.c.b16 %v2777, %v2773
        %v3914 = vpack.c.b16 %v2778, %v2774
        %v3915 = vpack.c.b16 %v2779, %v2775
        %v3916 = vpack.c.b16 %v2780, %v2776
        %v3917 = vpack.c.b16 %v2785, %v2781
        %v3918 = vpack.c.b16 %v2786, %v2782
        %v3919 = vpack.c.b16 %v2787, %v2783
        %v3920 = vpack.c.b16 %v2788, %v2784
        %v3921 = vpack.c.b16 %v2793, %v2789
        %v3922 = vpack.c.b16 %v2794, %v2790
        %v3923 = vpack.c.b16 %v2795, %v2791
        %v3924 = vpack.c.b16 %v2796, %v2792
        %v3925 = vpack.c.b16 %v2801, %v2797
        %v3926 = vpack.c.b16 %v2802, %v2798
        %v3927 = vpack.c.b16 %v2803, %v2799
        %v3928 = vpack.c.b16 %v2804, %v2800
        %v3929 = vpack.c.b16 %v2809, %v2805
        %v3930 = vpack.c.b16 %v2810, %v2806
        %v3931 = vpack.c.b16 %v2811, %v2807
        %v3932 = vpack.c.b16 %v2812, %v2808
        %v3933 = vpack.c.b16 %v2817, %v2813
        %v3934 = vpack.c.b16 %v2818, %v2814
        %v3935 = vpack.c.b16 %v2819, %v2815
        %v3936 = vpack.c.b16 %v2820, %v2816
        %v3937 = vpack.c.b16 %v2825, %v2821
        %v3938 = vpack.c.b16 %v2826, %v2822
        %v3939 = vpack.c.b16 %v2827, %v2823
        %v3940 = vpack.c.b16 %v2828, %v2824
        %v3941 = vpack.c.b16 %v2833, %v2829
        %v3942 = vpack.c.b16 %v2834, %v2830
        %v3943 = vpack.c.b16 %v2835, %v2831
        %v3944 = vpack.c.b16 %v2836, %v2832
        %v3945 = vpack.c.b16 %v2841, %v2837
        %v3946 = vpack.c.b16 %v2842, %v2838
        %v3947 = vpack.c.b16 %v2843, %v2839
        %v3948 = vpack.c.b16 %v2844, %v2840
        %v3949 = vpack.c.b16 %v2849, %v2845
        %v3950 = vpack.c.b16 %v2850, %v2846
        %v3951 = vpack.c.b16 %v2851, %v2847
        %v3952 = vpack.c.b16 %v2852, %v2848
        %v3953 = vpack.c.b16 %v2857, %v2853
        %v3954 = vpack.c.b16 %v2858, %v2854
        %v3955 = vpack.c.b16 %v2859, %v2855
        %v3956 = vpack.c.b16 %v2860, %v2856
        %v3957 = vpack.c.b16 %v2865, %v2861
        %v3958 = vpack.c.b16 %v2866, %v2862
        %v3959 = vpack.c.b16 %v2867, %v2863
        %v3960 = vpack.c.b16 %v2868, %v2864
        %v3961 = vpack.c.b16 %v2873, %v2869
        %v3962 = vpack.c.b16 %v2874, %v2870
        %v3963 = vpack.c.b16 %v2875, %v2871
        %v3964 = vpack.c.b16 %v2876, %v2872
        %v3965 = vpack.c.b16 %v2881, %v2877
        %v3966 = vpack.c.b16 %v2882, %v2878
        %v3967 = vpack.c.b16 %v2883, %v2879
        %v3968 = vpack.c.b16 %v2884, %v2880
        %v3969 = vpack.c.b16 %v2889, %v2885
        %v3970 = vpack.c.b16 %v2890, %v2886
        %v3971 = vpack.c.b16 %v2891, %v2887
        %v3972 = vpack.c.b16 %v2892, %v2888
        %v3973 = vpack.c.b16 %v2897, %v2893
        %v3974 = vpack.c.b16 %v2898, %v2894
        %v3975 = vpack.c.b16 %v2899, %v2895
        %v3976 = vpack.c.b16 %v2900, %v2896
        %v3977 = vpack.c.b16 %v2905, %v2901
        %v3978 = vpack.c.b16 %v2906, %v2902
        %v3979 = vpack.c.b16 %v2907, %v2903
        %v3980 = vpack.c.b16 %v2908, %v2904
        %v3981 = vpack.c.b16 %v2913, %v2909
        %v3982 = vpack.c.b16 %v2914, %v2910
        %v3983 = vpack.c.b16 %v2915, %v2911
        %v3984 = vpack.c.b16 %v2916, %v2912
        %v3985 = vpack.c.b16 %v2921, %v2917
        %v3986 = vpack.c.b16 %v2922, %v2918
        %v3987 = vpack.c.b16 %v2923, %v2919
        %v3988 = vpack.c.b16 %v2924, %v2920
        %v3989 = vpack.c.b16 %v2929, %v2925
        %v3990 = vpack.c.b16 %v2930, %v2926
        %v3991 = vpack.c.b16 %v2931, %v2927
        %v3992 = vpack.c.b16 %v2932, %v2928
        %v3993 = vpack.c.b16 %v2937, %v2933
        %v3994 = vpack.c.b16 %v2938, %v2934
        %v3995 = vpack.c.b16 %v2939, %v2935
        %v3996 = vpack.c.b16 %v2940, %v2936
        %v3997 = vpack.c.b16 %v2945, %v2941
        %v3998 = vpack.c.b16 %v2946, %v2942
        %v3999 = vpack.c.b16 %v2947, %v2943
        %v4000 = vpack.c.b16 %v2948, %v2944
        %v4001 = vpack.c.b16 %v2953, %v2949
        %v4002 = vpack.c.b16 %v2954, %v2950
        %v4003 = vpack.c.b16 %v2955, %v2951
        %v4004 = vpack.c.b16 %v2956, %v2952
        %v4005 = vpack.c.b16 %v2961, %v2957
        %v4006 = vpack.c.b16 %v2962, %v2958
        %v4007 = vpack.c.b16 %v2963, %v2959
        %v4008 = vpack.c.b16 %v2964, %v2960
        %v4009 = vpack.c.b16 %v2969, %v2965
        %v4010 = vpack.c.b16 %v2970, %v2966
        %v4011 = vpack.c.b16 %v2971, %v2967
        %v4012 = vpack.c.b16 %v2972, %v2968
        %v4013 = vpack.c.b16 %v2977, %v2973
        %v4014 = vpack.c.b16 %v2978, %v2974
        %v4015 = vpack.c.b16 %v2979, %v2975
        %v4016 = vpack.c.b16 %v2980, %v2976
        %v4017 = vpack.c.b16 %v2985, %v2981
        %v4018 = vpack.c.b16 %v2986, %v2982
        %v4019 = vpack.c.b16 %v2987, %v2983
        %v4020 = vpack.c.b16 %v2988, %v2984
        %v4021 = vpack.c.b16 %v2993, %v2989
        %v4022 = vpack.c.b16 %v2994, %v2990
        %v4023 = vpack.c.b16 %v2995, %v2991
        %v4024 = vpack.c.b16 %v2996, %v2992
        %v4025 = vpack.c.b16 %v3001, %v2997
        %v4026 = vpack.c.b16 %v3002, %v2998
        %v4027 = vpack.c.b16 %v3003, %v2999
        %v4028 = vpack.c.b16 %v3004, %v3000
        %v4029 = vpack.c.b16 %v3009, %v3005
        %v4030 = vpack.c.b16 %v3010, %v3006
        %v4031 = vpack.c.b16 %v3011, %v3007
        %v4032 = vpack.c.b16 %v3012, %v3008
        %v4033 = vpack.c.b16 %v3017, %v3013
        %v4034 = vpack.c.b16 %v3018, %v3014
        %v4035 = vpack.c.b16 %v3019, %v3015
        %v4036 = vpack.c.b16 %v3020, %v3016
        %v4037 = vpack.c.b16 %v3025, %v3021
        %v4038 = vpack.c.b16 %v3026, %v3022
        %v4039 = vpack.c.b16 %v3027, %v3023
        %v4040 = vpack.c.b16 %v3028, %v3024
        %v4041 = vpack.c.b16 %v3033, %v3029
        %v4042 = vpack.c.b16 %v3034, %v3030
        %v4043 = vpack.c.b16 %v3035, %v3031
        %v4044 = vpack.c.b16 %v3036, %v3032
        %v4045 = vpack.c.b16 %v3041, %v3037
        %v4046 = vpack.c.b16 %v3042, %v3038
        %v4047 = vpack.c.b16 %v3043, %v3039
        %v4048 = vpack.c.b16 %v3044, %v3040
        %v4049 = vpack.c.b16 %v3049, %v3045
        %v4050 = vpack.c.b16 %v3050, %v3046
        %v4051 = vpack.c.b16 %v3051, %v3047
        %v4052 = vpack.c.b16 %v3052, %v3048
        %v4053 = vpack.c.b16 %v3057, %v3053
        %v4054 = vpack.c.b16 %v3058, %v3054
        %v4055 = vpack.c.b16 %v3059, %v3055
        %v4056 = vpack.c.b16 %v3060, %v3056
        %v4057 = vpack.c.b16 %v3065, %v3061
        %v4058 = vpack.c.b16 %v3066, %v3062
        %v4059 = vpack.c.b16 %v3067, %v3063
        %v4060 = vpack.c.b16 %v3068, %v3064
        %v4061 = vpack.c.b16 %v3073, %v3069
        %v4062 = vpack.c.b16 %v3074, %v3070
        %v4063 = vpack.c.b16 %v3075, %v3071
        %v4064 = vpack.c.b16 %v3076, %v3072
        %v4065 = vpack.c.b16 %v3081, %v3077
        %v4066 = vpack.c.b16 %v3082, %v3078
        %v4067 = vpack.c.b16 %v3083, %v3079
        %v4068 = vpack.c.b16 %v3084, %v3080
        %v4069 = vpack.c.b16 %v3089, %v3085
        %v4070 = vpack.c.b16 %v3090, %v3086
        %v4071 = vpack.c.b16 %v3091, %v3087
        %v4072 = vpack.c.b16 %v3092, %v3088
        %v4073 = vpack.c.b16 %v3097, %v3093
        %v4074 = vpack.c.b16 %v3098, %v3094
        %v4075 = vpack.c.b16 %v3099, %v3095
        %v4076 = vpack.c.b16 %v3100, %v3096
        %v4077 = vpack.c.b16 %v3105, %v3101
        %v4078 = vpack.c.b16 %v3106, %v3102
        %v4079 = vpack.c.b16 %v3107, %v3103
        %v4080 = vpack.c.b16 %v3108, %v3104
        %v4081 = vpack.c.b16 %v3113, %v3109
        %v4082 = vpack.c.b16 %v3114, %v3110
        %v4083 = vpack.c.b16 %v3115, %v3111
        %v4084 = vpack.c.b16 %v3116, %v3112
        %v4085 = vpack.c.b16 %v3121, %v3117
        %v4086 = vpack.c.b16 %v3122, %v3118
        %v4087 = vpack.c.b16 %v3123, %v3119
        %v4088 = vpack.c.b16 %v3124, %v3120
        %v4089 = vpack.c.b16 %v3129, %v3125
        %v4090 = vpack.c.b16 %v3130, %v3126
        %v4091 = vpack.c.b16 %v3131, %v3127
        %v4092 = vpack.c.b16 %v3132, %v3128
        %v4093 = vpack.c.b16 %v3137, %v3133
        %v4094 = vpack.c.b16 %v3138, %v3134
        %v4095 = vpack.c.b16 %v3139, %v3135
        %v4096 = vpack.c.b16 %v3140, %v3136
        %v4097 = vpack.c.b16 %v3145, %v3141
        %v4098 = vpack.c.b16 %v3146, %v3142
        %v4099 = vpack.c.b16 %v3147, %v3143
        %v4100 = vpack.c.b16 %v3148, %v3144
        %v4101 = vpack.c.b16 %v3153, %v3149
        %v4102 = vpack.c.b16 %v3154, %v3150
        %v4103 = vpack.c.b16 %v3155, %v3151
        %v4104 = vpack.c.b16 %v3156, %v3152
        %v4105 = vpack.c.b16 %v3161, %v3157
        %v4106 = vpack.c.b16 %v3162, %v3158
        %v4107 = vpack.c.b16 %v3163, %v3159
        %v4108 = vpack.c.b16 %v3164, %v3160
        %v4109 = vpack.c.b16 %v3169, %v3165
        %v4110 = vpack.c.b16 %v3170, %v3166
        %v4111 = vpack.c.b16 %v3171, %v3167
        %v4112 = vpack.c.b16 %v3172, %v3168
        %v4113 = vpack.c.b16 %v3177, %v3173
        %v4114 = vpack.c.b16 %v3178, %v3174
        %v4115 = vpack.c.b16 %v3179, %v3175
        %v4116 = vpack.c.b16 %v3180, %v3176
        %v4117 = vpack.c.b16 %v3185, %v3181
        %v4118 = vpack.c.b16 %v3186, %v3182
        %v4119 = vpack.c.b16 %v3187, %v3183
        %v4120 = vpack.c.b16 %v3188, %v3184
        %v4121 = vpack.c.b16 %v3193, %v3189
        %v4122 = vpack.c.b16 %v3194, %v3190
        %v4123 = vpack.c.b16 %v3195, %v3191
        %v4124 = vpack.c.b16 %v3196, %v3192
        %v4125 = vpack.c.b16 %v3201, %v3197
        %v4126 = vpack.c.b16 %v3202, %v3198
        %v4127 = vpack.c.b16 %v3203, %v3199
        %v4128 = vpack.c.b16 %v3204, %v3200
        %v4129 = vpack.c.b16 %v3209, %v3205
        %v4130 = vpack.c.b16 %v3210, %v3206
        %v4131 = vpack.c.b16 %v3211, %v3207
        %v4132 = vpack.c.b16 %v3212, %v3208
        %v4133 = vpack.c.b16 %v3217, %v3213
        %v4134 = vpack.c.b16 %v3218, %v3214
        %v4135 = vpack.c.b16 %v3219, %v3215
        %v4136 = vpack.c.b16 %v3220, %v3216
        %v4137 = vpack.c.b16 %v3225, %v3221
        %v4138 = vpack.c.b16 %v3226, %v3222
        %v4139 = vpack.c.b16 %v3227, %v3223
        %v4140 = vpack.c.b16 %v3228, %v3224
        %v4141 = vpack.c.b16 %v3233, %v3229
        %v4142 = vpack.c.b16 %v3234, %v3230
        %v4143 = vpack.c.b16 %v3235, %v3231
        %v4144 = vpack.c.b16 %v3236, %v3232
        %v4145 = vpack.c.b16 %v3241, %v3237
        %v4146 = vpack.c.b16 %v3242, %v3238
        %v4147 = vpack.c.b16 %v3243, %v3239
        %v4148 = vpack.c.b16 %v3244, %v3240
        %v4149 = vpack.c.b16 %v3249, %v3245
        %v4150 = vpack.c.b16 %v3250, %v3246
        %v4151 = vpack.c.b16 %v3251, %v3247
        %v4152 = vpack.c.b16 %v3252, %v3248
        %v4153 = vpack.c.b16 %v3257, %v3253
        %v4154 = vpack.c.b16 %v3258, %v3254
        %v4155 = vpack.c.b16 %v3259, %v3255
        %v4156 = vpack.c.b16 %v3260, %v3256
        %v4157 = vpack.c.b16 %v3265, %v3261
        %v4158 = vpack.c.b16 %v3266, %v3262
        %v4159 = vpack.c.b16 %v3267, %v3263
        %v4160 = vpack.c.b16 %v3268, %v3264
        %v4161 = vpack.c.b16 %v3273, %v3269
        %v4162 = vpack.c.b16 %v3274, %v3270
        %v4163 = vpack.c.b16 %v3275, %v3271
        %v4164 = vpack.c.b16 %v3276, %v3272
        %v4165 = vpack.c.b16 %v3281, %v3277
        %v4166 = vpack.c.b16 %v3282, %v3278
        %v4167 = vpack.c.b16 %v3283, %v3279
        %v4168 = vpack.c.b16 %v3284, %v3280
        %v4169 = vpack.c.b16 %v3289, %v3285
        %v4170 = vpack.c.b16 %v3290, %v3286
        %v4171 = vpack.c.b16 %v3291, %v3287
        %v4172 = vpack.c.b16 %v3292, %v3288
        %v4173 = vpack.c.b16 %v3297, %v3293
        %v4174 = vpack.c.b16 %v3298, %v3294
        %v4175 = vpack.c.b16 %v3299, %v3295
        %v4176 = vpack.c.b16 %v3300, %v3296
        %v4177 = vpack.c.b16 %v3305, %v3301
        %v4178 = vpack.c.b16 %v3306, %v3302
        %v4179 = vpack.c.b16 %v3307, %v3303
        %v4180 = vpack.c.b16 %v3308, %v3304
        %v4181 = vpack.c.b16 %v3313, %v3309
        %v4182 = vpack.c.b16 %v3314, %v3310
        %v4183 = vpack.c.b16 %v3315, %v3311
        %v4184 = vpack.c.b16 %v3316, %v3312
        %v4185 = vpack.c.b16 %v3321, %v3317
        %v4186 = vpack.c.b16 %v3322, %v3318
        %v4187 = vpack.c.b16 %v3323, %v3319
        %v4188 = vpack.c.b16 %v3324, %v3320
        %v4189 = vpack.c.b16 %v3329, %v3325
        %v4190 = vpack.c.b16 %v3330, %v3326
        %v4191 = vpack.c.b16 %v3331, %v3327
        %v4192 = vpack.c.b16 %v3332, %v3328
        %v4193 = vpack.c.b16 %v3337, %v3333
        %v4194 = vpack.c.b16 %v3338, %v3334
        %v4195 = vpack.c.b16 %v3339, %v3335
        %v4196 = vpack.c.b16 %v3340, %v3336
        %v4197 = vpack.c.b16 %v3345, %v3341
        %v4198 = vpack.c.b16 %v3346, %v3342
        %v4199 = vpack.c.b16 %v3347, %v3343
        %v4200 = vpack.c.b16 %v3348, %v3344
        %v4201 = vpack.c.b16 %v3353, %v3349
        %v4202 = vpack.c.b16 %v3354, %v3350
        %v4203 = vpack.c.b16 %v3355, %v3351
        %v4204 = vpack.c.b16 %v3356, %v3352
        %v4205 = vpack.c.b16 %v3361, %v3357
        %v4206 = vpack.c.b16 %v3362, %v3358
        %v4207 = vpack.c.b16 %v3363, %v3359
        %v4208 = vpack.c.b16 %v3364, %v3360
        %v4209 = vpack.c.b16 %v3369, %v3365
        %v4210 = vpack.c.b16 %v3370, %v3366
        %v4211 = vpack.c.b16 %v3371, %v3367
        %v4212 = vpack.c.b16 %v3372, %v3368
        %v4213 = vpack.c.b16 %v3377, %v3373
        %v4214 = vpack.c.b16 %v3378, %v3374
        %v4215 = vpack.c.b16 %v3379, %v3375
        %v4216 = vpack.c.b16 %v3380, %v3376
        %v4217 = vpack.c.b16 %v3385, %v3381
        %v4218 = vpack.c.b16 %v3386, %v3382
        %v4219 = vpack.c.b16 %v3387, %v3383
        %v4220 = vpack.c.b16 %v3388, %v3384
        %v4221 = vpack.c.b16 %v3393, %v3389
        %v4222 = vpack.c.b16 %v3394, %v3390
        %v4223 = vpack.c.b16 %v3395, %v3391
        %v4224 = vpack.c.b16 %v3396, %v3392
        %v4225 = vpack.c.b16 %v3401, %v3397
        %v4226 = vpack.c.b16 %v3402, %v3398
        %v4227 = vpack.c.b16 %v3403, %v3399
        %v4228 = vpack.c.b16 %v3404, %v3400
        %v4229 = vpack.c.b16 %v3409, %v3405
        %v4230 = vpack.c.b16 %v3410, %v3406
        %v4231 = vpack.c.b16 %v3411, %v3407
        %v4232 = vpack.c.b16 %v3412, %v3408
        %v4233 = vpack.c.b16 %v3417, %v3413
        %v4234 = vpack.c.b16 %v3418, %v3414
        %v4235 = vpack.c.b16 %v3419, %v3415
        %v4236 = vpack.c.b16 %v3420, %v3416
        %v4237 = vpack.c.b16 %v3425, %v3421
        %v4238 = vpack.c.b16 %v3426, %v3422
        %v4239 = vpack.c.b16 %v3427, %v3423
        %v4240 = vpack.c.b16 %v3428, %v3424
        %v4241 = vpack.c.b16 %v3433, %v3429
        %v4242 = vpack.c.b16 %v3434, %v3430
        %v4243 = vpack.c.b16 %v3435, %v3431
        %v4244 = vpack.c.b16 %v3436, %v3432
        %v4245 = vpack.c.b16 %v3441, %v3437
        %v4246 = vpack.c.b16 %v3442, %v3438
        %v4247 = vpack.c.b16 %v3443, %v3439
        %v4248 = vpack.c.b16 %v3444, %v3440
        %v4249 = vpack.c.b16 %v3449, %v3445
        %v4250 = vpack.c.b16 %v3450, %v3446
        %v4251 = vpack.c.b16 %v3451, %v3447
        %v4252 = vpack.c.b16 %v3452, %v3448
        %v4253 = vpack.c.b16 %v3457, %v3453
        %v4254 = vpack.c.b16 %v3458, %v3454
        %v4255 = vpack.c.b16 %v3459, %v3455
        %v4256 = vpack.c.b16 %v3460, %v3456
        %v4257 = vpack.c.b16 %v3465, %v3461
        %v4258 = vpack.c.b16 %v3466, %v3462
        %v4259 = vpack.c.b16 %v3467, %v3463
        %v4260 = vpack.c.b16 %v3468, %v3464
        %v4261 = vpack.c.b16 %v3473, %v3469
        %v4262 = vpack.c.b16 %v3474, %v3470
        %v4263 = vpack.c.b16 %v3475, %v3471
        %v4264 = vpack.c.b16 %v3476, %v3472
        %v4265 = vpack.c.b16 %v3481, %v3477
        %v4266 = vpack.c.b16 %v3482, %v3478
        %v4267 = vpack.c.b16 %v3483, %v3479
        %v4268 = vpack.c.b16 %v3484, %v3480
        %v4269 = vpack.c.b16 %v3489, %v3485
        %v4270 = vpack.c.b16 %v3490, %v3486
        %v4271 = vpack.c.b16 %v3491, %v3487
        %v4272 = vpack.c.b16 %v3492, %v3488
        %v4273 = vpack.c.b16 %v3497, %v3493
        %v4274 = vpack.c.b16 %v3498, %v3494
        %v4275 = vpack.c.b16 %v3499, %v3495
        %v4276 = vpack.c.b16 %v3500, %v3496
        %v4277 = vpack.c.b16 %v3505, %v3501
        %v4278 = vpack.c.b16 %v3506, %v3502
        %v4279 = vpack.c.b16 %v3507, %v3503
        %v4280 = vpack.c.b16 %v3508, %v3504
        %v4281 = vpack.c.b16 %v3513, %v3509
        %v4282 = vpack.c.b16 %v3514, %v3510
        %v4283 = vpack.c.b16 %v3515, %v3511
        %v4284 = vpack.c.b16 %v3516, %v3512
        %5053 = vmatprep.subr.bf16.mxu0 %v3518
        %5054 = vmatpush1.bf16.msra.mxu0 %v3517
        %5055 = vmatprep.subr.bf16.mxu0 %v3522
        %5056 = vmatpush1.bf16.msra.mxu0 %v3521
        %5057 = vmatprep.subr.bf16.mxu0 %v3526
        %5058 = vmatpush1.bf16.msra.mxu0 %v3525
        %5059 = vmatprep.subr.bf16.mxu0 %v3530
        %5060 = vmatpush1.bf16.msra.mxu0 %v3529
        %5061 = vmatprep.subr.bf16.mxu0 %v3534
        %5062 = vmatpush1.bf16.msra.mxu0 %v3533
        %5063 = vmatprep.subr.bf16.mxu0 %v3538
        %5064 = vmatpush1.bf16.msra.mxu0 %v3537
        %5065 = vmatprep.subr.bf16.mxu0 %v3542
        %5066 = vmatpush1.bf16.msra.mxu0 %v3541
        %5067 = vmatprep.subr.bf16.mxu0 %v3546
        %5068 = vmatpush1.bf16.msra.mxu0 %v3545
        %5069 = vmatprep.subr.bf16.mxu0 %v3550
        %5070 = vmatpush1.bf16.msra.mxu0 %v3549
        %5071 = vmatprep.subr.bf16.mxu0 %v3554
        %5072 = vmatpush1.bf16.msra.mxu0 %v3553
        %5073 = vmatprep.subr.bf16.mxu0 %v3558
        %5074 = vmatpush1.bf16.msra.mxu0 %v3557
        %5075 = vmatprep.subr.bf16.mxu0 %v3562
        %5076 = vmatpush1.bf16.msra.mxu0 %v3561
        %5077 = vmatprep.subr.bf16.mxu0 %v3566
        %5078 = vmatpush1.bf16.msra.mxu0 %v3565
        %5079 = vmatprep.subr.bf16.mxu0 %v3570
        %5080 = vmatpush1.bf16.msra.mxu0 %v3569
        %5081 = vmatprep.subr.bf16.mxu0 %v3574
        %5082 = vmatpush1.bf16.msra.mxu0 %v3573
        %5083 = vmatprep.subr.bf16.mxu0 %v3578
        %5084 = vmatpush1.bf16.msra.mxu0 %v3577
        %5085 = vmatprep.mubr.bf16.mxu0 %v1166
        %5086 = vmatmul.mubr.bf16.gmra.mrb[0].mxu0 %v1165
        %v5087 = vpop.f32.mrb[0].mxu0
        %v5088 = vadd.f32 %v1112, %v5087
        %v5089 = vpop.f32.mrb[0].mxu0
        %v5090 = vadd.f32 %v1116, %v5089
        %v5091 = vpop.f32.mrb[0].mxu0
        %v5092 = vpop.f32.mrb[0].mxu0
        %5093 = vdwg.mxu0
        %5094 = vmatprep.subr.bf16.mxu0 %v3582
        %5095 = vmatpush1.bf16.msra.mxu0 %v3581
        %5096 = vmatprep.subr.bf16.mxu0 %v3586
        %5097 = vmatpush1.bf16.msra.mxu0 %v3585
        %5098 = vmatprep.subr.bf16.mxu0 %v3590
        %5099 = vmatpush1.bf16.msra.mxu0 %v3589
        %5100 = vmatprep.subr.bf16.mxu0 %v3594
        %5101 = vmatpush1.bf16.msra.mxu0 %v3593
        %5102 = vmatprep.subr.bf16.mxu0 %v3598
        %5103 = vmatpush1.bf16.msra.mxu0 %v3597
        %5104 = vmatprep.subr.bf16.mxu0 %v3602
        %5105 = vmatpush1.bf16.msra.mxu0 %v3601
        %5106 = vmatprep.subr.bf16.mxu0 %v3606
        %5107 = vmatpush1.bf16.msra.mxu0 %v3605
        %5108 = vmatprep.subr.bf16.mxu0 %v3610
        %5109 = vmatpush1.bf16.msra.mxu0 %v3609
        %5110 = vmatprep.subr.bf16.mxu0 %v3614
        %5111 = vmatpush1.bf16.msra.mxu0 %v3613
        %5112 = vmatprep.subr.bf16.mxu0 %v3618
        %5113 = vmatpush1.bf16.msra.mxu0 %v3617
        %5114 = vmatprep.subr.bf16.mxu0 %v3622
        %5115 = vmatpush1.bf16.msra.mxu0 %v3621
        %5116 = vmatprep.subr.bf16.mxu0 %v3626
        %5117 = vmatpush1.bf16.msra.mxu0 %v3625
        %5118 = vmatprep.subr.bf16.mxu0 %v3630
        %5119 = vmatpush1.bf16.msra.mxu0 %v3629
        %5120 = vmatprep.subr.bf16.mxu0 %v3634
        %5121 = vmatpush1.bf16.msra.mxu0 %v3633
        %5122 = vmatprep.subr.bf16.mxu0 %v3638
        %5123 = vmatpush1.bf16.msra.mxu0 %v3637
        %5124 = vmatprep.subr.bf16.mxu0 %v3642
        %5125 = vmatpush1.bf16.msra.mxu0 %v3641
        %5126 = vmatprep.mubr.bf16.mxu0 %v1168
        %5127 = vmatmul.mubr.bf16.gmra.mrb[0].mxu0 %v1167
        %v5128 = vpop.f32.mrb[0].mxu0
        %v5129 = vadd.f32 %v5088, %v5128
        %v5130 = vpop.f32.mrb[0].mxu0
        %v5131 = vadd.f32 %v5090, %v5130
        %v5132 = vpop.f32.mrb[0].mxu0
        %v5133 = vpop.f32.mrb[0].mxu0
        %5134 = vdwg.mxu0
        %5135 = vmatprep.subr.bf16.mxu0 %v3646
        %5136 = vmatpush1.bf16.msra.mxu0 %v3645
        %5137 = vmatprep.subr.bf16.mxu0 %v3650
        %5138 = vmatpush1.bf16.msra.mxu0 %v3649
        %5139 = vmatprep.subr.bf16.mxu0 %v3654
        %5140 = vmatpush1.bf16.msra.mxu0 %v3653
        %5141 = vmatprep.subr.bf16.mxu0 %v3658
        %5142 = vmatpush1.bf16.msra.mxu0 %v3657
        %5143 = vmatprep.subr.bf16.mxu0 %v3662
        %5144 = vmatpush1.bf16.msra.mxu0 %v3661
        %5145 = vmatprep.subr.bf16.mxu0 %v3666
        %5146 = vmatpush1.bf16.msra.mxu0 %v3665
        %5147 = vmatprep.subr.bf16.mxu0 %v3670
        %5148 = vmatpush1.bf16.msra.mxu0 %v3669
        %5149 = vmatprep.subr.bf16.mxu0 %v3674
        %5150 = vmatpush1.bf16.msra.mxu0 %v3673
        %5151 = vmatprep.subr.bf16.mxu0 %v3678
        %5152 = vmatpush1.bf16.msra.mxu0 %v3677
        %5153 = vmatprep.subr.bf16.mxu0 %v3682
        %5154 = vmatpush1.bf16.msra.mxu0 %v3681
        %5155 = vmatprep.subr.bf16.mxu0 %v3686
        %5156 = vmatpush1.bf16.msra.mxu0 %v3685
        %5157 = vmatprep.subr.bf16.mxu0 %v3690
        %5158 = vmatpush1.bf16.msra.mxu0 %v3689
        %5159 = vmatprep.subr.bf16.mxu0 %v3694
        %5160 = vmatpush1.bf16.msra.mxu0 %v3693
        %5161 = vmatprep.subr.bf16.mxu0 %v3698
        %5162 = vmatpush1.bf16.msra.mxu0 %v3697
        %5163 = vmatprep.subr.bf16.mxu0 %v3702
        %5164 = vmatpush1.bf16.msra.mxu0 %v3701
        %5165 = vmatprep.subr.bf16.mxu0 %v3706
        %5166 = vmatpush1.bf16.msra.mxu0 %v3705
        %5167 = vmatprep.mubr.bf16.mxu0 %v1170
        %5168 = vmatmul.mubr.bf16.gmra.mrb[0].mxu0 %v1169
        %v5169 = vpop.f32.mrb[0].mxu0
        %v5170 = vadd.f32 %v5129, %v5169
        %v5171 = vpop.f32.mrb[0].mxu0
        %v5172 = vadd.f32 %v5131, %v5171
        %v5173 = vpop.f32.mrb[0].mxu0
        %v5174 = vpop.f32.mrb[0].mxu0
        %5175 = vdwg.mxu0
        %5176 = vmatprep.subr.bf16.mxu0 %v3710
        %5177 = vmatpush1.bf16.msra.mxu0 %v3709
        %5178 = vmatprep.subr.bf16.mxu0 %v3714
        %5179 = vmatpush1.bf16.msra.mxu0 %v3713
        %5180 = vmatprep.subr.bf16.mxu0 %v3718
        %5181 = vmatpush1.bf16.msra.mxu0 %v3717
        %5182 = vmatprep.subr.bf16.mxu0 %v3722
        %5183 = vmatpush1.bf16.msra.mxu0 %v3721
        %5184 = vmatprep.subr.bf16.mxu0 %v3726
        %5185 = vmatpush1.bf16.msra.mxu0 %v3725
        %5186 = vmatprep.subr.bf16.mxu0 %v3730
        %5187 = vmatpush1.bf16.msra.mxu0 %v3729
        %5188 = vmatprep.subr.bf16.mxu0 %v3734
        %5189 = vmatpush1.bf16.msra.mxu0 %v3733
        %5190 = vmatprep.subr.bf16.mxu0 %v3738
        %5191 = vmatpush1.bf16.msra.mxu0 %v3737
        %5192 = vmatprep.subr.bf16.mxu0 %v3742
        %5193 = vmatpush1.bf16.msra.mxu0 %v3741
        %5194 = vmatprep.subr.bf16.mxu0 %v3746
        %5195 = vmatpush1.bf16.msra.mxu0 %v3745
        %5196 = vmatprep.subr.bf16.mxu0 %v3750
        %5197 = vmatpush1.bf16.msra.mxu0 %v3749
        %5198 = vmatprep.subr.bf16.mxu0 %v3754
        %5199 = vmatpush1.bf16.msra.mxu0 %v3753
        %5200 = vmatprep.subr.bf16.mxu0 %v3758
        %5201 = vmatpush1.bf16.msra.mxu0 %v3757
        %5202 = vmatprep.subr.bf16.mxu0 %v3762
        %5203 = vmatpush1.bf16.msra.mxu0 %v3761
        %5204 = vmatprep.subr.bf16.mxu0 %v3766
        %5205 = vmatpush1.bf16.msra.mxu0 %v3765
        %5206 = vmatprep.subr.bf16.mxu0 %v3770
        %5207 = vmatpush1.bf16.msra.mxu0 %v3769
        %5208 = vmatprep.mubr.bf16.mxu0 %v1172
        %5209 = vmatmul.mubr.bf16.gmra.mrb[0].mxu0 %v1171
        %v5210 = vpop.f32.mrb[0].mxu0
        %v5211 = vadd.f32 %v5170, %v5210
        %v5212 = vpop.f32.mrb[0].mxu0
        %v5213 = vadd.f32 %v5172, %v5212
        %v5214 = vpop.f32.mrb[0].mxu0
        %v5215 = vpop.f32.mrb[0].mxu0
        %5216 = vdwg.mxu0
        %5217 = vmatprep.subr.bf16.mxu0 %v3774
        %5218 = vmatpush1.bf16.msra.mxu0 %v3773
        %5219 = vmatprep.subr.bf16.mxu0 %v3778
        %5220 = vmatpush1.bf16.msra.mxu0 %v3777
        %5221 = vmatprep.subr.bf16.mxu0 %v3782
        %5222 = vmatpush1.bf16.msra.mxu0 %v3781
        %5223 = vmatprep.subr.bf16.mxu0 %v3786
        %5224 = vmatpush1.bf16.msra.mxu0 %v3785
        %5225 = vmatprep.subr.bf16.mxu0 %v3790
        %5226 = vmatpush1.bf16.msra.mxu0 %v3789
        %5227 = vmatprep.subr.bf16.mxu0 %v3794
        %5228 = vmatpush1.bf16.msra.mxu0 %v3793
        %5229 = vmatprep.subr.bf16.mxu0 %v3798
        %5230 = vmatpush1.bf16.msra.mxu0 %v3797
        %5231 = vmatprep.subr.bf16.mxu0 %v3802
        %5232 = vmatpush1.bf16.msra.mxu0 %v3801
        %5233 = vmatprep.subr.bf16.mxu0 %v3806
        %5234 = vmatpush1.bf16.msra.mxu0 %v3805
        %5235 = vmatprep.subr.bf16.mxu0 %v3810
        %5236 = vmatpush1.bf16.msra.mxu0 %v3809
        %5237 = vmatprep.subr.bf16.mxu0 %v3814
        %5238 = vmatpush1.bf16.msra.mxu0 %v3813
        %5239 = vmatprep.subr.bf16.mxu0 %v3818
        %5240 = vmatpush1.bf16.msra.mxu0 %v3817
        %5241 = vmatprep.subr.bf16.mxu0 %v3822
        %5242 = vmatpush1.bf16.msra.mxu0 %v3821
        %5243 = vmatprep.subr.bf16.mxu0 %v3826
        %5244 = vmatpush1.bf16.msra.mxu0 %v3825
        %5245 = vmatprep.subr.bf16.mxu0 %v3830
        %5246 = vmatpush1.bf16.msra.mxu0 %v3829
        %5247 = vmatprep.subr.bf16.mxu0 %v3834
        %5248 = vmatpush1.bf16.msra.mxu0 %v3833
        %5249 = vmatprep.mubr.bf16.mxu0 %v1174
        %5250 = vmatmul.mubr.bf16.gmra.mrb[0].mxu0 %v1173
        %v5251 = vpop.f32.mrb[0].mxu0
        %v5252 = vadd.f32 %v5211, %v5251
        %v5253 = vpop.f32.mrb[0].mxu0
        %v5254 = vadd.f32 %v5213, %v5253
        %v5255 = vpop.f32.mrb[0].mxu0
        %v5256 = vpop.f32.mrb[0].mxu0
        %5257 = vdwg.mxu0
        %5258 = vmatprep.subr.bf16.mxu0 %v3838
        %5259 = vmatpush1.bf16.msra.mxu0 %v3837
        %5260 = vmatprep.subr.bf16.mxu0 %v3842
        %5261 = vmatpush1.bf16.msra.mxu0 %v3841
        %5262 = vmatprep.subr.bf16.mxu0 %v3846
        %5263 = vmatpush1.bf16.msra.mxu0 %v3845
        %5264 = vmatprep.subr.bf16.mxu0 %v3850
        %5265 = vmatpush1.bf16.msra.mxu0 %v3849
        %5266 = vmatprep.subr.bf16.mxu0 %v3854
        %5267 = vmatpush1.bf16.msra.mxu0 %v3853
        %5268 = vmatprep.subr.bf16.mxu0 %v3858
        %5269 = vmatpush1.bf16.msra.mxu0 %v3857
        %5270 = vmatprep.subr.bf16.mxu0 %v3862
        %5271 = vmatpush1.bf16.msra.mxu0 %v3861
        %5272 = vmatprep.subr.bf16.mxu0 %v3866
        %5273 = vmatpush1.bf16.msra.mxu0 %v3865
        %5274 = vmatprep.subr.bf16.mxu0 %v3870
        %5275 = vmatpush1.bf16.msra.mxu0 %v3869
        %5276 = vmatprep.subr.bf16.mxu0 %v3874
        %5277 = vmatpush1.bf16.msra.mxu0 %v3873
        %5278 = vmatprep.subr.bf16.mxu0 %v3878
        %5279 = vmatpush1.bf16.msra.mxu0 %v3877
        %5280 = vmatprep.subr.bf16.mxu0 %v3882
        %5281 = vmatpush1.bf16.msra.mxu0 %v3881
        %5282 = vmatprep.subr.bf16.mxu0 %v3886
        %5283 = vmatpush1.bf16.msra.mxu0 %v3885
        %5284 = vmatprep.subr.bf16.mxu0 %v3890
        %5285 = vmatpush1.bf16.msra.mxu0 %v3889
        %5286 = vmatprep.subr.bf16.mxu0 %v3894
        %5287 = vmatpush1.bf16.msra.mxu0 %v3893
        %5288 = vmatprep.subr.bf16.mxu0 %v3898
        %5289 = vmatpush1.bf16.msra.mxu0 %v3897
        %5290 = vmatprep.mubr.bf16.mxu0 %v1176
        %5291 = vmatmul.mubr.bf16.gmra.mrb[0].mxu0 %v1175
        %v5292 = vpop.f32.mrb[0].mxu0
        %v5293 = vadd.f32 %v5252, %v5292
        %v5294 = vpop.f32.mrb[0].mxu0
        %v5295 = vadd.f32 %v5254, %v5294
        %v5296 = vpop.f32.mrb[0].mxu0
        %v5297 = vpop.f32.mrb[0].mxu0
        %5298 = vdwg.mxu0
        %5299 = vmatprep.subr.bf16.mxu0 %v3902
        %5300 = vmatpush1.bf16.msra.mxu0 %v3901
        %5301 = vmatprep.subr.bf16.mxu0 %v3906
        %5302 = vmatpush1.bf16.msra.mxu0 %v3905
        %5303 = vmatprep.subr.bf16.mxu0 %v3910
        %5304 = vmatpush1.bf16.msra.mxu0 %v3909
        %5305 = vmatprep.subr.bf16.mxu0 %v3914
        %5306 = vmatpush1.bf16.msra.mxu0 %v3913
        %5307 = vmatprep.subr.bf16.mxu0 %v3918
        %5308 = vmatpush1.bf16.msra.mxu0 %v3917
        %5309 = vmatprep.subr.bf16.mxu0 %v3922
        %5310 = vmatpush1.bf16.msra.mxu0 %v3921
        %5311 = vmatprep.subr.bf16.mxu0 %v3926
        %5312 = vmatpush1.bf16.msra.mxu0 %v3925
        %5313 = vmatprep.subr.bf16.mxu0 %v3930
        %5314 = vmatpush1.bf16.msra.mxu0 %v3929
        %5315 = vmatprep.subr.bf16.mxu0 %v3934
        %5316 = vmatpush1.bf16.msra.mxu0 %v3933
        %5317 = vmatprep.subr.bf16.mxu0 %v3938
        %5318 = vmatpush1.bf16.msra.mxu0 %v3937
        %5319 = vmatprep.subr.bf16.mxu0 %v3942
        %5320 = vmatpush1.bf16.msra.mxu0 %v3941
        %5321 = vmatprep.subr.bf16.mxu0 %v3946
        %5322 = vmatpush1.bf16.msra.mxu0 %v3945
        %5323 = vmatprep.subr.bf16.mxu0 %v3950
        %5324 = vmatpush1.bf16.msra.mxu0 %v3949
        %5325 = vmatprep.subr.bf16.mxu0 %v3954
        %5326 = vmatpush1.bf16.msra.mxu0 %v3953
        %5327 = vmatprep.subr.bf16.mxu0 %v3958
        %5328 = vmatpush1.bf16.msra.mxu0 %v3957
        %5329 = vmatprep.subr.bf16.mxu0 %v3962
        %5330 = vmatpush1.bf16.msra.mxu0 %v3961
        %5331 = vmatprep.mubr.bf16.mxu0 %v1178
        %5332 = vmatmul.mubr.bf16.gmra.mrb[0].mxu0 %v1177
        %v5333 = vpop.f32.mrb[0].mxu0
        %v5334 = vadd.f32 %v5293, %v5333
        %v5335 = vpop.f32.mrb[0].mxu0
        %v5336 = vadd.f32 %v5295, %v5335
        %v5337 = vpop.f32.mrb[0].mxu0
        %v5338 = vpop.f32.mrb[0].mxu0
        %5339 = vdwg.mxu0
        %5340 = vmatprep.subr.bf16.mxu0 %v3966
        %5341 = vmatpush1.bf16.msra.mxu0 %v3965
        %5342 = vmatprep.subr.bf16.mxu0 %v3970
        %5343 = vmatpush1.bf16.msra.mxu0 %v3969
        %5344 = vmatprep.subr.bf16.mxu0 %v3974
        %5345 = vmatpush1.bf16.msra.mxu0 %v3973
        %5346 = vmatprep.subr.bf16.mxu0 %v3978
        %5347 = vmatpush1.bf16.msra.mxu0 %v3977
        %5348 = vmatprep.subr.bf16.mxu0 %v3982
        %5349 = vmatpush1.bf16.msra.mxu0 %v3981
        %5350 = vmatprep.subr.bf16.mxu0 %v3986
        %5351 = vmatpush1.bf16.msra.mxu0 %v3985
        %5352 = vmatprep.subr.bf16.mxu0 %v3990
        %5353 = vmatpush1.bf16.msra.mxu0 %v3989
        %5354 = vmatprep.subr.bf16.mxu0 %v3994
        %5355 = vmatpush1.bf16.msra.mxu0 %v3993
        %5356 = vmatprep.subr.bf16.mxu0 %v3998
        %5357 = vmatpush1.bf16.msra.mxu0 %v3997
        %5358 = vmatprep.subr.bf16.mxu0 %v4002
        %5359 = vmatpush1.bf16.msra.mxu0 %v4001
        %5360 = vmatprep.subr.bf16.mxu0 %v4006
        %5361 = vmatpush1.bf16.msra.mxu0 %v4005
        %5362 = vmatprep.subr.bf16.mxu0 %v4010
        %5363 = vmatpush1.bf16.msra.mxu0 %v4009
        %5364 = vmatprep.subr.bf16.mxu0 %v4014
        %5365 = vmatpush1.bf16.msra.mxu0 %v4013
        %5366 = vmatprep.subr.bf16.mxu0 %v4018
        %5367 = vmatpush1.bf16.msra.mxu0 %v4017
        %5368 = vmatprep.subr.bf16.mxu0 %v4022
        %5369 = vmatpush1.bf16.msra.mxu0 %v4021
        %5370 = vmatprep.subr.bf16.mxu0 %v4026
        %5371 = vmatpush1.bf16.msra.mxu0 %v4025
        %5372 = vmatprep.mubr.bf16.mxu0 %v1180
        %5373 = vmatmul.mubr.bf16.gmra.mrb[0].mxu0 %v1179
        %v5374 = vpop.f32.mrb[0].mxu0
        %v5375 = vadd.f32 %v5334, %v5374
        %v5376 = vpop.f32.mrb[0].mxu0
        %v5377 = vadd.f32 %v5336, %v5376
        %v5378 = vpop.f32.mrb[0].mxu0
        %v5379 = vpop.f32.mrb[0].mxu0
        %5380 = vdwg.mxu0
        %5381 = vmatprep.subr.bf16.mxu0 %v4030
        %5382 = vmatpush1.bf16.msra.mxu0 %v4029
        %5383 = vmatprep.subr.bf16.mxu0 %v4034
        %5384 = vmatpush1.bf16.msra.mxu0 %v4033
        %5385 = vmatprep.subr.bf16.mxu0 %v4038
        %5386 = vmatpush1.bf16.msra.mxu0 %v4037
        %5387 = vmatprep.subr.bf16.mxu0 %v4042
        %5388 = vmatpush1.bf16.msra.mxu0 %v4041
        %5389 = vmatprep.subr.bf16.mxu0 %v4046
        %5390 = vmatpush1.bf16.msra.mxu0 %v4045
        %5391 = vmatprep.subr.bf16.mxu0 %v4050
        %5392 = vmatpush1.bf16.msra.mxu0 %v4049
        %5393 = vmatprep.subr.bf16.mxu0 %v4054
        %5394 = vmatpush1.bf16.msra.mxu0 %v4053
        %5395 = vmatprep.subr.bf16.mxu0 %v4058
        %5396 = vmatpush1.bf16.msra.mxu0 %v4057
        %5397 = vmatprep.subr.bf16.mxu0 %v4062
        %5398 = vmatpush1.bf16.msra.mxu0 %v4061
        %5399 = vmatprep.subr.bf16.mxu0 %v4066
        %5400 = vmatpush1.bf16.msra.mxu0 %v4065
        %5401 = vmatprep.subr.bf16.mxu0 %v4070
        %5402 = vmatpush1.bf16.msra.mxu0 %v4069
        %5403 = vmatprep.subr.bf16.mxu0 %v4074
        %5404 = vmatpush1.bf16.msra.mxu0 %v4073
        %5405 = vmatprep.subr.bf16.mxu0 %v4078
        %5406 = vmatpush1.bf16.msra.mxu0 %v4077
        %5407 = vmatprep.subr.bf16.mxu0 %v4082
        %5408 = vmatpush1.bf16.msra.mxu0 %v4081
        %5409 = vmatprep.subr.bf16.mxu0 %v4086
        %5410 = vmatpush1.bf16.msra.mxu0 %v4085
        %5411 = vmatprep.subr.bf16.mxu0 %v4090
        %5412 = vmatpush1.bf16.msra.mxu0 %v4089
        %5413 = vmatprep.mubr.bf16.mxu0 %v1182
        %5414 = vmatmul.mubr.bf16.gmra.mrb[0].mxu0 %v1181
        %v5415 = vpop.f32.mrb[0].mxu0
        %v5416 = vadd.f32 %v5375, %v5415
        %v5417 = vpop.f32.mrb[0].mxu0
        %v5418 = vadd.f32 %v5377, %v5417
        %v5419 = vpop.f32.mrb[0].mxu0
        %v5420 = vpop.f32.mrb[0].mxu0
        %5421 = vdwg.mxu0
        %5422 = vmatprep.subr.bf16.mxu0 %v4094
        %5423 = vmatpush1.bf16.msra.mxu0 %v4093
        %5424 = vmatprep.subr.bf16.mxu0 %v4098
        %5425 = vmatpush1.bf16.msra.mxu0 %v4097
        %5426 = vmatprep.subr.bf16.mxu0 %v4102
        %5427 = vmatpush1.bf16.msra.mxu0 %v4101
        %5428 = vmatprep.subr.bf16.mxu0 %v4106
        %5429 = vmatpush1.bf16.msra.mxu0 %v4105
        %5430 = vmatprep.subr.bf16.mxu0 %v4110
        %5431 = vmatpush1.bf16.msra.mxu0 %v4109
        %5432 = vmatprep.subr.bf16.mxu0 %v4114
        %5433 = vmatpush1.bf16.msra.mxu0 %v4113
        %5434 = vmatprep.subr.bf16.mxu0 %v4118
        %5435 = vmatpush1.bf16.msra.mxu0 %v4117
        %5436 = vmatprep.subr.bf16.mxu0 %v4122
        %5437 = vmatpush1.bf16.msra.mxu0 %v4121
        %5438 = vmatprep.subr.bf16.mxu0 %v4126
        %5439 = vmatpush1.bf16.msra.mxu0 %v4125
        %5440 = vmatprep.subr.bf16.mxu0 %v4130
        %5441 = vmatpush1.bf16.msra.mxu0 %v4129
        %5442 = vmatprep.subr.bf16.mxu0 %v4134
        %5443 = vmatpush1.bf16.msra.mxu0 %v4133
        %5444 = vmatprep.subr.bf16.mxu0 %v4138
        %5445 = vmatpush1.bf16.msra.mxu0 %v4137
        %5446 = vmatprep.subr.bf16.mxu0 %v4142
        %5447 = vmatpush1.bf16.msra.mxu0 %v4141
        %5448 = vmatprep.subr.bf16.mxu0 %v4146
        %5449 = vmatpush1.bf16.msra.mxu0 %v4145
        %5450 = vmatprep.subr.bf16.mxu0 %v4150
        %5451 = vmatpush1.bf16.msra.mxu0 %v4149
        %5452 = vmatprep.subr.bf16.mxu0 %v4154
        %5453 = vmatpush1.bf16.msra.mxu0 %v4153
        %5454 = vmatprep.mubr.bf16.mxu0 %v1184
        %5455 = vmatmul.mubr.bf16.gmra.mrb[0].mxu0 %v1183
        %v5456 = vpop.f32.mrb[0].mxu0
        %v5457 = vadd.f32 %v5416, %v5456
        %v5458 = vpop.f32.mrb[0].mxu0
        %v5459 = vadd.f32 %v5418, %v5458
        %v5460 = vpop.f32.mrb[0].mxu0
        %v5461 = vpop.f32.mrb[0].mxu0
        %5462 = vdwg.mxu0
        %5463 = vmatprep.subr.bf16.mxu0 %v4158
        %5464 = vmatpush1.bf16.msra.mxu0 %v4157
        %5465 = vmatprep.subr.bf16.mxu0 %v4162
        %5466 = vmatpush1.bf16.msra.mxu0 %v4161
        %5467 = vmatprep.subr.bf16.mxu0 %v4166
        %5468 = vmatpush1.bf16.msra.mxu0 %v4165
        %5469 = vmatprep.subr.bf16.mxu0 %v4170
        %5470 = vmatpush1.bf16.msra.mxu0 %v4169
        %5471 = vmatprep.subr.bf16.mxu0 %v4174
        %5472 = vmatpush1.bf16.msra.mxu0 %v4173
        %5473 = vmatprep.subr.bf16.mxu0 %v4178
        %5474 = vmatpush1.bf16.msra.mxu0 %v4177
        %5475 = vmatprep.subr.bf16.mxu0 %v4182
        %5476 = vmatpush1.bf16.msra.mxu0 %v4181
        %5477 = vmatprep.subr.bf16.mxu0 %v4186
        %5478 = vmatpush1.bf16.msra.mxu0 %v4185
        %5479 = vmatprep.subr.bf16.mxu0 %v4190
        %5480 = vmatpush1.bf16.msra.mxu0 %v4189
        %5481 = vmatprep.subr.bf16.mxu0 %v4194
        %5482 = vmatpush1.bf16.msra.mxu0 %v4193
        %5483 = vmatprep.subr.bf16.mxu0 %v4198
        %5484 = vmatpush1.bf16.msra.mxu0 %v4197
        %5485 = vmatprep.subr.bf16.mxu0 %v4202
        %5486 = vmatpush1.bf16.msra.mxu0 %v4201
        %5487 = vmatprep.subr.bf16.mxu0 %v4206
        %5488 = vmatpush1.bf16.msra.mxu0 %v4205
        %5489 = vmatprep.subr.bf16.mxu0 %v4210
        %5490 = vmatpush1.bf16.msra.mxu0 %v4209
        %5491 = vmatprep.subr.bf16.mxu0 %v4214
        %5492 = vmatpush1.bf16.msra.mxu0 %v4213
        %5493 = vmatprep.subr.bf16.mxu0 %v4218
        %5494 = vmatpush1.bf16.msra.mxu0 %v4217
        %5495 = vmatprep.mubr.bf16.mxu0 %v1186
        %5496 = vmatmul.mubr.bf16.gmra.mrb[0].mxu0 %v1185
        %v5497 = vpop.f32.mrb[0].mxu0
        %v5498 = vadd.f32 %v5457, %v5497
        %v5499 = vpop.f32.mrb[0].mxu0
        %v5500 = vadd.f32 %v5459, %v5499
        %v5501 = vpop.f32.mrb[0].mxu0
        %v5502 = vpop.f32.mrb[0].mxu0
        %5503 = vdwg.mxu0
        %5504 = vmatprep.subr.bf16.mxu0 %v4222
        %5505 = vmatpush1.bf16.msra.mxu0 %v4221
        %5506 = vmatprep.subr.bf16.mxu0 %v4226
        %5507 = vmatpush1.bf16.msra.mxu0 %v4225
        %5508 = vmatprep.subr.bf16.mxu0 %v4230
        %5509 = vmatpush1.bf16.msra.mxu0 %v4229
        %5510 = vmatprep.subr.bf16.mxu0 %v4234
        %5511 = vmatpush1.bf16.msra.mxu0 %v4233
        %5512 = vmatprep.subr.bf16.mxu0 %v4238
        %5513 = vmatpush1.bf16.msra.mxu0 %v4237
        %5514 = vmatprep.subr.bf16.mxu0 %v4242
        %5515 = vmatpush1.bf16.msra.mxu0 %v4241
        %5516 = vmatprep.subr.bf16.mxu0 %v4246
        %5517 = vmatpush1.bf16.msra.mxu0 %v4245
        %5518 = vmatprep.subr.bf16.mxu0 %v4250
        %5519 = vmatpush1.bf16.msra.mxu0 %v4249
        %5520 = vmatprep.subr.bf16.mxu0 %v4254
        %5521 = vmatpush1.bf16.msra.mxu0 %v4253
        %5522 = vmatprep.subr.bf16.mxu0 %v4258
        %5523 = vmatpush1.bf16.msra.mxu0 %v4257
        %5524 = vmatprep.subr.bf16.mxu0 %v4262
        %5525 = vmatpush1.bf16.msra.mxu0 %v4261
        %5526 = vmatprep.subr.bf16.mxu0 %v4266
        %5527 = vmatpush1.bf16.msra.mxu0 %v4265
        %5528 = vmatprep.subr.bf16.mxu0 %v4270
        %5529 = vmatpush1.bf16.msra.mxu0 %v4269
        %5530 = vmatprep.subr.bf16.mxu0 %v4274
        %5531 = vmatpush1.bf16.msra.mxu0 %v4273
        %5532 = vmatprep.subr.bf16.mxu0 %v4278
        %5533 = vmatpush1.bf16.msra.mxu0 %v4277
        %5534 = vmatprep.subr.bf16.mxu0 %v4282
        %5535 = vmatpush1.bf16.msra.mxu0 %v4281
        %5536 = vmatprep.mubr.bf16.mxu0 %v1188
        %5537 = vmatmul.mubr.bf16.gmra.mrb[0].mxu0 %v1187
        %v5538 = vpop.f32.mrb[0].mxu0
        %v5539 = vadd.f32 %v5498, %v5538
        %v5540 = vpop.f32.mrb[0].mxu0
        %v5541 = vadd.f32 %v5500, %v5540
        %v5542 = vpop.f32.mrb[0].mxu0
        %v5543 = vpop.f32.mrb[0].mxu0
        %5544 = vdwg.mxu0
        %5545 = vmatprep.subr.bf16.mxu0 %v3520
        %5546 = vmatpush1.bf16.msra.mxu0 %v3519
        %5547 = vmatprep.subr.bf16.mxu0 %v3524
        %5548 = vmatpush1.bf16.msra.mxu0 %v3523
        %5549 = vmatprep.subr.bf16.mxu0 %v3528
        %5550 = vmatpush1.bf16.msra.mxu0 %v3527
        %5551 = vmatprep.subr.bf16.mxu0 %v3532
        %5552 = vmatpush1.bf16.msra.mxu0 %v3531
        %5553 = vmatprep.subr.bf16.mxu0 %v3536
        %5554 = vmatpush1.bf16.msra.mxu0 %v3535
        %5555 = vmatprep.subr.bf16.mxu0 %v3540
        %5556 = vmatpush1.bf16.msra.mxu0 %v3539
        %5557 = vmatprep.subr.bf16.mxu0 %v3544
        %5558 = vmatpush1.bf16.msra.mxu0 %v3543
        %5559 = vmatprep.subr.bf16.mxu0 %v3548
        %5560 = vmatpush1.bf16.msra.mxu0 %v3547
        %5561 = vmatprep.subr.bf16.mxu0 %v3552
        %5562 = vmatpush1.bf16.msra.mxu0 %v3551
        %5563 = vmatprep.subr.bf16.mxu0 %v3556
        %5564 = vmatpush1.bf16.msra.mxu0 %v3555
        %5565 = vmatprep.subr.bf16.mxu0 %v3560
        %5566 = vmatpush1.bf16.msra.mxu0 %v3559
        %5567 = vmatprep.subr.bf16.mxu0 %v3564
        %5568 = vmatpush1.bf16.msra.mxu0 %v3563
        %5569 = vmatprep.subr.bf16.mxu0 %v3568
        %5570 = vmatpush1.bf16.msra.mxu0 %v3567
        %5571 = vmatprep.subr.bf16.mxu0 %v3572
        %5572 = vmatpush1.bf16.msra.mxu0 %v3571
        %5573 = vmatprep.subr.bf16.mxu0 %v3576
        %5574 = vmatpush1.bf16.msra.mxu0 %v3575
        %5575 = vmatprep.subr.bf16.mxu0 %v3580
        %5576 = vmatpush1.bf16.msra.mxu0 %v3579
        %5577 = vmatprep.mubr.bf16.mxu0 %v1166
        %5578 = vmatmul.mubr.bf16.gmra.mrb[0].mxu0 %v1165
        %v5579 = vpop.f32.mrb[0].mxu0
        %v5580 = vadd.f32 %v1120, %v5579
        %v5581 = vpop.f32.mrb[0].mxu0
        %v5582 = vadd.f32 %v1124, %v5581
        %v5583 = vpop.f32.mrb[0].mxu0
        %v5584 = vpop.f32.mrb[0].mxu0
        %5585 = vdwg.mxu0
        %5586 = vmatprep.subr.bf16.mxu0 %v3584
        %5587 = vmatpush1.bf16.msra.mxu0 %v3583
        %5588 = vmatprep.subr.bf16.mxu0 %v3588
        %5589 = vmatpush1.bf16.msra.mxu0 %v3587
        %5590 = vmatprep.subr.bf16.mxu0 %v3592
        %5591 = vmatpush1.bf16.msra.mxu0 %v3591
        %5592 = vmatprep.subr.bf16.mxu0 %v3596
        %5593 = vmatpush1.bf16.msra.mxu0 %v3595
        %5594 = vmatprep.subr.bf16.mxu0 %v3600
        %5595 = vmatpush1.bf16.msra.mxu0 %v3599
        %5596 = vmatprep.subr.bf16.mxu0 %v3604
        %5597 = vmatpush1.bf16.msra.mxu0 %v3603
        %5598 = vmatprep.subr.bf16.mxu0 %v3608
        %5599 = vmatpush1.bf16.msra.mxu0 %v3607
        %5600 = vmatprep.subr.bf16.mxu0 %v3612
        %5601 = vmatpush1.bf16.msra.mxu0 %v3611
        %5602 = vmatprep.subr.bf16.mxu0 %v3616
        %5603 = vmatpush1.bf16.msra.mxu0 %v3615
        %5604 = vmatprep.subr.bf16.mxu0 %v3620
        %5605 = vmatpush1.bf16.msra.mxu0 %v3619
        %5606 = vmatprep.subr.bf16.mxu0 %v3624
        %5607 = vmatpush1.bf16.msra.mxu0 %v3623
        %5608 = vmatprep.subr.bf16.mxu0 %v3628
        %5609 = vmatpush1.bf16.msra.mxu0 %v3627
        %5610 = vmatprep.subr.bf16.mxu0 %v3632
        %5611 = vmatpush1.bf16.msra.mxu0 %v3631
        %5612 = vmatprep.subr.bf16.mxu0 %v3636
        %5613 = vmatpush1.bf16.msra.mxu0 %v3635
        %5614 = vmatprep.subr.bf16.mxu0 %v3640
        %5615 = vmatpush1.bf16.msra.mxu0 %v3639
        %5616 = vmatprep.subr.bf16.mxu0 %v3644
        %5617 = vmatpush1.bf16.msra.mxu0 %v3643
        %5618 = vmatprep.mubr.bf16.mxu0 %v1168
        %5619 = vmatmul.mubr.bf16.gmra.mrb[0].mxu0 %v1167
        %v5620 = vpop.f32.mrb[0].mxu0
        %v5621 = vadd.f32 %v5580, %v5620
        %v5622 = vpop.f32.mrb[0].mxu0
        %v5623 = vadd.f32 %v5582, %v5622
        %v5624 = vpop.f32.mrb[0].mxu0
        %v5625 = vpop.f32.mrb[0].mxu0
        %5626 = vdwg.mxu0
        %5627 = vmatprep.subr.bf16.mxu0 %v3648
        %5628 = vmatpush1.bf16.msra.mxu0 %v3647
        %5629 = vmatprep.subr.bf16.mxu0 %v3652
        %5630 = vmatpush1.bf16.msra.mxu0 %v3651
        %5631 = vmatprep.subr.bf16.mxu0 %v3656
        %5632 = vmatpush1.bf16.msra.mxu0 %v3655
        %5633 = vmatprep.subr.bf16.mxu0 %v3660
        %5634 = vmatpush1.bf16.msra.mxu0 %v3659
        %5635 = vmatprep.subr.bf16.mxu0 %v3664
        %5636 = vmatpush1.bf16.msra.mxu0 %v3663
        %5637 = vmatprep.subr.bf16.mxu0 %v3668
        %5638 = vmatpush1.bf16.msra.mxu0 %v3667
        %5639 = vmatprep.subr.bf16.mxu0 %v3672
        %5640 = vmatpush1.bf16.msra.mxu0 %v3671
        %5641 = vmatprep.subr.bf16.mxu0 %v3676
        %5642 = vmatpush1.bf16.msra.mxu0 %v3675
        %5643 = vmatprep.subr.bf16.mxu0 %v3680
        %5644 = vmatpush1.bf16.msra.mxu0 %v3679
        %5645 = vmatprep.subr.bf16.mxu0 %v3684
        %5646 = vmatpush1.bf16.msra.mxu0 %v3683
        %5647 = vmatprep.subr.bf16.mxu0 %v3688
        %5648 = vmatpush1.bf16.msra.mxu0 %v3687
        %5649 = vmatprep.subr.bf16.mxu0 %v3692
        %5650 = vmatpush1.bf16.msra.mxu0 %v3691
        %5651 = vmatprep.subr.bf16.mxu0 %v3696
        %5652 = vmatpush1.bf16.msra.mxu0 %v3695
        %5653 = vmatprep.subr.bf16.mxu0 %v3700
        %5654 = vmatpush1.bf16.msra.mxu0 %v3699
        %5655 = vmatprep.subr.bf16.mxu0 %v3704
        %5656 = vmatpush1.bf16.msra.mxu0 %v3703
        %5657 = vmatprep.subr.bf16.mxu0 %v3708
        %5658 = vmatpush1.bf16.msra.mxu0 %v3707
        %5659 = vmatprep.mubr.bf16.mxu0 %v1170
        %5660 = vmatmul.mubr.bf16.gmra.mrb[0].mxu0 %v1169
        %v5661 = vpop.f32.mrb[0].mxu0
        %v5662 = vadd.f32 %v5621, %v5661
        %v5663 = vpop.f32.mrb[0].mxu0
        %v5664 = vadd.f32 %v5623, %v5663
        %v5665 = vpop.f32.mrb[0].mxu0
        %v5666 = vpop.f32.mrb[0].mxu0
        %5667 = vdwg.mxu0
        %5668 = vmatprep.subr.bf16.mxu0 %v3712
        %5669 = vmatpush1.bf16.msra.mxu0 %v3711
        %5670 = vmatprep.subr.bf16.mxu0 %v3716
        %5671 = vmatpush1.bf16.msra.mxu0 %v3715
        %5672 = vmatprep.subr.bf16.mxu0 %v3720
        %5673 = vmatpush1.bf16.msra.mxu0 %v3719
        %5674 = vmatprep.subr.bf16.mxu0 %v3724
        %5675 = vmatpush1.bf16.msra.mxu0 %v3723
        %5676 = vmatprep.subr.bf16.mxu0 %v3728
        %5677 = vmatpush1.bf16.msra.mxu0 %v3727
        %5678 = vmatprep.subr.bf16.mxu0 %v3732
        %5679 = vmatpush1.bf16.msra.mxu0 %v3731
        %5680 = vmatprep.subr.bf16.mxu0 %v3736
        %5681 = vmatpush1.bf16.msra.mxu0 %v3735
        %5682 = vmatprep.subr.bf16.mxu0 %v3740
        %5683 = vmatpush1.bf16.msra.mxu0 %v3739
        %5684 = vmatprep.subr.bf16.mxu0 %v3744
        %5685 = vmatpush1.bf16.msra.mxu0 %v3743
        %5686 = vmatprep.subr.bf16.mxu0 %v3748
        %5687 = vmatpush1.bf16.msra.mxu0 %v3747
        %5688 = vmatprep.subr.bf16.mxu0 %v3752
        %5689 = vmatpush1.bf16.msra.mxu0 %v3751
        %5690 = vmatprep.subr.bf16.mxu0 %v3756
        %5691 = vmatpush1.bf16.msra.mxu0 %v3755
        %5692 = vmatprep.subr.bf16.mxu0 %v3760
        %5693 = vmatpush1.bf16.msra.mxu0 %v3759
        %5694 = vmatprep.subr.bf16.mxu0 %v3764
        %5695 = vmatpush1.bf16.msra.mxu0 %v3763
        %5696 = vmatprep.subr.bf16.mxu0 %v3768
        %5697 = vmatpush1.bf16.msra.mxu0 %v3767
        %5698 = vmatprep.subr.bf16.mxu0 %v3772
        %5699 = vmatpush1.bf16.msra.mxu0 %v3771
        %5700 = vmatprep.mubr.bf16.mxu0 %v1172
        %5701 = vmatmul.mubr.bf16.gmra.mrb[0].mxu0 %v1171
        %v5702 = vpop.f32.mrb[0].mxu0
        %v5703 = vadd.f32 %v5662, %v5702
        %v5704 = vpop.f32.mrb[0].mxu0
        %v5705 = vadd.f32 %v5664, %v5704
        %v5706 = vpop.f32.mrb[0].mxu0
        %v5707 = vpop.f32.mrb[0].mxu0
        %5708 = vdwg.mxu0
        %5709 = vmatprep.subr.bf16.mxu0 %v3776
        %5710 = vmatpush1.bf16.msra.mxu0 %v3775
        %5711 = vmatprep.subr.bf16.mxu0 %v3780
        %5712 = vmatpush1.bf16.msra.mxu0 %v3779
        %5713 = vmatprep.subr.bf16.mxu0 %v3784
        %5714 = vmatpush1.bf16.msra.mxu0 %v3783
        %5715 = vmatprep.subr.bf16.mxu0 %v3788
        %5716 = vmatpush1.bf16.msra.mxu0 %v3787
        %5717 = vmatprep.subr.bf16.mxu0 %v3792
        %5718 = vmatpush1.bf16.msra.mxu0 %v3791
        %5719 = vmatprep.subr.bf16.mxu0 %v3796
        %5720 = vmatpush1.bf16.msra.mxu0 %v3795
        %5721 = vmatprep.subr.bf16.mxu0 %v3800
        %5722 = vmatpush1.bf16.msra.mxu0 %v3799
        %5723 = vmatprep.subr.bf16.mxu0 %v3804
        %5724 = vmatpush1.bf16.msra.mxu0 %v3803
        %5725 = vmatprep.subr.bf16.mxu0 %v3808
        %5726 = vmatpush1.bf16.msra.mxu0 %v3807
        %5727 = vmatprep.subr.bf16.mxu0 %v3812
        %5728 = vmatpush1.bf16.msra.mxu0 %v3811
        %5729 = vmatprep.subr.bf16.mxu0 %v3816
        %5730 = vmatpush1.bf16.msra.mxu0 %v3815
        %5731 = vmatprep.subr.bf16.mxu0 %v3820
        %5732 = vmatpush1.bf16.msra.mxu0 %v3819
        %5733 = vmatprep.subr.bf16.mxu0 %v3824
        %5734 = vmatpush1.bf16.msra.mxu0 %v3823
        %5735 = vmatprep.subr.bf16.mxu0 %v3828
        %5736 = vmatpush1.bf16.msra.mxu0 %v3827
        %5737 = vmatprep.subr.bf16.mxu0 %v3832
        %5738 = vmatpush1.bf16.msra.mxu0 %v3831
        %5739 = vmatprep.subr.bf16.mxu0 %v3836
        %5740 = vmatpush1.bf16.msra.mxu0 %v3835
        %5741 = vmatprep.mubr.bf16.mxu0 %v1174
        %5742 = vmatmul.mubr.bf16.gmra.mrb[0].mxu0 %v1173
        %v5743 = vpop.f32.mrb[0].mxu0
        %v5744 = vadd.f32 %v5703, %v5743
        %v5745 = vpop.f32.mrb[0].mxu0
        %v5746 = vadd.f32 %v5705, %v5745
        %v5747 = vpop.f32.mrb[0].mxu0
        %v5748 = vpop.f32.mrb[0].mxu0
        %5749 = vdwg.mxu0
        %5750 = vmatprep.subr.bf16.mxu0 %v3840
        %5751 = vmatpush1.bf16.msra.mxu0 %v3839
        %5752 = vmatprep.subr.bf16.mxu0 %v3844
        %5753 = vmatpush1.bf16.msra.mxu0 %v3843
        %5754 = vmatprep.subr.bf16.mxu0 %v3848
        %5755 = vmatpush1.bf16.msra.mxu0 %v3847
        %5756 = vmatprep.subr.bf16.mxu0 %v3852
        %5757 = vmatpush1.bf16.msra.mxu0 %v3851
        %5758 = vmatprep.subr.bf16.mxu0 %v3856
        %5759 = vmatpush1.bf16.msra.mxu0 %v3855
        %5760 = vmatprep.subr.bf16.mxu0 %v3860
        %5761 = vmatpush1.bf16.msra.mxu0 %v3859
        %5762 = vmatprep.subr.bf16.mxu0 %v3864
        %5763 = vmatpush1.bf16.msra.mxu0 %v3863
        %5764 = vmatprep.subr.bf16.mxu0 %v3868
        %5765 = vmatpush1.bf16.msra.mxu0 %v3867
        %5766 = vmatprep.subr.bf16.mxu0 %v3872
        %5767 = vmatpush1.bf16.msra.mxu0 %v3871
        %5768 = vmatprep.subr.bf16.mxu0 %v3876
        %5769 = vmatpush1.bf16.msra.mxu0 %v3875
        %5770 = vmatprep.subr.bf16.mxu0 %v3880
        %5771 = vmatpush1.bf16.msra.mxu0 %v3879
        %5772 = vmatprep.subr.bf16.mxu0 %v3884
        %5773 = vmatpush1.bf16.msra.mxu0 %v3883
        %5774 = vmatprep.subr.bf16.mxu0 %v3888
        %5775 = vmatpush1.bf16.msra.mxu0 %v3887
        %5776 = vmatprep.subr.bf16.mxu0 %v3892
        %5777 = vmatpush1.bf16.msra.mxu0 %v3891
        %5778 = vmatprep.subr.bf16.mxu0 %v3896
        %5779 = vmatpush1.bf16.msra.mxu0 %v3895
        %5780 = vmatprep.subr.bf16.mxu0 %v3900
        %5781 = vmatpush1.bf16.msra.mxu0 %v3899
        %5782 = vmatprep.mubr.bf16.mxu0 %v1176
        %5783 = vmatmul.mubr.bf16.gmra.mrb[0].mxu0 %v1175
        %v5784 = vpop.f32.mrb[0].mxu0
        %v5785 = vadd.f32 %v5744, %v5784
        %v5786 = vpop.f32.mrb[0].mxu0
        %v5787 = vadd.f32 %v5746, %v5786
        %v5788 = vpop.f32.mrb[0].mxu0
        %v5789 = vpop.f32.mrb[0].mxu0
        %5790 = vdwg.mxu0
        %5791 = vmatprep.subr.bf16.mxu0 %v3904
        %5792 = vmatpush1.bf16.msra.mxu0 %v3903
        %5793 = vmatprep.subr.bf16.mxu0 %v3908
        %5794 = vmatpush1.bf16.msra.mxu0 %v3907
        %5795 = vmatprep.subr.bf16.mxu0 %v3912
        %5796 = vmatpush1.bf16.msra.mxu0 %v3911
        %5797 = vmatprep.subr.bf16.mxu0 %v3916
        %5798 = vmatpush1.bf16.msra.mxu0 %v3915
        %5799 = vmatprep.subr.bf16.mxu0 %v3920
        %5800 = vmatpush1.bf16.msra.mxu0 %v3919
        %5801 = vmatprep.subr.bf16.mxu0 %v3924
        %5802 = vmatpush1.bf16.msra.mxu0 %v3923
        %5803 = vmatprep.subr.bf16.mxu0 %v3928
        %5804 = vmatpush1.bf16.msra.mxu0 %v3927
        %5805 = vmatprep.subr.bf16.mxu0 %v3932
        %5806 = vmatpush1.bf16.msra.mxu0 %v3931
        %5807 = vmatprep.subr.bf16.mxu0 %v3936
        %5808 = vmatpush1.bf16.msra.mxu0 %v3935
        %5809 = vmatprep.subr.bf16.mxu0 %v3940
        %5810 = vmatpush1.bf16.msra.mxu0 %v3939
        %5811 = vmatprep.subr.bf16.mxu0 %v3944
        %5812 = vmatpush1.bf16.msra.mxu0 %v3943
        %5813 = vmatprep.subr.bf16.mxu0 %v3948
        %5814 = vmatpush1.bf16.msra.mxu0 %v3947
        %5815 = vmatprep.subr.bf16.mxu0 %v3952
        %5816 = vmatpush1.bf16.msra.mxu0 %v3951
        %5817 = vmatprep.subr.bf16.mxu0 %v3956
        %5818 = vmatpush1.bf16.msra.mxu0 %v3955
        %5819 = vmatprep.subr.bf16.mxu0 %v3960
        %5820 = vmatpush1.bf16.msra.mxu0 %v3959
        %5821 = vmatprep.subr.bf16.mxu0 %v3964
        %5822 = vmatpush1.bf16.msra.mxu0 %v3963
        %5823 = vmatprep.mubr.bf16.mxu0 %v1178
        %5824 = vmatmul.mubr.bf16.gmra.mrb[0].mxu0 %v1177
        %v5825 = vpop.f32.mrb[0].mxu0
        %v5826 = vadd.f32 %v5785, %v5825
        %v5827 = vpop.f32.mrb[0].mxu0
        %v5828 = vadd.f32 %v5787, %v5827
        %v5829 = vpop.f32.mrb[0].mxu0
        %v5830 = vpop.f32.mrb[0].mxu0
        %5831 = vdwg.mxu0
        %5832 = vmatprep.subr.bf16.mxu0 %v3968
        %5833 = vmatpush1.bf16.msra.mxu0 %v3967
        %5834 = vmatprep.subr.bf16.mxu0 %v3972
        %5835 = vmatpush1.bf16.msra.mxu0 %v3971
        %5836 = vmatprep.subr.bf16.mxu0 %v3976
        %5837 = vmatpush1.bf16.msra.mxu0 %v3975
        %5838 = vmatprep.subr.bf16.mxu0 %v3980
        %5839 = vmatpush1.bf16.msra.mxu0 %v3979
        %5840 = vmatprep.subr.bf16.mxu0 %v3984
        %5841 = vmatpush1.bf16.msra.mxu0 %v3983
        %5842 = vmatprep.subr.bf16.mxu0 %v3988
        %5843 = vmatpush1.bf16.msra.mxu0 %v3987
        %5844 = vmatprep.subr.bf16.mxu0 %v3992
        %5845 = vmatpush1.bf16.msra.mxu0 %v3991
        %5846 = vmatprep.subr.bf16.mxu0 %v3996
        %5847 = vmatpush1.bf16.msra.mxu0 %v3995
        %5848 = vmatprep.subr.bf16.mxu0 %v4000
        %5849 = vmatpush1.bf16.msra.mxu0 %v3999
        %5850 = vmatprep.subr.bf16.mxu0 %v4004
        %5851 = vmatpush1.bf16.msra.mxu0 %v4003
        %5852 = vmatprep.subr.bf16.mxu0 %v4008
        %5853 = vmatpush1.bf16.msra.mxu0 %v4007
        %5854 = vmatprep.subr.bf16.mxu0 %v4012
        %5855 = vmatpush1.bf16.msra.mxu0 %v4011
        %5856 = vmatprep.subr.bf16.mxu0 %v4016
        %5857 = vmatpush1.bf16.msra.mxu0 %v4015
        %5858 = vmatprep.subr.bf16.mxu0 %v4020
        %5859 = vmatpush1.bf16.msra.mxu0 %v4019
        %5860 = vmatprep.subr.bf16.mxu0 %v4024
        %5861 = vmatpush1.bf16.msra.mxu0 %v4023
        %5862 = vmatprep.subr.bf16.mxu0 %v4028
        %5863 = vmatpush1.bf16.msra.mxu0 %v4027
        %5864 = vmatprep.mubr.bf16.mxu0 %v1180
        %5865 = vmatmul.mubr.bf16.gmra.mrb[0].mxu0 %v1179
        %v5866 = vpop.f32.mrb[0].mxu0
        %v5867 = vadd.f32 %v5826, %v5866
        %v5868 = vpop.f32.mrb[0].mxu0
        %v5869 = vadd.f32 %v5828, %v5868
        %v5870 = vpop.f32.mrb[0].mxu0
        %v5871 = vpop.f32.mrb[0].mxu0
        %5872 = vdwg.mxu0
        %5873 = vmatprep.subr.bf16.mxu0 %v4032
        %5874 = vmatpush1.bf16.msra.mxu0 %v4031
        %5875 = vmatprep.subr.bf16.mxu0 %v4036
        %5876 = vmatpush1.bf16.msra.mxu0 %v4035
        %5877 = vmatprep.subr.bf16.mxu0 %v4040
        %5878 = vmatpush1.bf16.msra.mxu0 %v4039
        %5879 = vmatprep.subr.bf16.mxu0 %v4044
        %5880 = vmatpush1.bf16.msra.mxu0 %v4043
        %5881 = vmatprep.subr.bf16.mxu0 %v4048
        %5882 = vmatpush1.bf16.msra.mxu0 %v4047
        %5883 = vmatprep.subr.bf16.mxu0 %v4052
        %5884 = vmatpush1.bf16.msra.mxu0 %v4051
        %5885 = vmatprep.subr.bf16.mxu0 %v4056
        %5886 = vmatpush1.bf16.msra.mxu0 %v4055
        %5887 = vmatprep.subr.bf16.mxu0 %v4060
        %5888 = vmatpush1.bf16.msra.mxu0 %v4059
        %5889 = vmatprep.subr.bf16.mxu0 %v4064
        %5890 = vmatpush1.bf16.msra.mxu0 %v4063
        %5891 = vmatprep.subr.bf16.mxu0 %v4068
        %5892 = vmatpush1.bf16.msra.mxu0 %v4067
        %5893 = vmatprep.subr.bf16.mxu0 %v4072
        %5894 = vmatpush1.bf16.msra.mxu0 %v4071
        %5895 = vmatprep.subr.bf16.mxu0 %v4076
        %5896 = vmatpush1.bf16.msra.mxu0 %v4075
        %5897 = vmatprep.subr.bf16.mxu0 %v4080
        %5898 = vmatpush1.bf16.msra.mxu0 %v4079
        %5899 = vmatprep.subr.bf16.mxu0 %v4084
        %5900 = vmatpush1.bf16.msra.mxu0 %v4083
        %5901 = vmatprep.subr.bf16.mxu0 %v4088
        %5902 = vmatpush1.bf16.msra.mxu0 %v4087
        %5903 = vmatprep.subr.bf16.mxu0 %v4092
        %5904 = vmatpush1.bf16.msra.mxu0 %v4091
        %5905 = vmatprep.mubr.bf16.mxu0 %v1182
        %5906 = vmatmul.mubr.bf16.gmra.mrb[0].mxu0 %v1181
        %v5907 = vpop.f32.mrb[0].mxu0
        %v5908 = vadd.f32 %v5867, %v5907
        %v5909 = vpop.f32.mrb[0].mxu0
        %v5910 = vadd.f32 %v5869, %v5909
        %v5911 = vpop.f32.mrb[0].mxu0
        %v5912 = vpop.f32.mrb[0].mxu0
        %5913 = vdwg.mxu0
        %5914 = vmatprep.subr.bf16.mxu0 %v4096
        %5915 = vmatpush1.bf16.msra.mxu0 %v4095
        %5916 = vmatprep.subr.bf16.mxu0 %v4100
        %5917 = vmatpush1.bf16.msra.mxu0 %v4099
        %5918 = vmatprep.subr.bf16.mxu0 %v4104
        %5919 = vmatpush1.bf16.msra.mxu0 %v4103
        %5920 = vmatprep.subr.bf16.mxu0 %v4108
        %5921 = vmatpush1.bf16.msra.mxu0 %v4107
        %5922 = vmatprep.subr.bf16.mxu0 %v4112
        %5923 = vmatpush1.bf16.msra.mxu0 %v4111
        %5924 = vmatprep.subr.bf16.mxu0 %v4116
        %5925 = vmatpush1.bf16.msra.mxu0 %v4115
        %5926 = vmatprep.subr.bf16.mxu0 %v4120
        %5927 = vmatpush1.bf16.msra.mxu0 %v4119
        %5928 = vmatprep.subr.bf16.mxu0 %v4124
        %5929 = vmatpush1.bf16.msra.mxu0 %v4123
        %5930 = vmatprep.subr.bf16.mxu0 %v4128
        %5931 = vmatpush1.bf16.msra.mxu0 %v4127
        %5932 = vmatprep.subr.bf16.mxu0 %v4132
        %5933 = vmatpush1.bf16.msra.mxu0 %v4131
        %5934 = vmatprep.subr.bf16.mxu0 %v4136
        %5935 = vmatpush1.bf16.msra.mxu0 %v4135
        %5936 = vmatprep.subr.bf16.mxu0 %v4140
        %5937 = vmatpush1.bf16.msra.mxu0 %v4139
        %5938 = vmatprep.subr.bf16.mxu0 %v4144
        %5939 = vmatpush1.bf16.msra.mxu0 %v4143
        %5940 = vmatprep.subr.bf16.mxu0 %v4148
        %5941 = vmatpush1.bf16.msra.mxu0 %v4147
        %5942 = vmatprep.subr.bf16.mxu0 %v4152
        %5943 = vmatpush1.bf16.msra.mxu0 %v4151
        %5944 = vmatprep.subr.bf16.mxu0 %v4156
        %5945 = vmatpush1.bf16.msra.mxu0 %v4155
        %5946 = vmatprep.mubr.bf16.mxu0 %v1184
        %5947 = vmatmul.mubr.bf16.gmra.mrb[0].mxu0 %v1183
        %v5948 = vpop.f32.mrb[0].mxu0
        %v5949 = vadd.f32 %v5908, %v5948
        %v5950 = vpop.f32.mrb[0].mxu0
        %v5951 = vadd.f32 %v5910, %v5950
        %v5952 = vpop.f32.mrb[0].mxu0
        %v5953 = vpop.f32.mrb[0].mxu0
        %5954 = vdwg.mxu0
        %5955 = vmatprep.subr.bf16.mxu0 %v4160
        %5956 = vmatpush1.bf16.msra.mxu0 %v4159
        %5957 = vmatprep.subr.bf16.mxu0 %v4164
        %5958 = vmatpush1.bf16.msra.mxu0 %v4163
        %5959 = vmatprep.subr.bf16.mxu0 %v4168
        %5960 = vmatpush1.bf16.msra.mxu0 %v4167
        %5961 = vmatprep.subr.bf16.mxu0 %v4172
        %5962 = vmatpush1.bf16.msra.mxu0 %v4171
        %5963 = vmatprep.subr.bf16.mxu0 %v4176
        %5964 = vmatpush1.bf16.msra.mxu0 %v4175
        %5965 = vmatprep.subr.bf16.mxu0 %v4180
        %5966 = vmatpush1.bf16.msra.mxu0 %v4179
        %5967 = vmatprep.subr.bf16.mxu0 %v4184
        %5968 = vmatpush1.bf16.msra.mxu0 %v4183
        %5969 = vmatprep.subr.bf16.mxu0 %v4188
        %5970 = vmatpush1.bf16.msra.mxu0 %v4187
        %5971 = vmatprep.subr.bf16.mxu0 %v4192
        %5972 = vmatpush1.bf16.msra.mxu0 %v4191
        %5973 = vmatprep.subr.bf16.mxu0 %v4196
        %5974 = vmatpush1.bf16.msra.mxu0 %v4195
        %5975 = vmatprep.subr.bf16.mxu0 %v4200
        %5976 = vmatpush1.bf16.msra.mxu0 %v4199
        %5977 = vmatprep.subr.bf16.mxu0 %v4204
        %5978 = vmatpush1.bf16.msra.mxu0 %v4203
        %5979 = vmatprep.subr.bf16.mxu0 %v4208
        %5980 = vmatpush1.bf16.msra.mxu0 %v4207
        %5981 = vmatprep.subr.bf16.mxu0 %v4212
        %5982 = vmatpush1.bf16.msra.mxu0 %v4211
        %5983 = vmatprep.subr.bf16.mxu0 %v4216
        %5984 = vmatpush1.bf16.msra.mxu0 %v4215
        %5985 = vmatprep.subr.bf16.mxu0 %v4220
        %5986 = vmatpush1.bf16.msra.mxu0 %v4219
        %5987 = vmatprep.mubr.bf16.mxu0 %v1186
        %5988 = vmatmul.mubr.bf16.gmra.mrb[0].mxu0 %v1185
        %v5989 = vpop.f32.mrb[0].mxu0
        %v5990 = vadd.f32 %v5949, %v5989
        %v5991 = vpop.f32.mrb[0].mxu0
        %v5992 = vadd.f32 %v5951, %v5991
        %v5993 = vpop.f32.mrb[0].mxu0
        %v5994 = vpop.f32.mrb[0].mxu0
        %5995 = vdwg.mxu0
        %5996 = vmatprep.subr.bf16.mxu0 %v4224
        %5997 = vmatpush1.bf16.msra.mxu0 %v4223
        %5998 = vmatprep.subr.bf16.mxu0 %v4228
        %5999 = vmatpush1.bf16.msra.mxu0 %v4227
        %6000 = vmatprep.subr.bf16.mxu0 %v4232
        %6001 = vmatpush1.bf16.msra.mxu0 %v4231
        %6002 = vmatprep.subr.bf16.mxu0 %v4236
        %6003 = vmatpush1.bf16.msra.mxu0 %v4235
        %6004 = vmatprep.subr.bf16.mxu0 %v4240
        %6005 = vmatpush1.bf16.msra.mxu0 %v4239
        %6006 = vmatprep.subr.bf16.mxu0 %v4244
        %6007 = vmatpush1.bf16.msra.mxu0 %v4243
        %6008 = vmatprep.subr.bf16.mxu0 %v4248
        %6009 = vmatpush1.bf16.msra.mxu0 %v4247
        %6010 = vmatprep.subr.bf16.mxu0 %v4252
        %6011 = vmatpush1.bf16.msra.mxu0 %v4251
        %6012 = vmatprep.subr.bf16.mxu0 %v4256
        %6013 = vmatpush1.bf16.msra.mxu0 %v4255
        %6014 = vmatprep.subr.bf16.mxu0 %v4260
        %6015 = vmatpush1.bf16.msra.mxu0 %v4259
        %6016 = vmatprep.subr.bf16.mxu0 %v4264
        %6017 = vmatpush1.bf16.msra.mxu0 %v4263
        %6018 = vmatprep.subr.bf16.mxu0 %v4268
        %6019 = vmatpush1.bf16.msra.mxu0 %v4267
        %6020 = vmatprep.subr.bf16.mxu0 %v4272
        %6021 = vmatpush1.bf16.msra.mxu0 %v4271
        %6022 = vmatprep.subr.bf16.mxu0 %v4276
        %6023 = vmatpush1.bf16.msra.mxu0 %v4275
        %6024 = vmatprep.subr.bf16.mxu0 %v4280
        %6025 = vmatpush1.bf16.msra.mxu0 %v4279
        %6026 = vmatprep.subr.bf16.mxu0 %v4284
        %6027 = vmatpush1.bf16.msra.mxu0 %v4283
        %6028 = vmatprep.mubr.bf16.mxu0 %v1188
        %6029 = vmatmul.mubr.bf16.gmra.mrb[0].mxu0 %v1187
        %v6030 = vpop.f32.mrb[0].mxu0
        %v6031 = vadd.f32 %v5990, %v6030
        %v6032 = vpop.f32.mrb[0].mxu0
        %v6033 = vadd.f32 %v5992, %v6032
        %v6034 = vpop.f32.mrb[0].mxu0
        %v6035 = vpop.f32.mrb[0].mxu0
        %6036 = vdwg.mxu0
        %v6037 = vmax.f32 %v5539, 0.0
        %v6038 = vmax.f32 %v5541, 0.0
        %v6039 = vmax.f32 %v6031, 0.0
        %v6040 = vmax.f32 %v6033, 0.0
        %v6041 = vld [vmem:[#allocation2] sm:$0xff]
        %v6042 = vpack.c.bf16 %v6037, %v6037
        %v6043 = vpack.c.bf16 %v6038, %v6038
        %v6044 = vpack.c.bf16 %v6039, %v6039
        %v6045 = vpack.c.bf16 %v6040, %v6040
        %v6046 = vld [vmem:[%s282] sm:$0xf]
        %v6047 = vld [vmem:[%s282 + $0x4] sm:$0xf]
        %v6048 = vld [vmem:[%s282 + $0x8] sm:$0xf]
        %v6049 = vld [vmem:[%s282 + $0xc] sm:$0xf]
        %v6050 = vld [vmem:[%s282 + $0x10] sm:$0xf]
        %v6051 = vld [vmem:[%s282 + $0x14] sm:$0xf]
        %v6052 = vld [vmem:[%s282 + $0x18] sm:$0xf]
        %v6053 = vld [vmem:[%s282 + $0x1c] sm:$0xf]
        %v6054 = vld [vmem:[%s282 + $0x20] sm:$0xf]
        %v6055 = vld [vmem:[%s282 + $0x24] sm:$0xf]
        %v6056 = vld [vmem:[%s282 + $0x28] sm:$0xf]
        %v6057 = vld [vmem:[%s282 + $0x2c] sm:$0xf]
        %v6058 = vld [vmem:[%s282 + $0x30] sm:$0xf]
        %v6059 = vld [vmem:[%s282 + $0x34] sm:$0xf]
        %v6060 = vld [vmem:[%s282 + $0x38] sm:$0xf]
        %v6061 = vld [vmem:[%s282 + $0x3c] sm:$0xf]
        %v6062 = vld [vmem:[%s282 + $0x40] sm:$0xf]
        %v6063 = vld [vmem:[%s282 + $0x44] sm:$0xf]
        %v6064 = vld [vmem:[%s282 + $0x48] sm:$0xf]
        %v6065 = vld [vmem:[%s282 + $0x4c] sm:$0xf]
        %v6066 = vld [vmem:[%s282 + $0x50] sm:$0xf]
        %v6067 = vld [vmem:[%s282 + $0x54] sm:$0xf]
        %v6068 = vld [vmem:[%s282 + $0x58] sm:$0xf]
        %v6069 = vld [vmem:[%s282 + $0x5c] sm:$0xf]
        %v6070 = vld [vmem:[%s282 + $0x60] sm:$0xf]
        %v6071 = vld [vmem:[%s282 + $0x64] sm:$0xf]
        %v6072 = vld [vmem:[%s282 + $0x68] sm:$0xf]
        %v6073 = vld [vmem:[%s282 + $0x6c] sm:$0xf]
        %v6074 = vld [vmem:[%s282 + $0x70] sm:$0xf]
        %v6075 = vld [vmem:[%s282 + $0x74] sm:$0xf]
        %v6076 = vld [vmem:[%s282 + $0x78] sm:$0xf]
        %v6077 = vld [vmem:[%s282 + $0x7c] sm:$0xf]
        %v6078 = vld [vmem:[%s282 + $0x80] sm:$0xf]
        %v6079 = vld [vmem:[%s282 + $0x84] sm:$0xf]
        %v6080 = vld [vmem:[%s282 + $0x88] sm:$0xf]
        %v6081 = vld [vmem:[%s282 + $0x8c] sm:$0xf]
        %v6082 = vld [vmem:[%s282 + $0x90] sm:$0xf]
        %v6083 = vld [vmem:[%s282 + $0x94] sm:$0xf]
        %v6084 = vld [vmem:[%s282 + $0x98] sm:$0xf]
        %v6085 = vld [vmem:[%s282 + $0x9c] sm:$0xf]
        %v6086 = vld [vmem:[%s282 + $0xa0] sm:$0xf]
        %v6087 = vld [vmem:[%s282 + $0xa4] sm:$0xf]
        %v6088 = vld [vmem:[%s282 + $0xa8] sm:$0xf]
        %v6089 = vld [vmem:[%s282 + $0xac] sm:$0xf]
        %v6090 = vld [vmem:[%s282 + $0xb0] sm:$0xf]
        %v6091 = vld [vmem:[%s282 + $0xb4] sm:$0xf]
        %v6092 = vld [vmem:[%s282 + $0xb8] sm:$0xf]
        %v6093 = vld [vmem:[%s282 + $0xbc] sm:$0xf]
        %v6094 = vld [vmem:[%s282 + $0xc0] sm:$0xf]
        %v6095 = vld [vmem:[%s282 + $0xc4] sm:$0xf]
        %v6096 = vld [vmem:[%s282 + $0xc8] sm:$0xf]
        %v6097 = vld [vmem:[%s282 + $0xcc] sm:$0xf]
        %v6098 = vld [vmem:[%s282 + $0xd0] sm:$0xf]
        %v6099 = vld [vmem:[%s282 + $0xd4] sm:$0xf]
        %v6100 = vld [vmem:[%s282 + $0xd8] sm:$0xf]
        %v6101 = vld [vmem:[%s282 + $0xdc] sm:$0xf]
        %v6102 = vld [vmem:[%s282 + $0xe0] sm:$0xf]
        %v6103 = vld [vmem:[%s282 + $0xe4] sm:$0xf]
        %v6104 = vld [vmem:[%s282 + $0xe8] sm:$0xf]
        %v6105 = vld [vmem:[%s282 + $0xec] sm:$0xf]
        %v6106 = vld [vmem:[%s282 + $0xf0] sm:$0xf]
        %v6107 = vld [vmem:[%s282 + $0xf4] sm:$0xf]
        %v6108 = vld [vmem:[%s282 + $0xf8] sm:$0xf]
        %v6109 = vld [vmem:[%s282 + $0xfc] sm:$0xf]
        %v6174 = vunpack.c.l.b16 %v6046
        %v6175 = vunpack.c.l.b16 %v6047
        %v6176 = vunpack.c.l.b16 %v6048
        %v6177 = vunpack.c.l.b16 %v6049
        %v6178 = vunpack.c.l.b16 %v6050
        %v6179 = vunpack.c.l.b16 %v6051
        %v6180 = vunpack.c.l.b16 %v6052
        %v6181 = vunpack.c.l.b16 %v6053
        %v6182 = vunpack.c.l.b16 %v6054
        %v6183 = vunpack.c.l.b16 %v6055
        %v6184 = vunpack.c.l.b16 %v6056
        %v6185 = vunpack.c.l.b16 %v6057
        %v6186 = vunpack.c.l.b16 %v6058
        %v6187 = vunpack.c.l.b16 %v6059
        %v6188 = vunpack.c.l.b16 %v6060
        %v6189 = vunpack.c.l.b16 %v6061
        %v6190 = vunpack.c.l.b16 %v6062
        %v6191 = vunpack.c.l.b16 %v6063
        %v6192 = vunpack.c.l.b16 %v6064
        %v6193 = vunpack.c.l.b16 %v6065
        %v6194 = vunpack.c.l.b16 %v6066
        %v6195 = vunpack.c.l.b16 %v6067
        %v6196 = vunpack.c.l.b16 %v6068
        %v6197 = vunpack.c.l.b16 %v6069
        %v6198 = vunpack.c.l.b16 %v6070
        %v6199 = vunpack.c.l.b16 %v6071
        %v6200 = vunpack.c.l.b16 %v6072
        %v6201 = vunpack.c.l.b16 %v6073
        %v6202 = vunpack.c.l.b16 %v6074
        %v6203 = vunpack.c.l.b16 %v6075
        %v6204 = vunpack.c.l.b16 %v6076
        %v6205 = vunpack.c.l.b16 %v6077
        %v6206 = vunpack.c.l.b16 %v6078
        %v6207 = vunpack.c.l.b16 %v6079
        %v6208 = vunpack.c.l.b16 %v6080
        %v6209 = vunpack.c.l.b16 %v6081
        %v6210 = vunpack.c.l.b16 %v6082
        %v6211 = vunpack.c.l.b16 %v6083
        %v6212 = vunpack.c.l.b16 %v6084
        %v6213 = vunpack.c.l.b16 %v6085
        %v6214 = vunpack.c.l.b16 %v6086
        %v6215 = vunpack.c.l.b16 %v6087
        %v6216 = vunpack.c.l.b16 %v6088
        %v6217 = vunpack.c.l.b16 %v6089
        %v6218 = vunpack.c.l.b16 %v6090
        %v6219 = vunpack.c.l.b16 %v6091
        %v6220 = vunpack.c.l.b16 %v6092
        %v6221 = vunpack.c.l.b16 %v6093
        %v6222 = vunpack.c.l.b16 %v6094
        %v6223 = vunpack.c.l.b16 %v6095
        %v6224 = vunpack.c.l.b16 %v6096
        %v6225 = vunpack.c.l.b16 %v6097
        %v6226 = vunpack.c.l.b16 %v6098
        %v6227 = vunpack.c.l.b16 %v6099
        %v6228 = vunpack.c.l.b16 %v6100
        %v6229 = vunpack.c.l.b16 %v6101
        %v6230 = vunpack.c.l.b16 %v6102
        %v6231 = vunpack.c.l.b16 %v6103
        %v6232 = vunpack.c.l.b16 %v6104
        %v6233 = vunpack.c.l.b16 %v6105
        %v6234 = vunpack.c.l.b16 %v6106
        %v6235 = vunpack.c.l.b16 %v6107
        %v6236 = vunpack.c.l.b16 %v6108
        %v6237 = vunpack.c.l.b16 %v6109
        %v6238 = vpack.c.b16 %v6175, %v6174
        %v6239 = vpack.c.b16 %v6177, %v6176
        %v6240 = vpack.c.b16 %v6179, %v6178
        %v6241 = vpack.c.b16 %v6181, %v6180
        %v6242 = vpack.c.b16 %v6183, %v6182
        %v6243 = vpack.c.b16 %v6185, %v6184
        %v6244 = vpack.c.b16 %v6187, %v6186
        %v6245 = vpack.c.b16 %v6189, %v6188
        %v6246 = vpack.c.b16 %v6191, %v6190
        %v6247 = vpack.c.b16 %v6193, %v6192
        %v6248 = vpack.c.b16 %v6195, %v6194
        %v6249 = vpack.c.b16 %v6197, %v6196
        %v6250 = vpack.c.b16 %v6199, %v6198
        %v6251 = vpack.c.b16 %v6201, %v6200
        %v6252 = vpack.c.b16 %v6203, %v6202
        %v6253 = vpack.c.b16 %v6205, %v6204
        %v6254 = vpack.c.b16 %v6207, %v6206
        %v6255 = vpack.c.b16 %v6209, %v6208
        %v6256 = vpack.c.b16 %v6211, %v6210
        %v6257 = vpack.c.b16 %v6213, %v6212
        %v6258 = vpack.c.b16 %v6215, %v6214
        %v6259 = vpack.c.b16 %v6217, %v6216
        %v6260 = vpack.c.b16 %v6219, %v6218
        %v6261 = vpack.c.b16 %v6221, %v6220
        %v6262 = vpack.c.b16 %v6223, %v6222
        %v6263 = vpack.c.b16 %v6225, %v6224
        %v6264 = vpack.c.b16 %v6227, %v6226
        %v6265 = vpack.c.b16 %v6229, %v6228
        %v6266 = vpack.c.b16 %v6231, %v6230
        %v6267 = vpack.c.b16 %v6233, %v6232
        %v6268 = vpack.c.b16 %v6235, %v6234
        %v6269 = vpack.c.b16 %v6237, %v6236
        %6302 = vmatprep.subr.bf16.mxu0 0
        %6303 = vmatpush1.bf16.msra.mxu0 %v6238
        %6304 = vmatprep.subr.bf16.mxu0 0
        %6305 = vmatpush1.bf16.msra.mxu0 %v6239
        %6306 = vmatprep.subr.bf16.mxu0 0
        %6307 = vmatpush1.bf16.msra.mxu0 %v6240
        %6308 = vmatprep.subr.bf16.mxu0 0
        %6309 = vmatpush1.bf16.msra.mxu0 %v6241
        %6310 = vmatprep.subr.bf16.mxu0 0
        %6311 = vmatpush1.bf16.msra.mxu0 %v6242
        %6312 = vmatprep.subr.bf16.mxu0 0
        %6313 = vmatpush1.bf16.msra.mxu0 %v6243
        %6314 = vmatprep.subr.bf16.mxu0 0
        %6315 = vmatpush1.bf16.msra.mxu0 %v6244
        %6316 = vmatprep.subr.bf16.mxu0 0
        %6317 = vmatpush1.bf16.msra.mxu0 %v6245
        %6318 = vmatprep.subr.bf16.mxu0 0
        %6319 = vmatpush1.bf16.msra.mxu0 %v6246
        %6320 = vmatprep.subr.bf16.mxu0 0
        %6321 = vmatpush1.bf16.msra.mxu0 %v6247
        %6322 = vmatprep.subr.bf16.mxu0 0
        %6323 = vmatpush1.bf16.msra.mxu0 %v6248
        %6324 = vmatprep.subr.bf16.mxu0 0
        %6325 = vmatpush1.bf16.msra.mxu0 %v6249
        %6326 = vmatprep.subr.bf16.mxu0 0
        %6327 = vmatpush1.bf16.msra.mxu0 %v6250
        %6328 = vmatprep.subr.bf16.mxu0 0
        %6329 = vmatpush1.bf16.msra.mxu0 %v6251
        %6330 = vmatprep.subr.bf16.mxu0 0
        %6331 = vmatpush1.bf16.msra.mxu0 %v6252
        %6332 = vmatprep.subr.bf16.mxu0 0
        %6333 = vmatpush1.bf16.msra.mxu0 %v6253
        %6334 = vmatprep.mubr.bf16.mxu0 %v6043
        %6335 = vmatmul.mubr.bf16.gmra.mrb[0].mxu0 %v6042
        %v6336 = vpop.f32.mrb[0].mxu0
        %v6337 = vadd.f32 0.0, %v6336
        %v6338 = vpop.f32.mrb[0].mxu0
        %v6339 = vpop.f32.mrb[0].mxu0
        %v6340 = vpop.f32.mrb[0].mxu0
        %6341 = vdwg.mxu0
        %6342 = vmatprep.subr.bf16.mxu0 0
        %6343 = vmatpush1.bf16.msra.mxu0 %v6254
        %6344 = vmatprep.subr.bf16.mxu0 0
        %6345 = vmatpush1.bf16.msra.mxu0 %v6255
        %6346 = vmatprep.subr.bf16.mxu0 0
        %6347 = vmatpush1.bf16.msra.mxu0 %v6256
        %6348 = vmatprep.subr.bf16.mxu0 0
        %6349 = vmatpush1.bf16.msra.mxu0 %v6257
        %6350 = vmatprep.subr.bf16.mxu0 0
        %6351 = vmatpush1.bf16.msra.mxu0 %v6258
        %6352 = vmatprep.subr.bf16.mxu0 0
        %6353 = vmatpush1.bf16.msra.mxu0 %v6259
        %6354 = vmatprep.subr.bf16.mxu0 0
        %6355 = vmatpush1.bf16.msra.mxu0 %v6260
        %6356 = vmatprep.subr.bf16.mxu0 0
        %6357 = vmatpush1.bf16.msra.mxu0 %v6261
        %6358 = vmatprep.subr.bf16.mxu0 0
        %6359 = vmatpush1.bf16.msra.mxu0 %v6262
        %6360 = vmatprep.subr.bf16.mxu0 0
        %6361 = vmatpush1.bf16.msra.mxu0 %v6263
        %6362 = vmatprep.subr.bf16.mxu0 0
        %6363 = vmatpush1.bf16.msra.mxu0 %v6264
        %6364 = vmatprep.subr.bf16.mxu0 0
        %6365 = vmatpush1.bf16.msra.mxu0 %v6265
        %6366 = vmatprep.subr.bf16.mxu0 0
        %6367 = vmatpush1.bf16.msra.mxu0 %v6266
        %6368 = vmatprep.subr.bf16.mxu0 0
        %6369 = vmatpush1.bf16.msra.mxu0 %v6267
        %6370 = vmatprep.subr.bf16.mxu0 0
        %6371 = vmatpush1.bf16.msra.mxu0 %v6268
        %6372 = vmatprep.subr.bf16.mxu0 0
        %6373 = vmatpush1.bf16.msra.mxu0 %v6269
        %6374 = vmatprep.mubr.bf16.mxu0 %v6045
        %6375 = vmatmul.mubr.bf16.gmra.mrb[0].mxu0 %v6044
        %v6376 = vpop.f32.mrb[0].mxu0
        %v6377 = vadd.f32 %v6337, %v6376
        %v6378 = vpop.f32.mrb[0].mxu0
        %v6379 = vpop.f32.mrb[0].mxu0
        %v6380 = vpop.f32.mrb[0].mxu0
        %6381 = vdwg.mxu0
        %v6382 = vadd.f32 %v6041, %v6377
        %6383 = vst [vmem:[#allocation2] sm:$0xff] %v6382
        %p6384 = scmp.eq.s32.totalorder %s23, 3
        // Predicated region
        $region61: #{image_captioning_forward.2} parent=39 // pred_check
          %p6385 = pneg %p6384
        $region62: #{image_captioning_forward.2} parent=39 // pred_check_branch
          %6387 = sbr.rel (%p6385) target = $region64
        $region63: #{image_captioning_forward.2} parent=39 // pred_region
          %v6388 = vld [vmem:[#allocation2] sm:$0xff]
          %v6389 = vld [vmem:[#allocation8] sm:$0x1]
          %v6391 = vlaneseq
          %v6392 = vshrl.u32 %v6391, 7
          %v6393 = vsub.s32 0, %v6392
          %v6394 = vrot.slane %v6389, %v6393
          %v6396 = vadd.f32 %v6388, %v6394
          %6397 = vst [vmem:[%s5] sm:$0xff] %v6396
        $region64: #{image_captioning_forward.2} parent=39 // pred_fallthru
          _
        // Predicated region
        $region65: #{image_captioning_forward.2} parent=39 // pred_check
          %p6398 = pneg %p156
        $region66: #{image_captioning_forward.2} parent=39 // pred_check_branch
          %6400 = sbr.rel (%p6398) target = $region68
        $region67: #{image_captioning_forward.2} parent=39 // pred_region
          _
        $region68: #{image_captioning_forward.2} parent=39 // pred_fallthru
          _
        // Predicated region
        $region69: #{image_captioning_forward.2} parent=39 // pred_check
          %p6401 = pneg %p156
        $region70: #{image_captioning_forward.2} parent=39 // pred_check_branch
          %6403 = sbr.rel (%p6401) target = $region72
        $region71: #{image_captioning_forward.2} parent=39 // pred_region
          _
        $region72: #{image_captioning_forward.2} parent=39 // pred_fallthru
          _
      $region40: #{image_captioning_forward.2} parent=5 // pred_fallthru
        _
      %p6404 = scmp.le.s32.totalorder 2, %s18
      // Predicated region
      $region73: #{image_captioning_forward.2} parent=5 // pred_check
        %p6405 = pneg %p6404
      $region74: #{image_captioning_forward.2} parent=5 // pred_check_branch
        %6407 = sbr.rel (%p6405) target = $region76
      $region75: #{image_captioning_forward.2} parent=5 // pred_region
        %s6408 = ssub.s32 %s18, 2
      $region76: #{image_captioning_forward.2} parent=5 // pred_fallthru
        _
    $region6: #{image_captioning_forward.2} parent=1 // loop_footer
      %s22 = sadd.s32 1, %s18
    $region7: #{image_captioning_forward.2} parent=1 // loop_footer_branch
      %17 = sbr.rel target = $region3
    $region8: #{image_captioning_forward.2} parent=1 // loop_exit
      _
    %6409 = vsyncpa [#allocation4], 1
    %s6410 = scalar_lea.sflag [#allocation4], 1
    %6411 = vsyncpa %s6410, 1
    %6412 = vsyncpa [#allocation6], 1
    %s6413 = scalar_lea.sflag [#allocation6], 1
    %6414 = vsyncpa %s6413, 1
    %6415 = vsyncpa [#allocation9], 1

</llo_original>
